<compile_context>
chip_gen: v5e
topology: v5e:2x2
jax: 0.10.0
libtpu: 0.0.40
codegen_flags: <defaults>
</compile_context>

<pallas_src>
import functools
from collections import OrderedDict

import jax
import jax.numpy as jnp
from jax.experimental import pallas as pl
from jax.experimental.pallas import tpu as pltpu


# ---------------------------------------------------------------------------
# helpers
# ---------------------------------------------------------------------------
def _pick_row_tile(total, target, quantum=8):
    """Full extent if it fits the target (fewest grid steps); otherwise the
    largest divisor of `total` <= target that is a multiple of `quantum`
    (sublane alignment); falls back to the full extent."""
    if total <= target:
        return total
    cands = [c for c in range(quantum, target + 1, quantum) if total % c == 0]
    return max(cands) if cands else total


# ---------------------------------------------------------------------------
# Kernel 1: 1x1 conv (top FPN lateral) -- row-tiled matmul
# ---------------------------------------------------------------------------
def _conv1x1_kernel(x_ref, w_ref, b_ref, o_ref):
    _, th, W, Cin = x_ref.shape
    Cout = o_ref.shape[-1]
    acc = jnp.dot(x_ref[...].reshape(th * W, Cin), w_ref[...],
                  preferred_element_type=jnp.float32) + b_ref[...]
    o_ref[...] = acc.reshape(1, th, W, Cout).astype(o_ref.dtype)


def conv1x1(x_nhwc, w, b, row_tile=64):
    """1x1 conv.  w: (Cin, Cout), b: (Cout,)."""
    N, H, W, Cin = x_nhwc.shape
    Cout = w.shape[1]
    th = _pick_row_tile(H, row_tile)
    return pl.pallas_call(
        _conv1x1_kernel,
        out_shape=jax.ShapeDtypeStruct((N, H, W, Cout), jnp.float32),
        grid=(N, H // th),
        in_specs=[
            pl.BlockSpec((1, th, W, Cin), lambda n, r: (n, r, 0, 0)),
            pl.BlockSpec((Cin, Cout), lambda n, r: (0, 0)),
            pl.BlockSpec((1, Cout), lambda n, r: (0, 0)),
        ],
        out_specs=pl.BlockSpec((1, th, W, Cout), lambda n, r: (n, r, 0, 0)),
        compiler_params=pltpu.CompilerParams(
            dimension_semantics=("parallel", "parallel")),
    )(x_nhwc, w, b.reshape(1, Cout))


# ---------------------------------------------------------------------------
# Kernel 2: 3x3 conv, stride 1, pad 1 (FPN layer blocks)
#   - single im2col matmul with K = 9*Cin (one MXU call per row tile)
# ---------------------------------------------------------------------------
def _conv3x3s1_kernel(x_ref, w_ref, b_ref, o_ref, *, relu):
    # x_ref: (1, H+2, W+2, Cin) full padded image (resident per batch element)
    # o_ref: (1, th, W, Cout)   output row tile
    r = pl.program_id(1)
    _, th, W, Cout = o_ref.shape
    r0 = pl.multiple_of(r * th, th)
    pieces = []
    for kh in range(3):
        band = x_ref[0, pl.ds(r0 + kh, th), :, :]       # (th, W+2, Cin)
        for kw in range(3):
            pieces.append(band[:, kw:kw + W, :])        # (th, W, Cin)
    patches = jnp.concatenate(pieces, axis=-1)          # (th, W, 9*Cin)
    k = patches.shape[-1]
    acc = jnp.dot(patches.reshape(th * W, k), w_ref[...],
                  preferred_element_type=jnp.float32)
    acc = acc + b_ref[...]
    if relu:
        acc = jnp.maximum(acc, 0.0)
    o_ref[...] = acc.reshape(1, th, W, Cout).astype(o_ref.dtype)


def conv3x3_s1(x_nhwc, w, b, apply_relu=False, row_tile=32):
    """3x3 conv, stride 1, padding 1.  w: (3,3,Cin,Cout), b: (Cout,)."""
    N, H, W, Cin = x_nhwc.shape
    Cout = w.shape[-1]
    # TODO(synk): fuse the zero padding into the kernel (halo / masked edge taps)
    xp = jnp.pad(x_nhwc, ((0, 0), (1, 1), (1, 1), (0, 0)))
    th = _pick_row_tile(H, row_tile)
    kern = functools.partial(_conv3x3s1_kernel, relu=apply_relu)
    return pl.pallas_call(
        kern,
        out_shape=jax.ShapeDtypeStruct((N, H, W, Cout), jnp.float32),
        grid=(N, H // th),
        in_specs=[
            # full padded image stays resident across the row-tile axis
            pl.BlockSpec((1, H + 2, W + 2, Cin), lambda n, r: (n, 0, 0, 0)),
            pl.BlockSpec((9 * Cin, Cout), lambda n, r: (0, 0)),
            pl.BlockSpec((1, Cout), lambda n, r: (0, 0)),
        ],
        out_specs=pl.BlockSpec((1, th, W, Cout), lambda n, r: (n, r, 0, 0)),
        compiler_params=pltpu.CompilerParams(
            dimension_semantics=("parallel", "arbitrary")),
    )(xp, w.reshape(9 * Cin, Cout), b.reshape(1, Cout))


# ---------------------------------------------------------------------------
# Kernel 3: fused backbone stage: 3x3 conv (stride 2, pad 1) + bias + ReLU
#   == conv3x3(stride=1) -> ReLU -> x[:, ::2, ::2, :]   (downsample fused)
# ---------------------------------------------------------------------------
def _conv3x3s2_relu_kernel(xe_ref, xo_ref, w_ref, b_ref, o_ref):
    # xe/xo: (1, Ho+1, Wo+1, 2*Cin) even/odd padded rows, column pairs packed
    #        into the lane dim.   o: (1, th, Wo, Cout) stride-2 output rows.
    r = pl.program_id(1)
    _, th, Wo, Cout = o_ref.shape
    r0 = pl.multiple_of(r * th, th)
    bands = (
        xe_ref[0, pl.ds(r0, th), :, :],       # kh = 0 : padded rows 2y
        xo_ref[0, pl.ds(r0, th), :, :],       # kh = 1 : padded rows 2y + 1
        xe_ref[0, pl.ds(r0 + 1, th), :, :],   # kh = 2 : padded rows 2y + 2
    )
    pieces = []
    for band in bands:                         # (th, Wo+1, 2*Cin)
        pieces.append(band[:, 0:Wo, :])        # taps kw = 0, 1 (packed pair)
        pieces.append(band[:, 1:Wo + 1, :])    # taps kw = 2, 3 (3rd is zero-weight)
    patches = jnp.concatenate(pieces, axis=-1)  # (th, Wo, 12*Cin)
    k = patches.shape[-1]
    acc = jnp.dot(patches.reshape(th * Wo, k), w_ref[...],
                  preferred_element_type=jnp.float32)
    acc = jnp.maximum(acc + b_ref[...], 0.0)    # fused bias + ReLU
    o_ref[...] = acc.reshape(1, th, Wo, Cout).astype(o_ref.dtype)


def conv3x3_s2_relu(x_nhwc, w, b, row_tile=32):
    """Fused backbone stage: 3x3 conv (stride 2, padding 1) + bias + ReLU."""
    N, H, W, Cin = x_nhwc.shape
    assert H % 2 == 0 and W % 2 == 0
    Cout = w.shape[-1]
    Ho, Wo = H // 2, W // 2
    # TODO(synk): fuse the zero padding into the kernel (halo / masked edge taps)
    xp = jnp.pad(x_nhwc, ((0, 0), (1, 1), (1, 1), (0, 0)))       # (N, H+2, W+2, Cin)
    # pack column pairs into lanes + split even/odd padded rows so the stride-2
    # decimation needs no strided access inside the kernel.
    xe = xp[:, 0::2].reshape(N, Ho + 1, Wo + 1, 2 * Cin)          # rows 0,2,...,H
    xo = xp[:, 1::2].reshape(N, Ho + 1, Wo + 1, 2 * Cin)          # rows 1,3,...,H+1
    # weights packed as (kh, kw in {0,1,2, zero-pad}) x Cin -> one matmul, K=12*Cin
    w4 = jnp.concatenate([w, jnp.zeros((3, 1, Cin, Cout), w.dtype)], axis=1)
    w12 = w4.reshape(12 * Cin, Cout)
    th = _pick_row_tile(Ho, row_tile)
    return pl.pallas_call(
        _conv3x3s2_relu_kernel,
        out_shape=jax.ShapeDtypeStruct((N, Ho, Wo, Cout), jnp.float32),
        grid=(N, Ho // th),
        in_specs=[
            pl.BlockSpec((1, Ho + 1, Wo + 1, 2 * Cin), lambda n, r: (n, 0, 0, 0)),
            pl.BlockSpec((1, Ho + 1, Wo + 1, 2 * Cin), lambda n, r: (n, 0, 0, 0)),
            pl.BlockSpec((12 * Cin, Cout), lambda n, r: (0, 0)),
            pl.BlockSpec((1, Cout), lambda n, r: (0, 0)),
        ],
        out_specs=pl.BlockSpec((1, th, Wo, Cout), lambda n, r: (n, r, 0, 0)),
        compiler_params=pltpu.CompilerParams(
            dimension_semantics=("parallel", "arbitrary")),
    )(xe, xo, w12, b.reshape(1, Cout))


# ---------------------------------------------------------------------------
# Kernel 4: fused FPN top-down step: 1x1 lateral + nearest-2x upsample + add
# ---------------------------------------------------------------------------
def _lateral_topdown_kernel(x_ref, c_ref, w_ref, b_ref, o_ref):
    # x: (1, th, W, Cin) fine backbone feature;  c: (1, th/2, W/2, C) coarse level
    _, th, W, Cin = x_ref.shape
    C = o_ref.shape[-1]
    lat = jnp.dot(x_ref[...].reshape(th * W, Cin), w_ref[...],
                  preferred_element_type=jnp.float32) + b_ref[...]
    lat = lat.reshape(th // 2, 2, W // 2, 2, C)
    top = c_ref[...].reshape(th // 2, 1, W // 2, 1, C)
    # nearest-2x upsample of the coarse level == broadcast over the (2, 2) dims
    o_ref[...] = (lat + top).reshape(1, th, W, C).astype(o_ref.dtype)


def lateral_topdown(x_nhwc, coarse, w, b, row_tile=32):
    """Fused: inner 1x1 conv of `x` + nearest-2x upsample of `coarse` + add."""
    N, H, W, Cin = x_nhwc.shape
    assert H % 2 == 0 and W % 2 == 0
    C = w.shape[1]
    assert coarse.shape == (N, H // 2, W // 2, C)
    th = _pick_row_tile(H, row_tile)           # multiple of 8 (even) or full H (even)
    return pl.pallas_call(
        _lateral_topdown_kernel,
        out_shape=jax.ShapeDtypeStruct((N, H, W, C), jnp.float32),
        grid=(N, H // th),
        in_specs=[
            pl.BlockSpec((1, th, W, Cin), lambda n, r: (n, r, 0, 0)),
            pl.BlockSpec((1, th // 2, W // 2, C), lambda n, r: (n, r, 0, 0)),
            pl.BlockSpec((Cin, C), lambda n, r: (0, 0)),
            pl.BlockSpec((1, C), lambda n, r: (0, 0)),
        ],
        out_specs=pl.BlockSpec((1, th, W, C), lambda n, r: (n, r, 0, 0)),
        compiler_params=pltpu.CompilerParams(
            dimension_semantics=("parallel", "parallel")),
    )(x_nhwc, coarse, w, b.reshape(1, C))


# ---------------------------------------------------------------------------
# Deterministic params: kaiming_normal_(a=1) -> std = 1/sqrt(fan_in), bias 0
# ---------------------------------------------------------------------------
def _kaiming(key, kh, kw, cin, cout):
    std = 1.0 / jnp.sqrt(float(kh * kw * cin))
    return jax.random.normal(key, (kh, kw, cin, cout), jnp.float32) * std


def init_params(key, in_ch, backbone_channels, out_channels):
    n = len(backbone_channels)
    keys = iter(jax.random.split(key, 3 * n))
    params = {"backbone": [], "inner_w": [], "inner_b": [],
              "layer_w": [], "layer_b": []}
    cin = in_ch
    for cout in backbone_channels:
        params["backbone"].append({"w": _kaiming(next(keys), 3, 3, cin, cout),
                                   "b": jnp.zeros((cout,), jnp.float32)})
        cin = cout
    for c in backbone_channels:                 # in_channel_list == backbone_channels
        params["inner_w"].append(_kaiming(next(keys), 1, 1, c, out_channels)[0, 0])
        params["inner_b"].append(jnp.zeros((out_channels,), jnp.float32))
        params["layer_w"].append(_kaiming(next(keys), 3, 3, out_channels, out_channels))
        params["layer_b"].append(jnp.zeros((out_channels,), jnp.float32))
    return params


# ---------------------------------------------------------------------------
# Forward: backbone (IntermediateLayerGetter) + FPN (+ LastLevelMaxPool)
# ---------------------------------------------------------------------------
def backbone_forward(x_nhwc, params):
    """Synthetic backbone: each stage = fused 3x3 conv (stride 2) + ReLU;
    every stage output is returned (IntermediateLayerGetter semantics)."""
    out = OrderedDict()
    h = x_nhwc
    for i, p in enumerate(params["backbone"]):
        h = conv3x3_s2_relu(h, p["w"], p["b"])
        out[str(i)] = h
    return out


def fpn_forward(feats, params, extra_blocks=True):
    names = list(feats.keys())
    xs = list(feats.values())
    last_inner = conv1x1(xs[-1], params["inner_w"][-1], params["inner_b"][-1])
    results = [conv3x3_s1(last_inner, params["layer_w"][-1], params["layer_b"][-1])]
    for idx in range(len(xs) - 2, -1, -1):
        # fused: 1x1 lateral + nearest-2x top-down upsample + add
        # TODO(synk): only exact 2x nearest resize supported (matches this model);
        # general F.interpolate(size=...) to arbitrary sizes is not implemented.
        last_inner = lateral_topdown(xs[idx], last_inner,
                                     params["inner_w"][idx], params["inner_b"][idx])
        results.insert(0, conv3x3_s1(last_inner, params["layer_w"][idx],
                                     params["layer_b"][idx]))
    if extra_blocks:
        # LastLevelMaxPool: max_pool2d(kernel=1, stride=2, pad=0) == decimation (glue)
        names = names + ["pool"]
        results.append(results[-1][:, ::2, ::2, :])
    return OrderedDict(zip(names, results))


def backbone_with_fpn(x_nchw, params, extra_blocks=True):
    x = jnp.transpose(x_nchw, (0, 2, 3, 1))                       # NCHW -> NHWC
    feats = backbone_forward(x, params)
    out = fpn_forward(feats, params, extra_blocks=extra_blocks)
    return OrderedDict((k, jnp.transpose(v, (0, 3, 1, 2))) for k, v in out.items())


# ---------------------------------------------------------------------------
# Pure-JAX reference of the same forward (for validation)
# ---------------------------------------------------------------------------
def reference_forward(x_nchw, params, extra_blocks=True):
    hi = jax.lax.Precision.HIGHEST

    def conv(x, w, b, stride):
        y = jax.lax.conv_general_dilated(
            x, w, (stride, stride), ((1, 1), (1, 1)),
            dimension_numbers=("NHWC", "HWIO", "NHWC"), precision=hi)
        return y + b

    def conv1(x, w, b):
        return jnp.einsum("nhwc,cd->nhwd", x, w, precision=hi) + b

    x = jnp.transpose(x_nchw, (0, 2, 3, 1))
    feats, h = [], x
    for p in params["backbone"]:
        h = jnp.maximum(conv(h, p["w"], p["b"], 2), 0.0)
        feats.append(h)
    last_inner = conv1(feats[-1], params["inner_w"][-1], params["inner_b"][-1])
    results = [conv(last_inner, params["layer_w"][-1], params["layer_b"][-1], 1)]
    for idx in range(len(feats) - 2, -1, -1):
        lat = conv1(feats[idx], params["inner_w"][idx], params["inner_b"][idx])
        up = jnp.repeat(jnp.repeat(last_inner, 2, axis=1), 2, axis=2)
        last_inner = lat + up
        results.insert(0, conv(last_inner, params["layer_w"][idx],
                               params["layer_b"][idx], 1))
    names = [str(i) for i in range(len(feats))]
    if extra_blocks:
        names.append("pool")
        results.append(results[-1][:, ::2, ::2, :])
    return OrderedDict((k, jnp.transpose(v, (0, 3, 1, 2)))
                       for k, v in zip(names, results))


# ---------------------------------------------------------------------------
if __name__ == "__main__":
    key = jax.random.PRNGKey(0)
    k_x, k_p = jax.random.split(key)

    in_ch = 4
    backbone_channels = [8, 16, 32]      # in_channel_list for the FPN
    out_channels = 16
    x = jax.random.normal(k_x, (2, in_ch, 32, 32), jnp.float32)   # NCHW input

    params = init_params(k_p, in_ch, backbone_channels, out_channels)

    fwd = jax.jit(functools.partial(backbone_with_fpn, extra_blocks=True))
    out = fwd(x, params)
    out = jax.tree_util.tree_map(jax.block_until_ready, dict(out))

    expected = {"0": (2, 16, 16, 16), "1": (2, 16, 8, 8),
                "2": (2, 16, 4, 4), "pool": (2, 16, 2, 2)}
    for k, shp in expected.items():
        assert out[k].shape == shp, (k, out[k].shape, shp)
        assert out[k].dtype == jnp.float32

    # numerical check against the pure-JAX reference
    ref = reference_forward(x, params, extra_blocks=True)
    for k in expected:
        err = float(jnp.max(jnp.abs(out[k] - ref[k]))
                    / (float(jnp.max(jnp.abs(ref[k]))) + 1e-6))
        assert err < 5e-2, (k, err)

    print("KERNEL_OK")
</pallas_src>

<mosaic_0001>
module attributes {stable_mosaic.version = 11 : i64} {
  func.func @_conv3x3s2_relu_kernel(%arg0: i32, %arg1: i32, %arg2: memref<1x17x17x8xf32, #tpu.memory_space<vmem>>, %arg3: memref<1x17x17x8xf32, #tpu.memory_space<vmem>>, %arg4: memref<48x8xf32, #tpu.memory_space<vmem>>, %arg5: memref<1x8xf32, #tpu.memory_space<vmem>>, %arg6: memref<1x16x16x8xf32, #tpu.memory_space<vmem>>) attributes {dimension_semantics = [#tpu.dimension_semantics<parallel>, #tpu.dimension_semantics<arbitrary>], iteration_bounds = array<i64: 2, 1>, scalar_prefetch = 0 : i64, scratch_operands = 0 : i64, tpu.core_type = #tpu.core_type<tc>, window_params = [{transform_indices = @transform_0, window_bounds = array<i64: 1, 17, 17, 8>}, {transform_indices = @transform_1, window_bounds = array<i64: 1, 17, 17, 8>}, {pipeline_mode = #tpu.pipeline_mode<synchronous>, transform_indices = @transform_2, window_bounds = array<i64: 48, 8>}, {pipeline_mode = #tpu.pipeline_mode<synchronous>, transform_indices = @transform_3, window_bounds = array<i64: 1, 8>}, {transform_indices = @transform_4, window_bounds = array<i64: 1, 16, 16, 8>}]} {
    %c16_i32 = arith.constant 16 : i32
    %0 = arith.muli %arg1, %c16_i32 : i32
    %1 = tpu.assume_multiple %0, 16 : i32
    %c0 = arith.constant 0 : index
    %2 = arith.index_cast %1 : i32 to index
    %c0_0 = arith.constant 0 : index
    %c0_1 = arith.constant 0 : index
    %3 = vector.load %arg2[%c0, %2, %c0_0, %c0_1] : memref<1x17x17x8xf32, #tpu.memory_space<vmem>>, vector<1x16x17x8xf32>
    %4 = vector.shape_cast %3 : vector<1x16x17x8xf32> to vector<16x17x8xf32>
    %c0_2 = arith.constant 0 : index
    %5 = arith.index_cast %1 : i32 to index
    %c0_3 = arith.constant 0 : index
    %c0_4 = arith.constant 0 : index
    %6 = vector.load %arg3[%c0_2, %5, %c0_3, %c0_4] : memref<1x17x17x8xf32, #tpu.memory_space<vmem>>, vector<1x16x17x8xf32>
    %7 = vector.shape_cast %6 : vector<1x16x17x8xf32> to vector<16x17x8xf32>
    %c1_i32 = arith.constant 1 : i32
    %8 = arith.addi %1, %c1_i32 : i32
    %c0_5 = arith.constant 0 : index
    %9 = arith.index_cast %8 : i32 to index
    %c0_6 = arith.constant 0 : index
    %c0_7 = arith.constant 0 : index
    %10 = vector.load %arg2[%c0_5, %9, %c0_6, %c0_7] : memref<1x17x17x8xf32, #tpu.memory_space<vmem>>, vector<1x16x17x8xf32>
    %11 = vector.shape_cast %10 : vector<1x16x17x8xf32> to vector<16x17x8xf32>
    %12 = vector.extract_strided_slice %4 {offsets = [0, 0, 0], sizes = [16, 16, 8], strides = [1, 1, 1]} : vector<16x17x8xf32> to vector<16x16x8xf32>
    %13 = vector.extract_strided_slice %4 {offsets = [0, 1, 0], sizes = [16, 16, 8], strides = [1, 1, 1]} : vector<16x17x8xf32> to vector<16x16x8xf32>
    %14 = vector.extract_strided_slice %7 {offsets = [0, 0, 0], sizes = [16, 16, 8], strides = [1, 1, 1]} : vector<16x17x8xf32> to vector<16x16x8xf32>
    %15 = vector.extract_strided_slice %7 {offsets = [0, 1, 0], sizes = [16, 16, 8], strides = [1, 1, 1]} : vector<16x17x8xf32> to vector<16x16x8xf32>
    %16 = vector.extract_strided_slice %11 {offsets = [0, 0, 0], sizes = [16, 16, 8], strides = [1, 1, 1]} : vector<16x17x8xf32> to vector<16x16x8xf32>
    %17 = vector.extract_strided_slice %11 {offsets = [0, 1, 0], sizes = [16, 16, 8], strides = [1, 1, 1]} : vector<16x17x8xf32> to vector<16x16x8xf32>
    %18 = tpu.concatenate %12, %13, %14, %15, %16, %17 in 2 : vector<16x16x8xf32>, vector<16x16x8xf32>, vector<16x16x8xf32>, vector<16x16x8xf32>, vector<16x16x8xf32>, vector<16x16x8xf32> -> vector<16x16x48xf32>
    %19 = vector.shape_cast %18 : vector<16x16x48xf32> to vector<256x48xf32>
    %c0_8 = arith.constant 0 : index
    %c0_9 = arith.constant 0 : index
    %20 = vector.load %arg4[%c0_8, %c0_9] : memref<48x8xf32, #tpu.memory_space<vmem>>, vector<48x8xf32>
    %cst = arith.constant dense<0.000000e+00> : vector<256x8xf32>
    %21 = tpu.matmul %19, %20, %cst {dimension_numbers = #tpu.dot_dimension_numbers<[1], [0], [0], [1], [0, 0, 1, 1], [], []>} : vector<256x48xf32>, vector<48x8xf32>, vector<256x8xf32> -> vector<256x8xf32>
    %c0_10 = arith.constant 0 : index
    %c0_11 = arith.constant 0 : index
    %22 = vector.load %arg5[%c0_10, %c0_11] : memref<1x8xf32, #tpu.memory_space<vmem>>, vector<1x8xf32>
    %23 = vector.broadcast %22 : vector<1x8xf32> to vector<256x8xf32>
    %24 = arith.addf %21, %23 : vector<256x8xf32>
    %cst_12 = arith.constant 0.000000e+00 : f32
    %25 = vector.broadcast %cst_12 : f32 to vector<256x8xf32>
    %26 = arith.maximumf %24, %25 : vector<256x8xf32>
    %27 = vector.shape_cast %26 : vector<256x8xf32> to vector<1x16x16x8xf32>
    %c0_13 = arith.constant 0 : index
    %c0_14 = arith.constant 0 : index
    %c0_15 = arith.constant 0 : index
    %c0_16 = arith.constant 0 : index
    %28 = vector.load %arg6[%c0_13, %c0_14, %c0_15, %c0_16] : memref<1x16x16x8xf32, #tpu.memory_space<vmem>>, vector<1x16x16x8xf32>
    tpu.vector_store %arg6[%c0_13, %c0_14, %c0_15, %c0_16], %27 {strides = array<i32>} : memref<1x16x16x8xf32, #tpu.memory_space<vmem>>, vector<1x16x16x8xf32>,
    return
  }
  func.func @transform_0(%arg0: i32, %arg1: i32) -> (i32, i32, i32, i32) {
    %c0_i32 = arith.constant 0 : i32
    %c0_i32_0 = arith.constant 0 : i32
    %c0_i32_1 = arith.constant 0 : i32
    %c0_i32_2 = arith.constant 0 : i32
    return %arg0, %c0_i32, %c0_i32_0, %c0_i32_1 : i32, i32, i32, i32
  }
  func.func @transform_1(%arg0: i32, %arg1: i32) -> (i32, i32, i32, i32) {
    %c0_i32 = arith.constant 0 : i32
    %c0_i32_0 = arith.constant 0 : i32
    %c0_i32_1 = arith.constant 0 : i32
    %c0_i32_2 = arith.constant 0 : i32
    return %arg0, %c0_i32, %c0_i32_0, %c0_i32_1 : i32, i32, i32, i32
  }
  func.func @transform_2(%arg0: i32, %arg1: i32) -> (i32, i32) {
    %c0_i32 = arith.constant 0 : i32
    %c0_i32_0 = arith.constant 0 : i32
    %c0_i32_1 = arith.constant 0 : i32
    return %c0_i32, %c0_i32_0 : i32, i32
  }
  func.func @transform_3(%arg0: i32, %arg1: i32) -> (i32, i32) {
    %c0_i32 = arith.constant 0 : i32
    %c0_i32_0 = arith.constant 0 : i32
    %c0_i32_1 = arith.constant 0 : i32
    return %c0_i32, %c0_i32_0 : i32, i32
  }
  func.func @transform_4(%arg0: i32, %arg1: i32) -> (i32, i32, i32, i32) {
    %c0_i32 = arith.constant 0 : i32
    %c0_i32_0 = arith.constant 0 : i32
    %c0_i32_1 = arith.constant 0 : i32
    return %arg0, %arg1, %c0_i32, %c0_i32_0 : i32, i32, i32, i32
  }
}

module attributes {stable_mosaic.version = 11 : i64} {
  func.func @_conv3x3s2_relu_kernel(%arg0: i32, %arg1: i32, %arg2: memref<1x9x9x16xf32, #tpu.memory_space<vmem>>, %arg3: memref<1x9x9x16xf32, #tpu.memory_space<vmem>>, %arg4: memref<96x16xf32, #tpu.memory_space<vmem>>, %arg5: memref<1x16xf32, #tpu.memory_space<vmem>>, %arg6: memref<1x8x8x16xf32, #tpu.memory_space<vmem>>) attributes {dimension_semantics = [#tpu.dimension_semantics<parallel>, #tpu.dimension_semantics<arbitrary>], iteration_bounds = array<i64: 2, 1>, scalar_prefetch = 0 : i64, scratch_operands = 0 : i64, tpu.core_type = #tpu.core_type<tc>, window_params = [{transform_indices = @transform_0, window_bounds = array<i64: 1, 9, 9, 16>}, {transform_indices = @transform_1, window_bounds = array<i64: 1, 9, 9, 16>}, {pipeline_mode = #tpu.pipeline_mode<synchronous>, transform_indices = @transform_2, window_bounds = array<i64: 96, 16>}, {pipeline_mode = #tpu.pipeline_mode<synchronous>, transform_indices = @transform_3, window_bounds = array<i64: 1, 16>}, {transform_indices = @transform_4, window_bounds = array<i64: 1, 8, 8, 16>}]} {
    %c8_i32 = arith.constant 8 : i32
    %0 = arith.muli %arg1, %c8_i32 : i32
    %1 = tpu.assume_multiple %0, 8 : i32
    %c0 = arith.constant 0 : index
    %2 = arith.index_cast %1 : i32 to index
    %c0_0 = arith.constant 0 : index
    %c0_1 = arith.constant 0 : index
    %3 = vector.load %arg2[%c0, %2, %c0_0, %c0_1] : memref<1x9x9x16xf32, #tpu.memory_space<vmem>>, vector<1x8x9x16xf32>
    %4 = vector.shape_cast %3 : vector<1x8x9x16xf32> to vector<8x9x16xf32>
    %c0_2 = arith.constant 0 : index
    %5 = arith.index_cast %1 : i32 to index
    %c0_3 = arith.constant 0 : index
    %c0_4 = arith.constant 0 : index
    %6 = vector.load %arg3[%c0_2, %5, %c0_3, %c0_4] : memref<1x9x9x16xf32, #tpu.memory_space<vmem>>, vector<1x8x9x16xf32>
    %7 = vector.shape_cast %6 : vector<1x8x9x16xf32> to vector<8x9x16xf32>
    %c1_i32 = arith.constant 1 : i32
    %8 = arith.addi %1, %c1_i32 : i32
    %c0_5 = arith.constant 0 : index
    %9 = arith.index_cast %8 : i32 to index
    %c0_6 = arith.constant 0 : index
    %c0_7 = arith.constant 0 : index
    %10 = vector.load %arg2[%c0_5, %9, %c0_6, %c0_7] : memref<1x9x9x16xf32, #tpu.memory_space<vmem>>, vector<1x8x9x16xf32>
    %11 = vector.shape_cast %10 : vector<1x8x9x16xf32> to vector<8x9x16xf32>
    %12 = vector.extract_strided_slice %4 {offsets = [0, 0, 0], sizes = [8, 8, 16], strides = [1, 1, 1]} : vector<8x9x16xf32> to vector<8x8x16xf32>
    %13 = vector.extract_strided_slice %4 {offsets = [0, 1, 0], sizes = [8, 8, 16], strides = [1, 1, 1]} : vector<8x9x16xf32> to vector<8x8x16xf32>
    %14 = vector.extract_strided_slice %7 {offsets = [0, 0, 0], sizes = [8, 8, 16], strides = [1, 1, 1]} : vector<8x9x16xf32> to vector<8x8x16xf32>
    %15 = vector.extract_strided_slice %7 {offsets = [0, 1, 0], sizes = [8, 8, 16], strides = [1, 1, 1]} : vector<8x9x16xf32> to vector<8x8x16xf32>
    %16 = vector.extract_strided_slice %11 {offsets = [0, 0, 0], sizes = [8, 8, 16], strides = [1, 1, 1]} : vector<8x9x16xf32> to vector<8x8x16xf32>
    %17 = vector.extract_strided_slice %11 {offsets = [0, 1, 0], sizes = [8, 8, 16], strides = [1, 1, 1]} : vector<8x9x16xf32> to vector<8x8x16xf32>
    %18 = tpu.concatenate %12, %13, %14, %15, %16, %17 in 2 : vector<8x8x16xf32>, vector<8x8x16xf32>, vector<8x8x16xf32>, vector<8x8x16xf32>, vector<8x8x16xf32>, vector<8x8x16xf32> -> vector<8x8x96xf32>
    %19 = vector.shape_cast %18 : vector<8x8x96xf32> to vector<64x96xf32>
    %c0_8 = arith.constant 0 : index
    %c0_9 = arith.constant 0 : index
    %20 = vector.load %arg4[%c0_8, %c0_9] : memref<96x16xf32, #tpu.memory_space<vmem>>, vector<96x16xf32>
    %cst = arith.constant dense<0.000000e+00> : vector<64x16xf32>
    %21 = tpu.matmul %19, %20, %cst {dimension_numbers = #tpu.dot_dimension_numbers<[1], [0], [0], [1], [0, 0, 1, 1], [], []>} : vector<64x96xf32>, vector<96x16xf32>, vector<64x16xf32> -> vector<64x16xf32>
    %c0_10 = arith.constant 0 : index
    %c0_11 = arith.constant 0 : index
    %22 = vector.load %arg5[%c0_10, %c0_11] : memref<1x16xf32, #tpu.memory_space<vmem>>, vector<1x16xf32>
    %23 = vector.broadcast %22 : vector<1x16xf32> to vector<64x16xf32>
    %24 = arith.addf %21, %23 : vector<64x16xf32>
    %cst_12 = arith.constant 0.000000e+00 : f32
    %25 = vector.broadcast %cst_12 : f32 to vector<64x16xf32>
    %26 = arith.maximumf %24, %25 : vector<64x16xf32>
    %27 = vector.shape_cast %26 : vector<64x16xf32> to vector<1x8x8x16xf32>
    %c0_13 = arith.constant 0 : index
    %c0_14 = arith.constant 0 : index
    %c0_15 = arith.constant 0 : index
    %c0_16 = arith.constant 0 : index
    %28 = vector.load %arg6[%c0_13, %c0_14, %c0_15, %c0_16] : memref<1x8x8x16xf32, #tpu.memory_space<vmem>>, vector<1x8x8x16xf32>
    tpu.vector_store %arg6[%c0_13, %c0_14, %c0_15, %c0_16], %27 {strides = array<i32>} : memref<1x8x8x16xf32, #tpu.memory_space<vmem>>, vector<1x8x8x16xf32>,
    return
  }
  func.func @transform_0(%arg0: i32, %arg1: i32) -> (i32, i32, i32, i32) {
    %c0_i32 = arith.constant 0 : i32
    %c0_i32_0 = arith.constant 0 : i32
    %c0_i32_1 = arith.constant 0 : i32
    %c0_i32_2 = arith.constant 0 : i32
    return %arg0, %c0_i32, %c0_i32_0, %c0_i32_1 : i32, i32, i32, i32
  }
  func.func @transform_1(%arg0: i32, %arg1: i32) -> (i32, i32, i32, i32) {
    %c0_i32 = arith.constant 0 : i32
    %c0_i32_0 = arith.constant 0 : i32
    %c0_i32_1 = arith.constant 0 : i32
    %c0_i32_2 = arith.constant 0 : i32
    return %arg0, %c0_i32, %c0_i32_0, %c0_i32_1 : i32, i32, i32, i32
  }
  func.func @transform_2(%arg0: i32, %arg1: i32) -> (i32, i32) {
    %c0_i32 = arith.constant 0 : i32
    %c0_i32_0 = arith.constant 0 : i32
    %c0_i32_1 = arith.constant 0 : i32
    return %c0_i32, %c0_i32_0 : i32, i32
  }
  func.func @transform_3(%arg0: i32, %arg1: i32) -> (i32, i32) {
    %c0_i32 = arith.constant 0 : i32
    %c0_i32_0 = arith.constant 0 : i32
    %c0_i32_1 = arith.constant 0 : i32
    return %c0_i32, %c0_i32_0 : i32, i32
  }
  func.func @transform_4(%arg0: i32, %arg1: i32) -> (i32, i32, i32, i32) {
    %c0_i32 = arith.constant 0 : i32
    %c0_i32_0 = arith.constant 0 : i32
    %c0_i32_1 = arith.constant 0 : i32
    return %arg0, %arg1, %c0_i32, %c0_i32_0 : i32, i32, i32, i32
  }
}

module attributes {stable_mosaic.version = 11 : i64} {
  func.func @_conv3x3s2_relu_kernel(%arg0: i32, %arg1: i32, %arg2: memref<1x5x5x32xf32, #tpu.memory_space<vmem>>, %arg3: memref<1x5x5x32xf32, #tpu.memory_space<vmem>>, %arg4: memref<192x32xf32, #tpu.memory_space<vmem>>, %arg5: memref<1x32xf32, #tpu.memory_space<vmem>>, %arg6: memref<1x4x4x32xf32, #tpu.memory_space<vmem>>) attributes {dimension_semantics = [#tpu.dimension_semantics<parallel>, #tpu.dimension_semantics<arbitrary>], iteration_bounds = array<i64: 2, 1>, scalar_prefetch = 0 : i64, scratch_operands = 0 : i64, tpu.core_type = #tpu.core_type<tc>, window_params = [{transform_indices = @transform_0, window_bounds = array<i64: 1, 5, 5, 32>}, {transform_indices = @transform_1, window_bounds = array<i64: 1, 5, 5, 32>}, {pipeline_mode = #tpu.pipeline_mode<synchronous>, transform_indices = @transform_2, window_bounds = array<i64: 192, 32>}, {pipeline_mode = #tpu.pipeline_mode<synchronous>, transform_indices = @transform_3, window_bounds = array<i64: 1, 32>}, {transform_indices = @transform_4, window_bounds = array<i64: 1, 4, 4, 32>}]} {
    %c4_i32 = arith.constant 4 : i32
    %0 = arith.muli %arg1, %c4_i32 : i32
    %1 = tpu.assume_multiple %0, 4 : i32
    %c0 = arith.constant 0 : index
    %2 = arith.index_cast %1 : i32 to index
    %c0_0 = arith.constant 0 : index
    %c0_1 = arith.constant 0 : index
    %3 = vector.load %arg2[%c0, %2, %c0_0, %c0_1] : memref<1x5x5x32xf32, #tpu.memory_space<vmem>>, vector<1x4x5x32xf32>
    %4 = vector.shape_cast %3 : vector<1x4x5x32xf32> to vector<4x5x32xf32>
    %c0_2 = arith.constant 0 : index
    %5 = arith.index_cast %1 : i32 to index
    %c0_3 = arith.constant 0 : index
    %c0_4 = arith.constant 0 : index
    %6 = vector.load %arg3[%c0_2, %5, %c0_3, %c0_4] : memref<1x5x5x32xf32, #tpu.memory_space<vmem>>, vector<1x4x5x32xf32>
    %7 = vector.shape_cast %6 : vector<1x4x5x32xf32> to vector<4x5x32xf32>
    %c1_i32 = arith.constant 1 : i32
    %8 = arith.addi %1, %c1_i32 : i32
    %c0_5 = arith.constant 0 : index
    %9 = arith.index_cast %8 : i32 to index
    %c0_6 = arith.constant 0 : index
    %c0_7 = arith.constant 0 : index
    %10 = vector.load %arg2[%c0_5, %9, %c0_6, %c0_7] : memref<1x5x5x32xf32, #tpu.memory_space<vmem>>, vector<1x4x5x32xf32>
    %11 = vector.shape_cast %10 : vector<1x4x5x32xf32> to vector<4x5x32xf32>
    %12 = vector.extract_strided_slice %4 {offsets = [0, 0, 0], sizes = [4, 4, 32], strides = [1, 1, 1]} : vector<4x5x32xf32> to vector<4x4x32xf32>
    %13 = vector.extract_strided_slice %4 {offsets = [0, 1, 0], sizes = [4, 4, 32], strides = [1, 1, 1]} : vector<4x5x32xf32> to vector<4x4x32xf32>
    %14 = vector.extract_strided_slice %7 {offsets = [0, 0, 0], sizes = [4, 4, 32], strides = [1, 1, 1]} : vector<4x5x32xf32> to vector<4x4x32xf32>
    %15 = vector.extract_strided_slice %7 {offsets = [0, 1, 0], sizes = [4, 4, 32], strides = [1, 1, 1]} : vector<4x5x32xf32> to vector<4x4x32xf32>
    %16 = vector.extract_strided_slice %11 {offsets = [0, 0, 0], sizes = [4, 4, 32], strides = [1, 1, 1]} : vector<4x5x32xf32> to vector<4x4x32xf32>
    %17 = vector.extract_strided_slice %11 {offsets = [0, 1, 0], sizes = [4, 4, 32], strides = [1, 1, 1]} : vector<4x5x32xf32> to vector<4x4x32xf32>
    %18 = tpu.concatenate %12, %13, %14, %15, %16, %17 in 2 : vector<4x4x32xf32>, vector<4x4x32xf32>, vector<4x4x32xf32>, vector<4x4x32xf32>, vector<4x4x32xf32>, vector<4x4x32xf32> -> vector<4x4x192xf32>
    %19 = vector.shape_cast %18 : vector<4x4x192xf32> to vector<16x192xf32>
    %c0_8 = arith.constant 0 : index
    %c0_9 = arith.constant 0 : index
    %20 = vector.load %arg4[%c0_8, %c0_9] : memref<192x32xf32, #tpu.memory_space<vmem>>, vector<192x32xf32>
    %cst = arith.constant dense<0.000000e+00> : vector<16x32xf32>
    %21 = tpu.matmul %19, %20, %cst {dimension_numbers = #tpu.dot_dimension_numbers<[1], [0], [0], [1], [0, 0, 1, 1], [], []>} : vector<16x192xf32>, vector<192x32xf32>, vector<16x32xf32> -> vector<16x32xf32>
    %c0_10 = arith.constant 0 : index
    %c0_11 = arith.constant 0 : index
    %22 = vector.load %arg5[%c0_10, %c0_11] : memref<1x32xf32, #tpu.memory_space<vmem>>, vector<1x32xf32>
    %23 = vector.broadcast %22 : vector<1x32xf32> to vector<16x32xf32>
    %24 = arith.addf %21, %23 : vector<16x32xf32>
    %cst_12 = arith.constant 0.000000e+00 : f32
    %25 = vector.broadcast %cst_12 : f32 to vector<16x32xf32>
    %26 = arith.maximumf %24, %25 : vector<16x32xf32>
    %27 = vector.shape_cast %26 : vector<16x32xf32> to vector<1x4x4x32xf32>
    %c0_13 = arith.constant 0 : index
    %c0_14 = arith.constant 0 : index
    %c0_15 = arith.constant 0 : index
    %c0_16 = arith.constant 0 : index
    %28 = vector.load %arg6[%c0_13, %c0_14, %c0_15, %c0_16] : memref<1x4x4x32xf32, #tpu.memory_space<vmem>>, vector<1x4x4x32xf32>
    tpu.vector_store %arg6[%c0_13, %c0_14, %c0_15, %c0_16], %27 {strides = array<i32>} : memref<1x4x4x32xf32, #tpu.memory_space<vmem>>, vector<1x4x4x32xf32>,
    return
  }
  func.func @transform_0(%arg0: i32, %arg1: i32) -> (i32, i32, i32, i32) {
    %c0_i32 = arith.constant 0 : i32
    %c0_i32_0 = arith.constant 0 : i32
    %c0_i32_1 = arith.constant 0 : i32
    %c0_i32_2 = arith.constant 0 : i32
    return %arg0, %c0_i32, %c0_i32_0, %c0_i32_1 : i32, i32, i32, i32
  }
  func.func @transform_1(%arg0: i32, %arg1: i32) -> (i32, i32, i32, i32) {
    %c0_i32 = arith.constant 0 : i32
    %c0_i32_0 = arith.constant 0 : i32
    %c0_i32_1 = arith.constant 0 : i32
    %c0_i32_2 = arith.constant 0 : i32
    return %arg0, %c0_i32, %c0_i32_0, %c0_i32_1 : i32, i32, i32, i32
  }
  func.func @transform_2(%arg0: i32, %arg1: i32) -> (i32, i32) {
    %c0_i32 = arith.constant 0 : i32
    %c0_i32_0 = arith.constant 0 : i32
    %c0_i32_1 = arith.constant 0 : i32
    return %c0_i32, %c0_i32_0 : i32, i32
  }
  func.func @transform_3(%arg0: i32, %arg1: i32) -> (i32, i32) {
    %c0_i32 = arith.constant 0 : i32
    %c0_i32_0 = arith.constant 0 : i32
    %c0_i32_1 = arith.constant 0 : i32
    return %c0_i32, %c0_i32_0 : i32, i32
  }
  func.func @transform_4(%arg0: i32, %arg1: i32) -> (i32, i32, i32, i32) {
    %c0_i32 = arith.constant 0 : i32
    %c0_i32_0 = arith.constant 0 : i32
    %c0_i32_1 = arith.constant 0 : i32
    return %arg0, %arg1, %c0_i32, %c0_i32_0 : i32, i32, i32, i32
  }
}

module attributes {stable_mosaic.version = 11 : i64} {
  func.func @_conv1x1_kernel(%arg0: i32, %arg1: i32, %arg2: memref<1x4x4x32xf32, #tpu.memory_space<vmem>>, %arg3: memref<32x16xf32, #tpu.memory_space<vmem>>, %arg4: memref<1x16xf32, #tpu.memory_space<vmem>>, %arg5: memref<1x4x4x16xf32, #tpu.memory_space<vmem>>) attributes {dimension_semantics = [#tpu.dimension_semantics<parallel>, #tpu.dimension_semantics<parallel>], iteration_bounds = array<i64: 2, 1>, scalar_prefetch = 0 : i64, scratch_operands = 0 : i64, tpu.core_type = #tpu.core_type<tc>, window_params = [{transform_indices = @transform_0, window_bounds = array<i64: 1, 4, 4, 32>}, {pipeline_mode = #tpu.pipeline_mode<synchronous>, transform_indices = @transform_1, window_bounds = array<i64: 32, 16>}, {pipeline_mode = #tpu.pipeline_mode<synchronous>, transform_indices = @transform_2, window_bounds = array<i64: 1, 16>}, {transform_indices = @transform_3, window_bounds = array<i64: 1, 4, 4, 16>}]} {
    %c0 = arith.constant 0 : index
    %c0_0 = arith.constant 0 : index
    %c0_1 = arith.constant 0 : index
    %c0_2 = arith.constant 0 : index
    %0 = vector.load %arg2[%c0, %c0_0, %c0_1, %c0_2] : memref<1x4x4x32xf32, #tpu.memory_space<vmem>>, vector<1x4x4x32xf32>
    %1 = vector.shape_cast %0 : vector<1x4x4x32xf32> to vector<16x32xf32>
    %c0_3 = arith.constant 0 : index
    %c0_4 = arith.constant 0 : index
    %2 = vector.load %arg3[%c0_3, %c0_4] : memref<32x16xf32, #tpu.memory_space<vmem>>, vector<32x16xf32>
    %cst = arith.constant dense<0.000000e+00> : vector<16x16xf32>
    %3 = tpu.matmul %1, %2, %cst {dimension_numbers = #tpu.dot_dimension_numbers<[1], [0], [0], [1], [0, 0, 1, 1], [], []>} : vector<16x32xf32>, vector<32x16xf32>, vector<16x16xf32> -> vector<16x16xf32>
    %c0_5 = arith.constant 0 : index
    %c0_6 = arith.constant 0 : index
    %4 = vector.load %arg4[%c0_5, %c0_6] : memref<1x16xf32, #tpu.memory_space<vmem>>, vector<1x16xf32>
    %5 = vector.broadcast %4 : vector<1x16xf32> to vector<16x16xf32>
    %6 = arith.addf %3, %5 : vector<16x16xf32>
    %7 = vector.shape_cast %6 : vector<16x16xf32> to vector<1x4x4x16xf32>
    %c0_7 = arith.constant 0 : index
    %c0_8 = arith.constant 0 : index
    %c0_9 = arith.constant 0 : index
    %c0_10 = arith.constant 0 : index
    %8 = vector.load %arg5[%c0_7, %c0_8, %c0_9, %c0_10] : memref<1x4x4x16xf32, #tpu.memory_space<vmem>>, vector<1x4x4x16xf32>
    tpu.vector_store %arg5[%c0_7, %c0_8, %c0_9, %c0_10], %7 {strides = array<i32>} : memref<1x4x4x16xf32, #tpu.memory_space<vmem>>, vector<1x4x4x16xf32>,
    return
  }
  func.func @transform_0(%arg0: i32, %arg1: i32) -> (i32, i32, i32, i32) {
    %c0_i32 = arith.constant 0 : i32
    %c0_i32_0 = arith.constant 0 : i32
    %c0_i32_1 = arith.constant 0 : i32
    return %arg0, %arg1, %c0_i32, %c0_i32_0 : i32, i32, i32, i32
  }
  func.func @transform_1(%arg0: i32, %arg1: i32) -> (i32, i32) {
    %c0_i32 = arith.constant 0 : i32
    %c0_i32_0 = arith.constant 0 : i32
    %c0_i32_1 = arith.constant 0 : i32
    return %c0_i32, %c0_i32_0 : i32, i32
  }
  func.func @transform_2(%arg0: i32, %arg1: i32) -> (i32, i32) {
    %c0_i32 = arith.constant 0 : i32
    %c0_i32_0 = arith.constant 0 : i32
    %c0_i32_1 = arith.constant 0 : i32
    return %c0_i32, %c0_i32_0 : i32, i32
  }
  func.func @transform_3(%arg0: i32, %arg1: i32) -> (i32, i32, i32, i32) {
    %c0_i32 = arith.constant 0 : i32
    %c0_i32_0 = arith.constant 0 : i32
    %c0_i32_1 = arith.constant 0 : i32
    return %arg0, %arg1, %c0_i32, %c0_i32_0 : i32, i32, i32, i32
  }
}

module attributes {stable_mosaic.version = 11 : i64} {
  func.func @_lateral_topdown_kernel(%arg0: i32, %arg1: i32, %arg2: memref<1x8x8x16xf32, #tpu.memory_space<vmem>>, %arg3: memref<1x4x4x16xf32, #tpu.memory_space<vmem>>, %arg4: memref<16x16xf32, #tpu.memory_space<vmem>>, %arg5: memref<1x16xf32, #tpu.memory_space<vmem>>, %arg6: memref<1x8x8x16xf32, #tpu.memory_space<vmem>>) attributes {dimension_semantics = [#tpu.dimension_semantics<parallel>, #tpu.dimension_semantics<parallel>], iteration_bounds = array<i64: 2, 1>, scalar_prefetch = 0 : i64, scratch_operands = 0 : i64, tpu.core_type = #tpu.core_type<tc>, window_params = [{transform_indices = @transform_0, window_bounds = array<i64: 1, 8, 8, 16>}, {transform_indices = @transform_1, window_bounds = array<i64: 1, 4, 4, 16>}, {pipeline_mode = #tpu.pipeline_mode<synchronous>, transform_indices = @transform_2, window_bounds = array<i64: 16, 16>}, {pipeline_mode = #tpu.pipeline_mode<synchronous>, transform_indices = @transform_3, window_bounds = array<i64: 1, 16>}, {transform_indices = @transform_4, window_bounds = array<i64: 1, 8, 8, 16>}]} {
    %c0 = arith.constant 0 : index
    %c0_0 = arith.constant 0 : index
    %c0_1 = arith.constant 0 : index
    %c0_2 = arith.constant 0 : index
    %0 = vector.load %arg2[%c0, %c0_0, %c0_1, %c0_2] : memref<1x8x8x16xf32, #tpu.memory_space<vmem>>, vector<1x8x8x16xf32>
    %1 = vector.shape_cast %0 : vector<1x8x8x16xf32> to vector<64x16xf32>
    %c0_3 = arith.constant 0 : index
    %c0_4 = arith.constant 0 : index
    %2 = vector.load %arg4[%c0_3, %c0_4] : memref<16x16xf32, #tpu.memory_space<vmem>>, vector<16x16xf32>
    %cst = arith.constant dense<0.000000e+00> : vector<64x16xf32>
    %3 = tpu.matmul %1, %2, %cst {dimension_numbers = #tpu.dot_dimension_numbers<[1], [0], [0], [1], [0, 0, 1, 1], [], []>} : vector<64x16xf32>, vector<16x16xf32>, vector<64x16xf32> -> vector<64x16xf32>
    %c0_5 = arith.constant 0 : index
    %c0_6 = arith.constant 0 : index
    %4 = vector.load %arg5[%c0_5, %c0_6] : memref<1x16xf32, #tpu.memory_space<vmem>>, vector<1x16xf32>
    %5 = vector.broadcast %4 : vector<1x16xf32> to vector<64x16xf32>
    %6 = arith.addf %3, %5 : vector<64x16xf32>
    %7 = vector.shape_cast %6 : vector<64x16xf32> to vector<4x2x4x2x16xf32>
    %c0_7 = arith.constant 0 : index
    %c0_8 = arith.constant 0 : index
    %c0_9 = arith.constant 0 : index
    %c0_10 = arith.constant 0 : index
    %8 = vector.load %arg3[%c0_7, %c0_8, %c0_9, %c0_10] : memref<1x4x4x16xf32, #tpu.memory_space<vmem>>, vector<1x4x4x16xf32>
    %9 = vector.shape_cast %8 : vector<1x4x4x16xf32> to vector<4x1x4x1x16xf32>
    %10 = vector.broadcast %9 : vector<4x1x4x1x16xf32> to vector<4x2x4x2x16xf32>
    %11 = arith.addf %7, %10 : vector<4x2x4x2x16xf32>
    %12 = vector.shape_cast %11 : vector<4x2x4x2x16xf32> to vector<1x8x8x16xf32>
    %c0_11 = arith.constant 0 : index
    %c0_12 = arith.constant 0 : index
    %c0_13 = arith.constant 0 : index
    %c0_14 = arith.constant 0 : index
    %13 = vector.load %arg6[%c0_11, %c0_12, %c0_13, %c0_14] : memref<1x8x8x16xf32, #tpu.memory_space<vmem>>, vector<1x8x8x16xf32>
    tpu.vector_store %arg6[%c0_11, %c0_12, %c0_13, %c0_14], %12 {strides = array<i32>} : memref<1x8x8x16xf32, #tpu.memory_space<vmem>>, vector<1x8x8x16xf32>,
    return
  }
  func.func @transform_0(%arg0: i32, %arg1: i32) -> (i32, i32, i32, i32) {
    %c0_i32 = arith.constant 0 : i32
    %c0_i32_0 = arith.constant 0 : i32
    %c0_i32_1 = arith.constant 0 : i32
    return %arg0, %arg1, %c0_i32, %c0_i32_0 : i32, i32, i32, i32
  }
  func.func @transform_1(%arg0: i32, %arg1: i32) -> (i32, i32, i32, i32) {
    %c0_i32 = arith.constant 0 : i32
    %c0_i32_0 = arith.constant 0 : i32
    %c0_i32_1 = arith.constant 0 : i32
    return %arg0, %arg1, %c0_i32, %c0_i32_0 : i32, i32, i32, i32
  }
  func.func @transform_2(%arg0: i32, %arg1: i32) -> (i32, i32) {
    %c0_i32 = arith.constant 0 : i32
    %c0_i32_0 = arith.constant 0 : i32
    %c0_i32_1 = arith.constant 0 : i32
    return %c0_i32, %c0_i32_0 : i32, i32
  }
  func.func @transform_3(%arg0: i32, %arg1: i32) -> (i32, i32) {
    %c0_i32 = arith.constant 0 : i32
    %c0_i32_0 = arith.constant 0 : i32
    %c0_i32_1 = arith.constant 0 : i32
    return %c0_i32, %c0_i32_0 : i32, i32
  }
  func.func @transform_4(%arg0: i32, %arg1: i32) -> (i32, i32, i32, i32) {
    %c0_i32 = arith.constant 0 : i32
    %c0_i32_0 = arith.constant 0 : i32
    %c0_i32_1 = arith.constant 0 : i32
    return %arg0, %arg1, %c0_i32, %c0_i32_0 : i32, i32, i32, i32
  }
}

module attributes {stable_mosaic.version = 11 : i64} {
  func.func @_lateral_topdown_kernel(%arg0: i32, %arg1: i32, %arg2: memref<1x16x16x8xf32, #tpu.memory_space<vmem>>, %arg3: memref<1x8x8x16xf32, #tpu.memory_space<vmem>>, %arg4: memref<8x16xf32, #tpu.memory_space<vmem>>, %arg5: memref<1x16xf32, #tpu.memory_space<vmem>>, %arg6: memref<1x16x16x16xf32, #tpu.memory_space<vmem>>) attributes {dimension_semantics = [#tpu.dimension_semantics<parallel>, #tpu.dimension_semantics<parallel>], iteration_bounds = array<i64: 2, 1>, scalar_prefetch = 0 : i64, scratch_operands = 0 : i64, tpu.core_type = #tpu.core_type<tc>, window_params = [{transform_indices = @transform_0, window_bounds = array<i64: 1, 16, 16, 8>}, {transform_indices = @transform_1, window_bounds = array<i64: 1, 8, 8, 16>}, {pipeline_mode = #tpu.pipeline_mode<synchronous>, transform_indices = @transform_2, window_bounds = array<i64: 8, 16>}, {pipeline_mode = #tpu.pipeline_mode<synchronous>, transform_indices = @transform_3, window_bounds = array<i64: 1, 16>}, {transform_indices = @transform_4, window_bounds = array<i64: 1, 16, 16, 16>}]} {
    %c0 = arith.constant 0 : index
    %c0_0 = arith.constant 0 : index
    %c0_1 = arith.constant 0 : index
    %c0_2 = arith.constant 0 : index
    %0 = vector.load %arg2[%c0, %c0_0, %c0_1, %c0_2] : memref<1x16x16x8xf32, #tpu.memory_space<vmem>>, vector<1x16x16x8xf32>
    %1 = vector.shape_cast %0 : vector<1x16x16x8xf32> to vector<256x8xf32>
    %c0_3 = arith.constant 0 : index
    %c0_4 = arith.constant 0 : index
    %2 = vector.load %arg4[%c0_3, %c0_4] : memref<8x16xf32, #tpu.memory_space<vmem>>, vector<8x16xf32>
    %cst = arith.constant dense<0.000000e+00> : vector<256x16xf32>
    %3 = tpu.matmul %1, %2, %cst {dimension_numbers = #tpu.dot_dimension_numbers<[1], [0], [0], [1], [0, 0, 1, 1], [], []>} : vector<256x8xf32>, vector<8x16xf32>, vector<256x16xf32> -> vector<256x16xf32>
    %c0_5 = arith.constant 0 : index
    %c0_6 = arith.constant 0 : index
    %4 = vector.load %arg5[%c0_5, %c0_6] : memref<1x16xf32, #tpu.memory_space<vmem>>, vector<1x16xf32>
    %5 = vector.broadcast %4 : vector<1x16xf32> to vector<256x16xf32>
    %6 = arith.addf %3, %5 : vector<256x16xf32>
    %7 = vector.shape_cast %6 : vector<256x16xf32> to vector<8x2x8x2x16xf32>
    %c0_7 = arith.constant 0 : index
    %c0_8 = arith.constant 0 : index
    %c0_9 = arith.constant 0 : index
    %c0_10 = arith.constant 0 : index
    %8 = vector.load %arg3[%c0_7, %c0_8, %c0_9, %c0_10] : memref<1x8x8x16xf32, #tpu.memory_space<vmem>>, vector<1x8x8x16xf32>
    %9 = vector.shape_cast %8 : vector<1x8x8x16xf32> to vector<8x1x8x1x16xf32>
    %10 = vector.broadcast %9 : vector<8x1x8x1x16xf32> to vector<8x2x8x2x16xf32>
    %11 = arith.addf %7, %10 : vector<8x2x8x2x16xf32>
    %12 = vector.shape_cast %11 : vector<8x2x8x2x16xf32> to vector<1x16x16x16xf32>
    %c0_11 = arith.constant 0 : index
    %c0_12 = arith.constant 0 : index
    %c0_13 = arith.constant 0 : index
    %c0_14 = arith.constant 0 : index
    %13 = vector.load %arg6[%c0_11, %c0_12, %c0_13, %c0_14] : memref<1x16x16x16xf32, #tpu.memory_space<vmem>>, vector<1x16x16x16xf32>
    tpu.vector_store %arg6[%c0_11, %c0_12, %c0_13, %c0_14], %12 {strides = array<i32>} : memref<1x16x16x16xf32, #tpu.memory_space<vmem>>, vector<1x16x16x16xf32>,
    return
  }
  func.func @transform_0(%arg0: i32, %arg1: i32) -> (i32, i32, i32, i32) {
    %c0_i32 = arith.constant 0 : i32
    %c0_i32_0 = arith.constant 0 : i32
    %c0_i32_1 = arith.constant 0 : i32
    return %arg0, %arg1, %c0_i32, %c0_i32_0 : i32, i32, i32, i32
  }
  func.func @transform_1(%arg0: i32, %arg1: i32) -> (i32, i32, i32, i32) {
    %c0_i32 = arith.constant 0 : i32
    %c0_i32_0 = arith.constant 0 : i32
    %c0_i32_1 = arith.constant 0 : i32
    return %arg0, %arg1, %c0_i32, %c0_i32_0 : i32, i32, i32, i32
  }
  func.func @transform_2(%arg0: i32, %arg1: i32) -> (i32, i32) {
    %c0_i32 = arith.constant 0 : i32
    %c0_i32_0 = arith.constant 0 : i32
    %c0_i32_1 = arith.constant 0 : i32
    return %c0_i32, %c0_i32_0 : i32, i32
  }
  func.func @transform_3(%arg0: i32, %arg1: i32) -> (i32, i32) {
    %c0_i32 = arith.constant 0 : i32
    %c0_i32_0 = arith.constant 0 : i32
    %c0_i32_1 = arith.constant 0 : i32
    return %c0_i32, %c0_i32_0 : i32, i32
  }
  func.func @transform_4(%arg0: i32, %arg1: i32) -> (i32, i32, i32, i32) {
    %c0_i32 = arith.constant 0 : i32
    %c0_i32_0 = arith.constant 0 : i32
    %c0_i32_1 = arith.constant 0 : i32
    return %arg0, %arg1, %c0_i32, %c0_i32_0 : i32, i32, i32, i32
  }
}

module attributes {stable_mosaic.version = 11 : i64} {
  func.func @_conv3x3s1_kernel(%arg0: i32, %arg1: i32, %arg2: memref<1x18x18x16xf32, #tpu.memory_space<vmem>>, %arg3: memref<144x16xf32, #tpu.memory_space<vmem>>, %arg4: memref<1x16xf32, #tpu.memory_space<vmem>>, %arg5: memref<1x16x16x16xf32, #tpu.memory_space<vmem>>) attributes {dimension_semantics = [#tpu.dimension_semantics<parallel>, #tpu.dimension_semantics<arbitrary>], iteration_bounds = array<i64: 2, 1>, scalar_prefetch = 0 : i64, scratch_operands = 0 : i64, tpu.core_type = #tpu.core_type<tc>, window_params = [{transform_indices = @transform_0, window_bounds = array<i64: 1, 18, 18, 16>}, {pipeline_mode = #tpu.pipeline_mode<synchronous>, transform_indices = @transform_1, window_bounds = array<i64: 144, 16>}, {pipeline_mode = #tpu.pipeline_mode<synchronous>, transform_indices = @transform_2, window_bounds = array<i64: 1, 16>}, {transform_indices = @transform_3, window_bounds = array<i64: 1, 16, 16, 16>}]} {
    %c16_i32 = arith.constant 16 : i32
    %0 = arith.muli %arg1, %c16_i32 : i32
    %1 = tpu.assume_multiple %0, 16 : i32
    %c0_i32 = arith.constant 0 : i32
    %2 = arith.addi %1, %c0_i32 : i32
    %c0 = arith.constant 0 : index
    %3 = arith.index_cast %2 : i32 to index
    %c0_0 = arith.constant 0 : index
    %c0_1 = arith.constant 0 : index
    %4 = vector.load %arg2[%c0, %3, %c0_0, %c0_1] : memref<1x18x18x16xf32, #tpu.memory_space<vmem>>, vector<1x16x18x16xf32>
    %5 = vector.shape_cast %4 : vector<1x16x18x16xf32> to vector<16x18x16xf32>
    %6 = vector.extract_strided_slice %5 {offsets = [0, 0, 0], sizes = [16, 16, 16], strides = [1, 1, 1]} : vector<16x18x16xf32> to vector<16x16x16xf32>
    %7 = vector.extract_strided_slice %5 {offsets = [0, 1, 0], sizes = [16, 16, 16], strides = [1, 1, 1]} : vector<16x18x16xf32> to vector<16x16x16xf32>
    %8 = vector.extract_strided_slice %5 {offsets = [0, 2, 0], sizes = [16, 16, 16], strides = [1, 1, 1]} : vector<16x18x16xf32> to vector<16x16x16xf32>
    %c1_i32 = arith.constant 1 : i32
    %9 = arith.addi %1, %c1_i32 : i32
    %c0_2 = arith.constant 0 : index
    %10 = arith.index_cast %9 : i32 to index
    %c0_3 = arith.constant 0 : index
    %c0_4 = arith.constant 0 : index
    %11 = vector.load %arg2[%c0_2, %10, %c0_3, %c0_4] : memref<1x18x18x16xf32, #tpu.memory_space<vmem>>, vector<1x16x18x16xf32>
    %12 = vector.shape_cast %11 : vector<1x16x18x16xf32> to vector<16x18x16xf32>
    %13 = vector.extract_strided_slice %12 {offsets = [0, 0, 0], sizes = [16, 16, 16], strides = [1, 1, 1]} : vector<16x18x16xf32> to vector<16x16x16xf32>
    %14 = vector.extract_strided_slice %12 {offsets = [0, 1, 0], sizes = [16, 16, 16], strides = [1, 1, 1]} : vector<16x18x16xf32> to vector<16x16x16xf32>
    %15 = vector.extract_strided_slice %12 {offsets = [0, 2, 0], sizes = [16, 16, 16], strides = [1, 1, 1]} : vector<16x18x16xf32> to vector<16x16x16xf32>
    %c2_i32 = arith.constant 2 : i32
    %16 = arith.addi %1, %c2_i32 : i32
    %c0_5 = arith.constant 0 : index
    %17 = arith.index_cast %16 : i32 to index
    %c0_6 = arith.constant 0 : index
    %c0_7 = arith.constant 0 : index
    %18 = vector.load %arg2[%c0_5, %17, %c0_6, %c0_7] : memref<1x18x18x16xf32, #tpu.memory_space<vmem>>, vector<1x16x18x16xf32>
    %19 = vector.shape_cast %18 : vector<1x16x18x16xf32> to vector<16x18x16xf32>
    %20 = vector.extract_strided_slice %19 {offsets = [0, 0, 0], sizes = [16, 16, 16], strides = [1, 1, 1]} : vector<16x18x16xf32> to vector<16x16x16xf32>
    %21 = vector.extract_strided_slice %19 {offsets = [0, 1, 0], sizes = [16, 16, 16], strides = [1, 1, 1]} : vector<16x18x16xf32> to vector<16x16x16xf32>
    %22 = vector.extract_strided_slice %19 {offsets = [0, 2, 0], sizes = [16, 16, 16], strides = [1, 1, 1]} : vector<16x18x16xf32> to vector<16x16x16xf32>
    %23 = tpu.concatenate %6, %7, %8, %13, %14, %15, %20, %21, %22 in 2 : vector<16x16x16xf32>, vector<16x16x16xf32>, vector<16x16x16xf32>, vector<16x16x16xf32>, vector<16x16x16xf32>, vector<16x16x16xf32>, vector<16x16x16xf32>, vector<16x16x16xf32>, vector<16x16x16xf32> -> vector<16x16x144xf32>
    %24 = vector.shape_cast %23 : vector<16x16x144xf32> to vector<256x144xf32>
    %c0_8 = arith.constant 0 : index
    %c0_9 = arith.constant 0 : index
    %25 = vector.load %arg3[%c0_8, %c0_9] : memref<144x16xf32, #tpu.memory_space<vmem>>, vector<144x16xf32>
    %cst = arith.constant dense<0.000000e+00> : vector<256x16xf32>
    %26 = tpu.matmul %24, %25, %cst {dimension_numbers = #tpu.dot_dimension_numbers<[1], [0], [0], [1], [0, 0, 1, 1], [], []>} : vector<256x144xf32>, vector<144x16xf32>, vector<256x16xf32> -> vector<256x16xf32>
    %c0_10 = arith.constant 0 : index
    %c0_11 = arith.constant 0 : index
    %27 = vector.load %arg4[%c0_10, %c0_11] : memref<1x16xf32, #tpu.memory_space<vmem>>, vector<1x16xf32>
    %28 = vector.broadcast %27 : vector<1x16xf32> to vector<256x16xf32>
    %29 = arith.addf %26, %28 : vector<256x16xf32>
    %30 = vector.shape_cast %29 : vector<256x16xf32> to vector<1x16x16x16xf32>
    %c0_12 = arith.constant 0 : index
    %c0_13 = arith.constant 0 : index
    %c0_14 = arith.constant 0 : index
    %c0_15 = arith.constant 0 : index
    %31 = vector.load %arg5[%c0_12, %c0_13, %c0_14, %c0_15] : memref<1x16x16x16xf32, #tpu.memory_space<vmem>>, vector<1x16x16x16xf32>
    tpu.vector_store %arg5[%c0_12, %c0_13, %c0_14, %c0_15], %30 {strides = array<i32>} : memref<1x16x16x16xf32, #tpu.memory_space<vmem>>, vector<1x16x16x16xf32>,
    return
  }
  func.func @transform_0(%arg0: i32, %arg1: i32) -> (i32, i32, i32, i32) {
    %c0_i32 = arith.constant 0 : i32
    %c0_i32_0 = arith.constant 0 : i32
    %c0_i32_1 = arith.constant 0 : i32
    %c0_i32_2 = arith.constant 0 : i32
    return %arg0, %c0_i32, %c0_i32_0, %c0_i32_1 : i32, i32, i32, i32
  }
  func.func @transform_1(%arg0: i32, %arg1: i32) -> (i32, i32) {
    %c0_i32 = arith.constant 0 : i32
    %c0_i32_0 = arith.constant 0 : i32
    %c0_i32_1 = arith.constant 0 : i32
    return %c0_i32, %c0_i32_0 : i32, i32
  }
  func.func @transform_2(%arg0: i32, %arg1: i32) -> (i32, i32) {
    %c0_i32 = arith.constant 0 : i32
    %c0_i32_0 = arith.constant 0 : i32
    %c0_i32_1 = arith.constant 0 : i32
    return %c0_i32, %c0_i32_0 : i32, i32
  }
  func.func @transform_3(%arg0: i32, %arg1: i32) -> (i32, i32, i32, i32) {
    %c0_i32 = arith.constant 0 : i32
    %c0_i32_0 = arith.constant 0 : i32
    %c0_i32_1 = arith.constant 0 : i32
    return %arg0, %arg1, %c0_i32, %c0_i32_0 : i32, i32, i32, i32
  }
}

module attributes {stable_mosaic.version = 11 : i64} {
  func.func @_conv3x3s1_kernel(%arg0: i32, %arg1: i32, %arg2: memref<1x10x10x16xf32, #tpu.memory_space<vmem>>, %arg3: memref<144x16xf32, #tpu.memory_space<vmem>>, %arg4: memref<1x16xf32, #tpu.memory_space<vmem>>, %arg5: memref<1x8x8x16xf32, #tpu.memory_space<vmem>>) attributes {dimension_semantics = [#tpu.dimension_semantics<parallel>, #tpu.dimension_semantics<arbitrary>], iteration_bounds = array<i64: 2, 1>, scalar_prefetch = 0 : i64, scratch_operands = 0 : i64, tpu.core_type = #tpu.core_type<tc>, window_params = [{transform_indices = @transform_0, window_bounds = array<i64: 1, 10, 10, 16>}, {pipeline_mode = #tpu.pipeline_mode<synchronous>, transform_indices = @transform_1, window_bounds = array<i64: 144, 16>}, {pipeline_mode = #tpu.pipeline_mode<synchronous>, transform_indices = @transform_2, window_bounds = array<i64: 1, 16>}, {transform_indices = @transform_3, window_bounds = array<i64: 1, 8, 8, 16>}]} {
    %c8_i32 = arith.constant 8 : i32
    %0 = arith.muli %arg1, %c8_i32 : i32
    %1 = tpu.assume_multiple %0, 8 : i32
    %c0_i32 = arith.constant 0 : i32
    %2 = arith.addi %1, %c0_i32 : i32
    %c0 = arith.constant 0 : index
    %3 = arith.index_cast %2 : i32 to index
    %c0_0 = arith.constant 0 : index
    %c0_1 = arith.constant 0 : index
    %4 = vector.load %arg2[%c0, %3, %c0_0, %c0_1] : memref<1x10x10x16xf32, #tpu.memory_space<vmem>>, vector<1x8x10x16xf32>
    %5 = vector.shape_cast %4 : vector<1x8x10x16xf32> to vector<8x10x16xf32>
    %6 = vector.extract_strided_slice %5 {offsets = [0, 0, 0], sizes = [8, 8, 16], strides = [1, 1, 1]} : vector<8x10x16xf32> to vector<8x8x16xf32>
    %7 = vector.extract_strided_slice %5 {offsets = [0, 1, 0], sizes = [8, 8, 16], strides = [1, 1, 1]} : vector<8x10x16xf32> to vector<8x8x16xf32>
    %8 = vector.extract_strided_slice %5 {offsets = [0, 2, 0], sizes = [8, 8, 16], strides = [1, 1, 1]} : vector<8x10x16xf32> to vector<8x8x16xf32>
    %c1_i32 = arith.constant 1 : i32
    %9 = arith.addi %1, %c1_i32 : i32
    %c0_2 = arith.constant 0 : index
    %10 = arith.index_cast %9 : i32 to index
    %c0_3 = arith.constant 0 : index
    %c0_4 = arith.constant 0 : index
    %11 = vector.load %arg2[%c0_2, %10, %c0_3, %c0_4] : memref<1x10x10x16xf32, #tpu.memory_space<vmem>>, vector<1x8x10x16xf32>
    %12 = vector.shape_cast %11 : vector<1x8x10x16xf32> to vector<8x10x16xf32>
    %13 = vector.extract_strided_slice %12 {offsets = [0, 0, 0], sizes = [8, 8, 16], strides = [1, 1, 1]} : vector<8x10x16xf32> to vector<8x8x16xf32>
    %14 = vector.extract_strided_slice %12 {offsets = [0, 1, 0], sizes = [8, 8, 16], strides = [1, 1, 1]} : vector<8x10x16xf32> to vector<8x8x16xf32>
    %15 = vector.extract_strided_slice %12 {offsets = [0, 2, 0], sizes = [8, 8, 16], strides = [1, 1, 1]} : vector<8x10x16xf32> to vector<8x8x16xf32>
    %c2_i32 = arith.constant 2 : i32
    %16 = arith.addi %1, %c2_i32 : i32
    %c0_5 = arith.constant 0 : index
    %17 = arith.index_cast %16 : i32 to index
    %c0_6 = arith.constant 0 : index
    %c0_7 = arith.constant 0 : index
    %18 = vector.load %arg2[%c0_5, %17, %c0_6, %c0_7] : memref<1x10x10x16xf32, #tpu.memory_space<vmem>>, vector<1x8x10x16xf32>
    %19 = vector.shape_cast %18 : vector<1x8x10x16xf32> to vector<8x10x16xf32>
    %20 = vector.extract_strided_slice %19 {offsets = [0, 0, 0], sizes = [8, 8, 16], strides = [1, 1, 1]} : vector<8x10x16xf32> to vector<8x8x16xf32>
    %21 = vector.extract_strided_slice %19 {offsets = [0, 1, 0], sizes = [8, 8, 16], strides = [1, 1, 1]} : vector<8x10x16xf32> to vector<8x8x16xf32>
    %22 = vector.extract_strided_slice %19 {offsets = [0, 2, 0], sizes = [8, 8, 16], strides = [1, 1, 1]} : vector<8x10x16xf32> to vector<8x8x16xf32>
    %23 = tpu.concatenate %6, %7, %8, %13, %14, %15, %20, %21, %22 in 2 : vector<8x8x16xf32>, vector<8x8x16xf32>, vector<8x8x16xf32>, vector<8x8x16xf32>, vector<8x8x16xf32>, vector<8x8x16xf32>, vector<8x8x16xf32>, vector<8x8x16xf32>, vector<8x8x16xf32> -> vector<8x8x144xf32>
    %24 = vector.shape_cast %23 : vector<8x8x144xf32> to vector<64x144xf32>
    %c0_8 = arith.constant 0 : index
    %c0_9 = arith.constant 0 : index
    %25 = vector.load %arg3[%c0_8, %c0_9] : memref<144x16xf32, #tpu.memory_space<vmem>>, vector<144x16xf32>
    %cst = arith.constant dense<0.000000e+00> : vector<64x16xf32>
    %26 = tpu.matmul %24, %25, %cst {dimension_numbers = #tpu.dot_dimension_numbers<[1], [0], [0], [1], [0, 0, 1, 1], [], []>} : vector<64x144xf32>, vector<144x16xf32>, vector<64x16xf32> -> vector<64x16xf32>
    %c0_10 = arith.constant 0 : index
    %c0_11 = arith.constant 0 : index
    %27 = vector.load %arg4[%c0_10, %c0_11] : memref<1x16xf32, #tpu.memory_space<vmem>>, vector<1x16xf32>
    %28 = vector.broadcast %27 : vector<1x16xf32> to vector<64x16xf32>
    %29 = arith.addf %26, %28 : vector<64x16xf32>
    %30 = vector.shape_cast %29 : vector<64x16xf32> to vector<1x8x8x16xf32>
    %c0_12 = arith.constant 0 : index
    %c0_13 = arith.constant 0 : index
    %c0_14 = arith.constant 0 : index
    %c0_15 = arith.constant 0 : index
    %31 = vector.load %arg5[%c0_12, %c0_13, %c0_14, %c0_15] : memref<1x8x8x16xf32, #tpu.memory_space<vmem>>, vector<1x8x8x16xf32>
    tpu.vector_store %arg5[%c0_12, %c0_13, %c0_14, %c0_15], %30 {strides = array<i32>} : memref<1x8x8x16xf32, #tpu.memory_space<vmem>>, vector<1x8x8x16xf32>,
    return
  }
  func.func @transform_0(%arg0: i32, %arg1: i32) -> (i32, i32, i32, i32) {
    %c0_i32 = arith.constant 0 : i32
    %c0_i32_0 = arith.constant 0 : i32
    %c0_i32_1 = arith.constant 0 : i32
    %c0_i32_2 = arith.constant 0 : i32
    return %arg0, %c0_i32, %c0_i32_0, %c0_i32_1 : i32, i32, i32, i32
  }
  func.func @transform_1(%arg0: i32, %arg1: i32) -> (i32, i32) {
    %c0_i32 = arith.constant 0 : i32
    %c0_i32_0 = arith.constant 0 : i32
    %c0_i32_1 = arith.constant 0 : i32
    return %c0_i32, %c0_i32_0 : i32, i32
  }
  func.func @transform_2(%arg0: i32, %arg1: i32) -> (i32, i32) {
    %c0_i32 = arith.constant 0 : i32
    %c0_i32_0 = arith.constant 0 : i32
    %c0_i32_1 = arith.constant 0 : i32
    return %c0_i32, %c0_i32_0 : i32, i32
  }
  func.func @transform_3(%arg0: i32, %arg1: i32) -> (i32, i32, i32, i32) {
    %c0_i32 = arith.constant 0 : i32
    %c0_i32_0 = arith.constant 0 : i32
    %c0_i32_1 = arith.constant 0 : i32
    return %arg0, %arg1, %c0_i32, %c0_i32_0 : i32, i32, i32, i32
  }
}

module attributes {stable_mosaic.version = 11 : i64} {
  func.func @_conv3x3s1_kernel(%arg0: i32, %arg1: i32, %arg2: memref<1x6x6x16xf32, #tpu.memory_space<vmem>>, %arg3: memref<144x16xf32, #tpu.memory_space<vmem>>, %arg4: memref<1x16xf32, #tpu.memory_space<vmem>>, %arg5: memref<1x4x4x16xf32, #tpu.memory_space<vmem>>) attributes {dimension_semantics = [#tpu.dimension_semantics<parallel>, #tpu.dimension_semantics<arbitrary>], iteration_bounds = array<i64: 2, 1>, scalar_prefetch = 0 : i64, scratch_operands = 0 : i64, tpu.core_type = #tpu.core_type<tc>, window_params = [{transform_indices = @transform_0, window_bounds = array<i64: 1, 6, 6, 16>}, {pipeline_mode = #tpu.pipeline_mode<synchronous>, transform_indices = @transform_1, window_bounds = array<i64: 144, 16>}, {pipeline_mode = #tpu.pipeline_mode<synchronous>, transform_indices = @transform_2, window_bounds = array<i64: 1, 16>}, {transform_indices = @transform_3, window_bounds = array<i64: 1, 4, 4, 16>}]} {
    %c4_i32 = arith.constant 4 : i32
    %0 = arith.muli %arg1, %c4_i32 : i32
    %1 = tpu.assume_multiple %0, 4 : i32
    %c0_i32 = arith.constant 0 : i32
    %2 = arith.addi %1, %c0_i32 : i32
    %c0 = arith.constant 0 : index
    %3 = arith.index_cast %2 : i32 to index
    %c0_0 = arith.constant 0 : index
    %c0_1 = arith.constant 0 : index
    %4 = vector.load %arg2[%c0, %3, %c0_0, %c0_1] : memref<1x6x6x16xf32, #tpu.memory_space<vmem>>, vector<1x4x6x16xf32>
    %5 = vector.shape_cast %4 : vector<1x4x6x16xf32> to vector<4x6x16xf32>
    %6 = vector.extract_strided_slice %5 {offsets = [0, 0, 0], sizes = [4, 4, 16], strides = [1, 1, 1]} : vector<4x6x16xf32> to vector<4x4x16xf32>
    %7 = vector.extract_strided_slice %5 {offsets = [0, 1, 0], sizes = [4, 4, 16], strides = [1, 1, 1]} : vector<4x6x16xf32> to vector<4x4x16xf32>
    %8 = vector.extract_strided_slice %5 {offsets = [0, 2, 0], sizes = [4, 4, 16], strides = [1, 1, 1]} : vector<4x6x16xf32> to vector<4x4x16xf32>
    %c1_i32 = arith.constant 1 : i32
    %9 = arith.addi %1, %c1_i32 : i32
    %c0_2 = arith.constant 0 : index
    %10 = arith.index_cast %9 : i32 to index
    %c0_3 = arith.constant 0 : index
    %c0_4 = arith.constant 0 : index
    %11 = vector.load %arg2[%c0_2, %10, %c0_3, %c0_4] : memref<1x6x6x16xf32, #tpu.memory_space<vmem>>, vector<1x4x6x16xf32>
    %12 = vector.shape_cast %11 : vector<1x4x6x16xf32> to vector<4x6x16xf32>
    %13 = vector.extract_strided_slice %12 {offsets = [0, 0, 0], sizes = [4, 4, 16], strides = [1, 1, 1]} : vector<4x6x16xf32> to vector<4x4x16xf32>
    %14 = vector.extract_strided_slice %12 {offsets = [0, 1, 0], sizes = [4, 4, 16], strides = [1, 1, 1]} : vector<4x6x16xf32> to vector<4x4x16xf32>
    %15 = vector.extract_strided_slice %12 {offsets = [0, 2, 0], sizes = [4, 4, 16], strides = [1, 1, 1]} : vector<4x6x16xf32> to vector<4x4x16xf32>
    %c2_i32 = arith.constant 2 : i32
    %16 = arith.addi %1, %c2_i32 : i32
    %c0_5 = arith.constant 0 : index
    %17 = arith.index_cast %16 : i32 to index
    %c0_6 = arith.constant 0 : index
    %c0_7 = arith.constant 0 : index
    %18 = vector.load %arg2[%c0_5, %17, %c0_6, %c0_7] : memref<1x6x6x16xf32, #tpu.memory_space<vmem>>, vector<1x4x6x16xf32>
    %19 = vector.shape_cast %18 : vector<1x4x6x16xf32> to vector<4x6x16xf32>
    %20 = vector.extract_strided_slice %19 {offsets = [0, 0, 0], sizes = [4, 4, 16], strides = [1, 1, 1]} : vector<4x6x16xf32> to vector<4x4x16xf32>
    %21 = vector.extract_strided_slice %19 {offsets = [0, 1, 0], sizes = [4, 4, 16], strides = [1, 1, 1]} : vector<4x6x16xf32> to vector<4x4x16xf32>
    %22 = vector.extract_strided_slice %19 {offsets = [0, 2, 0], sizes = [4, 4, 16], strides = [1, 1, 1]} : vector<4x6x16xf32> to vector<4x4x16xf32>
    %23 = tpu.concatenate %6, %7, %8, %13, %14, %15, %20, %21, %22 in 2 : vector<4x4x16xf32>, vector<4x4x16xf32>, vector<4x4x16xf32>, vector<4x4x16xf32>, vector<4x4x16xf32>, vector<4x4x16xf32>, vector<4x4x16xf32>, vector<4x4x16xf32>, vector<4x4x16xf32> -> vector<4x4x144xf32>
    %24 = vector.shape_cast %23 : vector<4x4x144xf32> to vector<16x144xf32>
    %c0_8 = arith.constant 0 : index
    %c0_9 = arith.constant 0 : index
    %25 = vector.load %arg3[%c0_8, %c0_9] : memref<144x16xf32, #tpu.memory_space<vmem>>, vector<144x16xf32>
    %cst = arith.constant dense<0.000000e+00> : vector<16x16xf32>
    %26 = tpu.matmul %24, %25, %cst {dimension_numbers = #tpu.dot_dimension_numbers<[1], [0], [0], [1], [0, 0, 1, 1], [], []>} : vector<16x144xf32>, vector<144x16xf32>, vector<16x16xf32> -> vector<16x16xf32>
    %c0_10 = arith.constant 0 : index
    %c0_11 = arith.constant 0 : index
    %27 = vector.load %arg4[%c0_10, %c0_11] : memref<1x16xf32, #tpu.memory_space<vmem>>, vector<1x16xf32>
    %28 = vector.broadcast %27 : vector<1x16xf32> to vector<16x16xf32>
    %29 = arith.addf %26, %28 : vector<16x16xf32>
    %30 = vector.shape_cast %29 : vector<16x16xf32> to vector<1x4x4x16xf32>
    %c0_12 = arith.constant 0 : index
    %c0_13 = arith.constant 0 : index
    %c0_14 = arith.constant 0 : index
    %c0_15 = arith.constant 0 : index
    %31 = vector.load %arg5[%c0_12, %c0_13, %c0_14, %c0_15] : memref<1x4x4x16xf32, #tpu.memory_space<vmem>>, vector<1x4x4x16xf32>
    tpu.vector_store %arg5[%c0_12, %c0_13, %c0_14, %c0_15], %30 {strides = array<i32>} : memref<1x4x4x16xf32, #tpu.memory_space<vmem>>, vector<1x4x4x16xf32>,
    return
  }
  func.func @transform_0(%arg0: i32, %arg1: i32) -> (i32, i32, i32, i32) {
    %c0_i32 = arith.constant 0 : i32
    %c0_i32_0 = arith.constant 0 : i32
    %c0_i32_1 = arith.constant 0 : i32
    %c0_i32_2 = arith.constant 0 : i32
    return %arg0, %c0_i32, %c0_i32_0, %c0_i32_1 : i32, i32, i32, i32
  }
  func.func @transform_1(%arg0: i32, %arg1: i32) -> (i32, i32) {
    %c0_i32 = arith.constant 0 : i32
    %c0_i32_0 = arith.constant 0 : i32
    %c0_i32_1 = arith.constant 0 : i32
    return %c0_i32, %c0_i32_0 : i32, i32
  }
  func.func @transform_2(%arg0: i32, %arg1: i32) -> (i32, i32) {
    %c0_i32 = arith.constant 0 : i32
    %c0_i32_0 = arith.constant 0 : i32
    %c0_i32_1 = arith.constant 0 : i32
    return %c0_i32, %c0_i32_0 : i32, i32
  }
  func.func @transform_3(%arg0: i32, %arg1: i32) -> (i32, i32, i32, i32) {
    %c0_i32 = arith.constant 0 : i32
    %c0_i32_0 = arith.constant 0 : i32
    %c0_i32_1 = arith.constant 0 : i32
    return %arg0, %arg1, %c0_i32, %c0_i32_0 : i32, i32, i32, i32
  }
}

</mosaic_0001>

<llo_original>
// kernel: backbone_with_fpn.12
$region0: #{backbone_with_fpn.12}
  #allocation0 [shape = 'u32[]', space=smem, size = 0x4, offset = 0x4, fixed_abs, tag = 'smem constant byte address 0x4 - core index']
  #allocation1 [shape = 'u32[72,128]{1,0:T(1,128)}', space=vmem, size = 0x9000, scoped, tag = 'internal scratch']
  %s0 = inlined_call_operand.vmem [shape: f32[2,4,4,32], index: 0, kind: input, shape index: {}]
  %s1 = inlined_call_operand.vmem [shape: f32[32,16], index: 1, kind: input, shape index: {}]
  %s2 = inlined_call_operand.vmem [shape: f32[1,16], index: 2, kind: input, shape index: {}]
  %s3 = inlined_call_operand.vmem [shape: f32[2,4,4,16], index: 3, kind: output, shape index: {}]
  %s4 = sld [smem:[#allocation0]]
  $region45: #{backbone_with_fpn.12} parent=0
    _
  %s6 = ssub.s32 1, %s4
  %s7 = scalar_select 0, %s6, %s4
  loop: start=0, step=1, limit=4
  $region2: #{backbone_with_fpn.12} parent=0 // loop_pre_header
    _
  $region3: #{backbone_with_fpn.12} parent=0 // loop_header
    %s9 = sphi 0, %s13
    %p10 = scmp.ge.s32.totalorder %s9, 4
    %s16 = sphi 0, %s28
    %s17 = sphi 0, %s24
    %s18 = sphi 0, %s16
    %s19 = sphi 0, %s17
    %s20 = sphi 0, %s18
    %s21 = sphi 0, %s19
    %s33 = sphi 0, %s35
    %s36 = sphi 0, %s33
    %s37 = sphi 0, %s36
    %s53 = sphi 0, %s37
    %s57 = sphi 0, %s57
    %s59 = sphi 0, %s57
    %s60 = sphi 0, %s59
    %s74 = sphi 0, %s60
    %s78 = sphi 0, %s78
    %s80 = sphi 0, %s78
    %s81 = sphi 0, %s80
    %s95 = sphi 0, %s81
    %s103 = sphi 0, %s105
    %s106 = sphi 0, %s103
    %s107 = sphi 0, %s106
    %s123 = sphi 0, %s107
  $region4: #{backbone_with_fpn.12} parent=0 // loop_header_branch
    %12 = sbr.rel (%p10) target = $region8
  $region5: #{backbone_with_fpn.12} parent=0 // loop_body
    %s14 = ssub.s32 %s9, 1
    %s15 = ssub.s32 %s9, 2
    %s22 = sadd.s32 1, %s17
    %p23 = scmp.ge.s32.totalorder %s22, 1
    %s24 = scalar_select %p23, 0, %s22
    %s25 = sadd.s32 1, %s16
    %s26 = scalar_select %p23, %s25, %s16
    %p27 = scmp.ge.s32.totalorder %s26, 2
    %s28 = scalar_select %p27, 0, %s26
    %s29 = ssub.s32 %s16, %s28
    %s30 = ssub.s32 %s17, %s24
    %s31 = sor.u32 %s29, %s30
    %p32 = scmp.eq.s32.totalorder %s31, 0
    %s34 = sadd.s32 %s33, 1
    %s35 = scalar_select %p32, %s33, %s34
    %p38 = pneg %p32
    %p39 = scmp.eq.s32.totalorder %s9, 1
    %p40 = por %p38, %p39
    %p41 = scmp.ne.s32.totalorder %s33, %s36
    %p42 = scmp.eq.s32.totalorder %s9, 0
    %p43 = por %p41, %p42
    %p44 = scmp.ne.s32.totalorder %s33, %s36
    %p45 = scmp.eq.s32.totalorder %s14, 1
    %p46 = por %p44, %p45
    %p47 = scmp.ne.s32.totalorder %s36, %s37
    %p48 = scmp.eq.s32.totalorder %s14, 0
    %p49 = por %p47, %p48
    %p50 = scmp.ne.s32.totalorder %s36, %s37
    %p51 = scmp.eq.s32.totalorder %s15, 1
    %p52 = por %p50, %p51
    %p54 = scmp.ne.s32.totalorder %s37, %s53
    %p55 = scmp.eq.s32.totalorder %s15, 0
    %p56 = por %p54, %p55
    %s58 = sadd.s32 %s57, 1
    %p61 = scmp.eq.s32.totalorder %s9, 1
    %p62 = scmp.ne.s32.totalorder %s57, %s59
    %p63 = scmp.eq.s32.totalorder %s9, 0
    %p64 = por %p62, %p63
    %p65 = scmp.ne.s32.totalorder %s57, %s59
    %p66 = scmp.eq.s32.totalorder %s14, 1
    %p67 = por %p65, %p66
    %p68 = scmp.ne.s32.totalorder %s59, %s60
    %p69 = scmp.eq.s32.totalorder %s14, 0
    %p70 = por %p68, %p69
    %p71 = scmp.ne.s32.totalorder %s59, %s60
    %p72 = scmp.eq.s32.totalorder %s15, 1
    %p73 = por %p71, %p72
    %p75 = scmp.ne.s32.totalorder %s60, %s74
    %p76 = scmp.eq.s32.totalorder %s15, 0
    %p77 = por %p75, %p76
    %s79 = sadd.s32 %s78, 1
    %p82 = scmp.eq.s32.totalorder %s9, 1
    %p83 = scmp.ne.s32.totalorder %s78, %s80
    %p84 = scmp.eq.s32.totalorder %s9, 0
    %p85 = por %p83, %p84
    %p86 = scmp.ne.s32.totalorder %s78, %s80
    %p87 = scmp.eq.s32.totalorder %s14, 1
    %p88 = por %p86, %p87
    %p89 = scmp.ne.s32.totalorder %s80, %s81
    %p90 = scmp.eq.s32.totalorder %s14, 0
    %p91 = por %p89, %p90
    %p92 = scmp.ne.s32.totalorder %s80, %s81
    %p93 = scmp.eq.s32.totalorder %s15, 1
    %p94 = por %p92, %p93
    %p96 = scmp.ne.s32.totalorder %s81, %s95
    %p97 = scmp.eq.s32.totalorder %s15, 0
    %p98 = por %p96, %p97
    %s99 = ssub.s32 %s16, %s28
    %s100 = ssub.s32 %s17, %s24
    %s101 = sor.u32 %s99, %s100
    %p102 = scmp.eq.s32.totalorder %s101, 0
    %s104 = sadd.s32 %s103, 1
    %s105 = scalar_select %p102, %s103, %s104
    %p108 = pneg %p102
    %p109 = scmp.eq.s32.totalorder %s9, 1
    %p110 = por %p108, %p109
    %p111 = scmp.ne.s32.totalorder %s103, %s106
    %p112 = scmp.eq.s32.totalorder %s9, 0
    %p113 = por %p111, %p112
    %p114 = scmp.ne.s32.totalorder %s103, %s106
    %p115 = scmp.eq.s32.totalorder %s14, 1
    %p116 = por %p114, %p115
    %p117 = scmp.ne.s32.totalorder %s106, %s107
    %p118 = scmp.eq.s32.totalorder %s14, 0
    %p119 = por %p117, %p118
    %p120 = scmp.ne.s32.totalorder %s106, %s107
    %p121 = scmp.eq.s32.totalorder %s15, 1
    %p122 = por %p120, %p121
    %p124 = scmp.ne.s32.totalorder %s107, %s123
    %p125 = scmp.eq.s32.totalorder %s15, 0
    %p126 = por %p124, %p125
    %p127 = scmp.le.s32.totalorder 1, %s9
    %p128 = scmp.lt.s32.totalorder %s9, 3
    %p129 = pnand %p127, %p128
    %p130 = pneg %p129
    // Predicated region
    $region9: #{backbone_with_fpn.12} parent=5 // pred_check
      _
    $region10: #{backbone_with_fpn.12} parent=5 // pred_check_branch
      %132 = sbr.rel (%p129) target = $region12
    $region11: #{backbone_with_fpn.12} parent=5 // pred_region
      %s133 = ssub.s32 %s9, 1
      // Predicated region
      $region13: #{backbone_with_fpn.12} parent=11 // pred_check
        %p134 = pneg %p70
      $region14: #{backbone_with_fpn.12} parent=11 // pred_check_branch
        %136 = sbr.rel (%p134) target = $region16
      $region15: #{backbone_with_fpn.12} parent=11 // pred_region
        _
      $region16: #{backbone_with_fpn.12} parent=11 // pred_fallthru
        _
      // Predicated region
      $region17: #{backbone_with_fpn.12} parent=11 // pred_check
        %p137 = pneg %p91
      $region18: #{backbone_with_fpn.12} parent=11 // pred_check_branch
        %139 = sbr.rel (%p137) target = $region20
      $region19: #{backbone_with_fpn.12} parent=11 // pred_region
        _
      $region20: #{backbone_with_fpn.12} parent=11 // pred_fallthru
        _
    $region12: #{backbone_with_fpn.12} parent=5 // pred_fallthru
      _
    %p140 = scmp.lt.s32.totalorder %s9, 2
    // Predicated region
    $region21: #{backbone_with_fpn.12} parent=5 // pred_check
      %p141 = pneg %p140
    $region22: #{backbone_with_fpn.12} parent=5 // pred_check_branch
      %143 = sbr.rel (%p141) target = $region24
    $region23: #{backbone_with_fpn.12} parent=5 // pred_region
      // Predicated region
      $region25: #{backbone_with_fpn.12} parent=23 // pred_check
        %p144 = pneg %p43
      $region26: #{backbone_with_fpn.12} parent=23 // pred_check_branch
        %146 = sbr.rel (%p144) target = $region28
      $region27: #{backbone_with_fpn.12} parent=23 // pred_region
        %s147 = smul.u32 4, %s17
        %p148 = scmp.lt.s32.totalorder %s16, 1
        %s149 = scalar_select %p148, %s16, 1
        %p150 = scmp.lt.s32.totalorder %s147, 3
        %s151 = scalar_select %p150, %s147, 3
        %s152 = smul.addr %s149, 4
        %s153 = sadd.s32 %s151, %s152
        %s154 = smul.addr %s153, 4
        %s155 = scalar_lea.vmem %s0, %s154
        %s156 = smul.u32 4, %s17
      $region28: #{backbone_with_fpn.12} parent=23 // pred_fallthru
        _
    $region24: #{backbone_with_fpn.12} parent=5 // pred_fallthru
      _
    %p157 = scmp.le.s32.totalorder 1, %s9
    %p158 = scmp.lt.s32.totalorder %s9, 3
    %p159 = pnand %p157, %p158
    %p160 = pneg %p159
    // Predicated region
    $region29: #{backbone_with_fpn.12} parent=5 // pred_check
      _
    $region30: #{backbone_with_fpn.12} parent=5 // pred_check_branch
      %162 = sbr.rel (%p159) target = $region32
    $region31: #{backbone_with_fpn.12} parent=5 // pred_region
      %s163 = ssub.s32 %s9, 1
      %s164 = smul.u32 4, %s19
      %p165 = scmp.lt.s32.totalorder %s18, 1
      %s166 = scalar_select %p165, %s18, 1
      %p167 = scmp.lt.s32.totalorder %s164, 3
      %s168 = scalar_select %p167, %s164, 3
      %s169 = smul.addr %s166, 4
      %s170 = sadd.s32 %s168, %s169
      %s171 = smul.addr %s170, 4
      %s172 = scalar_lea.vmem %s0, %s171
      %p173 = pneg %p49
      %p174 = pneg %p46
      %p175 = pneg %p70
      %p176 = pneg %p67
      %p177 = pneg %p91
      %p178 = pneg %p88
      %p179 = pneg %p119
      %p180 = pneg %p116
      %s181 = smul.u32 4, %s19
      %p182 = scmp.lt.s32.totalorder %s18, 1
      %s183 = scalar_select %p182, %s18, 1
      %p184 = scmp.lt.s32.totalorder %s181, 3
      %s185 = scalar_select %p184, %s181, 3
      %s186 = smul.addr %s183, 4
      %s187 = sadd.s32 %s185, %s186
      %s188 = smul.addr %s187, 4
      %s189 = scalar_lea.vmem %s3, %s188
      %s190 = smul.u32 4, %s19
      %p191 = scmp.lt.s32.totalorder %s18, 1
      %s192 = scalar_select %p191, %s18, 1
      %p193 = scmp.lt.s32.totalorder %s190, 3
      %s194 = scalar_select %p193, %s190, 3
      %s195 = smul.addr %s192, 4
      %s196 = sadd.s32 %s194, %s195
      %s197 = smul.addr %s196, 4
      %s198 = scalar_lea.vmem %s0, %s197
      %s199 = smul.u32 4, %s19
      %s200 = smul.u32 4, %s19
      %p201 = scmp.lt.s32.totalorder %s18, 1
      %s202 = scalar_select %p201, %s18, 1
      %p203 = scmp.lt.s32.totalorder %s200, 3
      %s204 = scalar_select %p203, %s200, 3
      %s205 = smul.addr %s202, 4
      %s206 = sadd.s32 %s204, %s205
      %s207 = smul.addr %s206, 4
      %s208 = scalar_lea.vmem %s3, %s207
      %s209 = smul.u32 4, %s19
      %v210 = vld [vmem:[%s198] sm:$0xf]
      %v211 = vld [vmem:[%s198 + $0x4] sm:$0xf]
      %v212 = vld [vmem:[%s198 + $0x8] sm:$0xf]
      %v213 = vld [vmem:[%s198 + $0xc] sm:$0xf]
      %v214 = vld [vmem:[%s1] sm:$0xff]
      %v215 = vld [vmem:[%s1 + $0x8] sm:$0xff]
      %v216 = vld [vmem:[%s1 + $0x10] sm:$0xff]
      %v217 = vld [vmem:[%s1 + $0x18] sm:$0xff]
      %v218 = vld [vmem:[%s2] sm:$0x1]
      %v220 = vperm.slane %v218, 0
      %226 = vst [vmem:[#allocation1] ss:$2 sm:$0xff] %v210
      %s227 = scalar_lea.vmem [#allocation1], 1
      %228 = vst [vmem:[%s227] ss:$2 sm:$0xff] %v211
      %s229 = scalar_lea.vmem [#allocation1], 16
      %230 = vst [vmem:[%s229] ss:$2 sm:$0xff] %v212
      %s231 = scalar_lea.vmem [#allocation1], 17
      %232 = vst [vmem:[%s231] ss:$2 sm:$0xff] %v213
      %v233 = vld.sshfl [vmem:[#allocation1] sm:$0xff pattern:$0x75316420]
      %v234 = vld.sshfl [vmem:[#allocation1 + $0x10] sm:$0xff pattern:$0x75316420]
      %vm235 = vcmask 261120
      %v236 = vsel %vm235, %v233, 0
      %v238 = vsel %vm235, %v234, 0
      %240 = vmatpush.msra.mxu0 0.0
      %241 = vmatpush.msra.mxu0 0.0
      %242 = vmatpush.msra.mxu0 0.0
      %243 = vmatpush.msra.mxu0 0.0
      %244 = vmatpush.msra.mxu0 0.0
      %245 = vmatpush.msra.mxu0 0.0
      %246 = vmatpush.msra.mxu0 0.0
      %247 = vmatpush.msra.mxu0 0.0
      %248 = vmatpush.msra.mxu0 0.0
      %249 = vmatpush.msra.mxu0 0.0
      %250 = vmatpush.msra.mxu0 0.0
      %251 = vmatpush.msra.mxu0 0.0
      %252 = vmatpush.msra.mxu0 %v217
      %253 = vmatpush.msra.mxu0 %v216
      %254 = vmatpush.msra.mxu0 %v215
      %255 = vmatpush.msra.mxu0 %v214
      %256 = vmatmul.f32.gmra.mxu0 %v236
      %v257 = vpop.f32.mrf.mxu0
      %v258 = vadd.f32 %v220, %v257
      %259 = vmatmul.f32.gmra.mxu0 %v238
      %v260 = vpop.f32.mrf.mxu0
      %v261 = vadd.f32 %v220, %v260
      %262 = vdwg.mxu0
      %v265 = vrot.slane %v258, 4
      %v266 = vrot.slane %v261, 4
      %vm269 = vcmask 125952
      %270 = vst.msk [vmem:[%s208] sm:$0xf] %vm269, %v258
      %271 = vst.msk [vmem:[%s208 + $0x4] sm:$0xf] %vm269, %v265
      %272 = vst.msk [vmem:[%s208 + $0x8] sm:$0xf] %vm269, %v261
      %273 = vst.msk [vmem:[%s208 + $0xc] sm:$0xf] %vm269, %v266
      %s274 = smul.u32 4, %s19
      %p275 = scmp.lt.s32.totalorder %s18, 1
      %s276 = scalar_select %p275, %s18, 1
      %p277 = scmp.lt.s32.totalorder %s274, 3
      %s278 = scalar_select %p277, %s274, 3
      %s279 = smul.addr %s276, 4
      %s280 = sadd.s32 %s278, %s279
      %s281 = smul.addr %s280, 4
      %s282 = scalar_lea.vmem %s3, %s281
      // Predicated region
      $region33: #{backbone_with_fpn.12} parent=31 // pred_check
        %p283 = pneg %p116
      $region34: #{backbone_with_fpn.12} parent=31 // pred_check_branch
        %285 = sbr.rel (%p283) target = $region36
      $region35: #{backbone_with_fpn.12} parent=31 // pred_region
        %s286 = smul.u32 4, %s19
      $region36: #{backbone_with_fpn.12} parent=31 // pred_fallthru
        _
    $region32: #{backbone_with_fpn.12} parent=5 // pred_fallthru
      _
    %p287 = scmp.le.s32.totalorder 2, %s9
    // Predicated region
    $region37: #{backbone_with_fpn.12} parent=5 // pred_check
      %p288 = pneg %p287
    $region38: #{backbone_with_fpn.12} parent=5 // pred_check_branch
      %290 = sbr.rel (%p288) target = $region40
    $region39: #{backbone_with_fpn.12} parent=5 // pred_region
      %s291 = ssub.s32 %s9, 2
      // Predicated region
      $region41: #{backbone_with_fpn.12} parent=39 // pred_check
        %p292 = pneg %p122
      $region42: #{backbone_with_fpn.12} parent=39 // pred_check_branch
        %294 = sbr.rel (%p292) target = $region44
      $region43: #{backbone_with_fpn.12} parent=39 // pred_region
        %s295 = smul.u32 4, %s21
        %p296 = scmp.lt.s32.totalorder %s20, 1
        %s297 = scalar_select %p296, %s20, 1
        %p298 = scmp.lt.s32.totalorder %s295, 3
        %s299 = scalar_select %p298, %s295, 3
        %s300 = smul.addr %s297, 4
        %s301 = sadd.s32 %s299, %s300
        %s302 = smul.addr %s301, 4
        %s303 = scalar_lea.vmem %s3, %s302
      $region44: #{backbone_with_fpn.12} parent=39 // pred_fallthru
        _
    $region40: #{backbone_with_fpn.12} parent=5 // pred_fallthru
      _
  $region6: #{backbone_with_fpn.12} parent=0 // loop_footer
    %s13 = sadd.s32 1, %s9
  $region7: #{backbone_with_fpn.12} parent=0 // loop_footer_branch
    %8 = sbr.rel target = $region3
  $region8: #{backbone_with_fpn.12} parent=0 // loop_exit
    _

// kernel: backbone_with_fpn.10
$region0: #{backbone_with_fpn.10}
  #allocation0 [shape = 'u32[]', space=smem, size = 0x4, offset = 0x4, fixed_abs, tag = 'smem constant byte address 0x4 - core index']
  #allocation1 [shape = 'u32[72,128]{1,0:T(1,128)}', space=vmem, size = 0x9000, scoped, tag = 'internal scratch']
  %s0 = inlined_call_operand.vmem [shape: f32[2,9,9,16], index: 0, kind: input, shape index: {}]
  %s1 = inlined_call_operand.vmem [shape: f32[2,9,9,16], index: 1, kind: input, shape index: {}]
  %s2 = inlined_call_operand.vmem [shape: f32[96,16], index: 2, kind: input, shape index: {}]
  %s3 = inlined_call_operand.vmem [shape: f32[1,16], index: 3, kind: input, shape index: {}]
  %s4 = inlined_call_operand.vmem [shape: f32[2,8,8,16], index: 4, kind: output, shape index: {}]
  %s5 = sld [smem:[#allocation0]]
  $region49: #{backbone_with_fpn.10} parent=0
    _
  %s7 = ssub.s32 1, %s5
  %s8 = scalar_select 0, %s7, %s5
  loop: start=0, step=1, limit=4
  $region2: #{backbone_with_fpn.10} parent=0 // loop_pre_header
    _
  $region3: #{backbone_with_fpn.10} parent=0 // loop_header
    %s10 = sphi 0, %s14
    %p11 = scmp.ge.s32.totalorder %s10, 4
    %s17 = sphi 0, %s29
    %s18 = sphi 0, %s25
    %s19 = sphi 0, %s17
    %s20 = sphi 0, %s18
    %s21 = sphi 0, %s19
    %s22 = sphi 0, %s20
    %s32 = sphi 0, %s34
    %s35 = sphi 0, %s32
    %s36 = sphi 0, %s35
    %s52 = sphi 0, %s36
    %s58 = sphi 0, %s60
    %s61 = sphi 0, %s58
    %s62 = sphi 0, %s61
    %s78 = sphi 0, %s62
    %s82 = sphi 0, %s82
    %s84 = sphi 0, %s82
    %s85 = sphi 0, %s84
    %s99 = sphi 0, %s85
    %s103 = sphi 0, %s103
    %s105 = sphi 0, %s103
    %s106 = sphi 0, %s105
    %s120 = sphi 0, %s106
    %s128 = sphi 0, %s130
    %s131 = sphi 0, %s128
    %s132 = sphi 0, %s131
    %s148 = sphi 0, %s132
  $region4: #{backbone_with_fpn.10} parent=0 // loop_header_branch
    %13 = sbr.rel (%p11) target = $region8
  $region5: #{backbone_with_fpn.10} parent=0 // loop_body
    %s15 = ssub.s32 %s10, 1
    %s16 = ssub.s32 %s10, 2
    %s23 = sadd.s32 1, %s18
    %p24 = scmp.ge.s32.totalorder %s23, 1
    %s25 = scalar_select %p24, 0, %s23
    %s26 = sadd.s32 1, %s17
    %s27 = scalar_select %p24, %s26, %s17
    %p28 = scmp.ge.s32.totalorder %s27, 2
    %s29 = scalar_select %p28, 0, %s27
    %s30 = ssub.s32 %s17, %s29
    %p31 = scmp.eq.s32.totalorder %s30, 0
    %s33 = sadd.s32 %s32, 1
    %s34 = scalar_select %p31, %s32, %s33
    %p37 = pneg %p31
    %p38 = scmp.eq.s32.totalorder %s10, 1
    %p39 = por %p37, %p38
    %p40 = scmp.ne.s32.totalorder %s32, %s35
    %p41 = scmp.eq.s32.totalorder %s10, 0
    %p42 = por %p40, %p41
    %p43 = scmp.ne.s32.totalorder %s32, %s35
    %p44 = scmp.eq.s32.totalorder %s15, 1
    %p45 = por %p43, %p44
    %p46 = scmp.ne.s32.totalorder %s35, %s36
    %p47 = scmp.eq.s32.totalorder %s15, 0
    %p48 = por %p46, %p47
    %p49 = scmp.ne.s32.totalorder %s35, %s36
    %p50 = scmp.eq.s32.totalorder %s16, 1
    %p51 = por %p49, %p50
    %p53 = scmp.ne.s32.totalorder %s36, %s52
    %p54 = scmp.eq.s32.totalorder %s16, 0
    %p55 = por %p53, %p54
    %s56 = ssub.s32 %s17, %s29
    %p57 = scmp.eq.s32.totalorder %s56, 0
    %s59 = sadd.s32 %s58, 1
    %s60 = scalar_select %p57, %s58, %s59
    %p63 = pneg %p57
    %p64 = scmp.eq.s32.totalorder %s10, 1
    %p65 = por %p63, %p64
    %p66 = scmp.ne.s32.totalorder %s58, %s61
    %p67 = scmp.eq.s32.totalorder %s10, 0
    %p68 = por %p66, %p67
    %p69 = scmp.ne.s32.totalorder %s58, %s61
    %p70 = scmp.eq.s32.totalorder %s15, 1
    %p71 = por %p69, %p70
    %p72 = scmp.ne.s32.totalorder %s61, %s62
    %p73 = scmp.eq.s32.totalorder %s15, 0
    %p74 = por %p72, %p73
    %p75 = scmp.ne.s32.totalorder %s61, %s62
    %p76 = scmp.eq.s32.totalorder %s16, 1
    %p77 = por %p75, %p76
    %p79 = scmp.ne.s32.totalorder %s62, %s78
    %p80 = scmp.eq.s32.totalorder %s16, 0
    %p81 = por %p79, %p80
    %s83 = sadd.s32 %s82, 1
    %p86 = scmp.eq.s32.totalorder %s10, 1
    %p87 = scmp.ne.s32.totalorder %s82, %s84
    %p88 = scmp.eq.s32.totalorder %s10, 0
    %p89 = por %p87, %p88
    %p90 = scmp.ne.s32.totalorder %s82, %s84
    %p91 = scmp.eq.s32.totalorder %s15, 1
    %p92 = por %p90, %p91
    %p93 = scmp.ne.s32.totalorder %s84, %s85
    %p94 = scmp.eq.s32.totalorder %s15, 0
    %p95 = por %p93, %p94
    %p96 = scmp.ne.s32.totalorder %s84, %s85
    %p97 = scmp.eq.s32.totalorder %s16, 1
    %p98 = por %p96, %p97
    %p100 = scmp.ne.s32.totalorder %s85, %s99
    %p101 = scmp.eq.s32.totalorder %s16, 0
    %p102 = por %p100, %p101
    %s104 = sadd.s32 %s103, 1
    %p107 = scmp.eq.s32.totalorder %s10, 1
    %p108 = scmp.ne.s32.totalorder %s103, %s105
    %p109 = scmp.eq.s32.totalorder %s10, 0
    %p110 = por %p108, %p109
    %p111 = scmp.ne.s32.totalorder %s103, %s105
    %p112 = scmp.eq.s32.totalorder %s15, 1
    %p113 = por %p111, %p112
    %p114 = scmp.ne.s32.totalorder %s105, %s106
    %p115 = scmp.eq.s32.totalorder %s15, 0
    %p116 = por %p114, %p115
    %p117 = scmp.ne.s32.totalorder %s105, %s106
    %p118 = scmp.eq.s32.totalorder %s16, 1
    %p119 = por %p117, %p118
    %p121 = scmp.ne.s32.totalorder %s106, %s120
    %p122 = scmp.eq.s32.totalorder %s16, 0
    %p123 = por %p121, %p122
    %s124 = ssub.s32 %s17, %s29
    %s125 = ssub.s32 %s18, %s25
    %s126 = sor.u32 %s124, %s125
    %p127 = scmp.eq.s32.totalorder %s126, 0
    %s129 = sadd.s32 %s128, 1
    %s130 = scalar_select %p127, %s128, %s129
    %p133 = pneg %p127
    %p134 = scmp.eq.s32.totalorder %s10, 1
    %p135 = por %p133, %p134
    %p136 = scmp.ne.s32.totalorder %s128, %s131
    %p137 = scmp.eq.s32.totalorder %s10, 0
    %p138 = por %p136, %p137
    %p139 = scmp.ne.s32.totalorder %s128, %s131
    %p140 = scmp.eq.s32.totalorder %s15, 1
    %p141 = por %p139, %p140
    %p142 = scmp.ne.s32.totalorder %s131, %s132
    %p143 = scmp.eq.s32.totalorder %s15, 0
    %p144 = por %p142, %p143
    %p145 = scmp.ne.s32.totalorder %s131, %s132
    %p146 = scmp.eq.s32.totalorder %s16, 1
    %p147 = por %p145, %p146
    %p149 = scmp.ne.s32.totalorder %s132, %s148
    %p150 = scmp.eq.s32.totalorder %s16, 0
    %p151 = por %p149, %p150
    %p152 = scmp.le.s32.totalorder 1, %s10
    %p153 = scmp.lt.s32.totalorder %s10, 3
    %p154 = pnand %p152, %p153
    %p155 = pneg %p154
    // Predicated region
    $region9: #{backbone_with_fpn.10} parent=5 // pred_check
      _
    $region10: #{backbone_with_fpn.10} parent=5 // pred_check_branch
      %157 = sbr.rel (%p154) target = $region12
    $region11: #{backbone_with_fpn.10} parent=5 // pred_region
      %s158 = ssub.s32 %s10, 1
      // Predicated region
      $region13: #{backbone_with_fpn.10} parent=11 // pred_check
        %p159 = pneg %p95
      $region14: #{backbone_with_fpn.10} parent=11 // pred_check_branch
        %161 = sbr.rel (%p159) target = $region16
      $region15: #{backbone_with_fpn.10} parent=11 // pred_region
        _
      $region16: #{backbone_with_fpn.10} parent=11 // pred_fallthru
        _
      // Predicated region
      $region17: #{backbone_with_fpn.10} parent=11 // pred_check
        %p162 = pneg %p116
      $region18: #{backbone_with_fpn.10} parent=11 // pred_check_branch
        %164 = sbr.rel (%p162) target = $region20
      $region19: #{backbone_with_fpn.10} parent=11 // pred_region
        _
      $region20: #{backbone_with_fpn.10} parent=11 // pred_fallthru
        _
    $region12: #{backbone_with_fpn.10} parent=5 // pred_fallthru
      _
    %p165 = scmp.lt.s32.totalorder %s10, 2
    // Predicated region
    $region21: #{backbone_with_fpn.10} parent=5 // pred_check
      %p166 = pneg %p165
    $region22: #{backbone_with_fpn.10} parent=5 // pred_check_branch
      %168 = sbr.rel (%p166) target = $region24
    $region23: #{backbone_with_fpn.10} parent=5 // pred_region
      // Predicated region
      $region25: #{backbone_with_fpn.10} parent=23 // pred_check
        %p169 = pneg %p42
      $region26: #{backbone_with_fpn.10} parent=23 // pred_check_branch
        %171 = sbr.rel (%p169) target = $region28
      $region27: #{backbone_with_fpn.10} parent=23 // pred_region
        %p172 = scmp.lt.s32.totalorder %s17, 1
        %s173 = scalar_select %p172, %s17, 1
        %s174 = smul.addr %s173, 18
        %s175 = smul.addr %s174, 8
        %s176 = scalar_lea.vmem %s0, %s175
      $region28: #{backbone_with_fpn.10} parent=23 // pred_fallthru
        _
      // Predicated region
      $region29: #{backbone_with_fpn.10} parent=23 // pred_check
        %p177 = pneg %p68
      $region30: #{backbone_with_fpn.10} parent=23 // pred_check_branch
        %179 = sbr.rel (%p177) target = $region32
      $region31: #{backbone_with_fpn.10} parent=23 // pred_region
        %p180 = scmp.lt.s32.totalorder %s17, 1
        %s181 = scalar_select %p180, %s17, 1
        %s182 = smul.addr %s181, 18
        %s183 = smul.addr %s182, 8
        %s184 = scalar_lea.vmem %s1, %s183
      $region32: #{backbone_with_fpn.10} parent=23 // pred_fallthru
        _
    $region24: #{backbone_with_fpn.10} parent=5 // pred_fallthru
      _
    %p185 = scmp.le.s32.totalorder 1, %s10
    %p186 = scmp.lt.s32.totalorder %s10, 3
    %p187 = pnand %p185, %p186
    %p188 = pneg %p187
    // Predicated region
    $region33: #{backbone_with_fpn.10} parent=5 // pred_check
      _
    $region34: #{backbone_with_fpn.10} parent=5 // pred_check_branch
      %190 = sbr.rel (%p187) target = $region36
    $region35: #{backbone_with_fpn.10} parent=5 // pred_region
      %s191 = ssub.s32 %s10, 1
      %p192 = scmp.lt.s32.totalorder %s19, 1
      %s193 = scalar_select %p192, %s19, 1
      %s194 = smul.addr %s193, 18
      %s195 = smul.addr %s194, 8
      %s196 = scalar_lea.vmem %s0, %s195
      %p197 = pneg %p48
      %p198 = pneg %p45
      %p199 = scmp.lt.s32.totalorder %s19, 1
      %s200 = scalar_select %p199, %s19, 1
      %s201 = smul.addr %s200, 18
      %s202 = smul.addr %s201, 8
      %s203 = scalar_lea.vmem %s1, %s202
      %p204 = pneg %p74
      %p205 = pneg %p71
      %p206 = pneg %p95
      %p207 = pneg %p92
      %p208 = pneg %p116
      %p209 = pneg %p113
      %p210 = pneg %p144
      %p211 = pneg %p141
      %s212 = smul.u32 8, %s20
      %p213 = scmp.lt.s32.totalorder %s19, 1
      %s214 = scalar_select %p213, %s19, 1
      %p215 = scmp.lt.s32.totalorder %s212, 7
      %s216 = scalar_select %p215, %s212, 7
      %s217 = smul.addr %s214, 8
      %s218 = sadd.s32 %s216, %s217
      %s219 = smul.addr %s218, 8
      %s220 = scalar_lea.vmem %s4, %s219
      %p221 = scmp.lt.s32.totalorder %s19, 1
      %s222 = scalar_select %p221, %s19, 1
      %s223 = smul.addr %s222, 18
      %s224 = smul.addr %s223, 8
      %s225 = scalar_lea.vmem %s0, %s224
      %p226 = scmp.lt.s32.totalorder %s19, 1
      %s227 = scalar_select %p226, %s19, 1
      %s228 = smul.addr %s227, 18
      %s229 = smul.addr %s228, 8
      %s230 = scalar_lea.vmem %s1, %s229
      %s231 = smul.u32 8, %s20
      %p232 = scmp.lt.s32.totalorder %s19, 1
      %s233 = scalar_select %p232, %s19, 1
      %p234 = scmp.lt.s32.totalorder %s231, 7
      %s235 = scalar_select %p234, %s231, 7
      %s236 = smul.addr %s233, 8
      %s237 = sadd.s32 %s235, %s236
      %s238 = smul.addr %s237, 8
      %s239 = scalar_lea.vmem %s4, %s238
      %s240 = smul.u32 8, %s20
      %s241 = smul.u32 %s20, 8
      %s242 = smul.u32 %s241, 16
      %s243 = scalar_lea.vmem %s225, %s242
      %v244 = vld [vmem:[%s243] sm:$0xff]
      %v245 = vld [vmem:[%s243 + $0x8] sm:$0x1]
      %v246 = vld [vmem:[%s243 + $0x10] sm:$0xff]
      %v247 = vld [vmem:[%s243 + $0x18] sm:$0x1]
      %v248 = vld [vmem:[%s243 + $0x20] sm:$0xff]
      %v249 = vld [vmem:[%s243 + $0x28] sm:$0x1]
      %v250 = vld [vmem:[%s243 + $0x30] sm:$0xff]
      %v251 = vld [vmem:[%s243 + $0x38] sm:$0x1]
      %v252 = vld [vmem:[%s243 + $0x40] sm:$0xff]
      %v253 = vld [vmem:[%s243 + $0x48] sm:$0x1]
      %v254 = vld [vmem:[%s243 + $0x50] sm:$0xff]
      %v255 = vld [vmem:[%s243 + $0x58] sm:$0x1]
      %v256 = vld [vmem:[%s243 + $0x60] sm:$0xff]
      %v257 = vld [vmem:[%s243 + $0x68] sm:$0x1]
      %v258 = vld [vmem:[%s243 + $0x70] sm:$0xff]
      %v259 = vld [vmem:[%s243 + $0x78] sm:$0x1]
      %s260 = scalar_lea.vmem %s230, %s242
      %v261 = vld [vmem:[%s260] sm:$0xff]
      %v262 = vld [vmem:[%s260 + $0x8] sm:$0x1]
      %v263 = vld [vmem:[%s260 + $0x10] sm:$0xff]
      %v264 = vld [vmem:[%s260 + $0x18] sm:$0x1]
      %v265 = vld [vmem:[%s260 + $0x20] sm:$0xff]
      %v266 = vld [vmem:[%s260 + $0x28] sm:$0x1]
      %v267 = vld [vmem:[%s260 + $0x30] sm:$0xff]
      %v268 = vld [vmem:[%s260 + $0x38] sm:$0x1]
      %v269 = vld [vmem:[%s260 + $0x40] sm:$0xff]
      %v270 = vld [vmem:[%s260 + $0x48] sm:$0x1]
      %v271 = vld [vmem:[%s260 + $0x50] sm:$0xff]
      %v272 = vld [vmem:[%s260 + $0x58] sm:$0x1]
      %v273 = vld [vmem:[%s260 + $0x60] sm:$0xff]
      %v274 = vld [vmem:[%s260 + $0x68] sm:$0x1]
      %v275 = vld [vmem:[%s260 + $0x70] sm:$0xff]
      %v276 = vld [vmem:[%s260 + $0x78] sm:$0x1]
      %s277 = sadd.s32 %s241, 1
      %s278 = smul.u32 %s277, 16
      %s279 = scalar_lea.vmem %s225, %s278
      %v280 = vld [vmem:[%s279] sm:$0xff]
      %v281 = vld [vmem:[%s279 + $0x8] sm:$0x1]
      %v282 = vld [vmem:[%s279 + $0x10] sm:$0xff]
      %v283 = vld [vmem:[%s279 + $0x18] sm:$0x1]
      %v284 = vld [vmem:[%s279 + $0x20] sm:$0xff]
      %v285 = vld [vmem:[%s279 + $0x28] sm:$0x1]
      %v286 = vld [vmem:[%s279 + $0x30] sm:$0xff]
      %v287 = vld [vmem:[%s279 + $0x38] sm:$0x1]
      %v288 = vld [vmem:[%s279 + $0x40] sm:$0xff]
      %v289 = vld [vmem:[%s279 + $0x48] sm:$0x1]
      %v290 = vld [vmem:[%s279 + $0x50] sm:$0xff]
      %v291 = vld [vmem:[%s279 + $0x58] sm:$0x1]
      %v292 = vld [vmem:[%s279 + $0x60] sm:$0xff]
      %v293 = vld [vmem:[%s279 + $0x68] sm:$0x1]
      %v294 = vld [vmem:[%s279 + $0x70] sm:$0xff]
      %v295 = vld [vmem:[%s279 + $0x78] sm:$0x1]
      %vm312 = vcmask 1046528
      %v313 = vrot.slane %v244, 1
      %v314 = vrot.slane %v245, 1
      %v315 = vsel %vm312, %v313, %v314
      %v316 = vrot.slane %v246, 1
      %v317 = vrot.slane %v247, 1
      %v318 = vsel %vm312, %v316, %v317
      %v319 = vrot.slane %v248, 1
      %v320 = vrot.slane %v249, 1
      %v321 = vsel %vm312, %v319, %v320
      %v322 = vrot.slane %v250, 1
      %v323 = vrot.slane %v251, 1
      %v324 = vsel %vm312, %v322, %v323
      %v325 = vrot.slane %v252, 1
      %v326 = vrot.slane %v253, 1
      %v327 = vsel %vm312, %v325, %v326
      %v328 = vrot.slane %v254, 1
      %v329 = vrot.slane %v255, 1
      %v330 = vsel %vm312, %v328, %v329
      %v331 = vrot.slane %v256, 1
      %v332 = vrot.slane %v257, 1
      %v333 = vsel %vm312, %v331, %v332
      %v334 = vrot.slane %v258, 1
      %v335 = vrot.slane %v259, 1
      %v336 = vsel %vm312, %v334, %v335
      %337 = vrot.lane.b32.xlu0 %v315, 16
      %v338 = vpop.permute.xlu0 %337
      %339 = vrot.lane.b32.xlu0 %v318, 16
      %v340 = vpop.permute.xlu0 %339
      %341 = vrot.lane.b32.xlu0 %v321, 16
      %v342 = vpop.permute.xlu0 %341
      %343 = vrot.lane.b32.xlu0 %v324, 16
      %v344 = vpop.permute.xlu0 %343
      %345 = vrot.lane.b32.xlu0 %v327, 16
      %v346 = vpop.permute.xlu0 %345
      %347 = vrot.lane.b32.xlu0 %v330, 16
      %v348 = vpop.permute.xlu0 %347
      %349 = vrot.lane.b32.xlu0 %v333, 16
      %v350 = vpop.permute.xlu0 %349
      %351 = vrot.lane.b32.xlu0 %v336, 16
      %v352 = vpop.permute.xlu0 %351
      %369 = vrot.lane.b32.xlu0 %v261, 32
      %v370 = vpop.permute.xlu0 %369
      %371 = vrot.lane.b32.xlu0 %v263, 32
      %v372 = vpop.permute.xlu0 %371
      %373 = vrot.lane.b32.xlu0 %v265, 32
      %v374 = vpop.permute.xlu0 %373
      %375 = vrot.lane.b32.xlu0 %v267, 32
      %v376 = vpop.permute.xlu0 %375
      %377 = vrot.lane.b32.xlu0 %v269, 32
      %v378 = vpop.permute.xlu0 %377
      %379 = vrot.lane.b32.xlu0 %v271, 32
      %v380 = vpop.permute.xlu0 %379
      %381 = vrot.lane.b32.xlu0 %v273, 32
      %v382 = vpop.permute.xlu0 %381
      %383 = vrot.lane.b32.xlu0 %v275, 32
      %v384 = vpop.permute.xlu0 %383
      %v401 = vrot.slane %v261, 1
      %v402 = vrot.slane %v262, 1
      %v403 = vsel %vm312, %v401, %v402
      %v404 = vrot.slane %v263, 1
      %v405 = vrot.slane %v264, 1
      %v406 = vsel %vm312, %v404, %v405
      %v407 = vrot.slane %v265, 1
      %v408 = vrot.slane %v266, 1
      %v409 = vsel %vm312, %v407, %v408
      %v410 = vrot.slane %v267, 1
      %v411 = vrot.slane %v268, 1
      %v412 = vsel %vm312, %v410, %v411
      %v413 = vrot.slane %v269, 1
      %v414 = vrot.slane %v270, 1
      %v415 = vsel %vm312, %v413, %v414
      %v416 = vrot.slane %v271, 1
      %v417 = vrot.slane %v272, 1
      %v418 = vsel %vm312, %v416, %v417
      %v419 = vrot.slane %v273, 1
      %v420 = vrot.slane %v274, 1
      %v421 = vsel %vm312, %v419, %v420
      %v422 = vrot.slane %v275, 1
      %v423 = vrot.slane %v276, 1
      %v424 = vsel %vm312, %v422, %v423
      %425 = vrot.lane.b32.xlu0 %v403, 48
      %v426 = vpop.permute.xlu0 %425
      %427 = vrot.lane.b32.xlu0 %v406, 48
      %v428 = vpop.permute.xlu0 %427
      %429 = vrot.lane.b32.xlu0 %v409, 48
      %v430 = vpop.permute.xlu0 %429
      %431 = vrot.lane.b32.xlu0 %v412, 48
      %v432 = vpop.permute.xlu0 %431
      %433 = vrot.lane.b32.xlu0 %v415, 48
      %v434 = vpop.permute.xlu0 %433
      %435 = vrot.lane.b32.xlu0 %v418, 48
      %v436 = vpop.permute.xlu0 %435
      %437 = vrot.lane.b32.xlu0 %v421, 48
      %v438 = vpop.permute.xlu0 %437
      %439 = vrot.lane.b32.xlu0 %v424, 48
      %v440 = vpop.permute.xlu0 %439
      %457 = vrot.lane.b32.xlu0 %v280, 64
      %v458 = vpop.permute.xlu0 %457
      %459 = vrot.lane.b32.xlu0 %v282, 64
      %v460 = vpop.permute.xlu0 %459
      %461 = vrot.lane.b32.xlu0 %v284, 64
      %v462 = vpop.permute.xlu0 %461
      %463 = vrot.lane.b32.xlu0 %v286, 64
      %v464 = vpop.permute.xlu0 %463
      %465 = vrot.lane.b32.xlu0 %v288, 64
      %v466 = vpop.permute.xlu0 %465
      %467 = vrot.lane.b32.xlu0 %v290, 64
      %v468 = vpop.permute.xlu0 %467
      %469 = vrot.lane.b32.xlu0 %v292, 64
      %v470 = vpop.permute.xlu0 %469
      %471 = vrot.lane.b32.xlu0 %v294, 64
      %v472 = vpop.permute.xlu0 %471
      %v489 = vrot.slane %v280, 1
      %v490 = vrot.slane %v281, 1
      %v491 = vsel %vm312, %v489, %v490
      %v492 = vrot.slane %v282, 1
      %v493 = vrot.slane %v283, 1
      %v494 = vsel %vm312, %v492, %v493
      %v495 = vrot.slane %v284, 1
      %v496 = vrot.slane %v285, 1
      %v497 = vsel %vm312, %v495, %v496
      %v498 = vrot.slane %v286, 1
      %v499 = vrot.slane %v287, 1
      %v500 = vsel %vm312, %v498, %v499
      %v501 = vrot.slane %v288, 1
      %v502 = vrot.slane %v289, 1
      %v503 = vsel %vm312, %v501, %v502
      %v504 = vrot.slane %v290, 1
      %v505 = vrot.slane %v291, 1
      %v506 = vsel %vm312, %v504, %v505
      %v507 = vrot.slane %v292, 1
      %v508 = vrot.slane %v293, 1
      %v509 = vsel %vm312, %v507, %v508
      %v510 = vrot.slane %v294, 1
      %v511 = vrot.slane %v295, 1
      %v512 = vsel %vm312, %v510, %v511
      %513 = vrot.lane.b32.xlu0 %v491, 80
      %v514 = vpop.permute.xlu0 %513
      %515 = vrot.lane.b32.xlu0 %v494, 80
      %v516 = vpop.permute.xlu0 %515
      %517 = vrot.lane.b32.xlu0 %v497, 80
      %v518 = vpop.permute.xlu0 %517
      %519 = vrot.lane.b32.xlu0 %v500, 80
      %v520 = vpop.permute.xlu0 %519
      %521 = vrot.lane.b32.xlu0 %v503, 80
      %v522 = vpop.permute.xlu0 %521
      %523 = vrot.lane.b32.xlu0 %v506, 80
      %v524 = vpop.permute.xlu0 %523
      %525 = vrot.lane.b32.xlu0 %v509, 80
      %v526 = vpop.permute.xlu0 %525
      %527 = vrot.lane.b32.xlu0 %v512, 80
      %v528 = vpop.permute.xlu0 %527
      %vm537 = vcmask 130048
      %v538 = vsel %vm537, %v244, %v338
      %v539 = vsel %vm537, %v246, %v340
      %v540 = vsel %vm537, %v248, %v342
      %v541 = vsel %vm537, %v250, %v344
      %v542 = vsel %vm537, %v252, %v346
      %v543 = vsel %vm537, %v254, %v348
      %v544 = vsel %vm537, %v256, %v350
      %v545 = vsel %vm537, %v258, %v352
      %vm546 = vcmask 261120
      %v547 = vsel %vm546, %v538, %v370
      %v548 = vsel %vm546, %v539, %v372
      %v549 = vsel %vm546, %v540, %v374
      %v550 = vsel %vm546, %v541, %v376
      %v551 = vsel %vm546, %v542, %v378
      %v552 = vsel %vm546, %v543, %v380
      %v553 = vsel %vm546, %v544, %v382
      %v554 = vsel %vm546, %v545, %v384
      %vm555 = vcmask 392192
      %v556 = vsel %vm555, %v547, %v426
      %v557 = vsel %vm555, %v548, %v428
      %v558 = vsel %vm555, %v549, %v430
      %v559 = vsel %vm555, %v550, %v432
      %v560 = vsel %vm555, %v551, %v434
      %v561 = vsel %vm555, %v552, %v436
      %v562 = vsel %vm555, %v553, %v438
      %v563 = vsel %vm555, %v554, %v440
      %vm564 = vcmask 523264
      %v565 = vsel %vm564, %v556, %v458
      %v566 = vsel %vm564, %v557, %v460
      %v567 = vsel %vm564, %v558, %v462
      %v568 = vsel %vm564, %v559, %v464
      %v569 = vsel %vm564, %v560, %v466
      %v570 = vsel %vm564, %v561, %v468
      %v571 = vsel %vm564, %v562, %v470
      %v572 = vsel %vm564, %v563, %v472
      %vm573 = vcmask 654336
      %v574 = vsel %vm573, %v565, %v514
      %v575 = vsel %vm573, %v566, %v516
      %v576 = vsel %vm573, %v567, %v518
      %v577 = vsel %vm573, %v568, %v520
      %v578 = vsel %vm573, %v569, %v522
      %v579 = vsel %vm573, %v570, %v524
      %v580 = vsel %vm573, %v571, %v526
      %v581 = vsel %vm573, %v572, %v528
      %v582 = vld [vmem:[%s2] sm:$0xff]
      %v583 = vld [vmem:[%s2 + $0x8] sm:$0xff]
      %v584 = vld [vmem:[%s2 + $0x10] sm:$0xff]
      %v585 = vld [vmem:[%s2 + $0x18] sm:$0xff]
      %v586 = vld [vmem:[%s2 + $0x20] sm:$0xff]
      %v587 = vld [vmem:[%s2 + $0x28] sm:$0xff]
      %v588 = vld [vmem:[%s2 + $0x30] sm:$0xff]
      %v589 = vld [vmem:[%s2 + $0x38] sm:$0xff]
      %v590 = vld [vmem:[%s2 + $0x40] sm:$0xff]
      %v591 = vld [vmem:[%s2 + $0x48] sm:$0xff]
      %v592 = vld [vmem:[%s2 + $0x50] sm:$0xff]
      %v593 = vld [vmem:[%s2 + $0x58] sm:$0xff]
      %v594 = vld [vmem:[%s3] sm:$0x1]
      %v596 = vperm.slane %v594, 0
      %vm598 = vcmask 785408
      %v600 = vsel %vm598, %v574, 0
      %v603 = vsel %vm598, %v575, 0
      %v606 = vsel %vm598, %v576, 0
      %v609 = vsel %vm598, %v577, 0
      %v612 = vsel %vm598, %v578, 0
      %v615 = vsel %vm598, %v579, 0
      %v618 = vsel %vm598, %v580, 0
      %v621 = vsel %vm598, %v581, 0
      %623 = vmatpush.msra.mxu0 0.0
      %624 = vmatpush.msra.mxu0 0.0
      %625 = vmatpush.msra.mxu0 0.0
      %626 = vmatpush.msra.mxu0 0.0
      %627 = vmatpush.msra.mxu0 %v593
      %628 = vmatpush.msra.mxu0 %v592
      %629 = vmatpush.msra.mxu0 %v591
      %630 = vmatpush.msra.mxu0 %v590
      %631 = vmatpush.msra.mxu0 %v589
      %632 = vmatpush.msra.mxu0 %v588
      %633 = vmatpush.msra.mxu0 %v587
      %634 = vmatpush.msra.mxu0 %v586
      %635 = vmatpush.msra.mxu0 %v585
      %636 = vmatpush.msra.mxu0 %v584
      %637 = vmatpush.msra.mxu0 %v583
      %638 = vmatpush.msra.mxu0 %v582
      %639 = vmatmul.f32.gmra.mxu0 %v600
      %v640 = vpop.f32.mrf.mxu0
      %v641 = vadd.f32 %v596, %v640
      %642 = vmatmul.f32.gmra.mxu0 %v603
      %v643 = vpop.f32.mrf.mxu0
      %v644 = vadd.f32 %v596, %v643
      %645 = vmatmul.f32.gmra.mxu0 %v606
      %v646 = vpop.f32.mrf.mxu0
      %v647 = vadd.f32 %v596, %v646
      %648 = vmatmul.f32.gmra.mxu0 %v609
      %v649 = vpop.f32.mrf.mxu0
      %v650 = vadd.f32 %v596, %v649
      %651 = vmatmul.f32.gmra.mxu0 %v612
      %v652 = vpop.f32.mrf.mxu0
      %v653 = vadd.f32 %v596, %v652
      %654 = vmatmul.f32.gmra.mxu0 %v615
      %v655 = vpop.f32.mrf.mxu0
      %v656 = vadd.f32 %v596, %v655
      %657 = vmatmul.f32.gmra.mxu0 %v618
      %v658 = vpop.f32.mrf.mxu0
      %v659 = vadd.f32 %v596, %v658
      %660 = vmatmul.f32.gmra.mxu0 %v621
      %v661 = vpop.f32.mrf.mxu0
      %v662 = vadd.f32 %v596, %v661
      %663 = vdwg.mxu0
      %v664 = vmax.f32 %v641, 0.0
      %v665 = vmax.f32 %v644, 0.0
      %v666 = vmax.f32 %v647, 0.0
      %v667 = vmax.f32 %v650, 0.0
      %v668 = vmax.f32 %v653, 0.0
      %v669 = vmax.f32 %v656, 0.0
      %v670 = vmax.f32 %v659, 0.0
      %v671 = vmax.f32 %v662, 0.0
      %672 = vst.msk [vmem:[%s239] sm:$0xff] %vm537, %v664
      %673 = vst.msk [vmem:[%s239 + $0x8] sm:$0xff] %vm537, %v665
      %674 = vst.msk [vmem:[%s239 + $0x10] sm:$0xff] %vm537, %v666
      %675 = vst.msk [vmem:[%s239 + $0x18] sm:$0xff] %vm537, %v667
      %676 = vst.msk [vmem:[%s239 + $0x20] sm:$0xff] %vm537, %v668
      %677 = vst.msk [vmem:[%s239 + $0x28] sm:$0xff] %vm537, %v669
      %678 = vst.msk [vmem:[%s239 + $0x30] sm:$0xff] %vm537, %v670
      %679 = vst.msk [vmem:[%s239 + $0x38] sm:$0xff] %vm537, %v671
      %s680 = smul.u32 8, %s20
      %p681 = scmp.lt.s32.totalorder %s19, 1
      %s682 = scalar_select %p681, %s19, 1
      %p683 = scmp.lt.s32.totalorder %s680, 7
      %s684 = scalar_select %p683, %s680, 7
      %s685 = smul.addr %s682, 8
      %s686 = sadd.s32 %s684, %s685
      %s687 = smul.addr %s686, 8
      %s688 = scalar_lea.vmem %s4, %s687
      // Predicated region
      $region37: #{backbone_with_fpn.10} parent=35 // pred_check
        %p689 = pneg %p141
      $region38: #{backbone_with_fpn.10} parent=35 // pred_check_branch
        %691 = sbr.rel (%p689) target = $region40
      $region39: #{backbone_with_fpn.10} parent=35 // pred_region
        %s692 = smul.u32 8, %s20
      $region40: #{backbone_with_fpn.10} parent=35 // pred_fallthru
        _
    $region36: #{backbone_with_fpn.10} parent=5 // pred_fallthru
      _
    %p693 = scmp.le.s32.totalorder 2, %s10
    // Predicated region
    $region41: #{backbone_with_fpn.10} parent=5 // pred_check
      %p694 = pneg %p693
    $region42: #{backbone_with_fpn.10} parent=5 // pred_check_branch
      %696 = sbr.rel (%p694) target = $region44
    $region43: #{backbone_with_fpn.10} parent=5 // pred_region
      %s697 = ssub.s32 %s10, 2
      // Predicated region
      $region45: #{backbone_with_fpn.10} parent=43 // pred_check
        %p698 = pneg %p147
      $region46: #{backbone_with_fpn.10} parent=43 // pred_check_branch
        %700 = sbr.rel (%p698) target = $region48
      $region47: #{backbone_with_fpn.10} parent=43 // pred_region
        %s701 = smul.u32 8, %s22
        %p702 = scmp.lt.s32.totalorder %s21, 1
        %s703 = scalar_select %p702, %s21, 1
        %p704 = scmp.lt.s32.totalorder %s701, 7
        %s705 = scalar_select %p704, %s701, 7
        %s706 = smul.addr %s703, 8
        %s707 = sadd.s32 %s705, %s706
        %s708 = smul.addr %s707, 8
        %s709 = scalar_lea.vmem %s4, %s708
      $region48: #{backbone_with_fpn.10} parent=43 // pred_fallthru
        _
    $region44: #{backbone_with_fpn.10} parent=5 // pred_fallthru
      _
  $region6: #{backbone_with_fpn.10} parent=0 // loop_footer
    %s14 = sadd.s32 1, %s10
  $region7: #{backbone_with_fpn.10} parent=0 // loop_footer_branch
    %9 = sbr.rel target = $region3
  $region8: #{backbone_with_fpn.10} parent=0 // loop_exit
    _

// kernel: backbone_with_fpn.11
$region0: #{backbone_with_fpn.11}
  #allocation0 [shape = 'u32[]', space=smem, size = 0x4, offset = 0x4, fixed_abs, tag = 'smem constant byte address 0x4 - core index']
  #allocation1 [shape = 'u32[72,128]{1,0:T(1,128)}', space=vmem, size = 0x9000, scoped, tag = 'internal scratch']
  %s0 = inlined_call_operand.vmem [shape: f32[2,5,5,32], index: 0, kind: input, shape index: {}]
  %s1 = inlined_call_operand.vmem [shape: f32[2,5,5,32], index: 1, kind: input, shape index: {}]
  %s2 = inlined_call_operand.vmem [shape: f32[192,32], index: 2, kind: input, shape index: {}]
  %s3 = inlined_call_operand.vmem [shape: f32[1,32], index: 3, kind: input, shape index: {}]
  %s4 = inlined_call_operand.vmem [shape: f32[2,4,4,32], index: 4, kind: output, shape index: {}]
  %s5 = sld [smem:[#allocation0]]
  $region49: #{backbone_with_fpn.11} parent=0
    _
  %s7 = ssub.s32 1, %s5
  %s8 = scalar_select 0, %s7, %s5
  loop: start=0, step=1, limit=4
  $region2: #{backbone_with_fpn.11} parent=0 // loop_pre_header
    _
  $region3: #{backbone_with_fpn.11} parent=0 // loop_header
    %s10 = sphi 0, %s14
    %p11 = scmp.ge.s32.totalorder %s10, 4
    %s17 = sphi 0, %s29
    %s18 = sphi 0, %s25
    %s19 = sphi 0, %s17
    %s20 = sphi 0, %s18
    %s21 = sphi 0, %s19
    %s22 = sphi 0, %s20
    %s32 = sphi 0, %s34
    %s35 = sphi 0, %s32
    %s36 = sphi 0, %s35
    %s52 = sphi 0, %s36
    %s58 = sphi 0, %s60
    %s61 = sphi 0, %s58
    %s62 = sphi 0, %s61
    %s78 = sphi 0, %s62
    %s82 = sphi 0, %s82
    %s84 = sphi 0, %s82
    %s85 = sphi 0, %s84
    %s99 = sphi 0, %s85
    %s103 = sphi 0, %s103
    %s105 = sphi 0, %s103
    %s106 = sphi 0, %s105
    %s120 = sphi 0, %s106
    %s128 = sphi 0, %s130
    %s131 = sphi 0, %s128
    %s132 = sphi 0, %s131
    %s148 = sphi 0, %s132
  $region4: #{backbone_with_fpn.11} parent=0 // loop_header_branch
    %13 = sbr.rel (%p11) target = $region8
  $region5: #{backbone_with_fpn.11} parent=0 // loop_body
    %s15 = ssub.s32 %s10, 1
    %s16 = ssub.s32 %s10, 2
    %s23 = sadd.s32 1, %s18
    %p24 = scmp.ge.s32.totalorder %s23, 1
    %s25 = scalar_select %p24, 0, %s23
    %s26 = sadd.s32 1, %s17
    %s27 = scalar_select %p24, %s26, %s17
    %p28 = scmp.ge.s32.totalorder %s27, 2
    %s29 = scalar_select %p28, 0, %s27
    %s30 = ssub.s32 %s17, %s29
    %p31 = scmp.eq.s32.totalorder %s30, 0
    %s33 = sadd.s32 %s32, 1
    %s34 = scalar_select %p31, %s32, %s33
    %p37 = pneg %p31
    %p38 = scmp.eq.s32.totalorder %s10, 1
    %p39 = por %p37, %p38
    %p40 = scmp.ne.s32.totalorder %s32, %s35
    %p41 = scmp.eq.s32.totalorder %s10, 0
    %p42 = por %p40, %p41
    %p43 = scmp.ne.s32.totalorder %s32, %s35
    %p44 = scmp.eq.s32.totalorder %s15, 1
    %p45 = por %p43, %p44
    %p46 = scmp.ne.s32.totalorder %s35, %s36
    %p47 = scmp.eq.s32.totalorder %s15, 0
    %p48 = por %p46, %p47
    %p49 = scmp.ne.s32.totalorder %s35, %s36
    %p50 = scmp.eq.s32.totalorder %s16, 1
    %p51 = por %p49, %p50
    %p53 = scmp.ne.s32.totalorder %s36, %s52
    %p54 = scmp.eq.s32.totalorder %s16, 0
    %p55 = por %p53, %p54
    %s56 = ssub.s32 %s17, %s29
    %p57 = scmp.eq.s32.totalorder %s56, 0
    %s59 = sadd.s32 %s58, 1
    %s60 = scalar_select %p57, %s58, %s59
    %p63 = pneg %p57
    %p64 = scmp.eq.s32.totalorder %s10, 1
    %p65 = por %p63, %p64
    %p66 = scmp.ne.s32.totalorder %s58, %s61
    %p67 = scmp.eq.s32.totalorder %s10, 0
    %p68 = por %p66, %p67
    %p69 = scmp.ne.s32.totalorder %s58, %s61
    %p70 = scmp.eq.s32.totalorder %s15, 1
    %p71 = por %p69, %p70
    %p72 = scmp.ne.s32.totalorder %s61, %s62
    %p73 = scmp.eq.s32.totalorder %s15, 0
    %p74 = por %p72, %p73
    %p75 = scmp.ne.s32.totalorder %s61, %s62
    %p76 = scmp.eq.s32.totalorder %s16, 1
    %p77 = por %p75, %p76
    %p79 = scmp.ne.s32.totalorder %s62, %s78
    %p80 = scmp.eq.s32.totalorder %s16, 0
    %p81 = por %p79, %p80
    %s83 = sadd.s32 %s82, 1
    %p86 = scmp.eq.s32.totalorder %s10, 1
    %p87 = scmp.ne.s32.totalorder %s82, %s84
    %p88 = scmp.eq.s32.totalorder %s10, 0
    %p89 = por %p87, %p88
    %p90 = scmp.ne.s32.totalorder %s82, %s84
    %p91 = scmp.eq.s32.totalorder %s15, 1
    %p92 = por %p90, %p91
    %p93 = scmp.ne.s32.totalorder %s84, %s85
    %p94 = scmp.eq.s32.totalorder %s15, 0
    %p95 = por %p93, %p94
    %p96 = scmp.ne.s32.totalorder %s84, %s85
    %p97 = scmp.eq.s32.totalorder %s16, 1
    %p98 = por %p96, %p97
    %p100 = scmp.ne.s32.totalorder %s85, %s99
    %p101 = scmp.eq.s32.totalorder %s16, 0
    %p102 = por %p100, %p101
    %s104 = sadd.s32 %s103, 1
    %p107 = scmp.eq.s32.totalorder %s10, 1
    %p108 = scmp.ne.s32.totalorder %s103, %s105
    %p109 = scmp.eq.s32.totalorder %s10, 0
    %p110 = por %p108, %p109
    %p111 = scmp.ne.s32.totalorder %s103, %s105
    %p112 = scmp.eq.s32.totalorder %s15, 1
    %p113 = por %p111, %p112
    %p114 = scmp.ne.s32.totalorder %s105, %s106
    %p115 = scmp.eq.s32.totalorder %s15, 0
    %p116 = por %p114, %p115
    %p117 = scmp.ne.s32.totalorder %s105, %s106
    %p118 = scmp.eq.s32.totalorder %s16, 1
    %p119 = por %p117, %p118
    %p121 = scmp.ne.s32.totalorder %s106, %s120
    %p122 = scmp.eq.s32.totalorder %s16, 0
    %p123 = por %p121, %p122
    %s124 = ssub.s32 %s17, %s29
    %s125 = ssub.s32 %s18, %s25
    %s126 = sor.u32 %s124, %s125
    %p127 = scmp.eq.s32.totalorder %s126, 0
    %s129 = sadd.s32 %s128, 1
    %s130 = scalar_select %p127, %s128, %s129
    %p133 = pneg %p127
    %p134 = scmp.eq.s32.totalorder %s10, 1
    %p135 = por %p133, %p134
    %p136 = scmp.ne.s32.totalorder %s128, %s131
    %p137 = scmp.eq.s32.totalorder %s10, 0
    %p138 = por %p136, %p137
    %p139 = scmp.ne.s32.totalorder %s128, %s131
    %p140 = scmp.eq.s32.totalorder %s15, 1
    %p141 = por %p139, %p140
    %p142 = scmp.ne.s32.totalorder %s131, %s132
    %p143 = scmp.eq.s32.totalorder %s15, 0
    %p144 = por %p142, %p143
    %p145 = scmp.ne.s32.totalorder %s131, %s132
    %p146 = scmp.eq.s32.totalorder %s16, 1
    %p147 = por %p145, %p146
    %p149 = scmp.ne.s32.totalorder %s132, %s148
    %p150 = scmp.eq.s32.totalorder %s16, 0
    %p151 = por %p149, %p150
    %p152 = scmp.le.s32.totalorder 1, %s10
    %p153 = scmp.lt.s32.totalorder %s10, 3
    %p154 = pnand %p152, %p153
    %p155 = pneg %p154
    // Predicated region
    $region9: #{backbone_with_fpn.11} parent=5 // pred_check
      _
    $region10: #{backbone_with_fpn.11} parent=5 // pred_check_branch
      %157 = sbr.rel (%p154) target = $region12
    $region11: #{backbone_with_fpn.11} parent=5 // pred_region
      %s158 = ssub.s32 %s10, 1
      // Predicated region
      $region13: #{backbone_with_fpn.11} parent=11 // pred_check
        %p159 = pneg %p95
      $region14: #{backbone_with_fpn.11} parent=11 // pred_check_branch
        %161 = sbr.rel (%p159) target = $region16
      $region15: #{backbone_with_fpn.11} parent=11 // pred_region
        _
      $region16: #{backbone_with_fpn.11} parent=11 // pred_fallthru
        _
      // Predicated region
      $region17: #{backbone_with_fpn.11} parent=11 // pred_check
        %p162 = pneg %p116
      $region18: #{backbone_with_fpn.11} parent=11 // pred_check_branch
        %164 = sbr.rel (%p162) target = $region20
      $region19: #{backbone_with_fpn.11} parent=11 // pred_region
        _
      $region20: #{backbone_with_fpn.11} parent=11 // pred_fallthru
        _
    $region12: #{backbone_with_fpn.11} parent=5 // pred_fallthru
      _
    %p165 = scmp.lt.s32.totalorder %s10, 2
    // Predicated region
    $region21: #{backbone_with_fpn.11} parent=5 // pred_check
      %p166 = pneg %p165
    $region22: #{backbone_with_fpn.11} parent=5 // pred_check_branch
      %168 = sbr.rel (%p166) target = $region24
    $region23: #{backbone_with_fpn.11} parent=5 // pred_region
      // Predicated region
      $region25: #{backbone_with_fpn.11} parent=23 // pred_check
        %p169 = pneg %p42
      $region26: #{backbone_with_fpn.11} parent=23 // pred_check_branch
        %171 = sbr.rel (%p169) target = $region28
      $region27: #{backbone_with_fpn.11} parent=23 // pred_region
        %p172 = scmp.lt.s32.totalorder %s17, 1
        %s173 = scalar_select %p172, %s17, 1
        %s174 = smul.addr %s173, 5
        %s175 = smul.addr %s174, 8
        %s176 = scalar_lea.vmem %s0, %s175
      $region28: #{backbone_with_fpn.11} parent=23 // pred_fallthru
        _
      // Predicated region
      $region29: #{backbone_with_fpn.11} parent=23 // pred_check
        %p177 = pneg %p68
      $region30: #{backbone_with_fpn.11} parent=23 // pred_check_branch
        %179 = sbr.rel (%p177) target = $region32
      $region31: #{backbone_with_fpn.11} parent=23 // pred_region
        %p180 = scmp.lt.s32.totalorder %s17, 1
        %s181 = scalar_select %p180, %s17, 1
        %s182 = smul.addr %s181, 5
        %s183 = smul.addr %s182, 8
        %s184 = scalar_lea.vmem %s1, %s183
      $region32: #{backbone_with_fpn.11} parent=23 // pred_fallthru
        _
    $region24: #{backbone_with_fpn.11} parent=5 // pred_fallthru
      _
    %p185 = scmp.le.s32.totalorder 1, %s10
    %p186 = scmp.lt.s32.totalorder %s10, 3
    %p187 = pnand %p185, %p186
    %p188 = pneg %p187
    // Predicated region
    $region33: #{backbone_with_fpn.11} parent=5 // pred_check
      _
    $region34: #{backbone_with_fpn.11} parent=5 // pred_check_branch
      %190 = sbr.rel (%p187) target = $region36
    $region35: #{backbone_with_fpn.11} parent=5 // pred_region
      %s191 = ssub.s32 %s10, 1
      %p192 = scmp.lt.s32.totalorder %s19, 1
      %s193 = scalar_select %p192, %s19, 1
      %s194 = smul.addr %s193, 5
      %s195 = smul.addr %s194, 8
      %s196 = scalar_lea.vmem %s0, %s195
      %p197 = pneg %p48
      %p198 = pneg %p45
      %p199 = scmp.lt.s32.totalorder %s19, 1
      %s200 = scalar_select %p199, %s19, 1
      %s201 = smul.addr %s200, 5
      %s202 = smul.addr %s201, 8
      %s203 = scalar_lea.vmem %s1, %s202
      %p204 = pneg %p74
      %p205 = pneg %p71
      %p206 = pneg %p95
      %p207 = pneg %p92
      %p208 = pneg %p116
      %p209 = pneg %p113
      %p210 = pneg %p144
      %p211 = pneg %p141
      %s212 = smul.u32 4, %s20
      %p213 = scmp.lt.s32.totalorder %s19, 1
      %s214 = scalar_select %p213, %s19, 1
      %p215 = scmp.lt.s32.totalorder %s212, 3
      %s216 = scalar_select %p215, %s212, 3
      %s217 = smul.addr %s214, 4
      %s218 = sadd.s32 %s216, %s217
      %s219 = smul.addr %s218, 4
      %s220 = scalar_lea.vmem %s4, %s219
      %p221 = scmp.lt.s32.totalorder %s19, 1
      %s222 = scalar_select %p221, %s19, 1
      %s223 = smul.addr %s222, 5
      %s224 = smul.addr %s223, 8
      %s225 = scalar_lea.vmem %s0, %s224
      %p226 = scmp.lt.s32.totalorder %s19, 1
      %s227 = scalar_select %p226, %s19, 1
      %s228 = smul.addr %s227, 5
      %s229 = smul.addr %s228, 8
      %s230 = scalar_lea.vmem %s1, %s229
      %s231 = smul.u32 4, %s20
      %p232 = scmp.lt.s32.totalorder %s19, 1
      %s233 = scalar_select %p232, %s19, 1
      %p234 = scmp.lt.s32.totalorder %s231, 3
      %s235 = scalar_select %p234, %s231, 3
      %s236 = smul.addr %s233, 4
      %s237 = sadd.s32 %s235, %s236
      %s238 = smul.addr %s237, 4
      %s239 = scalar_lea.vmem %s4, %s238
      %s240 = smul.u32 4, %s20
      %s241 = smul.u32 %s20, 4
      %s242 = smul.u32 %s241, 8
      %s243 = scalar_lea.vmem %s225, %s242
      %v244 = vld [vmem:[%s243] sm:$0x1f]
      %v245 = vld [vmem:[%s243 + $0x8] sm:$0x1f]
      %v246 = vld [vmem:[%s243 + $0x10] sm:$0x1f]
      %v247 = vld [vmem:[%s243 + $0x18] sm:$0x1f]
      %s248 = scalar_lea.vmem %s230, %s242
      %v249 = vld [vmem:[%s248] sm:$0x1f]
      %v250 = vld [vmem:[%s248 + $0x8] sm:$0x1f]
      %v251 = vld [vmem:[%s248 + $0x10] sm:$0x1f]
      %v252 = vld [vmem:[%s248 + $0x18] sm:$0x1f]
      %s253 = sadd.s32 %s241, 1
      %s254 = smul.u32 %s253, 8
      %s255 = scalar_lea.vmem %s225, %s254
      %v256 = vld [vmem:[%s255] sm:$0x1f]
      %v257 = vld [vmem:[%s255 + $0x8] sm:$0x1f]
      %v258 = vld [vmem:[%s255 + $0x10] sm:$0x1f]
      %v259 = vld [vmem:[%s255 + $0x18] sm:$0x1f]
      %v264 = vrot.slane %v244, 1
      %v265 = vrot.slane %v245, 1
      %v266 = vrot.slane %v246, 1
      %v267 = vrot.slane %v247, 1
      %268 = vrot.lane.b32.xlu0 %v264, 32
      %v269 = vpop.permute.xlu0 %268
      %270 = vrot.lane.b32.xlu0 %v265, 32
      %v271 = vpop.permute.xlu0 %270
      %272 = vrot.lane.b32.xlu0 %v266, 32
      %v273 = vpop.permute.xlu0 %272
      %274 = vrot.lane.b32.xlu0 %v267, 32
      %v275 = vpop.permute.xlu0 %274
      %284 = vrot.lane.b32.xlu0 %v249, 64
      %v285 = vpop.permute.xlu0 %284
      %286 = vrot.lane.b32.xlu0 %v250, 64
      %v287 = vpop.permute.xlu0 %286
      %288 = vrot.lane.b32.xlu0 %v251, 64
      %v289 = vpop.permute.xlu0 %288
      %290 = vrot.lane.b32.xlu0 %v252, 64
      %v291 = vpop.permute.xlu0 %290
      %v296 = vrot.slane %v249, 1
      %v297 = vrot.slane %v250, 1
      %v298 = vrot.slane %v251, 1
      %v299 = vrot.slane %v252, 1
      %300 = vrot.lane.b32.xlu0 %v296, 96
      %v301 = vpop.permute.xlu0 %300
      %302 = vrot.lane.b32.xlu0 %v297, 96
      %v303 = vpop.permute.xlu0 %302
      %304 = vrot.lane.b32.xlu0 %v298, 96
      %v305 = vpop.permute.xlu0 %304
      %306 = vrot.lane.b32.xlu0 %v299, 96
      %v307 = vpop.permute.xlu0 %306
      %v316 = vrot.slane %v256, 1
      %v317 = vrot.slane %v257, 1
      %v318 = vrot.slane %v258, 1
      %v319 = vrot.slane %v259, 1
      %320 = vrot.lane.b32.xlu0 %v316, 32
      %v321 = vpop.permute.xlu0 %320
      %322 = vrot.lane.b32.xlu0 %v317, 32
      %v323 = vpop.permute.xlu0 %322
      %324 = vrot.lane.b32.xlu0 %v318, 32
      %v325 = vpop.permute.xlu0 %324
      %326 = vrot.lane.b32.xlu0 %v319, 32
      %v327 = vpop.permute.xlu0 %326
      %vm332 = vcmask 261120
      %v333 = vsel %vm332, %v244, %v269
      %v334 = vsel %vm332, %v245, %v271
      %v335 = vsel %vm332, %v246, %v273
      %v336 = vsel %vm332, %v247, %v275
      %vm337 = vcmask 523264
      %v338 = vsel %vm337, %v333, %v285
      %v339 = vsel %vm337, %v334, %v287
      %v340 = vsel %vm337, %v335, %v289
      %v341 = vsel %vm337, %v336, %v291
      %vm342 = vcmask 785408
      %v343 = vsel %vm342, %v338, %v301
      %v344 = vsel %vm342, %v339, %v303
      %v345 = vsel %vm342, %v340, %v305
      %v346 = vsel %vm342, %v341, %v307
      %v347 = vsel %vm332, %v256, %v321
      %v348 = vsel %vm332, %v257, %v323
      %v349 = vsel %vm332, %v258, %v325
      %v350 = vsel %vm332, %v259, %v327
      %v359 = vrot.slane %v347, 4
      %v360 = vrot.slane %v348, 4
      %v361 = vrot.slane %v349, 4
      %v362 = vrot.slane %v350, 4
      %vm363 = vcmask 1043456
      %v364 = vsel %vm363, %v343, %v359
      %v365 = vsel %vm363, %v344, %v360
      %v366 = vsel %vm363, %v345, %v361
      %v367 = vsel %vm363, %v346, %v362
      %v368 = vld [vmem:[%s2] sm:$0xff]
      %v369 = vld [vmem:[%s2 + $0x8] sm:$0xff]
      %v370 = vld [vmem:[%s2 + $0x10] sm:$0xff]
      %v371 = vld [vmem:[%s2 + $0x18] sm:$0xff]
      %v372 = vld [vmem:[%s2 + $0x20] sm:$0xff]
      %v373 = vld [vmem:[%s2 + $0x28] sm:$0xff]
      %v374 = vld [vmem:[%s2 + $0x30] sm:$0xff]
      %v375 = vld [vmem:[%s2 + $0x38] sm:$0xff]
      %v376 = vld [vmem:[%s2 + $0x40] sm:$0xff]
      %v377 = vld [vmem:[%s2 + $0x48] sm:$0xff]
      %v378 = vld [vmem:[%s2 + $0x50] sm:$0xff]
      %v379 = vld [vmem:[%s2 + $0x58] sm:$0xff]
      %v380 = vld [vmem:[%s2 + $0x60] sm:$0xff]
      %v381 = vld [vmem:[%s2 + $0x68] sm:$0xff]
      %v382 = vld [vmem:[%s2 + $0x70] sm:$0xff]
      %v383 = vld [vmem:[%s2 + $0x78] sm:$0xff]
      %v384 = vld [vmem:[%s2 + $0x80] sm:$0xff]
      %v385 = vld [vmem:[%s2 + $0x88] sm:$0xff]
      %v386 = vld [vmem:[%s2 + $0x90] sm:$0xff]
      %v387 = vld [vmem:[%s2 + $0x98] sm:$0xff]
      %v388 = vld [vmem:[%s2 + $0xa0] sm:$0xff]
      %v389 = vld [vmem:[%s2 + $0xa8] sm:$0xff]
      %v390 = vld [vmem:[%s2 + $0xb0] sm:$0xff]
      %v391 = vld [vmem:[%s2 + $0xb8] sm:$0xff]
      %v392 = vld [vmem:[%s3] sm:$0x1]
      %v394 = vperm.slane %v392, 0
      %396 = vst [vmem:[#allocation1] ss:$2 sm:$0xff] %v364
      %s397 = scalar_lea.vmem [#allocation1], 1
      %398 = vst [vmem:[%s397] ss:$2 sm:$0xff] %v365
      %s399 = scalar_lea.vmem [#allocation1], 16
      %400 = vst [vmem:[%s399] ss:$2 sm:$0xff] %v366
      %s401 = scalar_lea.vmem [#allocation1], 17
      %402 = vst [vmem:[%s401] ss:$2 sm:$0xff] %v367
      %v403 = vld.sshfl [vmem:[#allocation1] sm:$0xff pattern:$0x75316420]
      %v404 = vld.sshfl [vmem:[#allocation1 + $0x8] sm:$0xff pattern:$0x75316420]
      %v405 = vld.sshfl [vmem:[#allocation1 + $0x10] sm:$0xff pattern:$0x75316420]
      %v406 = vld.sshfl [vmem:[#allocation1 + $0x18] sm:$0xff pattern:$0x75316420]
      %v409 = vsel %vm337, %v404, 0
      %v411 = vsel %vm337, %v406, 0
      %413 = vmatpush.msra.mxu0 %v383
      %414 = vmatpush.msra.mxu0 %v382
      %415 = vmatpush.msra.mxu0 %v381
      %416 = vmatpush.msra.mxu0 %v380
      %417 = vmatpush.msra.mxu0 %v379
      %418 = vmatpush.msra.mxu0 %v378
      %419 = vmatpush.msra.mxu0 %v377
      %420 = vmatpush.msra.mxu0 %v376
      %421 = vmatpush.msra.mxu0 %v375
      %422 = vmatpush.msra.mxu0 %v374
      %423 = vmatpush.msra.mxu0 %v373
      %424 = vmatpush.msra.mxu0 %v372
      %425 = vmatpush.msra.mxu0 %v371
      %426 = vmatpush.msra.mxu0 %v370
      %427 = vmatpush.msra.mxu0 %v369
      %428 = vmatpush.msra.mxu0 %v368
      %429 = vmatmul.f32.gmra.mxu0 %v403
      %v430 = vpop.f32.mrf.mxu0
      %v431 = vadd.f32 %v394, %v430
      %432 = vmatmul.f32.gmra.mxu0 %v405
      %v433 = vpop.f32.mrf.mxu0
      %v434 = vadd.f32 %v394, %v433
      %435 = vdwg.mxu0
      %436 = vmatpush.msra.mxu0 0.0
      %437 = vmatpush.msra.mxu0 0.0
      %438 = vmatpush.msra.mxu0 0.0
      %439 = vmatpush.msra.mxu0 0.0
      %440 = vmatpush.msra.mxu0 0.0
      %441 = vmatpush.msra.mxu0 0.0
      %442 = vmatpush.msra.mxu0 0.0
      %443 = vmatpush.msra.mxu0 0.0
      %444 = vmatpush.msra.mxu0 %v391
      %445 = vmatpush.msra.mxu0 %v390
      %446 = vmatpush.msra.mxu0 %v389
      %447 = vmatpush.msra.mxu0 %v388
      %448 = vmatpush.msra.mxu0 %v387
      %449 = vmatpush.msra.mxu0 %v386
      %450 = vmatpush.msra.mxu0 %v385
      %451 = vmatpush.msra.mxu0 %v384
      %452 = vmatmul.f32.gmra.mxu0 %v409
      %v453 = vpop.f32.mrf.mxu0
      %v454 = vadd.f32 %v431, %v453
      %455 = vmatmul.f32.gmra.mxu0 %v411
      %v456 = vpop.f32.mrf.mxu0
      %v457 = vadd.f32 %v434, %v456
      %458 = vdwg.mxu0
      %v459 = vmax.f32 %v454, 0.0
      %v460 = vmax.f32 %v457, 0.0
      %v463 = vrot.slane %v459, 4
      %v464 = vrot.slane %v460, 4
      %vm467 = vcmask 257024
      %468 = vst.msk [vmem:[%s239] sm:$0xf] %vm467, %v459
      %469 = vst.msk [vmem:[%s239 + $0x4] sm:$0xf] %vm467, %v463
      %470 = vst.msk [vmem:[%s239 + $0x8] sm:$0xf] %vm467, %v460
      %471 = vst.msk [vmem:[%s239 + $0xc] sm:$0xf] %vm467, %v464
      %s472 = smul.u32 4, %s20
      %p473 = scmp.lt.s32.totalorder %s19, 1
      %s474 = scalar_select %p473, %s19, 1
      %p475 = scmp.lt.s32.totalorder %s472, 3
      %s476 = scalar_select %p475, %s472, 3
      %s477 = smul.addr %s474, 4
      %s478 = sadd.s32 %s476, %s477
      %s479 = smul.addr %s478, 4
      %s480 = scalar_lea.vmem %s4, %s479
      // Predicated region
      $region37: #{backbone_with_fpn.11} parent=35 // pred_check
        %p481 = pneg %p141
      $region38: #{backbone_with_fpn.11} parent=35 // pred_check_branch
        %483 = sbr.rel (%p481) target = $region40
      $region39: #{backbone_with_fpn.11} parent=35 // pred_region
        %s484 = smul.u32 4, %s20
      $region40: #{backbone_with_fpn.11} parent=35 // pred_fallthru
        _
    $region36: #{backbone_with_fpn.11} parent=5 // pred_fallthru
      _
    %p485 = scmp.le.s32.totalorder 2, %s10
    // Predicated region
    $region41: #{backbone_with_fpn.11} parent=5 // pred_check
      %p486 = pneg %p485
    $region42: #{backbone_with_fpn.11} parent=5 // pred_check_branch
      %488 = sbr.rel (%p486) target = $region44
    $region43: #{backbone_with_fpn.11} parent=5 // pred_region
      %s489 = ssub.s32 %s10, 2
      // Predicated region
      $region45: #{backbone_with_fpn.11} parent=43 // pred_check
        %p490 = pneg %p147
      $region46: #{backbone_with_fpn.11} parent=43 // pred_check_branch
        %492 = sbr.rel (%p490) target = $region48
      $region47: #{backbone_with_fpn.11} parent=43 // pred_region
        %s493 = smul.u32 4, %s22
        %p494 = scmp.lt.s32.totalorder %s21, 1
        %s495 = scalar_select %p494, %s21, 1
        %p496 = scmp.lt.s32.totalorder %s493, 3
        %s497 = scalar_select %p496, %s493, 3
        %s498 = smul.addr %s495, 4
        %s499 = sadd.s32 %s497, %s498
        %s500 = smul.addr %s499, 4
        %s501 = scalar_lea.vmem %s4, %s500
      $region48: #{backbone_with_fpn.11} parent=43 // pred_fallthru
        _
    $region44: #{backbone_with_fpn.11} parent=5 // pred_fallthru
      _
  $region6: #{backbone_with_fpn.11} parent=0 // loop_footer
    %s14 = sadd.s32 1, %s10
  $region7: #{backbone_with_fpn.11} parent=0 // loop_footer_branch
    %9 = sbr.rel target = $region3
  $region8: #{backbone_with_fpn.11} parent=0 // loop_exit
    _

// kernel: backbone_with_fpn.9
$region0: #{backbone_with_fpn.9}
  #allocation0 [shape = 'u32[]', space=smem, size = 0x4, offset = 0x4, fixed_abs, tag = 'smem constant byte address 0x4 - core index']
  #allocation1 [shape = 'u32[72,128]{1,0:T(1,128)}', space=vmem, size = 0x9000, scoped, tag = 'internal scratch']
  %s0 = inlined_call_operand.vmem [shape: f32[2,17,17,8], index: 0, kind: input, shape index: {}]
  %s1 = inlined_call_operand.vmem [shape: f32[2,17,17,8], index: 1, kind: input, shape index: {}]
  %s2 = inlined_call_operand.vmem [shape: f32[48,8], index: 2, kind: input, shape index: {}]
  %s3 = inlined_call_operand.vmem [shape: f32[1,8], index: 3, kind: input, shape index: {}]
  %s4 = inlined_call_operand.vmem [shape: f32[2,16,16,8], index: 4, kind: output, shape index: {}]
  %s5 = sld [smem:[#allocation0]]
  $region49: #{backbone_with_fpn.9} parent=0
    _
  %s7 = ssub.s32 1, %s5
  %s8 = scalar_select 0, %s7, %s5
  loop: start=0, step=1, limit=4
  $region2: #{backbone_with_fpn.9} parent=0 // loop_pre_header
    _
  $region3: #{backbone_with_fpn.9} parent=0 // loop_header
    %s10 = sphi 0, %s14
    %p11 = scmp.ge.s32.totalorder %s10, 4
    %s17 = sphi 0, %s29
    %s18 = sphi 0, %s25
    %s19 = sphi 0, %s17
    %s20 = sphi 0, %s18
    %s21 = sphi 0, %s19
    %s22 = sphi 0, %s20
    %s32 = sphi 0, %s34
    %s35 = sphi 0, %s32
    %s36 = sphi 0, %s35
    %s52 = sphi 0, %s36
    %s58 = sphi 0, %s60
    %s61 = sphi 0, %s58
    %s62 = sphi 0, %s61
    %s78 = sphi 0, %s62
    %s82 = sphi 0, %s82
    %s84 = sphi 0, %s82
    %s85 = sphi 0, %s84
    %s99 = sphi 0, %s85
    %s103 = sphi 0, %s103
    %s105 = sphi 0, %s103
    %s106 = sphi 0, %s105
    %s120 = sphi 0, %s106
    %s128 = sphi 0, %s130
    %s131 = sphi 0, %s128
    %s132 = sphi 0, %s131
    %s148 = sphi 0, %s132
  $region4: #{backbone_with_fpn.9} parent=0 // loop_header_branch
    %13 = sbr.rel (%p11) target = $region8
  $region5: #{backbone_with_fpn.9} parent=0 // loop_body
    %s15 = ssub.s32 %s10, 1
    %s16 = ssub.s32 %s10, 2
    %s23 = sadd.s32 1, %s18
    %p24 = scmp.ge.s32.totalorder %s23, 1
    %s25 = scalar_select %p24, 0, %s23
    %s26 = sadd.s32 1, %s17
    %s27 = scalar_select %p24, %s26, %s17
    %p28 = scmp.ge.s32.totalorder %s27, 2
    %s29 = scalar_select %p28, 0, %s27
    %s30 = ssub.s32 %s17, %s29
    %p31 = scmp.eq.s32.totalorder %s30, 0
    %s33 = sadd.s32 %s32, 1
    %s34 = scalar_select %p31, %s32, %s33
    %p37 = pneg %p31
    %p38 = scmp.eq.s32.totalorder %s10, 1
    %p39 = por %p37, %p38
    %p40 = scmp.ne.s32.totalorder %s32, %s35
    %p41 = scmp.eq.s32.totalorder %s10, 0
    %p42 = por %p40, %p41
    %p43 = scmp.ne.s32.totalorder %s32, %s35
    %p44 = scmp.eq.s32.totalorder %s15, 1
    %p45 = por %p43, %p44
    %p46 = scmp.ne.s32.totalorder %s35, %s36
    %p47 = scmp.eq.s32.totalorder %s15, 0
    %p48 = por %p46, %p47
    %p49 = scmp.ne.s32.totalorder %s35, %s36
    %p50 = scmp.eq.s32.totalorder %s16, 1
    %p51 = por %p49, %p50
    %p53 = scmp.ne.s32.totalorder %s36, %s52
    %p54 = scmp.eq.s32.totalorder %s16, 0
    %p55 = por %p53, %p54
    %s56 = ssub.s32 %s17, %s29
    %p57 = scmp.eq.s32.totalorder %s56, 0
    %s59 = sadd.s32 %s58, 1
    %s60 = scalar_select %p57, %s58, %s59
    %p63 = pneg %p57
    %p64 = scmp.eq.s32.totalorder %s10, 1
    %p65 = por %p63, %p64
    %p66 = scmp.ne.s32.totalorder %s58, %s61
    %p67 = scmp.eq.s32.totalorder %s10, 0
    %p68 = por %p66, %p67
    %p69 = scmp.ne.s32.totalorder %s58, %s61
    %p70 = scmp.eq.s32.totalorder %s15, 1
    %p71 = por %p69, %p70
    %p72 = scmp.ne.s32.totalorder %s61, %s62
    %p73 = scmp.eq.s32.totalorder %s15, 0
    %p74 = por %p72, %p73
    %p75 = scmp.ne.s32.totalorder %s61, %s62
    %p76 = scmp.eq.s32.totalorder %s16, 1
    %p77 = por %p75, %p76
    %p79 = scmp.ne.s32.totalorder %s62, %s78
    %p80 = scmp.eq.s32.totalorder %s16, 0
    %p81 = por %p79, %p80
    %s83 = sadd.s32 %s82, 1
    %p86 = scmp.eq.s32.totalorder %s10, 1
    %p87 = scmp.ne.s32.totalorder %s82, %s84
    %p88 = scmp.eq.s32.totalorder %s10, 0
    %p89 = por %p87, %p88
    %p90 = scmp.ne.s32.totalorder %s82, %s84
    %p91 = scmp.eq.s32.totalorder %s15, 1
    %p92 = por %p90, %p91
    %p93 = scmp.ne.s32.totalorder %s84, %s85
    %p94 = scmp.eq.s32.totalorder %s15, 0
    %p95 = por %p93, %p94
    %p96 = scmp.ne.s32.totalorder %s84, %s85
    %p97 = scmp.eq.s32.totalorder %s16, 1
    %p98 = por %p96, %p97
    %p100 = scmp.ne.s32.totalorder %s85, %s99
    %p101 = scmp.eq.s32.totalorder %s16, 0
    %p102 = por %p100, %p101
    %s104 = sadd.s32 %s103, 1
    %p107 = scmp.eq.s32.totalorder %s10, 1
    %p108 = scmp.ne.s32.totalorder %s103, %s105
    %p109 = scmp.eq.s32.totalorder %s10, 0
    %p110 = por %p108, %p109
    %p111 = scmp.ne.s32.totalorder %s103, %s105
    %p112 = scmp.eq.s32.totalorder %s15, 1
    %p113 = por %p111, %p112
    %p114 = scmp.ne.s32.totalorder %s105, %s106
    %p115 = scmp.eq.s32.totalorder %s15, 0
    %p116 = por %p114, %p115
    %p117 = scmp.ne.s32.totalorder %s105, %s106
    %p118 = scmp.eq.s32.totalorder %s16, 1
    %p119 = por %p117, %p118
    %p121 = scmp.ne.s32.totalorder %s106, %s120
    %p122 = scmp.eq.s32.totalorder %s16, 0
    %p123 = por %p121, %p122
    %s124 = ssub.s32 %s17, %s29
    %s125 = ssub.s32 %s18, %s25
    %s126 = sor.u32 %s124, %s125
    %p127 = scmp.eq.s32.totalorder %s126, 0
    %s129 = sadd.s32 %s128, 1
    %s130 = scalar_select %p127, %s128, %s129
    %p133 = pneg %p127
    %p134 = scmp.eq.s32.totalorder %s10, 1
    %p135 = por %p133, %p134
    %p136 = scmp.ne.s32.totalorder %s128, %s131
    %p137 = scmp.eq.s32.totalorder %s10, 0
    %p138 = por %p136, %p137
    %p139 = scmp.ne.s32.totalorder %s128, %s131
    %p140 = scmp.eq.s32.totalorder %s15, 1
    %p141 = por %p139, %p140
    %p142 = scmp.ne.s32.totalorder %s131, %s132
    %p143 = scmp.eq.s32.totalorder %s15, 0
    %p144 = por %p142, %p143
    %p145 = scmp.ne.s32.totalorder %s131, %s132
    %p146 = scmp.eq.s32.totalorder %s16, 1
    %p147 = por %p145, %p146
    %p149 = scmp.ne.s32.totalorder %s132, %s148
    %p150 = scmp.eq.s32.totalorder %s16, 0
    %p151 = por %p149, %p150
    %p152 = scmp.le.s32.totalorder 1, %s10
    %p153 = scmp.lt.s32.totalorder %s10, 3
    %p154 = pnand %p152, %p153
    %p155 = pneg %p154
    // Predicated region
    $region9: #{backbone_with_fpn.9} parent=5 // pred_check
      _
    $region10: #{backbone_with_fpn.9} parent=5 // pred_check_branch
      %157 = sbr.rel (%p154) target = $region12
    $region11: #{backbone_with_fpn.9} parent=5 // pred_region
      %s158 = ssub.s32 %s10, 1
      // Predicated region
      $region13: #{backbone_with_fpn.9} parent=11 // pred_check
        %p159 = pneg %p95
      $region14: #{backbone_with_fpn.9} parent=11 // pred_check_branch
        %161 = sbr.rel (%p159) target = $region16
      $region15: #{backbone_with_fpn.9} parent=11 // pred_region
        _
      $region16: #{backbone_with_fpn.9} parent=11 // pred_fallthru
        _
      // Predicated region
      $region17: #{backbone_with_fpn.9} parent=11 // pred_check
        %p162 = pneg %p116
      $region18: #{backbone_with_fpn.9} parent=11 // pred_check_branch
        %164 = sbr.rel (%p162) target = $region20
      $region19: #{backbone_with_fpn.9} parent=11 // pred_region
        _
      $region20: #{backbone_with_fpn.9} parent=11 // pred_fallthru
        _
    $region12: #{backbone_with_fpn.9} parent=5 // pred_fallthru
      _
    %p165 = scmp.lt.s32.totalorder %s10, 2
    // Predicated region
    $region21: #{backbone_with_fpn.9} parent=5 // pred_check
      %p166 = pneg %p165
    $region22: #{backbone_with_fpn.9} parent=5 // pred_check_branch
      %168 = sbr.rel (%p166) target = $region24
    $region23: #{backbone_with_fpn.9} parent=5 // pred_region
      // Predicated region
      $region25: #{backbone_with_fpn.9} parent=23 // pred_check
        %p169 = pneg %p42
      $region26: #{backbone_with_fpn.9} parent=23 // pred_check_branch
        %171 = sbr.rel (%p169) target = $region28
      $region27: #{backbone_with_fpn.9} parent=23 // pred_region
        %p172 = scmp.lt.s32.totalorder %s17, 1
        %s173 = scalar_select %p172, %s17, 1
        %s174 = smul.addr %s173, 51
        %s175 = smul.addr %s174, 8
        %s176 = scalar_lea.vmem %s0, %s175
      $region28: #{backbone_with_fpn.9} parent=23 // pred_fallthru
        _
      // Predicated region
      $region29: #{backbone_with_fpn.9} parent=23 // pred_check
        %p177 = pneg %p68
      $region30: #{backbone_with_fpn.9} parent=23 // pred_check_branch
        %179 = sbr.rel (%p177) target = $region32
      $region31: #{backbone_with_fpn.9} parent=23 // pred_region
        %p180 = scmp.lt.s32.totalorder %s17, 1
        %s181 = scalar_select %p180, %s17, 1
        %s182 = smul.addr %s181, 51
        %s183 = smul.addr %s182, 8
        %s184 = scalar_lea.vmem %s1, %s183
      $region32: #{backbone_with_fpn.9} parent=23 // pred_fallthru
        _
    $region24: #{backbone_with_fpn.9} parent=5 // pred_fallthru
      _
    %p185 = scmp.le.s32.totalorder 1, %s10
    %p186 = scmp.lt.s32.totalorder %s10, 3
    %p187 = pnand %p185, %p186
    %p188 = pneg %p187
    // Predicated region
    $region33: #{backbone_with_fpn.9} parent=5 // pred_check
      _
    $region34: #{backbone_with_fpn.9} parent=5 // pred_check_branch
      %190 = sbr.rel (%p187) target = $region36
    $region35: #{backbone_with_fpn.9} parent=5 // pred_region
      %s191 = ssub.s32 %s10, 1
      %p192 = scmp.lt.s32.totalorder %s19, 1
      %s193 = scalar_select %p192, %s19, 1
      %s194 = smul.addr %s193, 51
      %s195 = smul.addr %s194, 8
      %s196 = scalar_lea.vmem %s0, %s195
      %p197 = pneg %p48
      %p198 = pneg %p45
      %p199 = scmp.lt.s32.totalorder %s19, 1
      %s200 = scalar_select %p199, %s19, 1
      %s201 = smul.addr %s200, 51
      %s202 = smul.addr %s201, 8
      %s203 = scalar_lea.vmem %s1, %s202
      %p204 = pneg %p74
      %p205 = pneg %p71
      %p206 = pneg %p95
      %p207 = pneg %p92
      %p208 = pneg %p116
      %p209 = pneg %p113
      %p210 = pneg %p144
      %p211 = pneg %p141
      %s212 = smul.u32 16, %s20
      %p213 = scmp.lt.s32.totalorder %s19, 1
      %s214 = scalar_select %p213, %s19, 1
      %p215 = scmp.lt.s32.totalorder %s212, 15
      %s216 = scalar_select %p215, %s212, 15
      %s217 = smul.addr %s216, 2
      %s218 = smul.addr %s214, 32
      %s219 = sadd.s32 %s217, %s218
      %s220 = smul.addr %s219, 8
      %s221 = scalar_lea.vmem %s4, %s220
      %p222 = scmp.lt.s32.totalorder %s19, 1
      %s223 = scalar_select %p222, %s19, 1
      %s224 = smul.addr %s223, 51
      %s225 = smul.addr %s224, 8
      %s226 = scalar_lea.vmem %s0, %s225
      %p227 = scmp.lt.s32.totalorder %s19, 1
      %s228 = scalar_select %p227, %s19, 1
      %s229 = smul.addr %s228, 51
      %s230 = smul.addr %s229, 8
      %s231 = scalar_lea.vmem %s1, %s230
      %s232 = smul.u32 16, %s20
      %p233 = scmp.lt.s32.totalorder %s19, 1
      %s234 = scalar_select %p233, %s19, 1
      %p235 = scmp.lt.s32.totalorder %s232, 15
      %s236 = scalar_select %p235, %s232, 15
      %s237 = smul.addr %s236, 2
      %s238 = smul.addr %s234, 32
      %s239 = sadd.s32 %s237, %s238
      %s240 = smul.addr %s239, 8
      %s241 = scalar_lea.vmem %s4, %s240
      %s242 = smul.u32 16, %s20
      %s243 = smul.u32 %s20, 16
      %s244 = smul.u32 %s243, 24
      %s245 = scalar_lea.vmem %s226, %s244
      %v246 = vld [vmem:[%s245] sm:$0xff]
      %v247 = vld [vmem:[%s245 + $0x8] sm:$0xff]
      %v248 = vld [vmem:[%s245 + $0x10] sm:$0x1]
      %v249 = vld [vmem:[%s245 + $0x18] sm:$0xff]
      %v250 = vld [vmem:[%s245 + $0x20] sm:$0xff]
      %v251 = vld [vmem:[%s245 + $0x28] sm:$0x1]
      %v252 = vld [vmem:[%s245 + $0x30] sm:$0xff]
      %v253 = vld [vmem:[%s245 + $0x38] sm:$0xff]
      %v254 = vld [vmem:[%s245 + $0x40] sm:$0x1]
      %v255 = vld [vmem:[%s245 + $0x48] sm:$0xff]
      %v256 = vld [vmem:[%s245 + $0x50] sm:$0xff]
      %v257 = vld [vmem:[%s245 + $0x58] sm:$0x1]
      %v258 = vld [vmem:[%s245 + $0x60] sm:$0xff]
      %v259 = vld [vmem:[%s245 + $0x68] sm:$0xff]
      %v260 = vld [vmem:[%s245 + $0x70] sm:$0x1]
      %v261 = vld [vmem:[%s245 + $0x78] sm:$0xff]
      %v262 = vld [vmem:[%s245 + $0x80] sm:$0xff]
      %v263 = vld [vmem:[%s245 + $0x88] sm:$0x1]
      %v264 = vld [vmem:[%s245 + $0x90] sm:$0xff]
      %v265 = vld [vmem:[%s245 + $0x98] sm:$0xff]
      %v266 = vld [vmem:[%s245 + $0xa0] sm:$0x1]
      %v267 = vld [vmem:[%s245 + $0xa8] sm:$0xff]
      %v268 = vld [vmem:[%s245 + $0xb0] sm:$0xff]
      %v269 = vld [vmem:[%s245 + $0xb8] sm:$0x1]
      %v270 = vld [vmem:[%s245 + $0xc0] sm:$0xff]
      %v271 = vld [vmem:[%s245 + $0xc8] sm:$0xff]
      %v272 = vld [vmem:[%s245 + $0xd0] sm:$0x1]
      %v273 = vld [vmem:[%s245 + $0xd8] sm:$0xff]
      %v274 = vld [vmem:[%s245 + $0xe0] sm:$0xff]
      %v275 = vld [vmem:[%s245 + $0xe8] sm:$0x1]
      %v276 = vld [vmem:[%s245 + $0xf0] sm:$0xff]
      %v277 = vld [vmem:[%s245 + $0xf8] sm:$0xff]
      %v278 = vld [vmem:[%s245 + $0x100] sm:$0x1]
      %v279 = vld [vmem:[%s245 + $0x108] sm:$0xff]
      %v280 = vld [vmem:[%s245 + $0x110] sm:$0xff]
      %v281 = vld [vmem:[%s245 + $0x118] sm:$0x1]
      %v282 = vld [vmem:[%s245 + $0x120] sm:$0xff]
      %v283 = vld [vmem:[%s245 + $0x128] sm:$0xff]
      %v284 = vld [vmem:[%s245 + $0x130] sm:$0x1]
      %v285 = vld [vmem:[%s245 + $0x138] sm:$0xff]
      %v286 = vld [vmem:[%s245 + $0x140] sm:$0xff]
      %v287 = vld [vmem:[%s245 + $0x148] sm:$0x1]
      %v288 = vld [vmem:[%s245 + $0x150] sm:$0xff]
      %v289 = vld [vmem:[%s245 + $0x158] sm:$0xff]
      %v290 = vld [vmem:[%s245 + $0x160] sm:$0x1]
      %v291 = vld [vmem:[%s245 + $0x168] sm:$0xff]
      %v292 = vld [vmem:[%s245 + $0x170] sm:$0xff]
      %v293 = vld [vmem:[%s245 + $0x178] sm:$0x1]
      %s294 = scalar_lea.vmem %s231, %s244
      %v295 = vld [vmem:[%s294] sm:$0xff]
      %v296 = vld [vmem:[%s294 + $0x8] sm:$0xff]
      %v297 = vld [vmem:[%s294 + $0x10] sm:$0x1]
      %v298 = vld [vmem:[%s294 + $0x18] sm:$0xff]
      %v299 = vld [vmem:[%s294 + $0x20] sm:$0xff]
      %v300 = vld [vmem:[%s294 + $0x28] sm:$0x1]
      %v301 = vld [vmem:[%s294 + $0x30] sm:$0xff]
      %v302 = vld [vmem:[%s294 + $0x38] sm:$0xff]
      %v303 = vld [vmem:[%s294 + $0x40] sm:$0x1]
      %v304 = vld [vmem:[%s294 + $0x48] sm:$0xff]
      %v305 = vld [vmem:[%s294 + $0x50] sm:$0xff]
      %v306 = vld [vmem:[%s294 + $0x58] sm:$0x1]
      %v307 = vld [vmem:[%s294 + $0x60] sm:$0xff]
      %v308 = vld [vmem:[%s294 + $0x68] sm:$0xff]
      %v309 = vld [vmem:[%s294 + $0x70] sm:$0x1]
      %v310 = vld [vmem:[%s294 + $0x78] sm:$0xff]
      %v311 = vld [vmem:[%s294 + $0x80] sm:$0xff]
      %v312 = vld [vmem:[%s294 + $0x88] sm:$0x1]
      %v313 = vld [vmem:[%s294 + $0x90] sm:$0xff]
      %v314 = vld [vmem:[%s294 + $0x98] sm:$0xff]
      %v315 = vld [vmem:[%s294 + $0xa0] sm:$0x1]
      %v316 = vld [vmem:[%s294 + $0xa8] sm:$0xff]
      %v317 = vld [vmem:[%s294 + $0xb0] sm:$0xff]
      %v318 = vld [vmem:[%s294 + $0xb8] sm:$0x1]
      %v319 = vld [vmem:[%s294 + $0xc0] sm:$0xff]
      %v320 = vld [vmem:[%s294 + $0xc8] sm:$0xff]
      %v321 = vld [vmem:[%s294 + $0xd0] sm:$0x1]
      %v322 = vld [vmem:[%s294 + $0xd8] sm:$0xff]
      %v323 = vld [vmem:[%s294 + $0xe0] sm:$0xff]
      %v324 = vld [vmem:[%s294 + $0xe8] sm:$0x1]
      %v325 = vld [vmem:[%s294 + $0xf0] sm:$0xff]
      %v326 = vld [vmem:[%s294 + $0xf8] sm:$0xff]
      %v327 = vld [vmem:[%s294 + $0x100] sm:$0x1]
      %v328 = vld [vmem:[%s294 + $0x108] sm:$0xff]
      %v329 = vld [vmem:[%s294 + $0x110] sm:$0xff]
      %v330 = vld [vmem:[%s294 + $0x118] sm:$0x1]
      %v331 = vld [vmem:[%s294 + $0x120] sm:$0xff]
      %v332 = vld [vmem:[%s294 + $0x128] sm:$0xff]
      %v333 = vld [vmem:[%s294 + $0x130] sm:$0x1]
      %v334 = vld [vmem:[%s294 + $0x138] sm:$0xff]
      %v335 = vld [vmem:[%s294 + $0x140] sm:$0xff]
      %v336 = vld [vmem:[%s294 + $0x148] sm:$0x1]
      %v337 = vld [vmem:[%s294 + $0x150] sm:$0xff]
      %v338 = vld [vmem:[%s294 + $0x158] sm:$0xff]
      %v339 = vld [vmem:[%s294 + $0x160] sm:$0x1]
      %v340 = vld [vmem:[%s294 + $0x168] sm:$0xff]
      %v341 = vld [vmem:[%s294 + $0x170] sm:$0xff]
      %v342 = vld [vmem:[%s294 + $0x178] sm:$0x1]
      %s343 = sadd.s32 %s243, 1
      %s344 = smul.u32 %s343, 24
      %s345 = scalar_lea.vmem %s226, %s344
      %v346 = vld [vmem:[%s345] sm:$0xff]
      %v347 = vld [vmem:[%s345 + $0x8] sm:$0xff]
      %v348 = vld [vmem:[%s345 + $0x10] sm:$0x1]
      %v349 = vld [vmem:[%s345 + $0x18] sm:$0xff]
      %v350 = vld [vmem:[%s345 + $0x20] sm:$0xff]
      %v351 = vld [vmem:[%s345 + $0x28] sm:$0x1]
      %v352 = vld [vmem:[%s345 + $0x30] sm:$0xff]
      %v353 = vld [vmem:[%s345 + $0x38] sm:$0xff]
      %v354 = vld [vmem:[%s345 + $0x40] sm:$0x1]
      %v355 = vld [vmem:[%s345 + $0x48] sm:$0xff]
      %v356 = vld [vmem:[%s345 + $0x50] sm:$0xff]
      %v357 = vld [vmem:[%s345 + $0x58] sm:$0x1]
      %v358 = vld [vmem:[%s345 + $0x60] sm:$0xff]
      %v359 = vld [vmem:[%s345 + $0x68] sm:$0xff]
      %v360 = vld [vmem:[%s345 + $0x70] sm:$0x1]
      %v361 = vld [vmem:[%s345 + $0x78] sm:$0xff]
      %v362 = vld [vmem:[%s345 + $0x80] sm:$0xff]
      %v363 = vld [vmem:[%s345 + $0x88] sm:$0x1]
      %v364 = vld [vmem:[%s345 + $0x90] sm:$0xff]
      %v365 = vld [vmem:[%s345 + $0x98] sm:$0xff]
      %v366 = vld [vmem:[%s345 + $0xa0] sm:$0x1]
      %v367 = vld [vmem:[%s345 + $0xa8] sm:$0xff]
      %v368 = vld [vmem:[%s345 + $0xb0] sm:$0xff]
      %v369 = vld [vmem:[%s345 + $0xb8] sm:$0x1]
      %v370 = vld [vmem:[%s345 + $0xc0] sm:$0xff]
      %v371 = vld [vmem:[%s345 + $0xc8] sm:$0xff]
      %v372 = vld [vmem:[%s345 + $0xd0] sm:$0x1]
      %v373 = vld [vmem:[%s345 + $0xd8] sm:$0xff]
      %v374 = vld [vmem:[%s345 + $0xe0] sm:$0xff]
      %v375 = vld [vmem:[%s345 + $0xe8] sm:$0x1]
      %v376 = vld [vmem:[%s345 + $0xf0] sm:$0xff]
      %v377 = vld [vmem:[%s345 + $0xf8] sm:$0xff]
      %v378 = vld [vmem:[%s345 + $0x100] sm:$0x1]
      %v379 = vld [vmem:[%s345 + $0x108] sm:$0xff]
      %v380 = vld [vmem:[%s345 + $0x110] sm:$0xff]
      %v381 = vld [vmem:[%s345 + $0x118] sm:$0x1]
      %v382 = vld [vmem:[%s345 + $0x120] sm:$0xff]
      %v383 = vld [vmem:[%s345 + $0x128] sm:$0xff]
      %v384 = vld [vmem:[%s345 + $0x130] sm:$0x1]
      %v385 = vld [vmem:[%s345 + $0x138] sm:$0xff]
      %v386 = vld [vmem:[%s345 + $0x140] sm:$0xff]
      %v387 = vld [vmem:[%s345 + $0x148] sm:$0x1]
      %v388 = vld [vmem:[%s345 + $0x150] sm:$0xff]
      %v389 = vld [vmem:[%s345 + $0x158] sm:$0xff]
      %v390 = vld [vmem:[%s345 + $0x160] sm:$0x1]
      %v391 = vld [vmem:[%s345 + $0x168] sm:$0xff]
      %v392 = vld [vmem:[%s345 + $0x170] sm:$0xff]
      %v393 = vld [vmem:[%s345 + $0x178] sm:$0x1]
      %vm442 = vcmask 1046528
      %v443 = vrot.slane %v246, 1
      %v444 = vrot.slane %v247, 1
      %v445 = vsel %vm442, %v443, %v444
      %v446 = vrot.slane %v248, 1
      %v447 = vsel %vm442, %v444, %v446
      %v448 = vrot.slane %v249, 1
      %v449 = vrot.slane %v250, 1
      %v450 = vsel %vm442, %v448, %v449
      %v451 = vrot.slane %v251, 1
      %v452 = vsel %vm442, %v449, %v451
      %v453 = vrot.slane %v252, 1
      %v454 = vrot.slane %v253, 1
      %v455 = vsel %vm442, %v453, %v454
      %v456 = vrot.slane %v254, 1
      %v457 = vsel %vm442, %v454, %v456
      %v458 = vrot.slane %v255, 1
      %v459 = vrot.slane %v256, 1
      %v460 = vsel %vm442, %v458, %v459
      %v461 = vrot.slane %v257, 1
      %v462 = vsel %vm442, %v459, %v461
      %v463 = vrot.slane %v258, 1
      %v464 = vrot.slane %v259, 1
      %v465 = vsel %vm442, %v463, %v464
      %v466 = vrot.slane %v260, 1
      %v467 = vsel %vm442, %v464, %v466
      %v468 = vrot.slane %v261, 1
      %v469 = vrot.slane %v262, 1
      %v470 = vsel %vm442, %v468, %v469
      %v471 = vrot.slane %v263, 1
      %v472 = vsel %vm442, %v469, %v471
      %v473 = vrot.slane %v264, 1
      %v474 = vrot.slane %v265, 1
      %v475 = vsel %vm442, %v473, %v474
      %v476 = vrot.slane %v266, 1
      %v477 = vsel %vm442, %v474, %v476
      %v478 = vrot.slane %v267, 1
      %v479 = vrot.slane %v268, 1
      %v480 = vsel %vm442, %v478, %v479
      %v481 = vrot.slane %v269, 1
      %v482 = vsel %vm442, %v479, %v481
      %v483 = vrot.slane %v270, 1
      %v484 = vrot.slane %v271, 1
      %v485 = vsel %vm442, %v483, %v484
      %v486 = vrot.slane %v272, 1
      %v487 = vsel %vm442, %v484, %v486
      %v488 = vrot.slane %v273, 1
      %v489 = vrot.slane %v274, 1
      %v490 = vsel %vm442, %v488, %v489
      %v491 = vrot.slane %v275, 1
      %v492 = vsel %vm442, %v489, %v491
      %v493 = vrot.slane %v276, 1
      %v494 = vrot.slane %v277, 1
      %v495 = vsel %vm442, %v493, %v494
      %v496 = vrot.slane %v278, 1
      %v497 = vsel %vm442, %v494, %v496
      %v498 = vrot.slane %v279, 1
      %v499 = vrot.slane %v280, 1
      %v500 = vsel %vm442, %v498, %v499
      %v501 = vrot.slane %v281, 1
      %v502 = vsel %vm442, %v499, %v501
      %v503 = vrot.slane %v282, 1
      %v504 = vrot.slane %v283, 1
      %v505 = vsel %vm442, %v503, %v504
      %v506 = vrot.slane %v284, 1
      %v507 = vsel %vm442, %v504, %v506
      %v508 = vrot.slane %v285, 1
      %v509 = vrot.slane %v286, 1
      %v510 = vsel %vm442, %v508, %v509
      %v511 = vrot.slane %v287, 1
      %v512 = vsel %vm442, %v509, %v511
      %v513 = vrot.slane %v288, 1
      %v514 = vrot.slane %v289, 1
      %v515 = vsel %vm442, %v513, %v514
      %v516 = vrot.slane %v290, 1
      %v517 = vsel %vm442, %v514, %v516
      %v518 = vrot.slane %v291, 1
      %v519 = vrot.slane %v292, 1
      %v520 = vsel %vm442, %v518, %v519
      %v521 = vrot.slane %v293, 1
      %v522 = vsel %vm442, %v519, %v521
      %523 = vrot.lane.b32.xlu0 %v445, 8
      %v524 = vpop.permute.xlu0 %523
      %525 = vrot.lane.b32.xlu0 %v447, 8
      %v526 = vpop.permute.xlu0 %525
      %527 = vrot.lane.b32.xlu0 %v450, 8
      %v528 = vpop.permute.xlu0 %527
      %529 = vrot.lane.b32.xlu0 %v452, 8
      %v530 = vpop.permute.xlu0 %529
      %531 = vrot.lane.b32.xlu0 %v455, 8
      %v532 = vpop.permute.xlu0 %531
      %533 = vrot.lane.b32.xlu0 %v457, 8
      %v534 = vpop.permute.xlu0 %533
      %535 = vrot.lane.b32.xlu0 %v460, 8
      %v536 = vpop.permute.xlu0 %535
      %537 = vrot.lane.b32.xlu0 %v462, 8
      %v538 = vpop.permute.xlu0 %537
      %539 = vrot.lane.b32.xlu0 %v465, 8
      %v540 = vpop.permute.xlu0 %539
      %541 = vrot.lane.b32.xlu0 %v467, 8
      %v542 = vpop.permute.xlu0 %541
      %543 = vrot.lane.b32.xlu0 %v470, 8
      %v544 = vpop.permute.xlu0 %543
      %545 = vrot.lane.b32.xlu0 %v472, 8
      %v546 = vpop.permute.xlu0 %545
      %547 = vrot.lane.b32.xlu0 %v475, 8
      %v548 = vpop.permute.xlu0 %547
      %549 = vrot.lane.b32.xlu0 %v477, 8
      %v550 = vpop.permute.xlu0 %549
      %551 = vrot.lane.b32.xlu0 %v480, 8
      %v552 = vpop.permute.xlu0 %551
      %553 = vrot.lane.b32.xlu0 %v482, 8
      %v554 = vpop.permute.xlu0 %553
      %555 = vrot.lane.b32.xlu0 %v485, 8
      %v556 = vpop.permute.xlu0 %555
      %557 = vrot.lane.b32.xlu0 %v487, 8
      %v558 = vpop.permute.xlu0 %557
      %559 = vrot.lane.b32.xlu0 %v490, 8
      %v560 = vpop.permute.xlu0 %559
      %561 = vrot.lane.b32.xlu0 %v492, 8
      %v562 = vpop.permute.xlu0 %561
      %563 = vrot.lane.b32.xlu0 %v495, 8
      %v564 = vpop.permute.xlu0 %563
      %565 = vrot.lane.b32.xlu0 %v497, 8
      %v566 = vpop.permute.xlu0 %565
      %567 = vrot.lane.b32.xlu0 %v500, 8
      %v568 = vpop.permute.xlu0 %567
      %569 = vrot.lane.b32.xlu0 %v502, 8
      %v570 = vpop.permute.xlu0 %569
      %571 = vrot.lane.b32.xlu0 %v505, 8
      %v572 = vpop.permute.xlu0 %571
      %573 = vrot.lane.b32.xlu0 %v507, 8
      %v574 = vpop.permute.xlu0 %573
      %575 = vrot.lane.b32.xlu0 %v510, 8
      %v576 = vpop.permute.xlu0 %575
      %577 = vrot.lane.b32.xlu0 %v512, 8
      %v578 = vpop.permute.xlu0 %577
      %579 = vrot.lane.b32.xlu0 %v515, 8
      %v580 = vpop.permute.xlu0 %579
      %581 = vrot.lane.b32.xlu0 %v517, 8
      %v582 = vpop.permute.xlu0 %581
      %583 = vrot.lane.b32.xlu0 %v520, 8
      %v584 = vpop.permute.xlu0 %583
      %585 = vrot.lane.b32.xlu0 %v522, 8
      %v586 = vpop.permute.xlu0 %585
      %651 = vrot.lane.b32.xlu0 %v295, 16
      %v652 = vpop.permute.xlu0 %651
      %653 = vrot.lane.b32.xlu0 %v296, 16
      %v654 = vpop.permute.xlu0 %653
      %655 = vrot.lane.b32.xlu0 %v298, 16
      %v656 = vpop.permute.xlu0 %655
      %657 = vrot.lane.b32.xlu0 %v299, 16
      %v658 = vpop.permute.xlu0 %657
      %659 = vrot.lane.b32.xlu0 %v301, 16
      %v660 = vpop.permute.xlu0 %659
      %661 = vrot.lane.b32.xlu0 %v302, 16
      %v662 = vpop.permute.xlu0 %661
      %663 = vrot.lane.b32.xlu0 %v304, 16
      %v664 = vpop.permute.xlu0 %663
      %665 = vrot.lane.b32.xlu0 %v305, 16
      %v666 = vpop.permute.xlu0 %665
      %667 = vrot.lane.b32.xlu0 %v307, 16
      %v668 = vpop.permute.xlu0 %667
      %669 = vrot.lane.b32.xlu0 %v308, 16
      %v670 = vpop.permute.xlu0 %669
      %671 = vrot.lane.b32.xlu0 %v310, 16
      %v672 = vpop.permute.xlu0 %671
      %673 = vrot.lane.b32.xlu0 %v311, 16
      %v674 = vpop.permute.xlu0 %673
      %675 = vrot.lane.b32.xlu0 %v313, 16
      %v676 = vpop.permute.xlu0 %675
      %677 = vrot.lane.b32.xlu0 %v314, 16
      %v678 = vpop.permute.xlu0 %677
      %679 = vrot.lane.b32.xlu0 %v316, 16
      %v680 = vpop.permute.xlu0 %679
      %681 = vrot.lane.b32.xlu0 %v317, 16
      %v682 = vpop.permute.xlu0 %681
      %683 = vrot.lane.b32.xlu0 %v319, 16
      %v684 = vpop.permute.xlu0 %683
      %685 = vrot.lane.b32.xlu0 %v320, 16
      %v686 = vpop.permute.xlu0 %685
      %687 = vrot.lane.b32.xlu0 %v322, 16
      %v688 = vpop.permute.xlu0 %687
      %689 = vrot.lane.b32.xlu0 %v323, 16
      %v690 = vpop.permute.xlu0 %689
      %691 = vrot.lane.b32.xlu0 %v325, 16
      %v692 = vpop.permute.xlu0 %691
      %693 = vrot.lane.b32.xlu0 %v326, 16
      %v694 = vpop.permute.xlu0 %693
      %695 = vrot.lane.b32.xlu0 %v328, 16
      %v696 = vpop.permute.xlu0 %695
      %697 = vrot.lane.b32.xlu0 %v329, 16
      %v698 = vpop.permute.xlu0 %697
      %699 = vrot.lane.b32.xlu0 %v331, 16
      %v700 = vpop.permute.xlu0 %699
      %701 = vrot.lane.b32.xlu0 %v332, 16
      %v702 = vpop.permute.xlu0 %701
      %703 = vrot.lane.b32.xlu0 %v334, 16
      %v704 = vpop.permute.xlu0 %703
      %705 = vrot.lane.b32.xlu0 %v335, 16
      %v706 = vpop.permute.xlu0 %705
      %707 = vrot.lane.b32.xlu0 %v337, 16
      %v708 = vpop.permute.xlu0 %707
      %709 = vrot.lane.b32.xlu0 %v338, 16
      %v710 = vpop.permute.xlu0 %709
      %711 = vrot.lane.b32.xlu0 %v340, 16
      %v712 = vpop.permute.xlu0 %711
      %713 = vrot.lane.b32.xlu0 %v341, 16
      %v714 = vpop.permute.xlu0 %713
      %v763 = vrot.slane %v295, 1
      %v764 = vrot.slane %v296, 1
      %v765 = vsel %vm442, %v763, %v764
      %v766 = vrot.slane %v297, 1
      %v767 = vsel %vm442, %v764, %v766
      %v768 = vrot.slane %v298, 1
      %v769 = vrot.slane %v299, 1
      %v770 = vsel %vm442, %v768, %v769
      %v771 = vrot.slane %v300, 1
      %v772 = vsel %vm442, %v769, %v771
      %v773 = vrot.slane %v301, 1
      %v774 = vrot.slane %v302, 1
      %v775 = vsel %vm442, %v773, %v774
      %v776 = vrot.slane %v303, 1
      %v777 = vsel %vm442, %v774, %v776
      %v778 = vrot.slane %v304, 1
      %v779 = vrot.slane %v305, 1
      %v780 = vsel %vm442, %v778, %v779
      %v781 = vrot.slane %v306, 1
      %v782 = vsel %vm442, %v779, %v781
      %v783 = vrot.slane %v307, 1
      %v784 = vrot.slane %v308, 1
      %v785 = vsel %vm442, %v783, %v784
      %v786 = vrot.slane %v309, 1
      %v787 = vsel %vm442, %v784, %v786
      %v788 = vrot.slane %v310, 1
      %v789 = vrot.slane %v311, 1
      %v790 = vsel %vm442, %v788, %v789
      %v791 = vrot.slane %v312, 1
      %v792 = vsel %vm442, %v789, %v791
      %v793 = vrot.slane %v313, 1
      %v794 = vrot.slane %v314, 1
      %v795 = vsel %vm442, %v793, %v794
      %v796 = vrot.slane %v315, 1
      %v797 = vsel %vm442, %v794, %v796
      %v798 = vrot.slane %v316, 1
      %v799 = vrot.slane %v317, 1
      %v800 = vsel %vm442, %v798, %v799
      %v801 = vrot.slane %v318, 1
      %v802 = vsel %vm442, %v799, %v801
      %v803 = vrot.slane %v319, 1
      %v804 = vrot.slane %v320, 1
      %v805 = vsel %vm442, %v803, %v804
      %v806 = vrot.slane %v321, 1
      %v807 = vsel %vm442, %v804, %v806
      %v808 = vrot.slane %v322, 1
      %v809 = vrot.slane %v323, 1
      %v810 = vsel %vm442, %v808, %v809
      %v811 = vrot.slane %v324, 1
      %v812 = vsel %vm442, %v809, %v811
      %v813 = vrot.slane %v325, 1
      %v814 = vrot.slane %v326, 1
      %v815 = vsel %vm442, %v813, %v814
      %v816 = vrot.slane %v327, 1
      %v817 = vsel %vm442, %v814, %v816
      %v818 = vrot.slane %v328, 1
      %v819 = vrot.slane %v329, 1
      %v820 = vsel %vm442, %v818, %v819
      %v821 = vrot.slane %v330, 1
      %v822 = vsel %vm442, %v819, %v821
      %v823 = vrot.slane %v331, 1
      %v824 = vrot.slane %v332, 1
      %v825 = vsel %vm442, %v823, %v824
      %v826 = vrot.slane %v333, 1
      %v827 = vsel %vm442, %v824, %v826
      %v828 = vrot.slane %v334, 1
      %v829 = vrot.slane %v335, 1
      %v830 = vsel %vm442, %v828, %v829
      %v831 = vrot.slane %v336, 1
      %v832 = vsel %vm442, %v829, %v831
      %v833 = vrot.slane %v337, 1
      %v834 = vrot.slane %v338, 1
      %v835 = vsel %vm442, %v833, %v834
      %v836 = vrot.slane %v339, 1
      %v837 = vsel %vm442, %v834, %v836
      %v838 = vrot.slane %v340, 1
      %v839 = vrot.slane %v341, 1
      %v840 = vsel %vm442, %v838, %v839
      %v841 = vrot.slane %v342, 1
      %v842 = vsel %vm442, %v839, %v841
      %843 = vrot.lane.b32.xlu0 %v765, 24
      %v844 = vpop.permute.xlu0 %843
      %845 = vrot.lane.b32.xlu0 %v767, 24
      %v846 = vpop.permute.xlu0 %845
      %847 = vrot.lane.b32.xlu0 %v770, 24
      %v848 = vpop.permute.xlu0 %847
      %849 = vrot.lane.b32.xlu0 %v772, 24
      %v850 = vpop.permute.xlu0 %849
      %851 = vrot.lane.b32.xlu0 %v775, 24
      %v852 = vpop.permute.xlu0 %851
      %853 = vrot.lane.b32.xlu0 %v777, 24
      %v854 = vpop.permute.xlu0 %853
      %855 = vrot.lane.b32.xlu0 %v780, 24
      %v856 = vpop.permute.xlu0 %855
      %857 = vrot.lane.b32.xlu0 %v782, 24
      %v858 = vpop.permute.xlu0 %857
      %859 = vrot.lane.b32.xlu0 %v785, 24
      %v860 = vpop.permute.xlu0 %859
      %861 = vrot.lane.b32.xlu0 %v787, 24
      %v862 = vpop.permute.xlu0 %861
      %863 = vrot.lane.b32.xlu0 %v790, 24
      %v864 = vpop.permute.xlu0 %863
      %865 = vrot.lane.b32.xlu0 %v792, 24
      %v866 = vpop.permute.xlu0 %865
      %867 = vrot.lane.b32.xlu0 %v795, 24
      %v868 = vpop.permute.xlu0 %867
      %869 = vrot.lane.b32.xlu0 %v797, 24
      %v870 = vpop.permute.xlu0 %869
      %871 = vrot.lane.b32.xlu0 %v800, 24
      %v872 = vpop.permute.xlu0 %871
      %873 = vrot.lane.b32.xlu0 %v802, 24
      %v874 = vpop.permute.xlu0 %873
      %875 = vrot.lane.b32.xlu0 %v805, 24
      %v876 = vpop.permute.xlu0 %875
      %877 = vrot.lane.b32.xlu0 %v807, 24
      %v878 = vpop.permute.xlu0 %877
      %879 = vrot.lane.b32.xlu0 %v810, 24
      %v880 = vpop.permute.xlu0 %879
      %881 = vrot.lane.b32.xlu0 %v812, 24
      %v882 = vpop.permute.xlu0 %881
      %883 = vrot.lane.b32.xlu0 %v815, 24
      %v884 = vpop.permute.xlu0 %883
      %885 = vrot.lane.b32.xlu0 %v817, 24
      %v886 = vpop.permute.xlu0 %885
      %887 = vrot.lane.b32.xlu0 %v820, 24
      %v888 = vpop.permute.xlu0 %887
      %889 = vrot.lane.b32.xlu0 %v822, 24
      %v890 = vpop.permute.xlu0 %889
      %891 = vrot.lane.b32.xlu0 %v825, 24
      %v892 = vpop.permute.xlu0 %891
      %893 = vrot.lane.b32.xlu0 %v827, 24
      %v894 = vpop.permute.xlu0 %893
      %895 = vrot.lane.b32.xlu0 %v830, 24
      %v896 = vpop.permute.xlu0 %895
      %897 = vrot.lane.b32.xlu0 %v832, 24
      %v898 = vpop.permute.xlu0 %897
      %899 = vrot.lane.b32.xlu0 %v835, 24
      %v900 = vpop.permute.xlu0 %899
      %901 = vrot.lane.b32.xlu0 %v837, 24
      %v902 = vpop.permute.xlu0 %901
      %903 = vrot.lane.b32.xlu0 %v840, 24
      %v904 = vpop.permute.xlu0 %903
      %905 = vrot.lane.b32.xlu0 %v842, 24
      %v906 = vpop.permute.xlu0 %905
      %971 = vrot.lane.b32.xlu0 %v346, 32
      %v972 = vpop.permute.xlu0 %971
      %973 = vrot.lane.b32.xlu0 %v347, 32
      %v974 = vpop.permute.xlu0 %973
      %975 = vrot.lane.b32.xlu0 %v349, 32
      %v976 = vpop.permute.xlu0 %975
      %977 = vrot.lane.b32.xlu0 %v350, 32
      %v978 = vpop.permute.xlu0 %977
      %979 = vrot.lane.b32.xlu0 %v352, 32
      %v980 = vpop.permute.xlu0 %979
      %981 = vrot.lane.b32.xlu0 %v353, 32
      %v982 = vpop.permute.xlu0 %981
      %983 = vrot.lane.b32.xlu0 %v355, 32
      %v984 = vpop.permute.xlu0 %983
      %985 = vrot.lane.b32.xlu0 %v356, 32
      %v986 = vpop.permute.xlu0 %985
      %987 = vrot.lane.b32.xlu0 %v358, 32
      %v988 = vpop.permute.xlu0 %987
      %989 = vrot.lane.b32.xlu0 %v359, 32
      %v990 = vpop.permute.xlu0 %989
      %991 = vrot.lane.b32.xlu0 %v361, 32
      %v992 = vpop.permute.xlu0 %991
      %993 = vrot.lane.b32.xlu0 %v362, 32
      %v994 = vpop.permute.xlu0 %993
      %995 = vrot.lane.b32.xlu0 %v364, 32
      %v996 = vpop.permute.xlu0 %995
      %997 = vrot.lane.b32.xlu0 %v365, 32
      %v998 = vpop.permute.xlu0 %997
      %999 = vrot.lane.b32.xlu0 %v367, 32
      %v1000 = vpop.permute.xlu0 %999
      %1001 = vrot.lane.b32.xlu0 %v368, 32
      %v1002 = vpop.permute.xlu0 %1001
      %1003 = vrot.lane.b32.xlu0 %v370, 32
      %v1004 = vpop.permute.xlu0 %1003
      %1005 = vrot.lane.b32.xlu0 %v371, 32
      %v1006 = vpop.permute.xlu0 %1005
      %1007 = vrot.lane.b32.xlu0 %v373, 32
      %v1008 = vpop.permute.xlu0 %1007
      %1009 = vrot.lane.b32.xlu0 %v374, 32
      %v1010 = vpop.permute.xlu0 %1009
      %1011 = vrot.lane.b32.xlu0 %v376, 32
      %v1012 = vpop.permute.xlu0 %1011
      %1013 = vrot.lane.b32.xlu0 %v377, 32
      %v1014 = vpop.permute.xlu0 %1013
      %1015 = vrot.lane.b32.xlu0 %v379, 32
      %v1016 = vpop.permute.xlu0 %1015
      %1017 = vrot.lane.b32.xlu0 %v380, 32
      %v1018 = vpop.permute.xlu0 %1017
      %1019 = vrot.lane.b32.xlu0 %v382, 32
      %v1020 = vpop.permute.xlu0 %1019
      %1021 = vrot.lane.b32.xlu0 %v383, 32
      %v1022 = vpop.permute.xlu0 %1021
      %1023 = vrot.lane.b32.xlu0 %v385, 32
      %v1024 = vpop.permute.xlu0 %1023
      %1025 = vrot.lane.b32.xlu0 %v386, 32
      %v1026 = vpop.permute.xlu0 %1025
      %1027 = vrot.lane.b32.xlu0 %v388, 32
      %v1028 = vpop.permute.xlu0 %1027
      %1029 = vrot.lane.b32.xlu0 %v389, 32
      %v1030 = vpop.permute.xlu0 %1029
      %1031 = vrot.lane.b32.xlu0 %v391, 32
      %v1032 = vpop.permute.xlu0 %1031
      %1033 = vrot.lane.b32.xlu0 %v392, 32
      %v1034 = vpop.permute.xlu0 %1033
      %v1083 = vrot.slane %v346, 1
      %v1084 = vrot.slane %v347, 1
      %v1085 = vsel %vm442, %v1083, %v1084
      %v1086 = vrot.slane %v348, 1
      %v1087 = vsel %vm442, %v1084, %v1086
      %v1088 = vrot.slane %v349, 1
      %v1089 = vrot.slane %v350, 1
      %v1090 = vsel %vm442, %v1088, %v1089
      %v1091 = vrot.slane %v351, 1
      %v1092 = vsel %vm442, %v1089, %v1091
      %v1093 = vrot.slane %v352, 1
      %v1094 = vrot.slane %v353, 1
      %v1095 = vsel %vm442, %v1093, %v1094
      %v1096 = vrot.slane %v354, 1
      %v1097 = vsel %vm442, %v1094, %v1096
      %v1098 = vrot.slane %v355, 1
      %v1099 = vrot.slane %v356, 1
      %v1100 = vsel %vm442, %v1098, %v1099
      %v1101 = vrot.slane %v357, 1
      %v1102 = vsel %vm442, %v1099, %v1101
      %v1103 = vrot.slane %v358, 1
      %v1104 = vrot.slane %v359, 1
      %v1105 = vsel %vm442, %v1103, %v1104
      %v1106 = vrot.slane %v360, 1
      %v1107 = vsel %vm442, %v1104, %v1106
      %v1108 = vrot.slane %v361, 1
      %v1109 = vrot.slane %v362, 1
      %v1110 = vsel %vm442, %v1108, %v1109
      %v1111 = vrot.slane %v363, 1
      %v1112 = vsel %vm442, %v1109, %v1111
      %v1113 = vrot.slane %v364, 1
      %v1114 = vrot.slane %v365, 1
      %v1115 = vsel %vm442, %v1113, %v1114
      %v1116 = vrot.slane %v366, 1
      %v1117 = vsel %vm442, %v1114, %v1116
      %v1118 = vrot.slane %v367, 1
      %v1119 = vrot.slane %v368, 1
      %v1120 = vsel %vm442, %v1118, %v1119
      %v1121 = vrot.slane %v369, 1
      %v1122 = vsel %vm442, %v1119, %v1121
      %v1123 = vrot.slane %v370, 1
      %v1124 = vrot.slane %v371, 1
      %v1125 = vsel %vm442, %v1123, %v1124
      %v1126 = vrot.slane %v372, 1
      %v1127 = vsel %vm442, %v1124, %v1126
      %v1128 = vrot.slane %v373, 1
      %v1129 = vrot.slane %v374, 1
      %v1130 = vsel %vm442, %v1128, %v1129
      %v1131 = vrot.slane %v375, 1
      %v1132 = vsel %vm442, %v1129, %v1131
      %v1133 = vrot.slane %v376, 1
      %v1134 = vrot.slane %v377, 1
      %v1135 = vsel %vm442, %v1133, %v1134
      %v1136 = vrot.slane %v378, 1
      %v1137 = vsel %vm442, %v1134, %v1136
      %v1138 = vrot.slane %v379, 1
      %v1139 = vrot.slane %v380, 1
      %v1140 = vsel %vm442, %v1138, %v1139
      %v1141 = vrot.slane %v381, 1
      %v1142 = vsel %vm442, %v1139, %v1141
      %v1143 = vrot.slane %v382, 1
      %v1144 = vrot.slane %v383, 1
      %v1145 = vsel %vm442, %v1143, %v1144
      %v1146 = vrot.slane %v384, 1
      %v1147 = vsel %vm442, %v1144, %v1146
      %v1148 = vrot.slane %v385, 1
      %v1149 = vrot.slane %v386, 1
      %v1150 = vsel %vm442, %v1148, %v1149
      %v1151 = vrot.slane %v387, 1
      %v1152 = vsel %vm442, %v1149, %v1151
      %v1153 = vrot.slane %v388, 1
      %v1154 = vrot.slane %v389, 1
      %v1155 = vsel %vm442, %v1153, %v1154
      %v1156 = vrot.slane %v390, 1
      %v1157 = vsel %vm442, %v1154, %v1156
      %v1158 = vrot.slane %v391, 1
      %v1159 = vrot.slane %v392, 1
      %v1160 = vsel %vm442, %v1158, %v1159
      %v1161 = vrot.slane %v393, 1
      %v1162 = vsel %vm442, %v1159, %v1161
      %1163 = vrot.lane.b32.xlu0 %v1085, 40
      %v1164 = vpop.permute.xlu0 %1163
      %1165 = vrot.lane.b32.xlu0 %v1087, 40
      %v1166 = vpop.permute.xlu0 %1165
      %1167 = vrot.lane.b32.xlu0 %v1090, 40
      %v1168 = vpop.permute.xlu0 %1167
      %1169 = vrot.lane.b32.xlu0 %v1092, 40
      %v1170 = vpop.permute.xlu0 %1169
      %1171 = vrot.lane.b32.xlu0 %v1095, 40
      %v1172 = vpop.permute.xlu0 %1171
      %1173 = vrot.lane.b32.xlu0 %v1097, 40
      %v1174 = vpop.permute.xlu0 %1173
      %1175 = vrot.lane.b32.xlu0 %v1100, 40
      %v1176 = vpop.permute.xlu0 %1175
      %1177 = vrot.lane.b32.xlu0 %v1102, 40
      %v1178 = vpop.permute.xlu0 %1177
      %1179 = vrot.lane.b32.xlu0 %v1105, 40
      %v1180 = vpop.permute.xlu0 %1179
      %1181 = vrot.lane.b32.xlu0 %v1107, 40
      %v1182 = vpop.permute.xlu0 %1181
      %1183 = vrot.lane.b32.xlu0 %v1110, 40
      %v1184 = vpop.permute.xlu0 %1183
      %1185 = vrot.lane.b32.xlu0 %v1112, 40
      %v1186 = vpop.permute.xlu0 %1185
      %1187 = vrot.lane.b32.xlu0 %v1115, 40
      %v1188 = vpop.permute.xlu0 %1187
      %1189 = vrot.lane.b32.xlu0 %v1117, 40
      %v1190 = vpop.permute.xlu0 %1189
      %1191 = vrot.lane.b32.xlu0 %v1120, 40
      %v1192 = vpop.permute.xlu0 %1191
      %1193 = vrot.lane.b32.xlu0 %v1122, 40
      %v1194 = vpop.permute.xlu0 %1193
      %1195 = vrot.lane.b32.xlu0 %v1125, 40
      %v1196 = vpop.permute.xlu0 %1195
      %1197 = vrot.lane.b32.xlu0 %v1127, 40
      %v1198 = vpop.permute.xlu0 %1197
      %1199 = vrot.lane.b32.xlu0 %v1130, 40
      %v1200 = vpop.permute.xlu0 %1199
      %1201 = vrot.lane.b32.xlu0 %v1132, 40
      %v1202 = vpop.permute.xlu0 %1201
      %1203 = vrot.lane.b32.xlu0 %v1135, 40
      %v1204 = vpop.permute.xlu0 %1203
      %1205 = vrot.lane.b32.xlu0 %v1137, 40
      %v1206 = vpop.permute.xlu0 %1205
      %1207 = vrot.lane.b32.xlu0 %v1140, 40
      %v1208 = vpop.permute.xlu0 %1207
      %1209 = vrot.lane.b32.xlu0 %v1142, 40
      %v1210 = vpop.permute.xlu0 %1209
      %1211 = vrot.lane.b32.xlu0 %v1145, 40
      %v1212 = vpop.permute.xlu0 %1211
      %1213 = vrot.lane.b32.xlu0 %v1147, 40
      %v1214 = vpop.permute.xlu0 %1213
      %1215 = vrot.lane.b32.xlu0 %v1150, 40
      %v1216 = vpop.permute.xlu0 %1215
      %1217 = vrot.lane.b32.xlu0 %v1152, 40
      %v1218 = vpop.permute.xlu0 %1217
      %1219 = vrot.lane.b32.xlu0 %v1155, 40
      %v1220 = vpop.permute.xlu0 %1219
      %1221 = vrot.lane.b32.xlu0 %v1157, 40
      %v1222 = vpop.permute.xlu0 %1221
      %1223 = vrot.lane.b32.xlu0 %v1160, 40
      %v1224 = vpop.permute.xlu0 %1223
      %1225 = vrot.lane.b32.xlu0 %v1162, 40
      %v1226 = vpop.permute.xlu0 %1225
      %vm1259 = vcmask 64512
      %v1260 = vsel %vm1259, %v246, %v524
      %v1261 = vsel %vm1259, %v247, %v526
      %v1262 = vsel %vm1259, %v249, %v528
      %v1263 = vsel %vm1259, %v250, %v530
      %v1264 = vsel %vm1259, %v252, %v532
      %v1265 = vsel %vm1259, %v253, %v534
      %v1266 = vsel %vm1259, %v255, %v536
      %v1267 = vsel %vm1259, %v256, %v538
      %v1268 = vsel %vm1259, %v258, %v540
      %v1269 = vsel %vm1259, %v259, %v542
      %v1270 = vsel %vm1259, %v261, %v544
      %v1271 = vsel %vm1259, %v262, %v546
      %v1272 = vsel %vm1259, %v264, %v548
      %v1273 = vsel %vm1259, %v265, %v550
      %v1274 = vsel %vm1259, %v267, %v552
      %v1275 = vsel %vm1259, %v268, %v554
      %v1276 = vsel %vm1259, %v270, %v556
      %v1277 = vsel %vm1259, %v271, %v558
      %v1278 = vsel %vm1259, %v273, %v560
      %v1279 = vsel %vm1259, %v274, %v562
      %v1280 = vsel %vm1259, %v276, %v564
      %v1281 = vsel %vm1259, %v277, %v566
      %v1282 = vsel %vm1259, %v279, %v568
      %v1283 = vsel %vm1259, %v280, %v570
      %v1284 = vsel %vm1259, %v282, %v572
      %v1285 = vsel %vm1259, %v283, %v574
      %v1286 = vsel %vm1259, %v285, %v576
      %v1287 = vsel %vm1259, %v286, %v578
      %v1288 = vsel %vm1259, %v288, %v580
      %v1289 = vsel %vm1259, %v289, %v582
      %v1290 = vsel %vm1259, %v291, %v584
      %v1291 = vsel %vm1259, %v292, %v586
      %vm1292 = vcmask 130048
      %v1293 = vsel %vm1292, %v1260, %v652
      %v1294 = vsel %vm1292, %v1261, %v654
      %v1295 = vsel %vm1292, %v1262, %v656
      %v1296 = vsel %vm1292, %v1263, %v658
      %v1297 = vsel %vm1292, %v1264, %v660
      %v1298 = vsel %vm1292, %v1265, %v662
      %v1299 = vsel %vm1292, %v1266, %v664
      %v1300 = vsel %vm1292, %v1267, %v666
      %v1301 = vsel %vm1292, %v1268, %v668
      %v1302 = vsel %vm1292, %v1269, %v670
      %v1303 = vsel %vm1292, %v1270, %v672
      %v1304 = vsel %vm1292, %v1271, %v674
      %v1305 = vsel %vm1292, %v1272, %v676
      %v1306 = vsel %vm1292, %v1273, %v678
      %v1307 = vsel %vm1292, %v1274, %v680
      %v1308 = vsel %vm1292, %v1275, %v682
      %v1309 = vsel %vm1292, %v1276, %v684
      %v1310 = vsel %vm1292, %v1277, %v686
      %v1311 = vsel %vm1292, %v1278, %v688
      %v1312 = vsel %vm1292, %v1279, %v690
      %v1313 = vsel %vm1292, %v1280, %v692
      %v1314 = vsel %vm1292, %v1281, %v694
      %v1315 = vsel %vm1292, %v1282, %v696
      %v1316 = vsel %vm1292, %v1283, %v698
      %v1317 = vsel %vm1292, %v1284, %v700
      %v1318 = vsel %vm1292, %v1285, %v702
      %v1319 = vsel %vm1292, %v1286, %v704
      %v1320 = vsel %vm1292, %v1287, %v706
      %v1321 = vsel %vm1292, %v1288, %v708
      %v1322 = vsel %vm1292, %v1289, %v710
      %v1323 = vsel %vm1292, %v1290, %v712
      %v1324 = vsel %vm1292, %v1291, %v714
      %vm1325 = vcmask 195584
      %v1326 = vsel %vm1325, %v1293, %v844
      %v1327 = vsel %vm1325, %v1294, %v846
      %v1328 = vsel %vm1325, %v1295, %v848
      %v1329 = vsel %vm1325, %v1296, %v850
      %v1330 = vsel %vm1325, %v1297, %v852
      %v1331 = vsel %vm1325, %v1298, %v854
      %v1332 = vsel %vm1325, %v1299, %v856
      %v1333 = vsel %vm1325, %v1300, %v858
      %v1334 = vsel %vm1325, %v1301, %v860
      %v1335 = vsel %vm1325, %v1302, %v862
      %v1336 = vsel %vm1325, %v1303, %v864
      %v1337 = vsel %vm1325, %v1304, %v866
      %v1338 = vsel %vm1325, %v1305, %v868
      %v1339 = vsel %vm1325, %v1306, %v870
      %v1340 = vsel %vm1325, %v1307, %v872
      %v1341 = vsel %vm1325, %v1308, %v874
      %v1342 = vsel %vm1325, %v1309, %v876
      %v1343 = vsel %vm1325, %v1310, %v878
      %v1344 = vsel %vm1325, %v1311, %v880
      %v1345 = vsel %vm1325, %v1312, %v882
      %v1346 = vsel %vm1325, %v1313, %v884
      %v1347 = vsel %vm1325, %v1314, %v886
      %v1348 = vsel %vm1325, %v1315, %v888
      %v1349 = vsel %vm1325, %v1316, %v890
      %v1350 = vsel %vm1325, %v1317, %v892
      %v1351 = vsel %vm1325, %v1318, %v894
      %v1352 = vsel %vm1325, %v1319, %v896
      %v1353 = vsel %vm1325, %v1320, %v898
      %v1354 = vsel %vm1325, %v1321, %v900
      %v1355 = vsel %vm1325, %v1322, %v902
      %v1356 = vsel %vm1325, %v1323, %v904
      %v1357 = vsel %vm1325, %v1324, %v906
      %vm1358 = vcmask 261120
      %v1359 = vsel %vm1358, %v1326, %v972
      %v1360 = vsel %vm1358, %v1327, %v974
      %v1361 = vsel %vm1358, %v1328, %v976
      %v1362 = vsel %vm1358, %v1329, %v978
      %v1363 = vsel %vm1358, %v1330, %v980
      %v1364 = vsel %vm1358, %v1331, %v982
      %v1365 = vsel %vm1358, %v1332, %v984
      %v1366 = vsel %vm1358, %v1333, %v986
      %v1367 = vsel %vm1358, %v1334, %v988
      %v1368 = vsel %vm1358, %v1335, %v990
      %v1369 = vsel %vm1358, %v1336, %v992
      %v1370 = vsel %vm1358, %v1337, %v994
      %v1371 = vsel %vm1358, %v1338, %v996
      %v1372 = vsel %vm1358, %v1339, %v998
      %v1373 = vsel %vm1358, %v1340, %v1000
      %v1374 = vsel %vm1358, %v1341, %v1002
      %v1375 = vsel %vm1358, %v1342, %v1004
      %v1376 = vsel %vm1358, %v1343, %v1006
      %v1377 = vsel %vm1358, %v1344, %v1008
      %v1378 = vsel %vm1358, %v1345, %v1010
      %v1379 = vsel %vm1358, %v1346, %v1012
      %v1380 = vsel %vm1358, %v1347, %v1014
      %v1381 = vsel %vm1358, %v1348, %v1016
      %v1382 = vsel %vm1358, %v1349, %v1018
      %v1383 = vsel %vm1358, %v1350, %v1020
      %v1384 = vsel %vm1358, %v1351, %v1022
      %v1385 = vsel %vm1358, %v1352, %v1024
      %v1386 = vsel %vm1358, %v1353, %v1026
      %v1387 = vsel %vm1358, %v1354, %v1028
      %v1388 = vsel %vm1358, %v1355, %v1030
      %v1389 = vsel %vm1358, %v1356, %v1032
      %v1390 = vsel %vm1358, %v1357, %v1034
      %vm1391 = vcmask 326656
      %v1392 = vsel %vm1391, %v1359, %v1164
      %v1393 = vsel %vm1391, %v1360, %v1166
      %v1394 = vsel %vm1391, %v1361, %v1168
      %v1395 = vsel %vm1391, %v1362, %v1170
      %v1396 = vsel %vm1391, %v1363, %v1172
      %v1397 = vsel %vm1391, %v1364, %v1174
      %v1398 = vsel %vm1391, %v1365, %v1176
      %v1399 = vsel %vm1391, %v1366, %v1178
      %v1400 = vsel %vm1391, %v1367, %v1180
      %v1401 = vsel %vm1391, %v1368, %v1182
      %v1402 = vsel %vm1391, %v1369, %v1184
      %v1403 = vsel %vm1391, %v1370, %v1186
      %v1404 = vsel %vm1391, %v1371, %v1188
      %v1405 = vsel %vm1391, %v1372, %v1190
      %v1406 = vsel %vm1391, %v1373, %v1192
      %v1407 = vsel %vm1391, %v1374, %v1194
      %v1408 = vsel %vm1391, %v1375, %v1196
      %v1409 = vsel %vm1391, %v1376, %v1198
      %v1410 = vsel %vm1391, %v1377, %v1200
      %v1411 = vsel %vm1391, %v1378, %v1202
      %v1412 = vsel %vm1391, %v1379, %v1204
      %v1413 = vsel %vm1391, %v1380, %v1206
      %v1414 = vsel %vm1391, %v1381, %v1208
      %v1415 = vsel %vm1391, %v1382, %v1210
      %v1416 = vsel %vm1391, %v1383, %v1212
      %v1417 = vsel %vm1391, %v1384, %v1214
      %v1418 = vsel %vm1391, %v1385, %v1216
      %v1419 = vsel %vm1391, %v1386, %v1218
      %v1420 = vsel %vm1391, %v1387, %v1220
      %v1421 = vsel %vm1391, %v1388, %v1222
      %v1422 = vsel %vm1391, %v1389, %v1224
      %v1423 = vsel %vm1391, %v1390, %v1226
      %v1424 = vld [vmem:[%s2] sm:$0xff]
      %v1425 = vld [vmem:[%s2 + $0x8] sm:$0xff]
      %v1426 = vld [vmem:[%s2 + $0x10] sm:$0xff]
      %v1427 = vld [vmem:[%s2 + $0x18] sm:$0xff]
      %v1428 = vld [vmem:[%s2 + $0x20] sm:$0xff]
      %v1429 = vld [vmem:[%s2 + $0x28] sm:$0xff]
      %v1430 = vld [vmem:[%s3] sm:$0x1]
      %v1432 = vperm.slane %v1430, 0
      %vm1434 = vcmask 392192
      %v1436 = vsel %vm1434, %v1392, 0
      %v1439 = vsel %vm1434, %v1393, 0
      %v1442 = vsel %vm1434, %v1394, 0
      %v1445 = vsel %vm1434, %v1395, 0
      %v1448 = vsel %vm1434, %v1396, 0
      %v1451 = vsel %vm1434, %v1397, 0
      %v1454 = vsel %vm1434, %v1398, 0
      %v1457 = vsel %vm1434, %v1399, 0
      %v1460 = vsel %vm1434, %v1400, 0
      %v1463 = vsel %vm1434, %v1401, 0
      %v1466 = vsel %vm1434, %v1402, 0
      %v1469 = vsel %vm1434, %v1403, 0
      %v1472 = vsel %vm1434, %v1404, 0
      %v1475 = vsel %vm1434, %v1405, 0
      %v1478 = vsel %vm1434, %v1406, 0
      %v1481 = vsel %vm1434, %v1407, 0
      %v1484 = vsel %vm1434, %v1408, 0
      %v1487 = vsel %vm1434, %v1409, 0
      %v1490 = vsel %vm1434, %v1410, 0
      %v1493 = vsel %vm1434, %v1411, 0
      %v1496 = vsel %vm1434, %v1412, 0
      %v1499 = vsel %vm1434, %v1413, 0
      %v1502 = vsel %vm1434, %v1414, 0
      %v1505 = vsel %vm1434, %v1415, 0
      %v1508 = vsel %vm1434, %v1416, 0
      %v1511 = vsel %vm1434, %v1417, 0
      %v1514 = vsel %vm1434, %v1418, 0
      %v1517 = vsel %vm1434, %v1419, 0
      %v1520 = vsel %vm1434, %v1420, 0
      %v1523 = vsel %vm1434, %v1421, 0
      %v1526 = vsel %vm1434, %v1422, 0
      %v1529 = vsel %vm1434, %v1423, 0
      %1531 = vmatpush.msra.mxu0 0.0
      %1532 = vmatpush.msra.mxu0 0.0
      %1533 = vmatpush.msra.mxu0 0.0
      %1534 = vmatpush.msra.mxu0 0.0
      %1535 = vmatpush.msra.mxu0 0.0
      %1536 = vmatpush.msra.mxu0 0.0
      %1537 = vmatpush.msra.mxu0 0.0
      %1538 = vmatpush.msra.mxu0 0.0
      %1539 = vmatpush.msra.mxu0 0.0
      %1540 = vmatpush.msra.mxu0 0.0
      %1541 = vmatpush.msra.mxu0 %v1429
      %1542 = vmatpush.msra.mxu0 %v1428
      %1543 = vmatpush.msra.mxu0 %v1427
      %1544 = vmatpush.msra.mxu0 %v1426
      %1545 = vmatpush.msra.mxu0 %v1425
      %1546 = vmatpush.msra.mxu0 %v1424
      %1547 = vmatmul.f32.gmra.mxu0 %v1436
      %v1548 = vpop.f32.mrf.mxu0
      %v1549 = vadd.f32 %v1432, %v1548
      %1550 = vmatmul.f32.gmra.mxu0 %v1439
      %v1551 = vpop.f32.mrf.mxu0
      %v1552 = vadd.f32 %v1432, %v1551
      %1553 = vmatmul.f32.gmra.mxu0 %v1442
      %v1554 = vpop.f32.mrf.mxu0
      %v1555 = vadd.f32 %v1432, %v1554
      %1556 = vmatmul.f32.gmra.mxu0 %v1445
      %v1557 = vpop.f32.mrf.mxu0
      %v1558 = vadd.f32 %v1432, %v1557
      %1559 = vmatmul.f32.gmra.mxu0 %v1448
      %v1560 = vpop.f32.mrf.mxu0
      %v1561 = vadd.f32 %v1432, %v1560
      %1562 = vmatmul.f32.gmra.mxu0 %v1451
      %v1563 = vpop.f32.mrf.mxu0
      %v1564 = vadd.f32 %v1432, %v1563
      %1565 = vmatmul.f32.gmra.mxu0 %v1454
      %v1566 = vpop.f32.mrf.mxu0
      %v1567 = vadd.f32 %v1432, %v1566
      %1568 = vmatmul.f32.gmra.mxu0 %v1457
      %v1569 = vpop.f32.mrf.mxu0
      %v1570 = vadd.f32 %v1432, %v1569
      %1571 = vmatmul.f32.gmra.mxu0 %v1460
      %v1572 = vpop.f32.mrf.mxu0
      %v1573 = vadd.f32 %v1432, %v1572
      %1574 = vmatmul.f32.gmra.mxu0 %v1463
      %v1575 = vpop.f32.mrf.mxu0
      %v1576 = vadd.f32 %v1432, %v1575
      %1577 = vmatmul.f32.gmra.mxu0 %v1466
      %v1578 = vpop.f32.mrf.mxu0
      %v1579 = vadd.f32 %v1432, %v1578
      %1580 = vmatmul.f32.gmra.mxu0 %v1469
      %v1581 = vpop.f32.mrf.mxu0
      %v1582 = vadd.f32 %v1432, %v1581
      %1583 = vmatmul.f32.gmra.mxu0 %v1472
      %v1584 = vpop.f32.mrf.mxu0
      %v1585 = vadd.f32 %v1432, %v1584
      %1586 = vmatmul.f32.gmra.mxu0 %v1475
      %v1587 = vpop.f32.mrf.mxu0
      %v1588 = vadd.f32 %v1432, %v1587
      %1589 = vmatmul.f32.gmra.mxu0 %v1478
      %v1590 = vpop.f32.mrf.mxu0
      %v1591 = vadd.f32 %v1432, %v1590
      %1592 = vmatmul.f32.gmra.mxu0 %v1481
      %v1593 = vpop.f32.mrf.mxu0
      %v1594 = vadd.f32 %v1432, %v1593
      %1595 = vmatmul.f32.gmra.mxu0 %v1484
      %v1596 = vpop.f32.mrf.mxu0
      %v1597 = vadd.f32 %v1432, %v1596
      %1598 = vmatmul.f32.gmra.mxu0 %v1487
      %v1599 = vpop.f32.mrf.mxu0
      %v1600 = vadd.f32 %v1432, %v1599
      %1601 = vmatmul.f32.gmra.mxu0 %v1490
      %v1602 = vpop.f32.mrf.mxu0
      %v1603 = vadd.f32 %v1432, %v1602
      %1604 = vmatmul.f32.gmra.mxu0 %v1493
      %v1605 = vpop.f32.mrf.mxu0
      %v1606 = vadd.f32 %v1432, %v1605
      %1607 = vmatmul.f32.gmra.mxu0 %v1496
      %v1608 = vpop.f32.mrf.mxu0
      %v1609 = vadd.f32 %v1432, %v1608
      %1610 = vmatmul.f32.gmra.mxu0 %v1499
      %v1611 = vpop.f32.mrf.mxu0
      %v1612 = vadd.f32 %v1432, %v1611
      %1613 = vmatmul.f32.gmra.mxu0 %v1502
      %v1614 = vpop.f32.mrf.mxu0
      %v1615 = vadd.f32 %v1432, %v1614
      %1616 = vmatmul.f32.gmra.mxu0 %v1505
      %v1617 = vpop.f32.mrf.mxu0
      %v1618 = vadd.f32 %v1432, %v1617
      %1619 = vmatmul.f32.gmra.mxu0 %v1508
      %v1620 = vpop.f32.mrf.mxu0
      %v1621 = vadd.f32 %v1432, %v1620
      %1622 = vmatmul.f32.gmra.mxu0 %v1511
      %v1623 = vpop.f32.mrf.mxu0
      %v1624 = vadd.f32 %v1432, %v1623
      %1625 = vmatmul.f32.gmra.mxu0 %v1514
      %v1626 = vpop.f32.mrf.mxu0
      %v1627 = vadd.f32 %v1432, %v1626
      %1628 = vmatmul.f32.gmra.mxu0 %v1517
      %v1629 = vpop.f32.mrf.mxu0
      %v1630 = vadd.f32 %v1432, %v1629
      %1631 = vmatmul.f32.gmra.mxu0 %v1520
      %v1632 = vpop.f32.mrf.mxu0
      %v1633 = vadd.f32 %v1432, %v1632
      %1634 = vmatmul.f32.gmra.mxu0 %v1523
      %v1635 = vpop.f32.mrf.mxu0
      %v1636 = vadd.f32 %v1432, %v1635
      %1637 = vmatmul.f32.gmra.mxu0 %v1526
      %v1638 = vpop.f32.mrf.mxu0
      %v1639 = vadd.f32 %v1432, %v1638
      %1640 = vmatmul.f32.gmra.mxu0 %v1529
      %v1641 = vpop.f32.mrf.mxu0
      %v1642 = vadd.f32 %v1432, %v1641
      %1643 = vdwg.mxu0
      %v1644 = vmax.f32 %v1549, 0.0
      %v1645 = vmax.f32 %v1552, 0.0
      %v1646 = vmax.f32 %v1555, 0.0
      %v1647 = vmax.f32 %v1558, 0.0
      %v1648 = vmax.f32 %v1561, 0.0
      %v1649 = vmax.f32 %v1564, 0.0
      %v1650 = vmax.f32 %v1567, 0.0
      %v1651 = vmax.f32 %v1570, 0.0
      %v1652 = vmax.f32 %v1573, 0.0
      %v1653 = vmax.f32 %v1576, 0.0
      %v1654 = vmax.f32 %v1579, 0.0
      %v1655 = vmax.f32 %v1582, 0.0
      %v1656 = vmax.f32 %v1585, 0.0
      %v1657 = vmax.f32 %v1588, 0.0
      %v1658 = vmax.f32 %v1591, 0.0
      %v1659 = vmax.f32 %v1594, 0.0
      %v1660 = vmax.f32 %v1597, 0.0
      %v1661 = vmax.f32 %v1600, 0.0
      %v1662 = vmax.f32 %v1603, 0.0
      %v1663 = vmax.f32 %v1606, 0.0
      %v1664 = vmax.f32 %v1609, 0.0
      %v1665 = vmax.f32 %v1612, 0.0
      %v1666 = vmax.f32 %v1615, 0.0
      %v1667 = vmax.f32 %v1618, 0.0
      %v1668 = vmax.f32 %v1621, 0.0
      %v1669 = vmax.f32 %v1624, 0.0
      %v1670 = vmax.f32 %v1627, 0.0
      %v1671 = vmax.f32 %v1630, 0.0
      %v1672 = vmax.f32 %v1633, 0.0
      %v1673 = vmax.f32 %v1636, 0.0
      %v1674 = vmax.f32 %v1639, 0.0
      %v1675 = vmax.f32 %v1642, 0.0
      %1676 = vst.msk [vmem:[%s241] sm:$0xff] %vm1259, %v1644
      %1677 = vst.msk [vmem:[%s241 + $0x8] sm:$0xff] %vm1259, %v1645
      %1678 = vst.msk [vmem:[%s241 + $0x10] sm:$0xff] %vm1259, %v1646
      %1679 = vst.msk [vmem:[%s241 + $0x18] sm:$0xff] %vm1259, %v1647
      %1680 = vst.msk [vmem:[%s241 + $0x20] sm:$0xff] %vm1259, %v1648
      %1681 = vst.msk [vmem:[%s241 + $0x28] sm:$0xff] %vm1259, %v1649
      %1682 = vst.msk [vmem:[%s241 + $0x30] sm:$0xff] %vm1259, %v1650
      %1683 = vst.msk [vmem:[%s241 + $0x38] sm:$0xff] %vm1259, %v1651
      %1684 = vst.msk [vmem:[%s241 + $0x40] sm:$0xff] %vm1259, %v1652
      %1685 = vst.msk [vmem:[%s241 + $0x48] sm:$0xff] %vm1259, %v1653
      %1686 = vst.msk [vmem:[%s241 + $0x50] sm:$0xff] %vm1259, %v1654
      %1687 = vst.msk [vmem:[%s241 + $0x58] sm:$0xff] %vm1259, %v1655
      %1688 = vst.msk [vmem:[%s241 + $0x60] sm:$0xff] %vm1259, %v1656
      %1689 = vst.msk [vmem:[%s241 + $0x68] sm:$0xff] %vm1259, %v1657
      %1690 = vst.msk [vmem:[%s241 + $0x70] sm:$0xff] %vm1259, %v1658
      %1691 = vst.msk [vmem:[%s241 + $0x78] sm:$0xff] %vm1259, %v1659
      %1692 = vst.msk [vmem:[%s241 + $0x80] sm:$0xff] %vm1259, %v1660
      %1693 = vst.msk [vmem:[%s241 + $0x88] sm:$0xff] %vm1259, %v1661
      %1694 = vst.msk [vmem:[%s241 + $0x90] sm:$0xff] %vm1259, %v1662
      %1695 = vst.msk [vmem:[%s241 + $0x98] sm:$0xff] %vm1259, %v1663
      %1696 = vst.msk [vmem:[%s241 + $0xa0] sm:$0xff] %vm1259, %v1664
      %1697 = vst.msk [vmem:[%s241 + $0xa8] sm:$0xff] %vm1259, %v1665
      %1698 = vst.msk [vmem:[%s241 + $0xb0] sm:$0xff] %vm1259, %v1666
      %1699 = vst.msk [vmem:[%s241 + $0xb8] sm:$0xff] %vm1259, %v1667
      %1700 = vst.msk [vmem:[%s241 + $0xc0] sm:$0xff] %vm1259, %v1668
      %1701 = vst.msk [vmem:[%s241 + $0xc8] sm:$0xff] %vm1259, %v1669
      %1702 = vst.msk [vmem:[%s241 + $0xd0] sm:$0xff] %vm1259, %v1670
      %1703 = vst.msk [vmem:[%s241 + $0xd8] sm:$0xff] %vm1259, %v1671
      %1704 = vst.msk [vmem:[%s241 + $0xe0] sm:$0xff] %vm1259, %v1672
      %1705 = vst.msk [vmem:[%s241 + $0xe8] sm:$0xff] %vm1259, %v1673
      %1706 = vst.msk [vmem:[%s241 + $0xf0] sm:$0xff] %vm1259, %v1674
      %1707 = vst.msk [vmem:[%s241 + $0xf8] sm:$0xff] %vm1259, %v1675
      %s1708 = smul.u32 16, %s20
      %p1709 = scmp.lt.s32.totalorder %s19, 1
      %s1710 = scalar_select %p1709, %s19, 1
      %p1711 = scmp.lt.s32.totalorder %s1708, 15
      %s1712 = scalar_select %p1711, %s1708, 15
      %s1713 = smul.addr %s1712, 2
      %s1714 = smul.addr %s1710, 32
      %s1715 = sadd.s32 %s1713, %s1714
      %s1716 = smul.addr %s1715, 8
      %s1717 = scalar_lea.vmem %s4, %s1716
      // Predicated region
      $region37: #{backbone_with_fpn.9} parent=35 // pred_check
        %p1718 = pneg %p141
      $region38: #{backbone_with_fpn.9} parent=35 // pred_check_branch
        %1720 = sbr.rel (%p1718) target = $region40
      $region39: #{backbone_with_fpn.9} parent=35 // pred_region
        %s1721 = smul.u32 16, %s20
      $region40: #{backbone_with_fpn.9} parent=35 // pred_fallthru
        _
    $region36: #{backbone_with_fpn.9} parent=5 // pred_fallthru
      _
    %p1722 = scmp.le.s32.totalorder 2, %s10
    // Predicated region
    $region41: #{backbone_with_fpn.9} parent=5 // pred_check
      %p1723 = pneg %p1722
    $region42: #{backbone_with_fpn.9} parent=5 // pred_check_branch
      %1725 = sbr.rel (%p1723) target = $region44
    $region43: #{backbone_with_fpn.9} parent=5 // pred_region
      %s1726 = ssub.s32 %s10, 2
      // Predicated region
      $region45: #{backbone_with_fpn.9} parent=43 // pred_check
        %p1727 = pneg %p147
      $region46: #{backbone_with_fpn.9} parent=43 // pred_check_branch
        %1729 = sbr.rel (%p1727) target = $region48
      $region47: #{backbone_with_fpn.9} parent=43 // pred_region
        %s1730 = smul.u32 16, %s22
        %p1731 = scmp.lt.s32.totalorder %s21, 1
        %s1732 = scalar_select %p1731, %s21, 1
        %p1733 = scmp.lt.s32.totalorder %s1730, 15
        %s1734 = scalar_select %p1733, %s1730, 15
        %s1735 = smul.addr %s1734, 2
        %s1736 = smul.addr %s1732, 32
        %s1737 = sadd.s32 %s1735, %s1736
        %s1738 = smul.addr %s1737, 8
        %s1739 = scalar_lea.vmem %s4, %s1738
      $region48: #{backbone_with_fpn.9} parent=43 // pred_fallthru
        _
    $region44: #{backbone_with_fpn.9} parent=5 // pred_fallthru
      _
  $region6: #{backbone_with_fpn.9} parent=0 // loop_footer
    %s14 = sadd.s32 1, %s10
  $region7: #{backbone_with_fpn.9} parent=0 // loop_footer_branch
    %9 = sbr.rel target = $region3
  $region8: #{backbone_with_fpn.9} parent=0 // loop_exit
    _

// kernel: backbone_with_fpn.14
$region0: #{backbone_with_fpn.14}
  #allocation0 [shape = 'u32[]', space=smem, size = 0x4, offset = 0x4, fixed_abs, tag = 'smem constant byte address 0x4 - core index']
  #allocation1 [shape = 'u32[72,128]{1,0:T(1,128)}', space=vmem, size = 0x9000, scoped, tag = 'internal scratch']
  %s0 = inlined_call_operand.vmem [shape: f32[2,8,8,16], index: 0, kind: input, shape index: {}]
  %s1 = inlined_call_operand.vmem [shape: f32[2,4,4,16], index: 1, kind: input, shape index: {}]
  %s2 = inlined_call_operand.vmem [shape: f32[16,16], index: 2, kind: input, shape index: {}]
  %s3 = inlined_call_operand.vmem [shape: f32[1,16], index: 3, kind: input, shape index: {}]
  %s4 = inlined_call_operand.vmem [shape: f32[2,8,8,16], index: 4, kind: output, shape index: {}]
  %s5 = sld [smem:[#allocation0]]
  $region49: #{backbone_with_fpn.14} parent=0
    _
  %s7 = ssub.s32 1, %s5
  %s8 = scalar_select 0, %s7, %s5
  loop: start=0, step=1, limit=4
  $region2: #{backbone_with_fpn.14} parent=0 // loop_pre_header
    _
  $region3: #{backbone_with_fpn.14} parent=0 // loop_header
    %s10 = sphi 0, %s14
    %p11 = scmp.ge.s32.totalorder %s10, 4
    %s17 = sphi 0, %s29
    %s18 = sphi 0, %s25
    %s19 = sphi 0, %s17
    %s20 = sphi 0, %s18
    %s21 = sphi 0, %s19
    %s22 = sphi 0, %s20
    %s34 = sphi 0, %s36
    %s37 = sphi 0, %s34
    %s38 = sphi 0, %s37
    %s54 = sphi 0, %s38
    %s62 = sphi 0, %s64
    %s65 = sphi 0, %s62
    %s66 = sphi 0, %s65
    %s82 = sphi 0, %s66
    %s86 = sphi 0, %s86
    %s88 = sphi 0, %s86
    %s89 = sphi 0, %s88
    %s103 = sphi 0, %s89
    %s107 = sphi 0, %s107
    %s109 = sphi 0, %s107
    %s110 = sphi 0, %s109
    %s124 = sphi 0, %s110
    %s132 = sphi 0, %s134
    %s135 = sphi 0, %s132
    %s136 = sphi 0, %s135
    %s152 = sphi 0, %s136
  $region4: #{backbone_with_fpn.14} parent=0 // loop_header_branch
    %13 = sbr.rel (%p11) target = $region8
  $region5: #{backbone_with_fpn.14} parent=0 // loop_body
    %s15 = ssub.s32 %s10, 1
    %s16 = ssub.s32 %s10, 2
    %s23 = sadd.s32 1, %s18
    %p24 = scmp.ge.s32.totalorder %s23, 1
    %s25 = scalar_select %p24, 0, %s23
    %s26 = sadd.s32 1, %s17
    %s27 = scalar_select %p24, %s26, %s17
    %p28 = scmp.ge.s32.totalorder %s27, 2
    %s29 = scalar_select %p28, 0, %s27
    %s30 = ssub.s32 %s17, %s29
    %s31 = ssub.s32 %s18, %s25
    %s32 = sor.u32 %s30, %s31
    %p33 = scmp.eq.s32.totalorder %s32, 0
    %s35 = sadd.s32 %s34, 1
    %s36 = scalar_select %p33, %s34, %s35
    %p39 = pneg %p33
    %p40 = scmp.eq.s32.totalorder %s10, 1
    %p41 = por %p39, %p40
    %p42 = scmp.ne.s32.totalorder %s34, %s37
    %p43 = scmp.eq.s32.totalorder %s10, 0
    %p44 = por %p42, %p43
    %p45 = scmp.ne.s32.totalorder %s34, %s37
    %p46 = scmp.eq.s32.totalorder %s15, 1
    %p47 = por %p45, %p46
    %p48 = scmp.ne.s32.totalorder %s37, %s38
    %p49 = scmp.eq.s32.totalorder %s15, 0
    %p50 = por %p48, %p49
    %p51 = scmp.ne.s32.totalorder %s37, %s38
    %p52 = scmp.eq.s32.totalorder %s16, 1
    %p53 = por %p51, %p52
    %p55 = scmp.ne.s32.totalorder %s38, %s54
    %p56 = scmp.eq.s32.totalorder %s16, 0
    %p57 = por %p55, %p56
    %s58 = ssub.s32 %s17, %s29
    %s59 = ssub.s32 %s18, %s25
    %s60 = sor.u32 %s58, %s59
    %p61 = scmp.eq.s32.totalorder %s60, 0
    %s63 = sadd.s32 %s62, 1
    %s64 = scalar_select %p61, %s62, %s63
    %p67 = pneg %p61
    %p68 = scmp.eq.s32.totalorder %s10, 1
    %p69 = por %p67, %p68
    %p70 = scmp.ne.s32.totalorder %s62, %s65
    %p71 = scmp.eq.s32.totalorder %s10, 0
    %p72 = por %p70, %p71
    %p73 = scmp.ne.s32.totalorder %s62, %s65
    %p74 = scmp.eq.s32.totalorder %s15, 1
    %p75 = por %p73, %p74
    %p76 = scmp.ne.s32.totalorder %s65, %s66
    %p77 = scmp.eq.s32.totalorder %s15, 0
    %p78 = por %p76, %p77
    %p79 = scmp.ne.s32.totalorder %s65, %s66
    %p80 = scmp.eq.s32.totalorder %s16, 1
    %p81 = por %p79, %p80
    %p83 = scmp.ne.s32.totalorder %s66, %s82
    %p84 = scmp.eq.s32.totalorder %s16, 0
    %p85 = por %p83, %p84
    %s87 = sadd.s32 %s86, 1
    %p90 = scmp.eq.s32.totalorder %s10, 1
    %p91 = scmp.ne.s32.totalorder %s86, %s88
    %p92 = scmp.eq.s32.totalorder %s10, 0
    %p93 = por %p91, %p92
    %p94 = scmp.ne.s32.totalorder %s86, %s88
    %p95 = scmp.eq.s32.totalorder %s15, 1
    %p96 = por %p94, %p95
    %p97 = scmp.ne.s32.totalorder %s88, %s89
    %p98 = scmp.eq.s32.totalorder %s15, 0
    %p99 = por %p97, %p98
    %p100 = scmp.ne.s32.totalorder %s88, %s89
    %p101 = scmp.eq.s32.totalorder %s16, 1
    %p102 = por %p100, %p101
    %p104 = scmp.ne.s32.totalorder %s89, %s103
    %p105 = scmp.eq.s32.totalorder %s16, 0
    %p106 = por %p104, %p105
    %s108 = sadd.s32 %s107, 1
    %p111 = scmp.eq.s32.totalorder %s10, 1
    %p112 = scmp.ne.s32.totalorder %s107, %s109
    %p113 = scmp.eq.s32.totalorder %s10, 0
    %p114 = por %p112, %p113
    %p115 = scmp.ne.s32.totalorder %s107, %s109
    %p116 = scmp.eq.s32.totalorder %s15, 1
    %p117 = por %p115, %p116
    %p118 = scmp.ne.s32.totalorder %s109, %s110
    %p119 = scmp.eq.s32.totalorder %s15, 0
    %p120 = por %p118, %p119
    %p121 = scmp.ne.s32.totalorder %s109, %s110
    %p122 = scmp.eq.s32.totalorder %s16, 1
    %p123 = por %p121, %p122
    %p125 = scmp.ne.s32.totalorder %s110, %s124
    %p126 = scmp.eq.s32.totalorder %s16, 0
    %p127 = por %p125, %p126
    %s128 = ssub.s32 %s17, %s29
    %s129 = ssub.s32 %s18, %s25
    %s130 = sor.u32 %s128, %s129
    %p131 = scmp.eq.s32.totalorder %s130, 0
    %s133 = sadd.s32 %s132, 1
    %s134 = scalar_select %p131, %s132, %s133
    %p137 = pneg %p131
    %p138 = scmp.eq.s32.totalorder %s10, 1
    %p139 = por %p137, %p138
    %p140 = scmp.ne.s32.totalorder %s132, %s135
    %p141 = scmp.eq.s32.totalorder %s10, 0
    %p142 = por %p140, %p141
    %p143 = scmp.ne.s32.totalorder %s132, %s135
    %p144 = scmp.eq.s32.totalorder %s15, 1
    %p145 = por %p143, %p144
    %p146 = scmp.ne.s32.totalorder %s135, %s136
    %p147 = scmp.eq.s32.totalorder %s15, 0
    %p148 = por %p146, %p147
    %p149 = scmp.ne.s32.totalorder %s135, %s136
    %p150 = scmp.eq.s32.totalorder %s16, 1
    %p151 = por %p149, %p150
    %p153 = scmp.ne.s32.totalorder %s136, %s152
    %p154 = scmp.eq.s32.totalorder %s16, 0
    %p155 = por %p153, %p154
    %p156 = scmp.le.s32.totalorder 1, %s10
    %p157 = scmp.lt.s32.totalorder %s10, 3
    %p158 = pnand %p156, %p157
    %p159 = pneg %p158
    // Predicated region
    $region9: #{backbone_with_fpn.14} parent=5 // pred_check
      _
    $region10: #{backbone_with_fpn.14} parent=5 // pred_check_branch
      %161 = sbr.rel (%p158) target = $region12
    $region11: #{backbone_with_fpn.14} parent=5 // pred_region
      %s162 = ssub.s32 %s10, 1
      // Predicated region
      $region13: #{backbone_with_fpn.14} parent=11 // pred_check
        %p163 = pneg %p99
      $region14: #{backbone_with_fpn.14} parent=11 // pred_check_branch
        %165 = sbr.rel (%p163) target = $region16
      $region15: #{backbone_with_fpn.14} parent=11 // pred_region
        _
      $region16: #{backbone_with_fpn.14} parent=11 // pred_fallthru
        _
      // Predicated region
      $region17: #{backbone_with_fpn.14} parent=11 // pred_check
        %p166 = pneg %p120
      $region18: #{backbone_with_fpn.14} parent=11 // pred_check_branch
        %168 = sbr.rel (%p166) target = $region20
      $region19: #{backbone_with_fpn.14} parent=11 // pred_region
        _
      $region20: #{backbone_with_fpn.14} parent=11 // pred_fallthru
        _
    $region12: #{backbone_with_fpn.14} parent=5 // pred_fallthru
      _
    %p169 = scmp.lt.s32.totalorder %s10, 2
    // Predicated region
    $region21: #{backbone_with_fpn.14} parent=5 // pred_check
      %p170 = pneg %p169
    $region22: #{backbone_with_fpn.14} parent=5 // pred_check_branch
      %172 = sbr.rel (%p170) target = $region24
    $region23: #{backbone_with_fpn.14} parent=5 // pred_region
      // Predicated region
      $region25: #{backbone_with_fpn.14} parent=23 // pred_check
        %p173 = pneg %p44
      $region26: #{backbone_with_fpn.14} parent=23 // pred_check_branch
        %175 = sbr.rel (%p173) target = $region28
      $region27: #{backbone_with_fpn.14} parent=23 // pred_region
        %s176 = smul.u32 8, %s18
        %p177 = scmp.lt.s32.totalorder %s17, 1
        %s178 = scalar_select %p177, %s17, 1
        %p179 = scmp.lt.s32.totalorder %s176, 7
        %s180 = scalar_select %p179, %s176, 7
        %s181 = smul.addr %s178, 8
        %s182 = sadd.s32 %s180, %s181
        %s183 = smul.addr %s182, 8
        %s184 = scalar_lea.vmem %s0, %s183
        %s185 = smul.u32 8, %s18
      $region28: #{backbone_with_fpn.14} parent=23 // pred_fallthru
        _
      // Predicated region
      $region29: #{backbone_with_fpn.14} parent=23 // pred_check
        %p186 = pneg %p72
      $region30: #{backbone_with_fpn.14} parent=23 // pred_check_branch
        %188 = sbr.rel (%p186) target = $region32
      $region31: #{backbone_with_fpn.14} parent=23 // pred_region
        %s189 = smul.u32 4, %s18
        %p190 = scmp.lt.s32.totalorder %s17, 1
        %s191 = scalar_select %p190, %s17, 1
        %p192 = scmp.lt.s32.totalorder %s189, 3
        %s193 = scalar_select %p192, %s189, 3
        %s194 = smul.addr %s191, 4
        %s195 = sadd.s32 %s193, %s194
        %s196 = smul.addr %s195, 4
        %s197 = scalar_lea.vmem %s1, %s196
        %s198 = smul.u32 4, %s18
      $region32: #{backbone_with_fpn.14} parent=23 // pred_fallthru
        _
    $region24: #{backbone_with_fpn.14} parent=5 // pred_fallthru
      _
    %p199 = scmp.le.s32.totalorder 1, %s10
    %p200 = scmp.lt.s32.totalorder %s10, 3
    %p201 = pnand %p199, %p200
    %p202 = pneg %p201
    // Predicated region
    $region33: #{backbone_with_fpn.14} parent=5 // pred_check
      _
    $region34: #{backbone_with_fpn.14} parent=5 // pred_check_branch
      %204 = sbr.rel (%p201) target = $region36
    $region35: #{backbone_with_fpn.14} parent=5 // pred_region
      %s205 = ssub.s32 %s10, 1
      %s206 = smul.u32 8, %s20
      %p207 = scmp.lt.s32.totalorder %s19, 1
      %s208 = scalar_select %p207, %s19, 1
      %p209 = scmp.lt.s32.totalorder %s206, 7
      %s210 = scalar_select %p209, %s206, 7
      %s211 = smul.addr %s208, 8
      %s212 = sadd.s32 %s210, %s211
      %s213 = smul.addr %s212, 8
      %s214 = scalar_lea.vmem %s0, %s213
      %p215 = pneg %p50
      %p216 = pneg %p47
      %s217 = smul.u32 4, %s20
      %p218 = scmp.lt.s32.totalorder %s19, 1
      %s219 = scalar_select %p218, %s19, 1
      %p220 = scmp.lt.s32.totalorder %s217, 3
      %s221 = scalar_select %p220, %s217, 3
      %s222 = smul.addr %s219, 4
      %s223 = sadd.s32 %s221, %s222
      %s224 = smul.addr %s223, 4
      %s225 = scalar_lea.vmem %s1, %s224
      %p226 = pneg %p78
      %p227 = pneg %p75
      %p228 = pneg %p99
      %p229 = pneg %p96
      %p230 = pneg %p120
      %p231 = pneg %p117
      %p232 = pneg %p148
      %p233 = pneg %p145
      %s234 = smul.u32 8, %s20
      %p235 = scmp.lt.s32.totalorder %s19, 1
      %s236 = scalar_select %p235, %s19, 1
      %p237 = scmp.lt.s32.totalorder %s234, 7
      %s238 = scalar_select %p237, %s234, 7
      %s239 = smul.addr %s236, 8
      %s240 = sadd.s32 %s238, %s239
      %s241 = smul.addr %s240, 8
      %s242 = scalar_lea.vmem %s4, %s241
      %s243 = smul.u32 8, %s20
      %p244 = scmp.lt.s32.totalorder %s19, 1
      %s245 = scalar_select %p244, %s19, 1
      %p246 = scmp.lt.s32.totalorder %s243, 7
      %s247 = scalar_select %p246, %s243, 7
      %s248 = smul.addr %s245, 8
      %s249 = sadd.s32 %s247, %s248
      %s250 = smul.addr %s249, 8
      %s251 = scalar_lea.vmem %s0, %s250
      %s252 = smul.u32 8, %s20
      %s253 = smul.u32 4, %s20
      %p254 = scmp.lt.s32.totalorder %s19, 1
      %s255 = scalar_select %p254, %s19, 1
      %p256 = scmp.lt.s32.totalorder %s253, 3
      %s257 = scalar_select %p256, %s253, 3
      %s258 = smul.addr %s255, 4
      %s259 = sadd.s32 %s257, %s258
      %s260 = smul.addr %s259, 4
      %s261 = scalar_lea.vmem %s1, %s260
      %s262 = smul.u32 4, %s20
      %s263 = smul.u32 8, %s20
      %p264 = scmp.lt.s32.totalorder %s19, 1
      %s265 = scalar_select %p264, %s19, 1
      %p266 = scmp.lt.s32.totalorder %s263, 7
      %s267 = scalar_select %p266, %s263, 7
      %s268 = smul.addr %s265, 8
      %s269 = sadd.s32 %s267, %s268
      %s270 = smul.addr %s269, 8
      %s271 = scalar_lea.vmem %s4, %s270
      %s272 = smul.u32 8, %s20
      %v273 = vld [vmem:[%s251] sm:$0xff]
      %v274 = vld [vmem:[%s251 + $0x8] sm:$0xff]
      %v275 = vld [vmem:[%s251 + $0x10] sm:$0xff]
      %v276 = vld [vmem:[%s251 + $0x18] sm:$0xff]
      %v277 = vld [vmem:[%s251 + $0x20] sm:$0xff]
      %v278 = vld [vmem:[%s251 + $0x28] sm:$0xff]
      %v279 = vld [vmem:[%s251 + $0x30] sm:$0xff]
      %v280 = vld [vmem:[%s251 + $0x38] sm:$0xff]
      %v281 = vld [vmem:[%s2] sm:$0xff]
      %v282 = vld [vmem:[%s2 + $0x8] sm:$0xff]
      %v283 = vld [vmem:[%s3] sm:$0x1]
      %v285 = vperm.slane %v283, 0
      %vm287 = vcmask 130048
      %v289 = vsel %vm287, %v273, 0
      %v292 = vsel %vm287, %v274, 0
      %v295 = vsel %vm287, %v275, 0
      %v298 = vsel %vm287, %v276, 0
      %v301 = vsel %vm287, %v277, 0
      %v304 = vsel %vm287, %v278, 0
      %v307 = vsel %vm287, %v279, 0
      %v310 = vsel %vm287, %v280, 0
      %312 = vmatpush.msra.mxu0 0.0
      %313 = vmatpush.msra.mxu0 0.0
      %314 = vmatpush.msra.mxu0 0.0
      %315 = vmatpush.msra.mxu0 0.0
      %316 = vmatpush.msra.mxu0 0.0
      %317 = vmatpush.msra.mxu0 0.0
      %318 = vmatpush.msra.mxu0 0.0
      %319 = vmatpush.msra.mxu0 0.0
      %320 = vmatpush.msra.mxu0 0.0
      %321 = vmatpush.msra.mxu0 0.0
      %322 = vmatpush.msra.mxu0 0.0
      %323 = vmatpush.msra.mxu0 0.0
      %324 = vmatpush.msra.mxu0 0.0
      %325 = vmatpush.msra.mxu0 0.0
      %326 = vmatpush.msra.mxu0 %v282
      %327 = vmatpush.msra.mxu0 %v281
      %328 = vmatmul.f32.gmra.mxu0 %v289
      %v329 = vpop.f32.mrf.mxu0
      %v330 = vadd.f32 %v285, %v329
      %331 = vmatmul.f32.gmra.mxu0 %v292
      %v332 = vpop.f32.mrf.mxu0
      %v333 = vadd.f32 %v285, %v332
      %334 = vmatmul.f32.gmra.mxu0 %v295
      %v335 = vpop.f32.mrf.mxu0
      %v336 = vadd.f32 %v285, %v335
      %337 = vmatmul.f32.gmra.mxu0 %v298
      %v338 = vpop.f32.mrf.mxu0
      %v339 = vadd.f32 %v285, %v338
      %340 = vmatmul.f32.gmra.mxu0 %v301
      %v341 = vpop.f32.mrf.mxu0
      %v342 = vadd.f32 %v285, %v341
      %343 = vmatmul.f32.gmra.mxu0 %v304
      %v344 = vpop.f32.mrf.mxu0
      %v345 = vadd.f32 %v285, %v344
      %346 = vmatmul.f32.gmra.mxu0 %v307
      %v347 = vpop.f32.mrf.mxu0
      %v348 = vadd.f32 %v285, %v347
      %349 = vmatmul.f32.gmra.mxu0 %v310
      %v350 = vpop.f32.mrf.mxu0
      %v351 = vadd.f32 %v285, %v350
      %352 = vdwg.mxu0
      %v361 = vrot.slane %v330, 2
      %v362 = vrot.slane %v330, 4
      %v363 = vrot.slane %v330, 6
      %v364 = vrot.slane %v333, 2
      %v365 = vrot.slane %v333, 4
      %v366 = vrot.slane %v333, 6
      %v367 = vrot.slane %v336, 2
      %v368 = vrot.slane %v336, 4
      %v369 = vrot.slane %v336, 6
      %v370 = vrot.slane %v339, 2
      %v371 = vrot.slane %v339, 4
      %v372 = vrot.slane %v339, 6
      %v373 = vrot.slane %v342, 2
      %v374 = vrot.slane %v342, 4
      %v375 = vrot.slane %v342, 6
      %v376 = vrot.slane %v345, 2
      %v377 = vrot.slane %v345, 4
      %v378 = vrot.slane %v345, 6
      %v379 = vrot.slane %v348, 2
      %v380 = vrot.slane %v348, 4
      %v381 = vrot.slane %v348, 6
      %v382 = vrot.slane %v351, 2
      %v383 = vrot.slane %v351, 4
      %v384 = vrot.slane %v351, 6
      %v409 = vld [vmem:[%s261] sm:$0xf]
      %v410 = vld [vmem:[%s261 + $0x4] sm:$0xf]
      %v411 = vld [vmem:[%s261 + $0x8] sm:$0xf]
      %v412 = vld [vmem:[%s261 + $0xc] sm:$0xf]
      %v417 = vrot.slane %v409, 1
      %v418 = vrot.slane %v409, 2
      %v419 = vrot.slane %v409, 3
      %v420 = vrot.slane %v410, 1
      %v421 = vrot.slane %v410, 2
      %v422 = vrot.slane %v410, 3
      %v423 = vrot.slane %v411, 1
      %v424 = vrot.slane %v411, 2
      %v425 = vrot.slane %v411, 3
      %v426 = vrot.slane %v412, 1
      %v427 = vrot.slane %v412, 2
      %v428 = vrot.slane %v412, 3
      %v429 = vperm.slane %v409, 0
      %v430 = vperm.slane %v417, 0
      %v431 = vperm.slane %v418, 0
      %v432 = vperm.slane %v419, 0
      %v433 = vperm.slane %v410, 0
      %v434 = vperm.slane %v420, 0
      %v435 = vperm.slane %v421, 0
      %v436 = vperm.slane %v422, 0
      %v437 = vperm.slane %v411, 0
      %v438 = vperm.slane %v423, 0
      %v439 = vperm.slane %v424, 0
      %v440 = vperm.slane %v425, 0
      %v441 = vperm.slane %v412, 0
      %v442 = vperm.slane %v426, 0
      %v443 = vperm.slane %v427, 0
      %v444 = vperm.slane %v428, 0
      %v461 = vadd.f32 %v330, %v429
      %v462 = vadd.f32 %v361, %v430
      %v463 = vadd.f32 %v362, %v431
      %v464 = vadd.f32 %v363, %v432
      %v465 = vadd.f32 %v333, %v429
      %v466 = vadd.f32 %v364, %v430
      %v467 = vadd.f32 %v365, %v431
      %v468 = vadd.f32 %v366, %v432
      %v469 = vadd.f32 %v336, %v433
      %v470 = vadd.f32 %v367, %v434
      %v471 = vadd.f32 %v368, %v435
      %v472 = vadd.f32 %v369, %v436
      %v473 = vadd.f32 %v339, %v433
      %v474 = vadd.f32 %v370, %v434
      %v475 = vadd.f32 %v371, %v435
      %v476 = vadd.f32 %v372, %v436
      %v477 = vadd.f32 %v342, %v437
      %v478 = vadd.f32 %v373, %v438
      %v479 = vadd.f32 %v374, %v439
      %v480 = vadd.f32 %v375, %v440
      %v481 = vadd.f32 %v345, %v437
      %v482 = vadd.f32 %v376, %v438
      %v483 = vadd.f32 %v377, %v439
      %v484 = vadd.f32 %v378, %v440
      %v485 = vadd.f32 %v348, %v441
      %v486 = vadd.f32 %v379, %v442
      %v487 = vadd.f32 %v380, %v443
      %v488 = vadd.f32 %v381, %v444
      %v489 = vadd.f32 %v351, %v441
      %v490 = vadd.f32 %v382, %v442
      %v491 = vadd.f32 %v383, %v443
      %v492 = vadd.f32 %v384, %v444
      %525 = vst [vmem:[#allocation1] ss:$4 sm:$0xff] %v461
      %s526 = scalar_lea.vmem [#allocation1], 1
      %527 = vst [vmem:[%s526] ss:$4 sm:$0xff] %v462
      %s528 = scalar_lea.vmem [#allocation1], 2
      %529 = vst [vmem:[%s528] ss:$4 sm:$0xff] %v463
      %s530 = scalar_lea.vmem [#allocation1], 3
      %531 = vst [vmem:[%s530] ss:$4 sm:$0xff] %v464
      %v532 = vld.sshfl [vmem:[#allocation1] sm:$0xff pattern:$0x73625140]
      %s533 = scalar_lea.vmem [#allocation1], 32
      %534 = vst [vmem:[%s533] ss:$4 sm:$0xff] %v465
      %s535 = scalar_lea.vmem [#allocation1], 33
      %536 = vst [vmem:[%s535] ss:$4 sm:$0xff] %v466
      %s537 = scalar_lea.vmem [#allocation1], 34
      %538 = vst [vmem:[%s537] ss:$4 sm:$0xff] %v467
      %s539 = scalar_lea.vmem [#allocation1], 35
      %540 = vst [vmem:[%s539] ss:$4 sm:$0xff] %v468
      %v541 = vld.sshfl [vmem:[#allocation1 + $0x20] sm:$0xff pattern:$0x73625140]
      %542 = vst [vmem:[#allocation1] ss:$4 sm:$0xff] %v469
      %543 = vst [vmem:[%s526] ss:$4 sm:$0xff] %v470
      %544 = vst [vmem:[%s528] ss:$4 sm:$0xff] %v471
      %545 = vst [vmem:[%s530] ss:$4 sm:$0xff] %v472
      %v546 = vld.sshfl [vmem:[#allocation1] sm:$0xff pattern:$0x73625140]
      %547 = vst [vmem:[%s533] ss:$4 sm:$0xff] %v473
      %548 = vst [vmem:[%s535] ss:$4 sm:$0xff] %v474
      %549 = vst [vmem:[%s537] ss:$4 sm:$0xff] %v475
      %550 = vst [vmem:[%s539] ss:$4 sm:$0xff] %v476
      %v551 = vld.sshfl [vmem:[#allocation1 + $0x20] sm:$0xff pattern:$0x73625140]
      %552 = vst [vmem:[#allocation1] ss:$4 sm:$0xff] %v477
      %553 = vst [vmem:[%s526] ss:$4 sm:$0xff] %v478
      %554 = vst [vmem:[%s528] ss:$4 sm:$0xff] %v479
      %555 = vst [vmem:[%s530] ss:$4 sm:$0xff] %v480
      %v556 = vld.sshfl [vmem:[#allocation1] sm:$0xff pattern:$0x73625140]
      %557 = vst [vmem:[%s533] ss:$4 sm:$0xff] %v481
      %558 = vst [vmem:[%s535] ss:$4 sm:$0xff] %v482
      %559 = vst [vmem:[%s537] ss:$4 sm:$0xff] %v483
      %560 = vst [vmem:[%s539] ss:$4 sm:$0xff] %v484
      %v561 = vld.sshfl [vmem:[#allocation1 + $0x20] sm:$0xff pattern:$0x73625140]
      %562 = vst [vmem:[#allocation1] ss:$4 sm:$0xff] %v485
      %563 = vst [vmem:[%s526] ss:$4 sm:$0xff] %v486
      %564 = vst [vmem:[%s528] ss:$4 sm:$0xff] %v487
      %565 = vst [vmem:[%s530] ss:$4 sm:$0xff] %v488
      %v566 = vld.sshfl [vmem:[#allocation1] sm:$0xff pattern:$0x73625140]
      %567 = vst [vmem:[%s533] ss:$4 sm:$0xff] %v489
      %568 = vst [vmem:[%s535] ss:$4 sm:$0xff] %v490
      %569 = vst [vmem:[%s537] ss:$4 sm:$0xff] %v491
      %570 = vst [vmem:[%s539] ss:$4 sm:$0xff] %v492
      %v571 = vld.sshfl [vmem:[#allocation1 + $0x20] sm:$0xff pattern:$0x73625140]
      %580 = vst.msk [vmem:[%s271] sm:$0xff] %vm287, %v532
      %581 = vst.msk [vmem:[%s271 + $0x8] sm:$0xff] %vm287, %v541
      %582 = vst.msk [vmem:[%s271 + $0x10] sm:$0xff] %vm287, %v546
      %583 = vst.msk [vmem:[%s271 + $0x18] sm:$0xff] %vm287, %v551
      %584 = vst.msk [vmem:[%s271 + $0x20] sm:$0xff] %vm287, %v556
      %585 = vst.msk [vmem:[%s271 + $0x28] sm:$0xff] %vm287, %v561
      %586 = vst.msk [vmem:[%s271 + $0x30] sm:$0xff] %vm287, %v566
      %587 = vst.msk [vmem:[%s271 + $0x38] sm:$0xff] %vm287, %v571
      %s588 = smul.u32 8, %s20
      %p589 = scmp.lt.s32.totalorder %s19, 1
      %s590 = scalar_select %p589, %s19, 1
      %p591 = scmp.lt.s32.totalorder %s588, 7
      %s592 = scalar_select %p591, %s588, 7
      %s593 = smul.addr %s590, 8
      %s594 = sadd.s32 %s592, %s593
      %s595 = smul.addr %s594, 8
      %s596 = scalar_lea.vmem %s4, %s595
      // Predicated region
      $region37: #{backbone_with_fpn.14} parent=35 // pred_check
        %p597 = pneg %p145
      $region38: #{backbone_with_fpn.14} parent=35 // pred_check_branch
        %599 = sbr.rel (%p597) target = $region40
      $region39: #{backbone_with_fpn.14} parent=35 // pred_region
        %s600 = smul.u32 8, %s20
      $region40: #{backbone_with_fpn.14} parent=35 // pred_fallthru
        _
    $region36: #{backbone_with_fpn.14} parent=5 // pred_fallthru
      _
    %p601 = scmp.le.s32.totalorder 2, %s10
    // Predicated region
    $region41: #{backbone_with_fpn.14} parent=5 // pred_check
      %p602 = pneg %p601
    $region42: #{backbone_with_fpn.14} parent=5 // pred_check_branch
      %604 = sbr.rel (%p602) target = $region44
    $region43: #{backbone_with_fpn.14} parent=5 // pred_region
      %s605 = ssub.s32 %s10, 2
      // Predicated region
      $region45: #{backbone_with_fpn.14} parent=43 // pred_check
        %p606 = pneg %p151
      $region46: #{backbone_with_fpn.14} parent=43 // pred_check_branch
        %608 = sbr.rel (%p606) target = $region48
      $region47: #{backbone_with_fpn.14} parent=43 // pred_region
        %s609 = smul.u32 8, %s22
        %p610 = scmp.lt.s32.totalorder %s21, 1
        %s611 = scalar_select %p610, %s21, 1
        %p612 = scmp.lt.s32.totalorder %s609, 7
        %s613 = scalar_select %p612, %s609, 7
        %s614 = smul.addr %s611, 8
        %s615 = sadd.s32 %s613, %s614
        %s616 = smul.addr %s615, 8
        %s617 = scalar_lea.vmem %s4, %s616
      $region48: #{backbone_with_fpn.14} parent=43 // pred_fallthru
        _
    $region44: #{backbone_with_fpn.14} parent=5 // pred_fallthru
      _
  $region6: #{backbone_with_fpn.14} parent=0 // loop_footer
    %s14 = sadd.s32 1, %s10
  $region7: #{backbone_with_fpn.14} parent=0 // loop_footer_branch
    %9 = sbr.rel target = $region3
  $region8: #{backbone_with_fpn.14} parent=0 // loop_exit
    _

// kernel: backbone_with_fpn.16
$region0: #{backbone_with_fpn.16}
  #allocation0 [shape = 'u32[]', space=smem, size = 0x4, offset = 0x4, fixed_abs, tag = 'smem constant byte address 0x4 - core index']
  #allocation1 [shape = 'u32[72,128]{1,0:T(1,128)}', space=vmem, size = 0x9000, scoped, tag = 'internal scratch']
  %s0 = inlined_call_operand.vmem [shape: f32[2,16,16,8], index: 0, kind: input, shape index: {}]
  %s1 = inlined_call_operand.vmem [shape: f32[2,8,8,16], index: 1, kind: input, shape index: {}]
  %s2 = inlined_call_operand.vmem [shape: f32[8,16], index: 2, kind: input, shape index: {}]
  %s3 = inlined_call_operand.vmem [shape: f32[1,16], index: 3, kind: input, shape index: {}]
  %s4 = inlined_call_operand.vmem [shape: f32[2,16,16,16], index: 4, kind: output, shape index: {}]
  %s5 = sld [smem:[#allocation0]]
  $region49: #{backbone_with_fpn.16} parent=0
    _
  %s7 = ssub.s32 1, %s5
  %s8 = scalar_select 0, %s7, %s5
  loop: start=0, step=1, limit=4
  $region2: #{backbone_with_fpn.16} parent=0 // loop_pre_header
    _
  $region3: #{backbone_with_fpn.16} parent=0 // loop_header
    %s10 = sphi 0, %s14
    %p11 = scmp.ge.s32.totalorder %s10, 4
    %s17 = sphi 0, %s29
    %s18 = sphi 0, %s25
    %s19 = sphi 0, %s17
    %s20 = sphi 0, %s18
    %s21 = sphi 0, %s19
    %s22 = sphi 0, %s20
    %s34 = sphi 0, %s36
    %s37 = sphi 0, %s34
    %s38 = sphi 0, %s37
    %s54 = sphi 0, %s38
    %s62 = sphi 0, %s64
    %s65 = sphi 0, %s62
    %s66 = sphi 0, %s65
    %s82 = sphi 0, %s66
    %s86 = sphi 0, %s86
    %s88 = sphi 0, %s86
    %s89 = sphi 0, %s88
    %s103 = sphi 0, %s89
    %s107 = sphi 0, %s107
    %s109 = sphi 0, %s107
    %s110 = sphi 0, %s109
    %s124 = sphi 0, %s110
    %s132 = sphi 0, %s134
    %s135 = sphi 0, %s132
    %s136 = sphi 0, %s135
    %s152 = sphi 0, %s136
  $region4: #{backbone_with_fpn.16} parent=0 // loop_header_branch
    %13 = sbr.rel (%p11) target = $region8
  $region5: #{backbone_with_fpn.16} parent=0 // loop_body
    %s15 = ssub.s32 %s10, 1
    %s16 = ssub.s32 %s10, 2
    %s23 = sadd.s32 1, %s18
    %p24 = scmp.ge.s32.totalorder %s23, 1
    %s25 = scalar_select %p24, 0, %s23
    %s26 = sadd.s32 1, %s17
    %s27 = scalar_select %p24, %s26, %s17
    %p28 = scmp.ge.s32.totalorder %s27, 2
    %s29 = scalar_select %p28, 0, %s27
    %s30 = ssub.s32 %s17, %s29
    %s31 = ssub.s32 %s18, %s25
    %s32 = sor.u32 %s30, %s31
    %p33 = scmp.eq.s32.totalorder %s32, 0
    %s35 = sadd.s32 %s34, 1
    %s36 = scalar_select %p33, %s34, %s35
    %p39 = pneg %p33
    %p40 = scmp.eq.s32.totalorder %s10, 1
    %p41 = por %p39, %p40
    %p42 = scmp.ne.s32.totalorder %s34, %s37
    %p43 = scmp.eq.s32.totalorder %s10, 0
    %p44 = por %p42, %p43
    %p45 = scmp.ne.s32.totalorder %s34, %s37
    %p46 = scmp.eq.s32.totalorder %s15, 1
    %p47 = por %p45, %p46
    %p48 = scmp.ne.s32.totalorder %s37, %s38
    %p49 = scmp.eq.s32.totalorder %s15, 0
    %p50 = por %p48, %p49
    %p51 = scmp.ne.s32.totalorder %s37, %s38
    %p52 = scmp.eq.s32.totalorder %s16, 1
    %p53 = por %p51, %p52
    %p55 = scmp.ne.s32.totalorder %s38, %s54
    %p56 = scmp.eq.s32.totalorder %s16, 0
    %p57 = por %p55, %p56
    %s58 = ssub.s32 %s17, %s29
    %s59 = ssub.s32 %s18, %s25
    %s60 = sor.u32 %s58, %s59
    %p61 = scmp.eq.s32.totalorder %s60, 0
    %s63 = sadd.s32 %s62, 1
    %s64 = scalar_select %p61, %s62, %s63
    %p67 = pneg %p61
    %p68 = scmp.eq.s32.totalorder %s10, 1
    %p69 = por %p67, %p68
    %p70 = scmp.ne.s32.totalorder %s62, %s65
    %p71 = scmp.eq.s32.totalorder %s10, 0
    %p72 = por %p70, %p71
    %p73 = scmp.ne.s32.totalorder %s62, %s65
    %p74 = scmp.eq.s32.totalorder %s15, 1
    %p75 = por %p73, %p74
    %p76 = scmp.ne.s32.totalorder %s65, %s66
    %p77 = scmp.eq.s32.totalorder %s15, 0
    %p78 = por %p76, %p77
    %p79 = scmp.ne.s32.totalorder %s65, %s66
    %p80 = scmp.eq.s32.totalorder %s16, 1
    %p81 = por %p79, %p80
    %p83 = scmp.ne.s32.totalorder %s66, %s82
    %p84 = scmp.eq.s32.totalorder %s16, 0
    %p85 = por %p83, %p84
    %s87 = sadd.s32 %s86, 1
    %p90 = scmp.eq.s32.totalorder %s10, 1
    %p91 = scmp.ne.s32.totalorder %s86, %s88
    %p92 = scmp.eq.s32.totalorder %s10, 0
    %p93 = por %p91, %p92
    %p94 = scmp.ne.s32.totalorder %s86, %s88
    %p95 = scmp.eq.s32.totalorder %s15, 1
    %p96 = por %p94, %p95
    %p97 = scmp.ne.s32.totalorder %s88, %s89
    %p98 = scmp.eq.s32.totalorder %s15, 0
    %p99 = por %p97, %p98
    %p100 = scmp.ne.s32.totalorder %s88, %s89
    %p101 = scmp.eq.s32.totalorder %s16, 1
    %p102 = por %p100, %p101
    %p104 = scmp.ne.s32.totalorder %s89, %s103
    %p105 = scmp.eq.s32.totalorder %s16, 0
    %p106 = por %p104, %p105
    %s108 = sadd.s32 %s107, 1
    %p111 = scmp.eq.s32.totalorder %s10, 1
    %p112 = scmp.ne.s32.totalorder %s107, %s109
    %p113 = scmp.eq.s32.totalorder %s10, 0
    %p114 = por %p112, %p113
    %p115 = scmp.ne.s32.totalorder %s107, %s109
    %p116 = scmp.eq.s32.totalorder %s15, 1
    %p117 = por %p115, %p116
    %p118 = scmp.ne.s32.totalorder %s109, %s110
    %p119 = scmp.eq.s32.totalorder %s15, 0
    %p120 = por %p118, %p119
    %p121 = scmp.ne.s32.totalorder %s109, %s110
    %p122 = scmp.eq.s32.totalorder %s16, 1
    %p123 = por %p121, %p122
    %p125 = scmp.ne.s32.totalorder %s110, %s124
    %p126 = scmp.eq.s32.totalorder %s16, 0
    %p127 = por %p125, %p126
    %s128 = ssub.s32 %s17, %s29
    %s129 = ssub.s32 %s18, %s25
    %s130 = sor.u32 %s128, %s129
    %p131 = scmp.eq.s32.totalorder %s130, 0
    %s133 = sadd.s32 %s132, 1
    %s134 = scalar_select %p131, %s132, %s133
    %p137 = pneg %p131
    %p138 = scmp.eq.s32.totalorder %s10, 1
    %p139 = por %p137, %p138
    %p140 = scmp.ne.s32.totalorder %s132, %s135
    %p141 = scmp.eq.s32.totalorder %s10, 0
    %p142 = por %p140, %p141
    %p143 = scmp.ne.s32.totalorder %s132, %s135
    %p144 = scmp.eq.s32.totalorder %s15, 1
    %p145 = por %p143, %p144
    %p146 = scmp.ne.s32.totalorder %s135, %s136
    %p147 = scmp.eq.s32.totalorder %s15, 0
    %p148 = por %p146, %p147
    %p149 = scmp.ne.s32.totalorder %s135, %s136
    %p150 = scmp.eq.s32.totalorder %s16, 1
    %p151 = por %p149, %p150
    %p153 = scmp.ne.s32.totalorder %s136, %s152
    %p154 = scmp.eq.s32.totalorder %s16, 0
    %p155 = por %p153, %p154
    %p156 = scmp.le.s32.totalorder 1, %s10
    %p157 = scmp.lt.s32.totalorder %s10, 3
    %p158 = pnand %p156, %p157
    %p159 = pneg %p158
    // Predicated region
    $region9: #{backbone_with_fpn.16} parent=5 // pred_check
      _
    $region10: #{backbone_with_fpn.16} parent=5 // pred_check_branch
      %161 = sbr.rel (%p158) target = $region12
    $region11: #{backbone_with_fpn.16} parent=5 // pred_region
      %s162 = ssub.s32 %s10, 1
      // Predicated region
      $region13: #{backbone_with_fpn.16} parent=11 // pred_check
        %p163 = pneg %p99
      $region14: #{backbone_with_fpn.16} parent=11 // pred_check_branch
        %165 = sbr.rel (%p163) target = $region16
      $region15: #{backbone_with_fpn.16} parent=11 // pred_region
        _
      $region16: #{backbone_with_fpn.16} parent=11 // pred_fallthru
        _
      // Predicated region
      $region17: #{backbone_with_fpn.16} parent=11 // pred_check
        %p166 = pneg %p120
      $region18: #{backbone_with_fpn.16} parent=11 // pred_check_branch
        %168 = sbr.rel (%p166) target = $region20
      $region19: #{backbone_with_fpn.16} parent=11 // pred_region
        _
      $region20: #{backbone_with_fpn.16} parent=11 // pred_fallthru
        _
    $region12: #{backbone_with_fpn.16} parent=5 // pred_fallthru
      _
    %p169 = scmp.lt.s32.totalorder %s10, 2
    // Predicated region
    $region21: #{backbone_with_fpn.16} parent=5 // pred_check
      %p170 = pneg %p169
    $region22: #{backbone_with_fpn.16} parent=5 // pred_check_branch
      %172 = sbr.rel (%p170) target = $region24
    $region23: #{backbone_with_fpn.16} parent=5 // pred_region
      // Predicated region
      $region25: #{backbone_with_fpn.16} parent=23 // pred_check
        %p173 = pneg %p44
      $region26: #{backbone_with_fpn.16} parent=23 // pred_check_branch
        %175 = sbr.rel (%p173) target = $region28
      $region27: #{backbone_with_fpn.16} parent=23 // pred_region
        %s176 = smul.u32 16, %s18
        %p177 = scmp.lt.s32.totalorder %s17, 1
        %s178 = scalar_select %p177, %s17, 1
        %p179 = scmp.lt.s32.totalorder %s176, 15
        %s180 = scalar_select %p179, %s176, 15
        %s181 = smul.addr %s180, 2
        %s182 = smul.addr %s178, 32
        %s183 = sadd.s32 %s181, %s182
        %s184 = smul.addr %s183, 8
        %s185 = scalar_lea.vmem %s0, %s184
        %s186 = smul.u32 16, %s18
      $region28: #{backbone_with_fpn.16} parent=23 // pred_fallthru
        _
      // Predicated region
      $region29: #{backbone_with_fpn.16} parent=23 // pred_check
        %p187 = pneg %p72
      $region30: #{backbone_with_fpn.16} parent=23 // pred_check_branch
        %189 = sbr.rel (%p187) target = $region32
      $region31: #{backbone_with_fpn.16} parent=23 // pred_region
        %s190 = smul.u32 8, %s18
        %p191 = scmp.lt.s32.totalorder %s17, 1
        %s192 = scalar_select %p191, %s17, 1
        %p193 = scmp.lt.s32.totalorder %s190, 7
        %s194 = scalar_select %p193, %s190, 7
        %s195 = smul.addr %s192, 8
        %s196 = sadd.s32 %s194, %s195
        %s197 = smul.addr %s196, 8
        %s198 = scalar_lea.vmem %s1, %s197
        %s199 = smul.u32 8, %s18
      $region32: #{backbone_with_fpn.16} parent=23 // pred_fallthru
        _
    $region24: #{backbone_with_fpn.16} parent=5 // pred_fallthru
      _
    %p200 = scmp.le.s32.totalorder 1, %s10
    %p201 = scmp.lt.s32.totalorder %s10, 3
    %p202 = pnand %p200, %p201
    %p203 = pneg %p202
    // Predicated region
    $region33: #{backbone_with_fpn.16} parent=5 // pred_check
      _
    $region34: #{backbone_with_fpn.16} parent=5 // pred_check_branch
      %205 = sbr.rel (%p202) target = $region36
    $region35: #{backbone_with_fpn.16} parent=5 // pred_region
      %s206 = ssub.s32 %s10, 1
      %s207 = smul.u32 16, %s20
      %p208 = scmp.lt.s32.totalorder %s19, 1
      %s209 = scalar_select %p208, %s19, 1
      %p210 = scmp.lt.s32.totalorder %s207, 15
      %s211 = scalar_select %p210, %s207, 15
      %s212 = smul.addr %s211, 2
      %s213 = smul.addr %s209, 32
      %s214 = sadd.s32 %s212, %s213
      %s215 = smul.addr %s214, 8
      %s216 = scalar_lea.vmem %s0, %s215
      %p217 = pneg %p50
      %p218 = pneg %p47
      %s219 = smul.u32 8, %s20
      %p220 = scmp.lt.s32.totalorder %s19, 1
      %s221 = scalar_select %p220, %s19, 1
      %p222 = scmp.lt.s32.totalorder %s219, 7
      %s223 = scalar_select %p222, %s219, 7
      %s224 = smul.addr %s221, 8
      %s225 = sadd.s32 %s223, %s224
      %s226 = smul.addr %s225, 8
      %s227 = scalar_lea.vmem %s1, %s226
      %p228 = pneg %p78
      %p229 = pneg %p75
      %p230 = pneg %p99
      %p231 = pneg %p96
      %p232 = pneg %p120
      %p233 = pneg %p117
      %p234 = pneg %p148
      %p235 = pneg %p145
      %s236 = smul.u32 16, %s20
      %p237 = scmp.lt.s32.totalorder %s19, 1
      %s238 = scalar_select %p237, %s19, 1
      %p239 = scmp.lt.s32.totalorder %s236, 15
      %s240 = scalar_select %p239, %s236, 15
      %s241 = smul.addr %s240, 2
      %s242 = smul.addr %s238, 32
      %s243 = sadd.s32 %s241, %s242
      %s244 = smul.addr %s243, 8
      %s245 = scalar_lea.vmem %s4, %s244
      %s246 = smul.u32 16, %s20
      %p247 = scmp.lt.s32.totalorder %s19, 1
      %s248 = scalar_select %p247, %s19, 1
      %p249 = scmp.lt.s32.totalorder %s246, 15
      %s250 = scalar_select %p249, %s246, 15
      %s251 = smul.addr %s250, 2
      %s252 = smul.addr %s248, 32
      %s253 = sadd.s32 %s251, %s252
      %s254 = smul.addr %s253, 8
      %s255 = scalar_lea.vmem %s0, %s254
      %s256 = smul.u32 16, %s20
      %s257 = smul.u32 8, %s20
      %p258 = scmp.lt.s32.totalorder %s19, 1
      %s259 = scalar_select %p258, %s19, 1
      %p260 = scmp.lt.s32.totalorder %s257, 7
      %s261 = scalar_select %p260, %s257, 7
      %s262 = smul.addr %s259, 8
      %s263 = sadd.s32 %s261, %s262
      %s264 = smul.addr %s263, 8
      %s265 = scalar_lea.vmem %s1, %s264
      %s266 = smul.u32 8, %s20
      %s267 = smul.u32 16, %s20
      %p268 = scmp.lt.s32.totalorder %s19, 1
      %s269 = scalar_select %p268, %s19, 1
      %p270 = scmp.lt.s32.totalorder %s267, 15
      %s271 = scalar_select %p270, %s267, 15
      %s272 = smul.addr %s271, 2
      %s273 = smul.addr %s269, 32
      %s274 = sadd.s32 %s272, %s273
      %s275 = smul.addr %s274, 8
      %s276 = scalar_lea.vmem %s4, %s275
      %s277 = smul.u32 16, %s20
      %v278 = vld [vmem:[%s255] sm:$0xff]
      %v279 = vld [vmem:[%s255 + $0x8] sm:$0xff]
      %v280 = vld [vmem:[%s255 + $0x10] sm:$0xff]
      %v281 = vld [vmem:[%s255 + $0x18] sm:$0xff]
      %v282 = vld [vmem:[%s255 + $0x20] sm:$0xff]
      %v283 = vld [vmem:[%s255 + $0x28] sm:$0xff]
      %v284 = vld [vmem:[%s255 + $0x30] sm:$0xff]
      %v285 = vld [vmem:[%s255 + $0x38] sm:$0xff]
      %v286 = vld [vmem:[%s255 + $0x40] sm:$0xff]
      %v287 = vld [vmem:[%s255 + $0x48] sm:$0xff]
      %v288 = vld [vmem:[%s255 + $0x50] sm:$0xff]
      %v289 = vld [vmem:[%s255 + $0x58] sm:$0xff]
      %v290 = vld [vmem:[%s255 + $0x60] sm:$0xff]
      %v291 = vld [vmem:[%s255 + $0x68] sm:$0xff]
      %v292 = vld [vmem:[%s255 + $0x70] sm:$0xff]
      %v293 = vld [vmem:[%s255 + $0x78] sm:$0xff]
      %v294 = vld [vmem:[%s255 + $0x80] sm:$0xff]
      %v295 = vld [vmem:[%s255 + $0x88] sm:$0xff]
      %v296 = vld [vmem:[%s255 + $0x90] sm:$0xff]
      %v297 = vld [vmem:[%s255 + $0x98] sm:$0xff]
      %v298 = vld [vmem:[%s255 + $0xa0] sm:$0xff]
      %v299 = vld [vmem:[%s255 + $0xa8] sm:$0xff]
      %v300 = vld [vmem:[%s255 + $0xb0] sm:$0xff]
      %v301 = vld [vmem:[%s255 + $0xb8] sm:$0xff]
      %v302 = vld [vmem:[%s255 + $0xc0] sm:$0xff]
      %v303 = vld [vmem:[%s255 + $0xc8] sm:$0xff]
      %v304 = vld [vmem:[%s255 + $0xd0] sm:$0xff]
      %v305 = vld [vmem:[%s255 + $0xd8] sm:$0xff]
      %v306 = vld [vmem:[%s255 + $0xe0] sm:$0xff]
      %v307 = vld [vmem:[%s255 + $0xe8] sm:$0xff]
      %v308 = vld [vmem:[%s255 + $0xf0] sm:$0xff]
      %v309 = vld [vmem:[%s255 + $0xf8] sm:$0xff]
      %v310 = vld [vmem:[%s2] sm:$0xff]
      %v311 = vld [vmem:[%s3] sm:$0x1]
      %v313 = vperm.slane %v311, 0
      %vm315 = vcmask 64512
      %v317 = vsel %vm315, %v278, 0
      %v320 = vsel %vm315, %v279, 0
      %v323 = vsel %vm315, %v280, 0
      %v326 = vsel %vm315, %v281, 0
      %v329 = vsel %vm315, %v282, 0
      %v332 = vsel %vm315, %v283, 0
      %v335 = vsel %vm315, %v284, 0
      %v338 = vsel %vm315, %v285, 0
      %v341 = vsel %vm315, %v286, 0
      %v344 = vsel %vm315, %v287, 0
      %v347 = vsel %vm315, %v288, 0
      %v350 = vsel %vm315, %v289, 0
      %v353 = vsel %vm315, %v290, 0
      %v356 = vsel %vm315, %v291, 0
      %v359 = vsel %vm315, %v292, 0
      %v362 = vsel %vm315, %v293, 0
      %v365 = vsel %vm315, %v294, 0
      %v368 = vsel %vm315, %v295, 0
      %v371 = vsel %vm315, %v296, 0
      %v374 = vsel %vm315, %v297, 0
      %v377 = vsel %vm315, %v298, 0
      %v380 = vsel %vm315, %v299, 0
      %v383 = vsel %vm315, %v300, 0
      %v386 = vsel %vm315, %v301, 0
      %v389 = vsel %vm315, %v302, 0
      %v392 = vsel %vm315, %v303, 0
      %v395 = vsel %vm315, %v304, 0
      %v398 = vsel %vm315, %v305, 0
      %v401 = vsel %vm315, %v306, 0
      %v404 = vsel %vm315, %v307, 0
      %v407 = vsel %vm315, %v308, 0
      %v410 = vsel %vm315, %v309, 0
      %412 = vmatpush.msra.mxu0 0.0
      %413 = vmatpush.msra.mxu0 0.0
      %414 = vmatpush.msra.mxu0 0.0
      %415 = vmatpush.msra.mxu0 0.0
      %416 = vmatpush.msra.mxu0 0.0
      %417 = vmatpush.msra.mxu0 0.0
      %418 = vmatpush.msra.mxu0 0.0
      %419 = vmatpush.msra.mxu0 0.0
      %420 = vmatpush.msra.mxu0 0.0
      %421 = vmatpush.msra.mxu0 0.0
      %422 = vmatpush.msra.mxu0 0.0
      %423 = vmatpush.msra.mxu0 0.0
      %424 = vmatpush.msra.mxu0 0.0
      %425 = vmatpush.msra.mxu0 0.0
      %426 = vmatpush.msra.mxu0 0.0
      %427 = vmatpush.msra.mxu0 %v310
      %428 = vmatmul.f32.gmra.mxu0 %v317
      %v429 = vpop.f32.mrf.mxu0
      %v430 = vadd.f32 %v313, %v429
      %431 = vmatmul.f32.gmra.mxu0 %v320
      %v432 = vpop.f32.mrf.mxu0
      %v433 = vadd.f32 %v313, %v432
      %434 = vmatmul.f32.gmra.mxu0 %v323
      %v435 = vpop.f32.mrf.mxu0
      %v436 = vadd.f32 %v313, %v435
      %437 = vmatmul.f32.gmra.mxu0 %v326
      %v438 = vpop.f32.mrf.mxu0
      %v439 = vadd.f32 %v313, %v438
      %440 = vmatmul.f32.gmra.mxu0 %v329
      %v441 = vpop.f32.mrf.mxu0
      %v442 = vadd.f32 %v313, %v441
      %443 = vmatmul.f32.gmra.mxu0 %v332
      %v444 = vpop.f32.mrf.mxu0
      %v445 = vadd.f32 %v313, %v444
      %446 = vmatmul.f32.gmra.mxu0 %v335
      %v447 = vpop.f32.mrf.mxu0
      %v448 = vadd.f32 %v313, %v447
      %449 = vmatmul.f32.gmra.mxu0 %v338
      %v450 = vpop.f32.mrf.mxu0
      %v451 = vadd.f32 %v313, %v450
      %452 = vmatmul.f32.gmra.mxu0 %v341
      %v453 = vpop.f32.mrf.mxu0
      %v454 = vadd.f32 %v313, %v453
      %455 = vmatmul.f32.gmra.mxu0 %v344
      %v456 = vpop.f32.mrf.mxu0
      %v457 = vadd.f32 %v313, %v456
      %458 = vmatmul.f32.gmra.mxu0 %v347
      %v459 = vpop.f32.mrf.mxu0
      %v460 = vadd.f32 %v313, %v459
      %461 = vmatmul.f32.gmra.mxu0 %v350
      %v462 = vpop.f32.mrf.mxu0
      %v463 = vadd.f32 %v313, %v462
      %464 = vmatmul.f32.gmra.mxu0 %v353
      %v465 = vpop.f32.mrf.mxu0
      %v466 = vadd.f32 %v313, %v465
      %467 = vmatmul.f32.gmra.mxu0 %v356
      %v468 = vpop.f32.mrf.mxu0
      %v469 = vadd.f32 %v313, %v468
      %470 = vmatmul.f32.gmra.mxu0 %v359
      %v471 = vpop.f32.mrf.mxu0
      %v472 = vadd.f32 %v313, %v471
      %473 = vmatmul.f32.gmra.mxu0 %v362
      %v474 = vpop.f32.mrf.mxu0
      %v475 = vadd.f32 %v313, %v474
      %476 = vmatmul.f32.gmra.mxu0 %v365
      %v477 = vpop.f32.mrf.mxu0
      %v478 = vadd.f32 %v313, %v477
      %479 = vmatmul.f32.gmra.mxu0 %v368
      %v480 = vpop.f32.mrf.mxu0
      %v481 = vadd.f32 %v313, %v480
      %482 = vmatmul.f32.gmra.mxu0 %v371
      %v483 = vpop.f32.mrf.mxu0
      %v484 = vadd.f32 %v313, %v483
      %485 = vmatmul.f32.gmra.mxu0 %v374
      %v486 = vpop.f32.mrf.mxu0
      %v487 = vadd.f32 %v313, %v486
      %488 = vmatmul.f32.gmra.mxu0 %v377
      %v489 = vpop.f32.mrf.mxu0
      %v490 = vadd.f32 %v313, %v489
      %491 = vmatmul.f32.gmra.mxu0 %v380
      %v492 = vpop.f32.mrf.mxu0
      %v493 = vadd.f32 %v313, %v492
      %494 = vmatmul.f32.gmra.mxu0 %v383
      %v495 = vpop.f32.mrf.mxu0
      %v496 = vadd.f32 %v313, %v495
      %497 = vmatmul.f32.gmra.mxu0 %v386
      %v498 = vpop.f32.mrf.mxu0
      %v499 = vadd.f32 %v313, %v498
      %500 = vmatmul.f32.gmra.mxu0 %v389
      %v501 = vpop.f32.mrf.mxu0
      %v502 = vadd.f32 %v313, %v501
      %503 = vmatmul.f32.gmra.mxu0 %v392
      %v504 = vpop.f32.mrf.mxu0
      %v505 = vadd.f32 %v313, %v504
      %506 = vmatmul.f32.gmra.mxu0 %v395
      %v507 = vpop.f32.mrf.mxu0
      %v508 = vadd.f32 %v313, %v507
      %509 = vmatmul.f32.gmra.mxu0 %v398
      %v510 = vpop.f32.mrf.mxu0
      %v511 = vadd.f32 %v313, %v510
      %512 = vmatmul.f32.gmra.mxu0 %v401
      %v513 = vpop.f32.mrf.mxu0
      %v514 = vadd.f32 %v313, %v513
      %515 = vmatmul.f32.gmra.mxu0 %v404
      %v516 = vpop.f32.mrf.mxu0
      %v517 = vadd.f32 %v313, %v516
      %518 = vmatmul.f32.gmra.mxu0 %v407
      %v519 = vpop.f32.mrf.mxu0
      %v520 = vadd.f32 %v313, %v519
      %521 = vmatmul.f32.gmra.mxu0 %v410
      %v522 = vpop.f32.mrf.mxu0
      %v523 = vadd.f32 %v313, %v522
      %524 = vdwg.mxu0
      %v557 = vrot.slane %v430, 2
      %v558 = vrot.slane %v430, 4
      %v559 = vrot.slane %v430, 6
      %v560 = vrot.slane %v433, 2
      %v561 = vrot.slane %v433, 4
      %v562 = vrot.slane %v433, 6
      %v563 = vrot.slane %v436, 2
      %v564 = vrot.slane %v436, 4
      %v565 = vrot.slane %v436, 6
      %v566 = vrot.slane %v439, 2
      %v567 = vrot.slane %v439, 4
      %v568 = vrot.slane %v439, 6
      %v569 = vrot.slane %v442, 2
      %v570 = vrot.slane %v442, 4
      %v571 = vrot.slane %v442, 6
      %v572 = vrot.slane %v445, 2
      %v573 = vrot.slane %v445, 4
      %v574 = vrot.slane %v445, 6
      %v575 = vrot.slane %v448, 2
      %v576 = vrot.slane %v448, 4
      %v577 = vrot.slane %v448, 6
      %v578 = vrot.slane %v451, 2
      %v579 = vrot.slane %v451, 4
      %v580 = vrot.slane %v451, 6
      %v581 = vrot.slane %v454, 2
      %v582 = vrot.slane %v454, 4
      %v583 = vrot.slane %v454, 6
      %v584 = vrot.slane %v457, 2
      %v585 = vrot.slane %v457, 4
      %v586 = vrot.slane %v457, 6
      %v587 = vrot.slane %v460, 2
      %v588 = vrot.slane %v460, 4
      %v589 = vrot.slane %v460, 6
      %v590 = vrot.slane %v463, 2
      %v591 = vrot.slane %v463, 4
      %v592 = vrot.slane %v463, 6
      %v593 = vrot.slane %v466, 2
      %v594 = vrot.slane %v466, 4
      %v595 = vrot.slane %v466, 6
      %v596 = vrot.slane %v469, 2
      %v597 = vrot.slane %v469, 4
      %v598 = vrot.slane %v469, 6
      %v599 = vrot.slane %v472, 2
      %v600 = vrot.slane %v472, 4
      %v601 = vrot.slane %v472, 6
      %v602 = vrot.slane %v475, 2
      %v603 = vrot.slane %v475, 4
      %v604 = vrot.slane %v475, 6
      %v605 = vrot.slane %v478, 2
      %v606 = vrot.slane %v478, 4
      %v607 = vrot.slane %v478, 6
      %v608 = vrot.slane %v481, 2
      %v609 = vrot.slane %v481, 4
      %v610 = vrot.slane %v481, 6
      %v611 = vrot.slane %v484, 2
      %v612 = vrot.slane %v484, 4
      %v613 = vrot.slane %v484, 6
      %v614 = vrot.slane %v487, 2
      %v615 = vrot.slane %v487, 4
      %v616 = vrot.slane %v487, 6
      %v617 = vrot.slane %v490, 2
      %v618 = vrot.slane %v490, 4
      %v619 = vrot.slane %v490, 6
      %v620 = vrot.slane %v493, 2
      %v621 = vrot.slane %v493, 4
      %v622 = vrot.slane %v493, 6
      %v623 = vrot.slane %v496, 2
      %v624 = vrot.slane %v496, 4
      %v625 = vrot.slane %v496, 6
      %v626 = vrot.slane %v499, 2
      %v627 = vrot.slane %v499, 4
      %v628 = vrot.slane %v499, 6
      %v629 = vrot.slane %v502, 2
      %v630 = vrot.slane %v502, 4
      %v631 = vrot.slane %v502, 6
      %v632 = vrot.slane %v505, 2
      %v633 = vrot.slane %v505, 4
      %v634 = vrot.slane %v505, 6
      %v635 = vrot.slane %v508, 2
      %v636 = vrot.slane %v508, 4
      %v637 = vrot.slane %v508, 6
      %v638 = vrot.slane %v511, 2
      %v639 = vrot.slane %v511, 4
      %v640 = vrot.slane %v511, 6
      %v641 = vrot.slane %v514, 2
      %v642 = vrot.slane %v514, 4
      %v643 = vrot.slane %v514, 6
      %v644 = vrot.slane %v517, 2
      %v645 = vrot.slane %v517, 4
      %v646 = vrot.slane %v517, 6
      %v647 = vrot.slane %v520, 2
      %v648 = vrot.slane %v520, 4
      %v649 = vrot.slane %v520, 6
      %v650 = vrot.slane %v523, 2
      %v651 = vrot.slane %v523, 4
      %v652 = vrot.slane %v523, 6
      %v749 = vld [vmem:[%s265] sm:$0xff]
      %v750 = vld [vmem:[%s265 + $0x8] sm:$0xff]
      %v751 = vld [vmem:[%s265 + $0x10] sm:$0xff]
      %v752 = vld [vmem:[%s265 + $0x18] sm:$0xff]
      %v753 = vld [vmem:[%s265 + $0x20] sm:$0xff]
      %v754 = vld [vmem:[%s265 + $0x28] sm:$0xff]
      %v755 = vld [vmem:[%s265 + $0x30] sm:$0xff]
      %v756 = vld [vmem:[%s265 + $0x38] sm:$0xff]
      %v765 = vrot.slane %v749, 1
      %v766 = vrot.slane %v749, 2
      %v767 = vrot.slane %v749, 3
      %v768 = vrot.slane %v749, 4
      %v769 = vrot.slane %v749, 5
      %v770 = vrot.slane %v749, 6
      %v771 = vrot.slane %v749, 7
      %v772 = vrot.slane %v750, 1
      %v773 = vrot.slane %v750, 2
      %v774 = vrot.slane %v750, 3
      %v775 = vrot.slane %v750, 4
      %v776 = vrot.slane %v750, 5
      %v777 = vrot.slane %v750, 6
      %v778 = vrot.slane %v750, 7
      %v779 = vrot.slane %v751, 1
      %v780 = vrot.slane %v751, 2
      %v781 = vrot.slane %v751, 3
      %v782 = vrot.slane %v751, 4
      %v783 = vrot.slane %v751, 5
      %v784 = vrot.slane %v751, 6
      %v785 = vrot.slane %v751, 7
      %v786 = vrot.slane %v752, 1
      %v787 = vrot.slane %v752, 2
      %v788 = vrot.slane %v752, 3
      %v789 = vrot.slane %v752, 4
      %v790 = vrot.slane %v752, 5
      %v791 = vrot.slane %v752, 6
      %v792 = vrot.slane %v752, 7
      %v793 = vrot.slane %v753, 1
      %v794 = vrot.slane %v753, 2
      %v795 = vrot.slane %v753, 3
      %v796 = vrot.slane %v753, 4
      %v797 = vrot.slane %v753, 5
      %v798 = vrot.slane %v753, 6
      %v799 = vrot.slane %v753, 7
      %v800 = vrot.slane %v754, 1
      %v801 = vrot.slane %v754, 2
      %v802 = vrot.slane %v754, 3
      %v803 = vrot.slane %v754, 4
      %v804 = vrot.slane %v754, 5
      %v805 = vrot.slane %v754, 6
      %v806 = vrot.slane %v754, 7
      %v807 = vrot.slane %v755, 1
      %v808 = vrot.slane %v755, 2
      %v809 = vrot.slane %v755, 3
      %v810 = vrot.slane %v755, 4
      %v811 = vrot.slane %v755, 5
      %v812 = vrot.slane %v755, 6
      %v813 = vrot.slane %v755, 7
      %v814 = vrot.slane %v756, 1
      %v815 = vrot.slane %v756, 2
      %v816 = vrot.slane %v756, 3
      %v817 = vrot.slane %v756, 4
      %v818 = vrot.slane %v756, 5
      %v819 = vrot.slane %v756, 6
      %v820 = vrot.slane %v756, 7
      %v821 = vperm.slane %v749, 0
      %v822 = vperm.slane %v765, 0
      %v823 = vperm.slane %v766, 0
      %v824 = vperm.slane %v767, 0
      %v825 = vperm.slane %v768, 0
      %v826 = vperm.slane %v769, 0
      %v827 = vperm.slane %v770, 0
      %v828 = vperm.slane %v771, 0
      %v829 = vperm.slane %v750, 0
      %v830 = vperm.slane %v772, 0
      %v831 = vperm.slane %v773, 0
      %v832 = vperm.slane %v774, 0
      %v833 = vperm.slane %v775, 0
      %v834 = vperm.slane %v776, 0
      %v835 = vperm.slane %v777, 0
      %v836 = vperm.slane %v778, 0
      %v837 = vperm.slane %v751, 0
      %v838 = vperm.slane %v779, 0
      %v839 = vperm.slane %v780, 0
      %v840 = vperm.slane %v781, 0
      %v841 = vperm.slane %v782, 0
      %v842 = vperm.slane %v783, 0
      %v843 = vperm.slane %v784, 0
      %v844 = vperm.slane %v785, 0
      %v845 = vperm.slane %v752, 0
      %v846 = vperm.slane %v786, 0
      %v847 = vperm.slane %v787, 0
      %v848 = vperm.slane %v788, 0
      %v849 = vperm.slane %v789, 0
      %v850 = vperm.slane %v790, 0
      %v851 = vperm.slane %v791, 0
      %v852 = vperm.slane %v792, 0
      %v853 = vperm.slane %v753, 0
      %v854 = vperm.slane %v793, 0
      %v855 = vperm.slane %v794, 0
      %v856 = vperm.slane %v795, 0
      %v857 = vperm.slane %v796, 0
      %v858 = vperm.slane %v797, 0
      %v859 = vperm.slane %v798, 0
      %v860 = vperm.slane %v799, 0
      %v861 = vperm.slane %v754, 0
      %v862 = vperm.slane %v800, 0
      %v863 = vperm.slane %v801, 0
      %v864 = vperm.slane %v802, 0
      %v865 = vperm.slane %v803, 0
      %v866 = vperm.slane %v804, 0
      %v867 = vperm.slane %v805, 0
      %v868 = vperm.slane %v806, 0
      %v869 = vperm.slane %v755, 0
      %v870 = vperm.slane %v807, 0
      %v871 = vperm.slane %v808, 0
      %v872 = vperm.slane %v809, 0
      %v873 = vperm.slane %v810, 0
      %v874 = vperm.slane %v811, 0
      %v875 = vperm.slane %v812, 0
      %v876 = vperm.slane %v813, 0
      %v877 = vperm.slane %v756, 0
      %v878 = vperm.slane %v814, 0
      %v879 = vperm.slane %v815, 0
      %v880 = vperm.slane %v816, 0
      %v881 = vperm.slane %v817, 0
      %v882 = vperm.slane %v818, 0
      %v883 = vperm.slane %v819, 0
      %v884 = vperm.slane %v820, 0
      %v949 = vadd.f32 %v430, %v821
      %v950 = vadd.f32 %v557, %v822
      %v951 = vadd.f32 %v558, %v823
      %v952 = vadd.f32 %v559, %v824
      %v953 = vadd.f32 %v433, %v825
      %v954 = vadd.f32 %v560, %v826
      %v955 = vadd.f32 %v561, %v827
      %v956 = vadd.f32 %v562, %v828
      %v957 = vadd.f32 %v436, %v821
      %v958 = vadd.f32 %v563, %v822
      %v959 = vadd.f32 %v564, %v823
      %v960 = vadd.f32 %v565, %v824
      %v961 = vadd.f32 %v439, %v825
      %v962 = vadd.f32 %v566, %v826
      %v963 = vadd.f32 %v567, %v827
      %v964 = vadd.f32 %v568, %v828
      %v965 = vadd.f32 %v442, %v829
      %v966 = vadd.f32 %v569, %v830
      %v967 = vadd.f32 %v570, %v831
      %v968 = vadd.f32 %v571, %v832
      %v969 = vadd.f32 %v445, %v833
      %v970 = vadd.f32 %v572, %v834
      %v971 = vadd.f32 %v573, %v835
      %v972 = vadd.f32 %v574, %v836
      %v973 = vadd.f32 %v448, %v829
      %v974 = vadd.f32 %v575, %v830
      %v975 = vadd.f32 %v576, %v831
      %v976 = vadd.f32 %v577, %v832
      %v977 = vadd.f32 %v451, %v833
      %v978 = vadd.f32 %v578, %v834
      %v979 = vadd.f32 %v579, %v835
      %v980 = vadd.f32 %v580, %v836
      %v981 = vadd.f32 %v454, %v837
      %v982 = vadd.f32 %v581, %v838
      %v983 = vadd.f32 %v582, %v839
      %v984 = vadd.f32 %v583, %v840
      %v985 = vadd.f32 %v457, %v841
      %v986 = vadd.f32 %v584, %v842
      %v987 = vadd.f32 %v585, %v843
      %v988 = vadd.f32 %v586, %v844
      %v989 = vadd.f32 %v460, %v837
      %v990 = vadd.f32 %v587, %v838
      %v991 = vadd.f32 %v588, %v839
      %v992 = vadd.f32 %v589, %v840
      %v993 = vadd.f32 %v463, %v841
      %v994 = vadd.f32 %v590, %v842
      %v995 = vadd.f32 %v591, %v843
      %v996 = vadd.f32 %v592, %v844
      %v997 = vadd.f32 %v466, %v845
      %v998 = vadd.f32 %v593, %v846
      %v999 = vadd.f32 %v594, %v847
      %v1000 = vadd.f32 %v595, %v848
      %v1001 = vadd.f32 %v469, %v849
      %v1002 = vadd.f32 %v596, %v850
      %v1003 = vadd.f32 %v597, %v851
      %v1004 = vadd.f32 %v598, %v852
      %v1005 = vadd.f32 %v472, %v845
      %v1006 = vadd.f32 %v599, %v846
      %v1007 = vadd.f32 %v600, %v847
      %v1008 = vadd.f32 %v601, %v848
      %v1009 = vadd.f32 %v475, %v849
      %v1010 = vadd.f32 %v602, %v850
      %v1011 = vadd.f32 %v603, %v851
      %v1012 = vadd.f32 %v604, %v852
      %v1013 = vadd.f32 %v478, %v853
      %v1014 = vadd.f32 %v605, %v854
      %v1015 = vadd.f32 %v606, %v855
      %v1016 = vadd.f32 %v607, %v856
      %v1017 = vadd.f32 %v481, %v857
      %v1018 = vadd.f32 %v608, %v858
      %v1019 = vadd.f32 %v609, %v859
      %v1020 = vadd.f32 %v610, %v860
      %v1021 = vadd.f32 %v484, %v853
      %v1022 = vadd.f32 %v611, %v854
      %v1023 = vadd.f32 %v612, %v855
      %v1024 = vadd.f32 %v613, %v856
      %v1025 = vadd.f32 %v487, %v857
      %v1026 = vadd.f32 %v614, %v858
      %v1027 = vadd.f32 %v615, %v859
      %v1028 = vadd.f32 %v616, %v860
      %v1029 = vadd.f32 %v490, %v861
      %v1030 = vadd.f32 %v617, %v862
      %v1031 = vadd.f32 %v618, %v863
      %v1032 = vadd.f32 %v619, %v864
      %v1033 = vadd.f32 %v493, %v865
      %v1034 = vadd.f32 %v620, %v866
      %v1035 = vadd.f32 %v621, %v867
      %v1036 = vadd.f32 %v622, %v868
      %v1037 = vadd.f32 %v496, %v861
      %v1038 = vadd.f32 %v623, %v862
      %v1039 = vadd.f32 %v624, %v863
      %v1040 = vadd.f32 %v625, %v864
      %v1041 = vadd.f32 %v499, %v865
      %v1042 = vadd.f32 %v626, %v866
      %v1043 = vadd.f32 %v627, %v867
      %v1044 = vadd.f32 %v628, %v868
      %v1045 = vadd.f32 %v502, %v869
      %v1046 = vadd.f32 %v629, %v870
      %v1047 = vadd.f32 %v630, %v871
      %v1048 = vadd.f32 %v631, %v872
      %v1049 = vadd.f32 %v505, %v873
      %v1050 = vadd.f32 %v632, %v874
      %v1051 = vadd.f32 %v633, %v875
      %v1052 = vadd.f32 %v634, %v876
      %v1053 = vadd.f32 %v508, %v869
      %v1054 = vadd.f32 %v635, %v870
      %v1055 = vadd.f32 %v636, %v871
      %v1056 = vadd.f32 %v637, %v872
      %v1057 = vadd.f32 %v511, %v873
      %v1058 = vadd.f32 %v638, %v874
      %v1059 = vadd.f32 %v639, %v875
      %v1060 = vadd.f32 %v640, %v876
      %v1061 = vadd.f32 %v514, %v877
      %v1062 = vadd.f32 %v641, %v878
      %v1063 = vadd.f32 %v642, %v879
      %v1064 = vadd.f32 %v643, %v880
      %v1065 = vadd.f32 %v517, %v881
      %v1066 = vadd.f32 %v644, %v882
      %v1067 = vadd.f32 %v645, %v883
      %v1068 = vadd.f32 %v646, %v884
      %v1069 = vadd.f32 %v520, %v877
      %v1070 = vadd.f32 %v647, %v878
      %v1071 = vadd.f32 %v648, %v879
      %v1072 = vadd.f32 %v649, %v880
      %v1073 = vadd.f32 %v523, %v881
      %v1074 = vadd.f32 %v650, %v882
      %v1075 = vadd.f32 %v651, %v883
      %v1076 = vadd.f32 %v652, %v884
      %1205 = vst [vmem:[#allocation1] ss:$4 sm:$0xff] %v949
      %s1206 = scalar_lea.vmem [#allocation1], 1
      %1207 = vst [vmem:[%s1206] ss:$4 sm:$0xff] %v950
      %s1208 = scalar_lea.vmem [#allocation1], 2
      %1209 = vst [vmem:[%s1208] ss:$4 sm:$0xff] %v951
      %s1210 = scalar_lea.vmem [#allocation1], 3
      %1211 = vst [vmem:[%s1210] ss:$4 sm:$0xff] %v952
      %s1212 = scalar_lea.vmem [#allocation1], 32
      %1213 = vst [vmem:[%s1212] ss:$4 sm:$0xff] %v953
      %s1214 = scalar_lea.vmem [#allocation1], 33
      %1215 = vst [vmem:[%s1214] ss:$4 sm:$0xff] %v954
      %s1216 = scalar_lea.vmem [#allocation1], 34
      %1217 = vst [vmem:[%s1216] ss:$4 sm:$0xff] %v955
      %s1218 = scalar_lea.vmem [#allocation1], 35
      %1219 = vst [vmem:[%s1218] ss:$4 sm:$0xff] %v956
      %v1220 = vld.sshfl [vmem:[#allocation1] sm:$0xff pattern:$0x73625140]
      %v1221 = vld.sshfl [vmem:[#allocation1 + $0x20] sm:$0xff pattern:$0x73625140]
      %1222 = vst [vmem:[#allocation1] ss:$4 sm:$0xff] %v957
      %1223 = vst [vmem:[%s1206] ss:$4 sm:$0xff] %v958
      %1224 = vst [vmem:[%s1208] ss:$4 sm:$0xff] %v959
      %1225 = vst [vmem:[%s1210] ss:$4 sm:$0xff] %v960
      %1226 = vst [vmem:[%s1212] ss:$4 sm:$0xff] %v961
      %1227 = vst [vmem:[%s1214] ss:$4 sm:$0xff] %v962
      %1228 = vst [vmem:[%s1216] ss:$4 sm:$0xff] %v963
      %1229 = vst [vmem:[%s1218] ss:$4 sm:$0xff] %v964
      %v1230 = vld.sshfl [vmem:[#allocation1] sm:$0xff pattern:$0x73625140]
      %v1231 = vld.sshfl [vmem:[#allocation1 + $0x20] sm:$0xff pattern:$0x73625140]
      %1232 = vst [vmem:[#allocation1] ss:$4 sm:$0xff] %v965
      %1233 = vst [vmem:[%s1206] ss:$4 sm:$0xff] %v966
      %1234 = vst [vmem:[%s1208] ss:$4 sm:$0xff] %v967
      %1235 = vst [vmem:[%s1210] ss:$4 sm:$0xff] %v968
      %1236 = vst [vmem:[%s1212] ss:$4 sm:$0xff] %v969
      %1237 = vst [vmem:[%s1214] ss:$4 sm:$0xff] %v970
      %1238 = vst [vmem:[%s1216] ss:$4 sm:$0xff] %v971
      %1239 = vst [vmem:[%s1218] ss:$4 sm:$0xff] %v972
      %v1240 = vld.sshfl [vmem:[#allocation1] sm:$0xff pattern:$0x73625140]
      %v1241 = vld.sshfl [vmem:[#allocation1 + $0x20] sm:$0xff pattern:$0x73625140]
      %1242 = vst [vmem:[#allocation1] ss:$4 sm:$0xff] %v973
      %1243 = vst [vmem:[%s1206] ss:$4 sm:$0xff] %v974
      %1244 = vst [vmem:[%s1208] ss:$4 sm:$0xff] %v975
      %1245 = vst [vmem:[%s1210] ss:$4 sm:$0xff] %v976
      %1246 = vst [vmem:[%s1212] ss:$4 sm:$0xff] %v977
      %1247 = vst [vmem:[%s1214] ss:$4 sm:$0xff] %v978
      %1248 = vst [vmem:[%s1216] ss:$4 sm:$0xff] %v979
      %1249 = vst [vmem:[%s1218] ss:$4 sm:$0xff] %v980
      %v1250 = vld.sshfl [vmem:[#allocation1] sm:$0xff pattern:$0x73625140]
      %v1251 = vld.sshfl [vmem:[#allocation1 + $0x20] sm:$0xff pattern:$0x73625140]
      %1252 = vst [vmem:[#allocation1] ss:$4 sm:$0xff] %v981
      %1253 = vst [vmem:[%s1206] ss:$4 sm:$0xff] %v982
      %1254 = vst [vmem:[%s1208] ss:$4 sm:$0xff] %v983
      %1255 = vst [vmem:[%s1210] ss:$4 sm:$0xff] %v984
      %1256 = vst [vmem:[%s1212] ss:$4 sm:$0xff] %v985
      %1257 = vst [vmem:[%s1214] ss:$4 sm:$0xff] %v986
      %1258 = vst [vmem:[%s1216] ss:$4 sm:$0xff] %v987
      %1259 = vst [vmem:[%s1218] ss:$4 sm:$0xff] %v988
      %v1260 = vld.sshfl [vmem:[#allocation1] sm:$0xff pattern:$0x73625140]
      %v1261 = vld.sshfl [vmem:[#allocation1 + $0x20] sm:$0xff pattern:$0x73625140]
      %1262 = vst [vmem:[#allocation1] ss:$4 sm:$0xff] %v989
      %1263 = vst [vmem:[%s1206] ss:$4 sm:$0xff] %v990
      %1264 = vst [vmem:[%s1208] ss:$4 sm:$0xff] %v991
      %1265 = vst [vmem:[%s1210] ss:$4 sm:$0xff] %v992
      %1266 = vst [vmem:[%s1212] ss:$4 sm:$0xff] %v993
      %1267 = vst [vmem:[%s1214] ss:$4 sm:$0xff] %v994
      %1268 = vst [vmem:[%s1216] ss:$4 sm:$0xff] %v995
      %1269 = vst [vmem:[%s1218] ss:$4 sm:$0xff] %v996
      %v1270 = vld.sshfl [vmem:[#allocation1] sm:$0xff pattern:$0x73625140]
      %v1271 = vld.sshfl [vmem:[#allocation1 + $0x20] sm:$0xff pattern:$0x73625140]
      %1272 = vst [vmem:[#allocation1] ss:$4 sm:$0xff] %v997
      %1273 = vst [vmem:[%s1206] ss:$4 sm:$0xff] %v998
      %1274 = vst [vmem:[%s1208] ss:$4 sm:$0xff] %v999
      %1275 = vst [vmem:[%s1210] ss:$4 sm:$0xff] %v1000
      %1276 = vst [vmem:[%s1212] ss:$4 sm:$0xff] %v1001
      %1277 = vst [vmem:[%s1214] ss:$4 sm:$0xff] %v1002
      %1278 = vst [vmem:[%s1216] ss:$4 sm:$0xff] %v1003
      %1279 = vst [vmem:[%s1218] ss:$4 sm:$0xff] %v1004
      %v1280 = vld.sshfl [vmem:[#allocation1] sm:$0xff pattern:$0x73625140]
      %v1281 = vld.sshfl [vmem:[#allocation1 + $0x20] sm:$0xff pattern:$0x73625140]
      %1282 = vst [vmem:[#allocation1] ss:$4 sm:$0xff] %v1005
      %1283 = vst [vmem:[%s1206] ss:$4 sm:$0xff] %v1006
      %1284 = vst [vmem:[%s1208] ss:$4 sm:$0xff] %v1007
      %1285 = vst [vmem:[%s1210] ss:$4 sm:$0xff] %v1008
      %1286 = vst [vmem:[%s1212] ss:$4 sm:$0xff] %v1009
      %1287 = vst [vmem:[%s1214] ss:$4 sm:$0xff] %v1010
      %1288 = vst [vmem:[%s1216] ss:$4 sm:$0xff] %v1011
      %1289 = vst [vmem:[%s1218] ss:$4 sm:$0xff] %v1012
      %v1290 = vld.sshfl [vmem:[#allocation1] sm:$0xff pattern:$0x73625140]
      %v1291 = vld.sshfl [vmem:[#allocation1 + $0x20] sm:$0xff pattern:$0x73625140]
      %1292 = vst [vmem:[#allocation1] ss:$4 sm:$0xff] %v1013
      %1293 = vst [vmem:[%s1206] ss:$4 sm:$0xff] %v1014
      %1294 = vst [vmem:[%s1208] ss:$4 sm:$0xff] %v1015
      %1295 = vst [vmem:[%s1210] ss:$4 sm:$0xff] %v1016
      %1296 = vst [vmem:[%s1212] ss:$4 sm:$0xff] %v1017
      %1297 = vst [vmem:[%s1214] ss:$4 sm:$0xff] %v1018
      %1298 = vst [vmem:[%s1216] ss:$4 sm:$0xff] %v1019
      %1299 = vst [vmem:[%s1218] ss:$4 sm:$0xff] %v1020
      %v1300 = vld.sshfl [vmem:[#allocation1] sm:$0xff pattern:$0x73625140]
      %v1301 = vld.sshfl [vmem:[#allocation1 + $0x20] sm:$0xff pattern:$0x73625140]
      %1302 = vst [vmem:[#allocation1] ss:$4 sm:$0xff] %v1021
      %1303 = vst [vmem:[%s1206] ss:$4 sm:$0xff] %v1022
      %1304 = vst [vmem:[%s1208] ss:$4 sm:$0xff] %v1023
      %1305 = vst [vmem:[%s1210] ss:$4 sm:$0xff] %v1024
      %1306 = vst [vmem:[%s1212] ss:$4 sm:$0xff] %v1025
      %1307 = vst [vmem:[%s1214] ss:$4 sm:$0xff] %v1026
      %1308 = vst [vmem:[%s1216] ss:$4 sm:$0xff] %v1027
      %1309 = vst [vmem:[%s1218] ss:$4 sm:$0xff] %v1028
      %v1310 = vld.sshfl [vmem:[#allocation1] sm:$0xff pattern:$0x73625140]
      %v1311 = vld.sshfl [vmem:[#allocation1 + $0x20] sm:$0xff pattern:$0x73625140]
      %1312 = vst [vmem:[#allocation1] ss:$4 sm:$0xff] %v1029
      %1313 = vst [vmem:[%s1206] ss:$4 sm:$0xff] %v1030
      %1314 = vst [vmem:[%s1208] ss:$4 sm:$0xff] %v1031
      %1315 = vst [vmem:[%s1210] ss:$4 sm:$0xff] %v1032
      %1316 = vst [vmem:[%s1212] ss:$4 sm:$0xff] %v1033
      %1317 = vst [vmem:[%s1214] ss:$4 sm:$0xff] %v1034
      %1318 = vst [vmem:[%s1216] ss:$4 sm:$0xff] %v1035
      %1319 = vst [vmem:[%s1218] ss:$4 sm:$0xff] %v1036
      %v1320 = vld.sshfl [vmem:[#allocation1] sm:$0xff pattern:$0x73625140]
      %v1321 = vld.sshfl [vmem:[#allocation1 + $0x20] sm:$0xff pattern:$0x73625140]
      %1322 = vst [vmem:[#allocation1] ss:$4 sm:$0xff] %v1037
      %1323 = vst [vmem:[%s1206] ss:$4 sm:$0xff] %v1038
      %1324 = vst [vmem:[%s1208] ss:$4 sm:$0xff] %v1039
      %1325 = vst [vmem:[%s1210] ss:$4 sm:$0xff] %v1040
      %1326 = vst [vmem:[%s1212] ss:$4 sm:$0xff] %v1041
      %1327 = vst [vmem:[%s1214] ss:$4 sm:$0xff] %v1042
      %1328 = vst [vmem:[%s1216] ss:$4 sm:$0xff] %v1043
      %1329 = vst [vmem:[%s1218] ss:$4 sm:$0xff] %v1044
      %v1330 = vld.sshfl [vmem:[#allocation1] sm:$0xff pattern:$0x73625140]
      %v1331 = vld.sshfl [vmem:[#allocation1 + $0x20] sm:$0xff pattern:$0x73625140]
      %1332 = vst [vmem:[#allocation1] ss:$4 sm:$0xff] %v1045
      %1333 = vst [vmem:[%s1206] ss:$4 sm:$0xff] %v1046
      %1334 = vst [vmem:[%s1208] ss:$4 sm:$0xff] %v1047
      %1335 = vst [vmem:[%s1210] ss:$4 sm:$0xff] %v1048
      %1336 = vst [vmem:[%s1212] ss:$4 sm:$0xff] %v1049
      %1337 = vst [vmem:[%s1214] ss:$4 sm:$0xff] %v1050
      %1338 = vst [vmem:[%s1216] ss:$4 sm:$0xff] %v1051
      %1339 = vst [vmem:[%s1218] ss:$4 sm:$0xff] %v1052
      %v1340 = vld.sshfl [vmem:[#allocation1] sm:$0xff pattern:$0x73625140]
      %v1341 = vld.sshfl [vmem:[#allocation1 + $0x20] sm:$0xff pattern:$0x73625140]
      %1342 = vst [vmem:[#allocation1] ss:$4 sm:$0xff] %v1053
      %1343 = vst [vmem:[%s1206] ss:$4 sm:$0xff] %v1054
      %1344 = vst [vmem:[%s1208] ss:$4 sm:$0xff] %v1055
      %1345 = vst [vmem:[%s1210] ss:$4 sm:$0xff] %v1056
      %1346 = vst [vmem:[%s1212] ss:$4 sm:$0xff] %v1057
      %1347 = vst [vmem:[%s1214] ss:$4 sm:$0xff] %v1058
      %1348 = vst [vmem:[%s1216] ss:$4 sm:$0xff] %v1059
      %1349 = vst [vmem:[%s1218] ss:$4 sm:$0xff] %v1060
      %v1350 = vld.sshfl [vmem:[#allocation1] sm:$0xff pattern:$0x73625140]
      %v1351 = vld.sshfl [vmem:[#allocation1 + $0x20] sm:$0xff pattern:$0x73625140]
      %1352 = vst [vmem:[#allocation1] ss:$4 sm:$0xff] %v1061
      %1353 = vst [vmem:[%s1206] ss:$4 sm:$0xff] %v1062
      %1354 = vst [vmem:[%s1208] ss:$4 sm:$0xff] %v1063
      %1355 = vst [vmem:[%s1210] ss:$4 sm:$0xff] %v1064
      %1356 = vst [vmem:[%s1212] ss:$4 sm:$0xff] %v1065
      %1357 = vst [vmem:[%s1214] ss:$4 sm:$0xff] %v1066
      %1358 = vst [vmem:[%s1216] ss:$4 sm:$0xff] %v1067
      %1359 = vst [vmem:[%s1218] ss:$4 sm:$0xff] %v1068
      %v1360 = vld.sshfl [vmem:[#allocation1] sm:$0xff pattern:$0x73625140]
      %v1361 = vld.sshfl [vmem:[#allocation1 + $0x20] sm:$0xff pattern:$0x73625140]
      %1362 = vst [vmem:[#allocation1] ss:$4 sm:$0xff] %v1069
      %1363 = vst [vmem:[%s1206] ss:$4 sm:$0xff] %v1070
      %1364 = vst [vmem:[%s1208] ss:$4 sm:$0xff] %v1071
      %1365 = vst [vmem:[%s1210] ss:$4 sm:$0xff] %v1072
      %1366 = vst [vmem:[%s1212] ss:$4 sm:$0xff] %v1073
      %1367 = vst [vmem:[%s1214] ss:$4 sm:$0xff] %v1074
      %1368 = vst [vmem:[%s1216] ss:$4 sm:$0xff] %v1075
      %1369 = vst [vmem:[%s1218] ss:$4 sm:$0xff] %v1076
      %v1370 = vld.sshfl [vmem:[#allocation1] sm:$0xff pattern:$0x73625140]
      %v1371 = vld.sshfl [vmem:[#allocation1 + $0x20] sm:$0xff pattern:$0x73625140]
      %vm1404 = vcmask 130048
      %1405 = vst.msk [vmem:[%s276] sm:$0xff] %vm1404, %v1220
      %1406 = vst.msk [vmem:[%s276 + $0x8] sm:$0xff] %vm1404, %v1221
      %1407 = vst.msk [vmem:[%s276 + $0x10] sm:$0xff] %vm1404, %v1230
      %1408 = vst.msk [vmem:[%s276 + $0x18] sm:$0xff] %vm1404, %v1231
      %1409 = vst.msk [vmem:[%s276 + $0x20] sm:$0xff] %vm1404, %v1240
      %1410 = vst.msk [vmem:[%s276 + $0x28] sm:$0xff] %vm1404, %v1241
      %1411 = vst.msk [vmem:[%s276 + $0x30] sm:$0xff] %vm1404, %v1250
      %1412 = vst.msk [vmem:[%s276 + $0x38] sm:$0xff] %vm1404, %v1251
      %1413 = vst.msk [vmem:[%s276 + $0x40] sm:$0xff] %vm1404, %v1260
      %1414 = vst.msk [vmem:[%s276 + $0x48] sm:$0xff] %vm1404, %v1261
      %1415 = vst.msk [vmem:[%s276 + $0x50] sm:$0xff] %vm1404, %v1270
      %1416 = vst.msk [vmem:[%s276 + $0x58] sm:$0xff] %vm1404, %v1271
      %1417 = vst.msk [vmem:[%s276 + $0x60] sm:$0xff] %vm1404, %v1280
      %1418 = vst.msk [vmem:[%s276 + $0x68] sm:$0xff] %vm1404, %v1281
      %1419 = vst.msk [vmem:[%s276 + $0x70] sm:$0xff] %vm1404, %v1290
      %1420 = vst.msk [vmem:[%s276 + $0x78] sm:$0xff] %vm1404, %v1291
      %1421 = vst.msk [vmem:[%s276 + $0x80] sm:$0xff] %vm1404, %v1300
      %1422 = vst.msk [vmem:[%s276 + $0x88] sm:$0xff] %vm1404, %v1301
      %1423 = vst.msk [vmem:[%s276 + $0x90] sm:$0xff] %vm1404, %v1310
      %1424 = vst.msk [vmem:[%s276 + $0x98] sm:$0xff] %vm1404, %v1311
      %1425 = vst.msk [vmem:[%s276 + $0xa0] sm:$0xff] %vm1404, %v1320
      %1426 = vst.msk [vmem:[%s276 + $0xa8] sm:$0xff] %vm1404, %v1321
      %1427 = vst.msk [vmem:[%s276 + $0xb0] sm:$0xff] %vm1404, %v1330
      %1428 = vst.msk [vmem:[%s276 + $0xb8] sm:$0xff] %vm1404, %v1331
      %1429 = vst.msk [vmem:[%s276 + $0xc0] sm:$0xff] %vm1404, %v1340
      %1430 = vst.msk [vmem:[%s276 + $0xc8] sm:$0xff] %vm1404, %v1341
      %1431 = vst.msk [vmem:[%s276 + $0xd0] sm:$0xff] %vm1404, %v1350
      %1432 = vst.msk [vmem:[%s276 + $0xd8] sm:$0xff] %vm1404, %v1351
      %1433 = vst.msk [vmem:[%s276 + $0xe0] sm:$0xff] %vm1404, %v1360
      %1434 = vst.msk [vmem:[%s276 + $0xe8] sm:$0xff] %vm1404, %v1361
      %1435 = vst.msk [vmem:[%s276 + $0xf0] sm:$0xff] %vm1404, %v1370
      %1436 = vst.msk [vmem:[%s276 + $0xf8] sm:$0xff] %vm1404, %v1371
      %s1437 = smul.u32 16, %s20
      %p1438 = scmp.lt.s32.totalorder %s19, 1
      %s1439 = scalar_select %p1438, %s19, 1
      %p1440 = scmp.lt.s32.totalorder %s1437, 15
      %s1441 = scalar_select %p1440, %s1437, 15
      %s1442 = smul.addr %s1441, 2
      %s1443 = smul.addr %s1439, 32
      %s1444 = sadd.s32 %s1442, %s1443
      %s1445 = smul.addr %s1444, 8
      %s1446 = scalar_lea.vmem %s4, %s1445
      // Predicated region
      $region37: #{backbone_with_fpn.16} parent=35 // pred_check
        %p1447 = pneg %p145
      $region38: #{backbone_with_fpn.16} parent=35 // pred_check_branch
        %1449 = sbr.rel (%p1447) target = $region40
      $region39: #{backbone_with_fpn.16} parent=35 // pred_region
        %s1450 = smul.u32 16, %s20
      $region40: #{backbone_with_fpn.16} parent=35 // pred_fallthru
        _
    $region36: #{backbone_with_fpn.16} parent=5 // pred_fallthru
      _
    %p1451 = scmp.le.s32.totalorder 2, %s10
    // Predicated region
    $region41: #{backbone_with_fpn.16} parent=5 // pred_check
      %p1452 = pneg %p1451
    $region42: #{backbone_with_fpn.16} parent=5 // pred_check_branch
      %1454 = sbr.rel (%p1452) target = $region44
    $region43: #{backbone_with_fpn.16} parent=5 // pred_region
      %s1455 = ssub.s32 %s10, 2
      // Predicated region
      $region45: #{backbone_with_fpn.16} parent=43 // pred_check
        %p1456 = pneg %p151
      $region46: #{backbone_with_fpn.16} parent=43 // pred_check_branch
        %1458 = sbr.rel (%p1456) target = $region48
      $region47: #{backbone_with_fpn.16} parent=43 // pred_region
        %s1459 = smul.u32 16, %s22
        %p1460 = scmp.lt.s32.totalorder %s21, 1
        %s1461 = scalar_select %p1460, %s21, 1
        %p1462 = scmp.lt.s32.totalorder %s1459, 15
        %s1463 = scalar_select %p1462, %s1459, 15
        %s1464 = smul.addr %s1463, 2
        %s1465 = smul.addr %s1461, 32
        %s1466 = sadd.s32 %s1464, %s1465
        %s1467 = smul.addr %s1466, 8
        %s1468 = scalar_lea.vmem %s4, %s1467
      $region48: #{backbone_with_fpn.16} parent=43 // pred_fallthru
        _
    $region44: #{backbone_with_fpn.16} parent=5 // pred_fallthru
      _
  $region6: #{backbone_with_fpn.16} parent=0 // loop_footer
    %s14 = sadd.s32 1, %s10
  $region7: #{backbone_with_fpn.16} parent=0 // loop_footer_branch
    %9 = sbr.rel target = $region3
  $region8: #{backbone_with_fpn.16} parent=0 // loop_exit
    _

// kernel: backbone_with_fpn.15
$region0: #{backbone_with_fpn.15}
  #allocation0 [shape = 'u32[]', space=smem, size = 0x4, offset = 0x4, fixed_abs, tag = 'smem constant byte address 0x4 - core index']
  #allocation1 [shape = 'u32[72,128]{1,0:T(1,128)}', space=vmem, size = 0x9000, scoped, tag = 'internal scratch']
  %s0 = inlined_call_operand.vmem [shape: f32[2,10,10,16], index: 0, kind: input, shape index: {}]
  %s1 = inlined_call_operand.vmem [shape: f32[144,16], index: 1, kind: input, shape index: {}]
  %s2 = inlined_call_operand.vmem [shape: f32[1,16], index: 2, kind: input, shape index: {}]
  %s3 = inlined_call_operand.hbm [shape: f32[2,8,8,16], index: 3, kind: output, shape index: {}]
  %s4 = sld [smem:[#allocation0]]
  $region45: #{backbone_with_fpn.15} parent=0
    _
  %s6 = ssub.s32 1, %s4
  %s7 = scalar_select 0, %s6, %s4
  $region1: #{backbone_with_fpn.15} parent=0
    #allocation2 [shape = 'u8[65536]{0}', space=vmem, size = 0x10000, scoped, tag = 'output window, operand 0']
    #allocation3 [shape = 's32[2]{0}', space=sflag, size = 0x8, scoped, tag = 'scoped memory for backbone_with_fpn.15']
    %8 = vsyncpa [#allocation3], 0
    %s9 = scalar_lea.sflag [#allocation3], 1
    %10 = vsyncpa %s9, 0
    loop: start=0, step=1, limit=4
    $region2: #{backbone_with_fpn.15} parent=1 // loop_pre_header
      _
    $region3: #{backbone_with_fpn.15} parent=1 // loop_header
      %s12 = sphi 0, %s16
      %p13 = scmp.ge.s32.totalorder %s12, 4
      %s19 = sphi 0, %s31
      %s20 = sphi 0, %s27
      %s21 = sphi 0, %s19
      %s22 = sphi 0, %s20
      %s23 = sphi 0, %s21
      %s24 = sphi 0, %s22
      %s34 = sphi 0, %s36
      %s37 = sphi 0, %s34
      %s38 = sphi 0, %s37
      %s54 = sphi 0, %s38
      %s58 = sphi 0, %s58
      %s60 = sphi 0, %s58
      %s61 = sphi 0, %s60
      %s75 = sphi 0, %s61
      %s79 = sphi 0, %s79
      %s81 = sphi 0, %s79
      %s82 = sphi 0, %s81
      %s96 = sphi 0, %s82
      %s104 = sphi 0, %s106
      %s107 = sphi 0, %s104
      %s108 = sphi 0, %s107
      %s124 = sphi 0, %s108
    $region4: #{backbone_with_fpn.15} parent=1 // loop_header_branch
      %15 = sbr.rel (%p13) target = $region8
    $region5: #{backbone_with_fpn.15} parent=1 // loop_body
      %s17 = ssub.s32 %s12, 1
      %s18 = ssub.s32 %s12, 2
      %s25 = sadd.s32 1, %s20
      %p26 = scmp.ge.s32.totalorder %s25, 1
      %s27 = scalar_select %p26, 0, %s25
      %s28 = sadd.s32 1, %s19
      %s29 = scalar_select %p26, %s28, %s19
      %p30 = scmp.ge.s32.totalorder %s29, 2
      %s31 = scalar_select %p30, 0, %s29
      %s32 = ssub.s32 %s19, %s31
      %p33 = scmp.eq.s32.totalorder %s32, 0
      %s35 = sadd.s32 %s34, 1
      %s36 = scalar_select %p33, %s34, %s35
      %p39 = pneg %p33
      %p40 = scmp.eq.s32.totalorder %s12, 1
      %p41 = por %p39, %p40
      %p42 = scmp.ne.s32.totalorder %s34, %s37
      %p43 = scmp.eq.s32.totalorder %s12, 0
      %p44 = por %p42, %p43
      %p45 = scmp.ne.s32.totalorder %s34, %s37
      %p46 = scmp.eq.s32.totalorder %s17, 1
      %p47 = por %p45, %p46
      %p48 = scmp.ne.s32.totalorder %s37, %s38
      %p49 = scmp.eq.s32.totalorder %s17, 0
      %p50 = por %p48, %p49
      %p51 = scmp.ne.s32.totalorder %s37, %s38
      %p52 = scmp.eq.s32.totalorder %s18, 1
      %p53 = por %p51, %p52
      %p55 = scmp.ne.s32.totalorder %s38, %s54
      %p56 = scmp.eq.s32.totalorder %s18, 0
      %p57 = por %p55, %p56
      %s59 = sadd.s32 %s58, 1
      %p62 = scmp.eq.s32.totalorder %s12, 1
      %p63 = scmp.ne.s32.totalorder %s58, %s60
      %p64 = scmp.eq.s32.totalorder %s12, 0
      %p65 = por %p63, %p64
      %p66 = scmp.ne.s32.totalorder %s58, %s60
      %p67 = scmp.eq.s32.totalorder %s17, 1
      %p68 = por %p66, %p67
      %p69 = scmp.ne.s32.totalorder %s60, %s61
      %p70 = scmp.eq.s32.totalorder %s17, 0
      %p71 = por %p69, %p70
      %p72 = scmp.ne.s32.totalorder %s60, %s61
      %p73 = scmp.eq.s32.totalorder %s18, 1
      %p74 = por %p72, %p73
      %p76 = scmp.ne.s32.totalorder %s61, %s75
      %p77 = scmp.eq.s32.totalorder %s18, 0
      %p78 = por %p76, %p77
      %s80 = sadd.s32 %s79, 1
      %p83 = scmp.eq.s32.totalorder %s12, 1
      %p84 = scmp.ne.s32.totalorder %s79, %s81
      %p85 = scmp.eq.s32.totalorder %s12, 0
      %p86 = por %p84, %p85
      %p87 = scmp.ne.s32.totalorder %s79, %s81
      %p88 = scmp.eq.s32.totalorder %s17, 1
      %p89 = por %p87, %p88
      %p90 = scmp.ne.s32.totalorder %s81, %s82
      %p91 = scmp.eq.s32.totalorder %s17, 0
      %p92 = por %p90, %p91
      %p93 = scmp.ne.s32.totalorder %s81, %s82
      %p94 = scmp.eq.s32.totalorder %s18, 1
      %p95 = por %p93, %p94
      %p97 = scmp.ne.s32.totalorder %s82, %s96
      %p98 = scmp.eq.s32.totalorder %s18, 0
      %p99 = por %p97, %p98
      %s100 = ssub.s32 %s19, %s31
      %s101 = ssub.s32 %s20, %s27
      %s102 = sor.u32 %s100, %s101
      %p103 = scmp.eq.s32.totalorder %s102, 0
      %s105 = sadd.s32 %s104, 1
      %s106 = scalar_select %p103, %s104, %s105
      %p109 = pneg %p103
      %p110 = scmp.eq.s32.totalorder %s12, 1
      %p111 = por %p109, %p110
      %p112 = scmp.ne.s32.totalorder %s104, %s107
      %p113 = scmp.eq.s32.totalorder %s12, 0
      %p114 = por %p112, %p113
      %p115 = scmp.ne.s32.totalorder %s104, %s107
      %p116 = scmp.eq.s32.totalorder %s17, 1
      %p117 = por %p115, %p116
      %p118 = scmp.ne.s32.totalorder %s107, %s108
      %p119 = scmp.eq.s32.totalorder %s17, 0
      %p120 = por %p118, %p119
      %p121 = scmp.ne.s32.totalorder %s107, %s108
      %p122 = scmp.eq.s32.totalorder %s18, 1
      %p123 = por %p121, %p122
      %p125 = scmp.ne.s32.totalorder %s108, %s124
      %p126 = scmp.eq.s32.totalorder %s18, 0
      %p127 = por %p125, %p126
      %p128 = scmp.le.s32.totalorder 1, %s12
      %p129 = scmp.lt.s32.totalorder %s12, 3
      %p130 = pnand %p128, %p129
      %p131 = pneg %p130
      // Predicated region
      $region9: #{backbone_with_fpn.15} parent=5 // pred_check
        _
      $region10: #{backbone_with_fpn.15} parent=5 // pred_check_branch
        %133 = sbr.rel (%p130) target = $region12
      $region11: #{backbone_with_fpn.15} parent=5 // pred_region
        %s134 = ssub.s32 %s12, 1
        // Predicated region
        $region13: #{backbone_with_fpn.15} parent=11 // pred_check
          %p135 = pneg %p71
        $region14: #{backbone_with_fpn.15} parent=11 // pred_check_branch
          %137 = sbr.rel (%p135) target = $region16
        $region15: #{backbone_with_fpn.15} parent=11 // pred_region
          _
        $region16: #{backbone_with_fpn.15} parent=11 // pred_fallthru
          _
        // Predicated region
        $region17: #{backbone_with_fpn.15} parent=11 // pred_check
          %p138 = pneg %p92
        $region18: #{backbone_with_fpn.15} parent=11 // pred_check_branch
          %140 = sbr.rel (%p138) target = $region20
        $region19: #{backbone_with_fpn.15} parent=11 // pred_region
          _
        $region20: #{backbone_with_fpn.15} parent=11 // pred_fallthru
          _
      $region12: #{backbone_with_fpn.15} parent=5 // pred_fallthru
        _
      %p141 = scmp.lt.s32.totalorder %s12, 2
      // Predicated region
      $region21: #{backbone_with_fpn.15} parent=5 // pred_check
        %p142 = pneg %p141
      $region22: #{backbone_with_fpn.15} parent=5 // pred_check_branch
        %144 = sbr.rel (%p142) target = $region24
      $region23: #{backbone_with_fpn.15} parent=5 // pred_region
        // Predicated region
        $region25: #{backbone_with_fpn.15} parent=23 // pred_check
          %p145 = pneg %p44
        $region26: #{backbone_with_fpn.15} parent=23 // pred_check_branch
          %147 = sbr.rel (%p145) target = $region28
        $region27: #{backbone_with_fpn.15} parent=23 // pred_region
          %p148 = scmp.lt.s32.totalorder %s19, 1
          %s149 = scalar_select %p148, %s19, 1
          %s150 = smul.addr %s149, 20
          %s151 = smul.addr %s150, 8
          %s152 = scalar_lea.vmem %s0, %s151
        $region28: #{backbone_with_fpn.15} parent=23 // pred_fallthru
          _
      $region24: #{backbone_with_fpn.15} parent=5 // pred_fallthru
        _
      %p153 = scmp.le.s32.totalorder 1, %s12
      %p154 = scmp.lt.s32.totalorder %s12, 3
      %p155 = pnand %p153, %p154
      %p156 = pneg %p155
      // Predicated region
      $region29: #{backbone_with_fpn.15} parent=5 // pred_check
        _
      $region30: #{backbone_with_fpn.15} parent=5 // pred_check_branch
        %158 = sbr.rel (%p155) target = $region32
      $region31: #{backbone_with_fpn.15} parent=5 // pred_region
        %s159 = ssub.s32 %s12, 1
        %p160 = scmp.lt.s32.totalorder %s21, 1
        %s161 = scalar_select %p160, %s21, 1
        %s162 = smul.addr %s161, 20
        %s163 = smul.addr %s162, 8
        %s164 = scalar_lea.vmem %s0, %s163
        %p165 = pneg %p50
        %p166 = pneg %p47
        %p167 = pneg %p71
        %p168 = pneg %p68
        %p169 = pneg %p92
        %p170 = pneg %p89
        %p171 = pneg %p120
        %p172 = pneg %p117
        %s173 = sand.u32 %s107, 1
        %s174 = scalar_lea.sflag [#allocation3], %s173
        %s175 = sand.u32 %s107, 1
        %s176 = smul.addr %s175, 64
        %s177 = scalar_lea.vmem [#allocation2], %s176
        %p178 = scmp.lt.s32.totalorder %s21, 1
        %s179 = scalar_select %p178, %s21, 1
        %s180 = smul.addr %s179, 20
        %s181 = smul.addr %s180, 8
        %s182 = scalar_lea.vmem %s0, %s181
        %s183 = smul.u32 8, %s22
        %s184 = smul.u32 %s22, 8
        %s185 = smul.u32 %s184, 16
        %s186 = scalar_lea.vmem %s182, %s185
        %v187 = vld [vmem:[%s186] sm:$0xff]
        %v188 = vld [vmem:[%s186 + $0x8] sm:$0x3]
        %v189 = vld [vmem:[%s186 + $0x10] sm:$0xff]
        %v190 = vld [vmem:[%s186 + $0x18] sm:$0x3]
        %v191 = vld [vmem:[%s186 + $0x20] sm:$0xff]
        %v192 = vld [vmem:[%s186 + $0x28] sm:$0x3]
        %v193 = vld [vmem:[%s186 + $0x30] sm:$0xff]
        %v194 = vld [vmem:[%s186 + $0x38] sm:$0x3]
        %v195 = vld [vmem:[%s186 + $0x40] sm:$0xff]
        %v196 = vld [vmem:[%s186 + $0x48] sm:$0x3]
        %v197 = vld [vmem:[%s186 + $0x50] sm:$0xff]
        %v198 = vld [vmem:[%s186 + $0x58] sm:$0x3]
        %v199 = vld [vmem:[%s186 + $0x60] sm:$0xff]
        %v200 = vld [vmem:[%s186 + $0x68] sm:$0x3]
        %v201 = vld [vmem:[%s186 + $0x70] sm:$0xff]
        %v202 = vld [vmem:[%s186 + $0x78] sm:$0x3]
        %s203 = sadd.s32 %s184, 1
        %s204 = smul.u32 %s203, 16
        %s205 = scalar_lea.vmem %s182, %s204
        %v206 = vld [vmem:[%s205] sm:$0xff]
        %v207 = vld [vmem:[%s205 + $0x8] sm:$0x3]
        %v208 = vld [vmem:[%s205 + $0x10] sm:$0xff]
        %v209 = vld [vmem:[%s205 + $0x18] sm:$0x3]
        %v210 = vld [vmem:[%s205 + $0x20] sm:$0xff]
        %v211 = vld [vmem:[%s205 + $0x28] sm:$0x3]
        %v212 = vld [vmem:[%s205 + $0x30] sm:$0xff]
        %v213 = vld [vmem:[%s205 + $0x38] sm:$0x3]
        %v214 = vld [vmem:[%s205 + $0x40] sm:$0xff]
        %v215 = vld [vmem:[%s205 + $0x48] sm:$0x3]
        %v216 = vld [vmem:[%s205 + $0x50] sm:$0xff]
        %v217 = vld [vmem:[%s205 + $0x58] sm:$0x3]
        %v218 = vld [vmem:[%s205 + $0x60] sm:$0xff]
        %v219 = vld [vmem:[%s205 + $0x68] sm:$0x3]
        %v220 = vld [vmem:[%s205 + $0x70] sm:$0xff]
        %v221 = vld [vmem:[%s205 + $0x78] sm:$0x3]
        %s222 = sadd.s32 %s184, 2
        %s223 = smul.u32 %s222, 16
        %s224 = scalar_lea.vmem %s182, %s223
        %v225 = vld [vmem:[%s224] sm:$0xff]
        %v226 = vld [vmem:[%s224 + $0x8] sm:$0x3]
        %v227 = vld [vmem:[%s224 + $0x10] sm:$0xff]
        %v228 = vld [vmem:[%s224 + $0x18] sm:$0x3]
        %v229 = vld [vmem:[%s224 + $0x20] sm:$0xff]
        %v230 = vld [vmem:[%s224 + $0x28] sm:$0x3]
        %v231 = vld [vmem:[%s224 + $0x30] sm:$0xff]
        %v232 = vld [vmem:[%s224 + $0x38] sm:$0x3]
        %v233 = vld [vmem:[%s224 + $0x40] sm:$0xff]
        %v234 = vld [vmem:[%s224 + $0x48] sm:$0x3]
        %v235 = vld [vmem:[%s224 + $0x50] sm:$0xff]
        %v236 = vld [vmem:[%s224 + $0x58] sm:$0x3]
        %v237 = vld [vmem:[%s224 + $0x60] sm:$0xff]
        %v238 = vld [vmem:[%s224 + $0x68] sm:$0x3]
        %v239 = vld [vmem:[%s224 + $0x70] sm:$0xff]
        %v240 = vld [vmem:[%s224 + $0x78] sm:$0x3]
        %vm257 = vcmask 1046528
        %v258 = vrot.slane %v187, 1
        %v259 = vrot.slane %v188, 1
        %v260 = vsel %vm257, %v258, %v259
        %v261 = vrot.slane %v189, 1
        %v262 = vrot.slane %v190, 1
        %v263 = vsel %vm257, %v261, %v262
        %v264 = vrot.slane %v191, 1
        %v265 = vrot.slane %v192, 1
        %v266 = vsel %vm257, %v264, %v265
        %v267 = vrot.slane %v193, 1
        %v268 = vrot.slane %v194, 1
        %v269 = vsel %vm257, %v267, %v268
        %v270 = vrot.slane %v195, 1
        %v271 = vrot.slane %v196, 1
        %v272 = vsel %vm257, %v270, %v271
        %v273 = vrot.slane %v197, 1
        %v274 = vrot.slane %v198, 1
        %v275 = vsel %vm257, %v273, %v274
        %v276 = vrot.slane %v199, 1
        %v277 = vrot.slane %v200, 1
        %v278 = vsel %vm257, %v276, %v277
        %v279 = vrot.slane %v201, 1
        %v280 = vrot.slane %v202, 1
        %v281 = vsel %vm257, %v279, %v280
        %282 = vrot.lane.b32.xlu0 %v260, 16
        %v283 = vpop.permute.xlu0 %282
        %284 = vrot.lane.b32.xlu0 %v263, 16
        %v285 = vpop.permute.xlu0 %284
        %286 = vrot.lane.b32.xlu0 %v266, 16
        %v287 = vpop.permute.xlu0 %286
        %288 = vrot.lane.b32.xlu0 %v269, 16
        %v289 = vpop.permute.xlu0 %288
        %290 = vrot.lane.b32.xlu0 %v272, 16
        %v291 = vpop.permute.xlu0 %290
        %292 = vrot.lane.b32.xlu0 %v275, 16
        %v293 = vpop.permute.xlu0 %292
        %294 = vrot.lane.b32.xlu0 %v278, 16
        %v295 = vpop.permute.xlu0 %294
        %296 = vrot.lane.b32.xlu0 %v281, 16
        %v297 = vpop.permute.xlu0 %296
        %vm306 = vcmask 1045504
        %v307 = vrot.slane %v187, 2
        %v308 = vrot.slane %v188, 2
        %v309 = vsel %vm306, %v307, %v308
        %v310 = vrot.slane %v189, 2
        %v311 = vrot.slane %v190, 2
        %v312 = vsel %vm306, %v310, %v311
        %v313 = vrot.slane %v191, 2
        %v314 = vrot.slane %v192, 2
        %v315 = vsel %vm306, %v313, %v314
        %v316 = vrot.slane %v193, 2
        %v317 = vrot.slane %v194, 2
        %v318 = vsel %vm306, %v316, %v317
        %v319 = vrot.slane %v195, 2
        %v320 = vrot.slane %v196, 2
        %v321 = vsel %vm306, %v319, %v320
        %v322 = vrot.slane %v197, 2
        %v323 = vrot.slane %v198, 2
        %v324 = vsel %vm306, %v322, %v323
        %v325 = vrot.slane %v199, 2
        %v326 = vrot.slane %v200, 2
        %v327 = vsel %vm306, %v325, %v326
        %v328 = vrot.slane %v201, 2
        %v329 = vrot.slane %v202, 2
        %v330 = vsel %vm306, %v328, %v329
        %331 = vrot.lane.b32.xlu0 %v309, 32
        %v332 = vpop.permute.xlu0 %331
        %333 = vrot.lane.b32.xlu0 %v312, 32
        %v334 = vpop.permute.xlu0 %333
        %335 = vrot.lane.b32.xlu0 %v315, 32
        %v336 = vpop.permute.xlu0 %335
        %337 = vrot.lane.b32.xlu0 %v318, 32
        %v338 = vpop.permute.xlu0 %337
        %339 = vrot.lane.b32.xlu0 %v321, 32
        %v340 = vpop.permute.xlu0 %339
        %341 = vrot.lane.b32.xlu0 %v324, 32
        %v342 = vpop.permute.xlu0 %341
        %343 = vrot.lane.b32.xlu0 %v327, 32
        %v344 = vpop.permute.xlu0 %343
        %345 = vrot.lane.b32.xlu0 %v330, 32
        %v346 = vpop.permute.xlu0 %345
        %363 = vrot.lane.b32.xlu0 %v206, 48
        %v364 = vpop.permute.xlu0 %363
        %365 = vrot.lane.b32.xlu0 %v208, 48
        %v366 = vpop.permute.xlu0 %365
        %367 = vrot.lane.b32.xlu0 %v210, 48
        %v368 = vpop.permute.xlu0 %367
        %369 = vrot.lane.b32.xlu0 %v212, 48
        %v370 = vpop.permute.xlu0 %369
        %371 = vrot.lane.b32.xlu0 %v214, 48
        %v372 = vpop.permute.xlu0 %371
        %373 = vrot.lane.b32.xlu0 %v216, 48
        %v374 = vpop.permute.xlu0 %373
        %375 = vrot.lane.b32.xlu0 %v218, 48
        %v376 = vpop.permute.xlu0 %375
        %377 = vrot.lane.b32.xlu0 %v220, 48
        %v378 = vpop.permute.xlu0 %377
        %v395 = vrot.slane %v206, 1
        %v396 = vrot.slane %v207, 1
        %v397 = vsel %vm257, %v395, %v396
        %v398 = vrot.slane %v208, 1
        %v399 = vrot.slane %v209, 1
        %v400 = vsel %vm257, %v398, %v399
        %v401 = vrot.slane %v210, 1
        %v402 = vrot.slane %v211, 1
        %v403 = vsel %vm257, %v401, %v402
        %v404 = vrot.slane %v212, 1
        %v405 = vrot.slane %v213, 1
        %v406 = vsel %vm257, %v404, %v405
        %v407 = vrot.slane %v214, 1
        %v408 = vrot.slane %v215, 1
        %v409 = vsel %vm257, %v407, %v408
        %v410 = vrot.slane %v216, 1
        %v411 = vrot.slane %v217, 1
        %v412 = vsel %vm257, %v410, %v411
        %v413 = vrot.slane %v218, 1
        %v414 = vrot.slane %v219, 1
        %v415 = vsel %vm257, %v413, %v414
        %v416 = vrot.slane %v220, 1
        %v417 = vrot.slane %v221, 1
        %v418 = vsel %vm257, %v416, %v417
        %419 = vrot.lane.b32.xlu0 %v397, 64
        %v420 = vpop.permute.xlu0 %419
        %421 = vrot.lane.b32.xlu0 %v400, 64
        %v422 = vpop.permute.xlu0 %421
        %423 = vrot.lane.b32.xlu0 %v403, 64
        %v424 = vpop.permute.xlu0 %423
        %425 = vrot.lane.b32.xlu0 %v406, 64
        %v426 = vpop.permute.xlu0 %425
        %427 = vrot.lane.b32.xlu0 %v409, 64
        %v428 = vpop.permute.xlu0 %427
        %429 = vrot.lane.b32.xlu0 %v412, 64
        %v430 = vpop.permute.xlu0 %429
        %431 = vrot.lane.b32.xlu0 %v415, 64
        %v432 = vpop.permute.xlu0 %431
        %433 = vrot.lane.b32.xlu0 %v418, 64
        %v434 = vpop.permute.xlu0 %433
        %v443 = vrot.slane %v206, 2
        %v444 = vrot.slane %v207, 2
        %v445 = vsel %vm306, %v443, %v444
        %v446 = vrot.slane %v208, 2
        %v447 = vrot.slane %v209, 2
        %v448 = vsel %vm306, %v446, %v447
        %v449 = vrot.slane %v210, 2
        %v450 = vrot.slane %v211, 2
        %v451 = vsel %vm306, %v449, %v450
        %v452 = vrot.slane %v212, 2
        %v453 = vrot.slane %v213, 2
        %v454 = vsel %vm306, %v452, %v453
        %v455 = vrot.slane %v214, 2
        %v456 = vrot.slane %v215, 2
        %v457 = vsel %vm306, %v455, %v456
        %v458 = vrot.slane %v216, 2
        %v459 = vrot.slane %v217, 2
        %v460 = vsel %vm306, %v458, %v459
        %v461 = vrot.slane %v218, 2
        %v462 = vrot.slane %v219, 2
        %v463 = vsel %vm306, %v461, %v462
        %v464 = vrot.slane %v220, 2
        %v465 = vrot.slane %v221, 2
        %v466 = vsel %vm306, %v464, %v465
        %467 = vrot.lane.b32.xlu0 %v445, 80
        %v468 = vpop.permute.xlu0 %467
        %469 = vrot.lane.b32.xlu0 %v448, 80
        %v470 = vpop.permute.xlu0 %469
        %471 = vrot.lane.b32.xlu0 %v451, 80
        %v472 = vpop.permute.xlu0 %471
        %473 = vrot.lane.b32.xlu0 %v454, 80
        %v474 = vpop.permute.xlu0 %473
        %475 = vrot.lane.b32.xlu0 %v457, 80
        %v476 = vpop.permute.xlu0 %475
        %477 = vrot.lane.b32.xlu0 %v460, 80
        %v478 = vpop.permute.xlu0 %477
        %479 = vrot.lane.b32.xlu0 %v463, 80
        %v480 = vpop.permute.xlu0 %479
        %481 = vrot.lane.b32.xlu0 %v466, 80
        %v482 = vpop.permute.xlu0 %481
        %499 = vrot.lane.b32.xlu0 %v225, 96
        %v500 = vpop.permute.xlu0 %499
        %501 = vrot.lane.b32.xlu0 %v227, 96
        %v502 = vpop.permute.xlu0 %501
        %503 = vrot.lane.b32.xlu0 %v229, 96
        %v504 = vpop.permute.xlu0 %503
        %505 = vrot.lane.b32.xlu0 %v231, 96
        %v506 = vpop.permute.xlu0 %505
        %507 = vrot.lane.b32.xlu0 %v233, 96
        %v508 = vpop.permute.xlu0 %507
        %509 = vrot.lane.b32.xlu0 %v235, 96
        %v510 = vpop.permute.xlu0 %509
        %511 = vrot.lane.b32.xlu0 %v237, 96
        %v512 = vpop.permute.xlu0 %511
        %513 = vrot.lane.b32.xlu0 %v239, 96
        %v514 = vpop.permute.xlu0 %513
        %v531 = vrot.slane %v225, 1
        %v532 = vrot.slane %v226, 1
        %v533 = vsel %vm257, %v531, %v532
        %v534 = vrot.slane %v227, 1
        %v535 = vrot.slane %v228, 1
        %v536 = vsel %vm257, %v534, %v535
        %v537 = vrot.slane %v229, 1
        %v538 = vrot.slane %v230, 1
        %v539 = vsel %vm257, %v537, %v538
        %v540 = vrot.slane %v231, 1
        %v541 = vrot.slane %v232, 1
        %v542 = vsel %vm257, %v540, %v541
        %v543 = vrot.slane %v233, 1
        %v544 = vrot.slane %v234, 1
        %v545 = vsel %vm257, %v543, %v544
        %v546 = vrot.slane %v235, 1
        %v547 = vrot.slane %v236, 1
        %v548 = vsel %vm257, %v546, %v547
        %v549 = vrot.slane %v237, 1
        %v550 = vrot.slane %v238, 1
        %v551 = vsel %vm257, %v549, %v550
        %v552 = vrot.slane %v239, 1
        %v553 = vrot.slane %v240, 1
        %v554 = vsel %vm257, %v552, %v553
        %555 = vrot.lane.b32.xlu0 %v533, 112
        %v556 = vpop.permute.xlu0 %555
        %557 = vrot.lane.b32.xlu0 %v536, 112
        %v558 = vpop.permute.xlu0 %557
        %559 = vrot.lane.b32.xlu0 %v539, 112
        %v560 = vpop.permute.xlu0 %559
        %561 = vrot.lane.b32.xlu0 %v542, 112
        %v562 = vpop.permute.xlu0 %561
        %563 = vrot.lane.b32.xlu0 %v545, 112
        %v564 = vpop.permute.xlu0 %563
        %565 = vrot.lane.b32.xlu0 %v548, 112
        %v566 = vpop.permute.xlu0 %565
        %567 = vrot.lane.b32.xlu0 %v551, 112
        %v568 = vpop.permute.xlu0 %567
        %569 = vrot.lane.b32.xlu0 %v554, 112
        %v570 = vpop.permute.xlu0 %569
        %v579 = vrot.slane %v225, 2
        %v580 = vrot.slane %v226, 2
        %v581 = vsel %vm306, %v579, %v580
        %v582 = vrot.slane %v227, 2
        %v583 = vrot.slane %v228, 2
        %v584 = vsel %vm306, %v582, %v583
        %v585 = vrot.slane %v229, 2
        %v586 = vrot.slane %v230, 2
        %v587 = vsel %vm306, %v585, %v586
        %v588 = vrot.slane %v231, 2
        %v589 = vrot.slane %v232, 2
        %v590 = vsel %vm306, %v588, %v589
        %v591 = vrot.slane %v233, 2
        %v592 = vrot.slane %v234, 2
        %v593 = vsel %vm306, %v591, %v592
        %v594 = vrot.slane %v235, 2
        %v595 = vrot.slane %v236, 2
        %v596 = vsel %vm306, %v594, %v595
        %v597 = vrot.slane %v237, 2
        %v598 = vrot.slane %v238, 2
        %v599 = vsel %vm306, %v597, %v598
        %v600 = vrot.slane %v239, 2
        %v601 = vrot.slane %v240, 2
        %v602 = vsel %vm306, %v600, %v601
        %vm603 = vcmask 130048
        %v604 = vsel %vm603, %v187, %v283
        %v605 = vsel %vm603, %v189, %v285
        %v606 = vsel %vm603, %v191, %v287
        %v607 = vsel %vm603, %v193, %v289
        %v608 = vsel %vm603, %v195, %v291
        %v609 = vsel %vm603, %v197, %v293
        %v610 = vsel %vm603, %v199, %v295
        %v611 = vsel %vm603, %v201, %v297
        %vm612 = vcmask 261120
        %v613 = vsel %vm612, %v604, %v332
        %v614 = vsel %vm612, %v605, %v334
        %v615 = vsel %vm612, %v606, %v336
        %v616 = vsel %vm612, %v607, %v338
        %v617 = vsel %vm612, %v608, %v340
        %v618 = vsel %vm612, %v609, %v342
        %v619 = vsel %vm612, %v610, %v344
        %v620 = vsel %vm612, %v611, %v346
        %vm621 = vcmask 392192
        %v622 = vsel %vm621, %v613, %v364
        %v623 = vsel %vm621, %v614, %v366
        %v624 = vsel %vm621, %v615, %v368
        %v625 = vsel %vm621, %v616, %v370
        %v626 = vsel %vm621, %v617, %v372
        %v627 = vsel %vm621, %v618, %v374
        %v628 = vsel %vm621, %v619, %v376
        %v629 = vsel %vm621, %v620, %v378
        %vm630 = vcmask 523264
        %v631 = vsel %vm630, %v622, %v420
        %v632 = vsel %vm630, %v623, %v422
        %v633 = vsel %vm630, %v624, %v424
        %v634 = vsel %vm630, %v625, %v426
        %v635 = vsel %vm630, %v626, %v428
        %v636 = vsel %vm630, %v627, %v430
        %v637 = vsel %vm630, %v628, %v432
        %v638 = vsel %vm630, %v629, %v434
        %vm639 = vcmask 654336
        %v640 = vsel %vm639, %v631, %v468
        %v641 = vsel %vm639, %v632, %v470
        %v642 = vsel %vm639, %v633, %v472
        %v643 = vsel %vm639, %v634, %v474
        %v644 = vsel %vm639, %v635, %v476
        %v645 = vsel %vm639, %v636, %v478
        %v646 = vsel %vm639, %v637, %v480
        %v647 = vsel %vm639, %v638, %v482
        %vm648 = vcmask 785408
        %v649 = vsel %vm648, %v640, %v500
        %v650 = vsel %vm648, %v641, %v502
        %v651 = vsel %vm648, %v642, %v504
        %v652 = vsel %vm648, %v643, %v506
        %v653 = vsel %vm648, %v644, %v508
        %v654 = vsel %vm648, %v645, %v510
        %v655 = vsel %vm648, %v646, %v512
        %v656 = vsel %vm648, %v647, %v514
        %vm657 = vcmask 916480
        %v658 = vsel %vm657, %v649, %v556
        %v659 = vsel %vm657, %v650, %v558
        %v660 = vsel %vm657, %v651, %v560
        %v661 = vsel %vm657, %v652, %v562
        %v662 = vsel %vm657, %v653, %v564
        %v663 = vsel %vm657, %v654, %v566
        %v664 = vsel %vm657, %v655, %v568
        %v665 = vsel %vm657, %v656, %v570
        %v666 = vld [vmem:[%s1] sm:$0xff]
        %v667 = vld [vmem:[%s1 + $0x8] sm:$0xff]
        %v668 = vld [vmem:[%s1 + $0x10] sm:$0xff]
        %v669 = vld [vmem:[%s1 + $0x18] sm:$0xff]
        %v670 = vld [vmem:[%s1 + $0x20] sm:$0xff]
        %v671 = vld [vmem:[%s1 + $0x28] sm:$0xff]
        %v672 = vld [vmem:[%s1 + $0x30] sm:$0xff]
        %v673 = vld [vmem:[%s1 + $0x38] sm:$0xff]
        %v674 = vld [vmem:[%s1 + $0x40] sm:$0xff]
        %v675 = vld [vmem:[%s1 + $0x48] sm:$0xff]
        %v676 = vld [vmem:[%s1 + $0x50] sm:$0xff]
        %v677 = vld [vmem:[%s1 + $0x58] sm:$0xff]
        %v678 = vld [vmem:[%s1 + $0x60] sm:$0xff]
        %v679 = vld [vmem:[%s1 + $0x68] sm:$0xff]
        %v680 = vld [vmem:[%s1 + $0x70] sm:$0xff]
        %v681 = vld [vmem:[%s1 + $0x78] sm:$0xff]
        %v682 = vld [vmem:[%s1 + $0x80] sm:$0xff]
        %v683 = vld [vmem:[%s1 + $0x88] sm:$0xff]
        %v684 = vld [vmem:[%s2] sm:$0x1]
        %v686 = vperm.slane %v684, 0
        %v688 = vsel %vm603, %v581, 0
        %v690 = vsel %vm603, %v584, 0
        %v692 = vsel %vm603, %v587, 0
        %v694 = vsel %vm603, %v590, 0
        %v696 = vsel %vm603, %v593, 0
        %v698 = vsel %vm603, %v596, 0
        %v700 = vsel %vm603, %v599, 0
        %v702 = vsel %vm603, %v602, 0
        %704 = vmatpush.msra.mxu0 %v681
        %705 = vmatpush.msra.mxu0 %v680
        %706 = vmatpush.msra.mxu0 %v679
        %707 = vmatpush.msra.mxu0 %v678
        %708 = vmatpush.msra.mxu0 %v677
        %709 = vmatpush.msra.mxu0 %v676
        %710 = vmatpush.msra.mxu0 %v675
        %711 = vmatpush.msra.mxu0 %v674
        %712 = vmatpush.msra.mxu0 %v673
        %713 = vmatpush.msra.mxu0 %v672
        %714 = vmatpush.msra.mxu0 %v671
        %715 = vmatpush.msra.mxu0 %v670
        %716 = vmatpush.msra.mxu0 %v669
        %717 = vmatpush.msra.mxu0 %v668
        %718 = vmatpush.msra.mxu0 %v667
        %719 = vmatpush.msra.mxu0 %v666
        %720 = vmatmul.f32.gmra.mxu0 %v658
        %v721 = vpop.f32.mrf.mxu0
        %v722 = vadd.f32 %v686, %v721
        %723 = vmatmul.f32.gmra.mxu0 %v659
        %v724 = vpop.f32.mrf.mxu0
        %v725 = vadd.f32 %v686, %v724
        %726 = vmatmul.f32.gmra.mxu0 %v660
        %v727 = vpop.f32.mrf.mxu0
        %v728 = vadd.f32 %v686, %v727
        %729 = vmatmul.f32.gmra.mxu0 %v661
        %v730 = vpop.f32.mrf.mxu0
        %v731 = vadd.f32 %v686, %v730
        %732 = vmatmul.f32.gmra.mxu0 %v662
        %v733 = vpop.f32.mrf.mxu0
        %v734 = vadd.f32 %v686, %v733
        %735 = vmatmul.f32.gmra.mxu0 %v663
        %v736 = vpop.f32.mrf.mxu0
        %v737 = vadd.f32 %v686, %v736
        %738 = vmatmul.f32.gmra.mxu0 %v664
        %v739 = vpop.f32.mrf.mxu0
        %v740 = vadd.f32 %v686, %v739
        %741 = vmatmul.f32.gmra.mxu0 %v665
        %v742 = vpop.f32.mrf.mxu0
        %v743 = vadd.f32 %v686, %v742
        %744 = vdwg.mxu0
        %745 = vmatpush.msra.mxu0 0.0
        %746 = vmatpush.msra.mxu0 0.0
        %747 = vmatpush.msra.mxu0 0.0
        %748 = vmatpush.msra.mxu0 0.0
        %749 = vmatpush.msra.mxu0 0.0
        %750 = vmatpush.msra.mxu0 0.0
        %751 = vmatpush.msra.mxu0 0.0
        %752 = vmatpush.msra.mxu0 0.0
        %753 = vmatpush.msra.mxu0 0.0
        %754 = vmatpush.msra.mxu0 0.0
        %755 = vmatpush.msra.mxu0 0.0
        %756 = vmatpush.msra.mxu0 0.0
        %757 = vmatpush.msra.mxu0 0.0
        %758 = vmatpush.msra.mxu0 0.0
        %759 = vmatpush.msra.mxu0 %v683
        %760 = vmatpush.msra.mxu0 %v682
        %761 = vmatmul.f32.gmra.mxu0 %v688
        %v762 = vpop.f32.mrf.mxu0
        %v763 = vadd.f32 %v722, %v762
        %764 = vmatmul.f32.gmra.mxu0 %v690
        %v765 = vpop.f32.mrf.mxu0
        %v766 = vadd.f32 %v725, %v765
        %767 = vmatmul.f32.gmra.mxu0 %v692
        %v768 = vpop.f32.mrf.mxu0
        %v769 = vadd.f32 %v728, %v768
        %770 = vmatmul.f32.gmra.mxu0 %v694
        %v771 = vpop.f32.mrf.mxu0
        %v772 = vadd.f32 %v731, %v771
        %773 = vmatmul.f32.gmra.mxu0 %v696
        %v774 = vpop.f32.mrf.mxu0
        %v775 = vadd.f32 %v734, %v774
        %776 = vmatmul.f32.gmra.mxu0 %v698
        %v777 = vpop.f32.mrf.mxu0
        %v778 = vadd.f32 %v737, %v777
        %779 = vmatmul.f32.gmra.mxu0 %v700
        %v780 = vpop.f32.mrf.mxu0
        %v781 = vadd.f32 %v740, %v780
        %782 = vmatmul.f32.gmra.mxu0 %v702
        %v783 = vpop.f32.mrf.mxu0
        %v784 = vadd.f32 %v743, %v783
        %785 = vdwg.mxu0
        %786 = vst.msk [vmem:[%s177] sm:$0xff] %vm603, %v763
        %787 = vst.msk [vmem:[%s177 + $0x8] sm:$0xff] %vm603, %v766
        %788 = vst.msk [vmem:[%s177 + $0x10] sm:$0xff] %vm603, %v769
        %789 = vst.msk [vmem:[%s177 + $0x18] sm:$0xff] %vm603, %v772
        %790 = vst.msk [vmem:[%s177 + $0x20] sm:$0xff] %vm603, %v775
        %791 = vst.msk [vmem:[%s177 + $0x28] sm:$0xff] %vm603, %v778
        %792 = vst.msk [vmem:[%s177 + $0x30] sm:$0xff] %vm603, %v781
        %793 = vst.msk [vmem:[%s177 + $0x38] sm:$0xff] %vm603, %v784
        %s794 = sand.u32 %s107, 1
        %s795 = scalar_lea.sflag [#allocation3], %s794
        %s796 = sand.u32 %s107, 1
        %s797 = smul.addr %s796, 64
        %s798 = scalar_lea.vmem [#allocation2], %s797
        // Predicated region
        $region33: #{backbone_with_fpn.15} parent=31 // pred_check
          %p799 = pneg %p117
        $region34: #{backbone_with_fpn.15} parent=31 // pred_check_branch
          %801 = sbr.rel (%p799) target = $region36
        $region35: #{backbone_with_fpn.15} parent=31 // pred_region
          %s802 = smul.u32 8, %s22
          %804 = vsyncadd %s795, 0
          %s805 = smul.addr %s21, 8
          %s806 = sadd.s32 %s802, %s805
          %s807 = smul.addr %s806, 8
          %s808 = scalar_lea.hbm %s3, %s807
          %s809 = sshll.u32 %s798, 4
          %s810 = int_to_ptr.vmem [resolvable:$true] %s809
          %s811 = sshll.u32 %s808, 4
          %s812 = int_to_ptr.hbm [resolvable:$true] %s811
          %817 = dma.vmem_to_hbm [thread:$0]  %s810, 1024, %s812, %s795, 128, 128, 8
        $region36: #{backbone_with_fpn.15} parent=31 // pred_fallthru
          _
      $region32: #{backbone_with_fpn.15} parent=5 // pred_fallthru
        _
      %p818 = scmp.le.s32.totalorder 2, %s12
      // Predicated region
      $region37: #{backbone_with_fpn.15} parent=5 // pred_check
        %p819 = pneg %p818
      $region38: #{backbone_with_fpn.15} parent=5 // pred_check_branch
        %821 = sbr.rel (%p819) target = $region40
      $region39: #{backbone_with_fpn.15} parent=5 // pred_region
        %s822 = ssub.s32 %s12, 2
        // Predicated region
        $region41: #{backbone_with_fpn.15} parent=39 // pred_check
          %p823 = pneg %p123
        $region42: #{backbone_with_fpn.15} parent=39 // pred_check_branch
          %825 = sbr.rel (%p823) target = $region44
        $region43: #{backbone_with_fpn.15} parent=39 // pred_region
          %s826 = sand.u32 %s108, 1
          %s827 = scalar_lea.sflag [#allocation3], %s826
          %s828 = sand.u32 %s108, 1
          %s829 = smul.addr %s828, 64
          %s830 = scalar_lea.vmem [#allocation2], %s829
          %832 = dma.done %s827, 1024
        $region44: #{backbone_with_fpn.15} parent=39 // pred_fallthru
          _
      $region40: #{backbone_with_fpn.15} parent=5 // pred_fallthru
        _
    $region6: #{backbone_with_fpn.15} parent=1 // loop_footer
      %s16 = sadd.s32 1, %s12
    $region7: #{backbone_with_fpn.15} parent=1 // loop_footer_branch
      %11 = sbr.rel target = $region3
    $region8: #{backbone_with_fpn.15} parent=1 // loop_exit
      _
    %833 = vsyncpa [#allocation3], 1
    %s834 = scalar_lea.sflag [#allocation3], 1
    %835 = vsyncpa %s834, 1

// kernel: backbone_with_fpn.13
$region0: #{backbone_with_fpn.13}
  #allocation0 [shape = 'u32[]', space=smem, size = 0x4, offset = 0x4, fixed_abs, tag = 'smem constant byte address 0x4 - core index']
  #allocation1 [shape = 'u32[72,128]{1,0:T(1,128)}', space=vmem, size = 0x9000, scoped, tag = 'internal scratch']
  %s0 = inlined_call_operand.vmem [shape: f32[2,6,6,16], index: 0, kind: input, shape index: {}]
  %s1 = inlined_call_operand.vmem [shape: f32[144,16], index: 1, kind: input, shape index: {}]
  %s2 = inlined_call_operand.vmem [shape: f32[1,16], index: 2, kind: input, shape index: {}]
  %s3 = inlined_call_operand.vmem [shape: f32[2,4,4,16], index: 3, kind: output, shape index: {}]
  %s4 = sld [smem:[#allocation0]]
  $region45: #{backbone_with_fpn.13} parent=0
    _
  %s6 = ssub.s32 1, %s4
  %s7 = scalar_select 0, %s6, %s4
  loop: start=0, step=1, limit=4
  $region2: #{backbone_with_fpn.13} parent=0 // loop_pre_header
    _
  $region3: #{backbone_with_fpn.13} parent=0 // loop_header
    %s9 = sphi 0, %s13
    %p10 = scmp.ge.s32.totalorder %s9, 4
    %s16 = sphi 0, %s28
    %s17 = sphi 0, %s24
    %s18 = sphi 0, %s16
    %s19 = sphi 0, %s17
    %s20 = sphi 0, %s18
    %s21 = sphi 0, %s19
    %s31 = sphi 0, %s33
    %s34 = sphi 0, %s31
    %s35 = sphi 0, %s34
    %s51 = sphi 0, %s35
    %s55 = sphi 0, %s55
    %s57 = sphi 0, %s55
    %s58 = sphi 0, %s57
    %s72 = sphi 0, %s58
    %s76 = sphi 0, %s76
    %s78 = sphi 0, %s76
    %s79 = sphi 0, %s78
    %s93 = sphi 0, %s79
    %s101 = sphi 0, %s103
    %s104 = sphi 0, %s101
    %s105 = sphi 0, %s104
    %s121 = sphi 0, %s105
  $region4: #{backbone_with_fpn.13} parent=0 // loop_header_branch
    %12 = sbr.rel (%p10) target = $region8
  $region5: #{backbone_with_fpn.13} parent=0 // loop_body
    %s14 = ssub.s32 %s9, 1
    %s15 = ssub.s32 %s9, 2
    %s22 = sadd.s32 1, %s17
    %p23 = scmp.ge.s32.totalorder %s22, 1
    %s24 = scalar_select %p23, 0, %s22
    %s25 = sadd.s32 1, %s16
    %s26 = scalar_select %p23, %s25, %s16
    %p27 = scmp.ge.s32.totalorder %s26, 2
    %s28 = scalar_select %p27, 0, %s26
    %s29 = ssub.s32 %s16, %s28
    %p30 = scmp.eq.s32.totalorder %s29, 0
    %s32 = sadd.s32 %s31, 1
    %s33 = scalar_select %p30, %s31, %s32
    %p36 = pneg %p30
    %p37 = scmp.eq.s32.totalorder %s9, 1
    %p38 = por %p36, %p37
    %p39 = scmp.ne.s32.totalorder %s31, %s34
    %p40 = scmp.eq.s32.totalorder %s9, 0
    %p41 = por %p39, %p40
    %p42 = scmp.ne.s32.totalorder %s31, %s34
    %p43 = scmp.eq.s32.totalorder %s14, 1
    %p44 = por %p42, %p43
    %p45 = scmp.ne.s32.totalorder %s34, %s35
    %p46 = scmp.eq.s32.totalorder %s14, 0
    %p47 = por %p45, %p46
    %p48 = scmp.ne.s32.totalorder %s34, %s35
    %p49 = scmp.eq.s32.totalorder %s15, 1
    %p50 = por %p48, %p49
    %p52 = scmp.ne.s32.totalorder %s35, %s51
    %p53 = scmp.eq.s32.totalorder %s15, 0
    %p54 = por %p52, %p53
    %s56 = sadd.s32 %s55, 1
    %p59 = scmp.eq.s32.totalorder %s9, 1
    %p60 = scmp.ne.s32.totalorder %s55, %s57
    %p61 = scmp.eq.s32.totalorder %s9, 0
    %p62 = por %p60, %p61
    %p63 = scmp.ne.s32.totalorder %s55, %s57
    %p64 = scmp.eq.s32.totalorder %s14, 1
    %p65 = por %p63, %p64
    %p66 = scmp.ne.s32.totalorder %s57, %s58
    %p67 = scmp.eq.s32.totalorder %s14, 0
    %p68 = por %p66, %p67
    %p69 = scmp.ne.s32.totalorder %s57, %s58
    %p70 = scmp.eq.s32.totalorder %s15, 1
    %p71 = por %p69, %p70
    %p73 = scmp.ne.s32.totalorder %s58, %s72
    %p74 = scmp.eq.s32.totalorder %s15, 0
    %p75 = por %p73, %p74
    %s77 = sadd.s32 %s76, 1
    %p80 = scmp.eq.s32.totalorder %s9, 1
    %p81 = scmp.ne.s32.totalorder %s76, %s78
    %p82 = scmp.eq.s32.totalorder %s9, 0
    %p83 = por %p81, %p82
    %p84 = scmp.ne.s32.totalorder %s76, %s78
    %p85 = scmp.eq.s32.totalorder %s14, 1
    %p86 = por %p84, %p85
    %p87 = scmp.ne.s32.totalorder %s78, %s79
    %p88 = scmp.eq.s32.totalorder %s14, 0
    %p89 = por %p87, %p88
    %p90 = scmp.ne.s32.totalorder %s78, %s79
    %p91 = scmp.eq.s32.totalorder %s15, 1
    %p92 = por %p90, %p91
    %p94 = scmp.ne.s32.totalorder %s79, %s93
    %p95 = scmp.eq.s32.totalorder %s15, 0
    %p96 = por %p94, %p95
    %s97 = ssub.s32 %s16, %s28
    %s98 = ssub.s32 %s17, %s24
    %s99 = sor.u32 %s97, %s98
    %p100 = scmp.eq.s32.totalorder %s99, 0
    %s102 = sadd.s32 %s101, 1
    %s103 = scalar_select %p100, %s101, %s102
    %p106 = pneg %p100
    %p107 = scmp.eq.s32.totalorder %s9, 1
    %p108 = por %p106, %p107
    %p109 = scmp.ne.s32.totalorder %s101, %s104
    %p110 = scmp.eq.s32.totalorder %s9, 0
    %p111 = por %p109, %p110
    %p112 = scmp.ne.s32.totalorder %s101, %s104
    %p113 = scmp.eq.s32.totalorder %s14, 1
    %p114 = por %p112, %p113
    %p115 = scmp.ne.s32.totalorder %s104, %s105
    %p116 = scmp.eq.s32.totalorder %s14, 0
    %p117 = por %p115, %p116
    %p118 = scmp.ne.s32.totalorder %s104, %s105
    %p119 = scmp.eq.s32.totalorder %s15, 1
    %p120 = por %p118, %p119
    %p122 = scmp.ne.s32.totalorder %s105, %s121
    %p123 = scmp.eq.s32.totalorder %s15, 0
    %p124 = por %p122, %p123
    %p125 = scmp.le.s32.totalorder 1, %s9
    %p126 = scmp.lt.s32.totalorder %s9, 3
    %p127 = pnand %p125, %p126
    %p128 = pneg %p127
    // Predicated region
    $region9: #{backbone_with_fpn.13} parent=5 // pred_check
      _
    $region10: #{backbone_with_fpn.13} parent=5 // pred_check_branch
      %130 = sbr.rel (%p127) target = $region12
    $region11: #{backbone_with_fpn.13} parent=5 // pred_region
      %s131 = ssub.s32 %s9, 1
      // Predicated region
      $region13: #{backbone_with_fpn.13} parent=11 // pred_check
        %p132 = pneg %p68
      $region14: #{backbone_with_fpn.13} parent=11 // pred_check_branch
        %134 = sbr.rel (%p132) target = $region16
      $region15: #{backbone_with_fpn.13} parent=11 // pred_region
        _
      $region16: #{backbone_with_fpn.13} parent=11 // pred_fallthru
        _
      // Predicated region
      $region17: #{backbone_with_fpn.13} parent=11 // pred_check
        %p135 = pneg %p89
      $region18: #{backbone_with_fpn.13} parent=11 // pred_check_branch
        %137 = sbr.rel (%p135) target = $region20
      $region19: #{backbone_with_fpn.13} parent=11 // pred_region
        _
      $region20: #{backbone_with_fpn.13} parent=11 // pred_fallthru
        _
    $region12: #{backbone_with_fpn.13} parent=5 // pred_fallthru
      _
    %p138 = scmp.lt.s32.totalorder %s9, 2
    // Predicated region
    $region21: #{backbone_with_fpn.13} parent=5 // pred_check
      %p139 = pneg %p138
    $region22: #{backbone_with_fpn.13} parent=5 // pred_check_branch
      %141 = sbr.rel (%p139) target = $region24
    $region23: #{backbone_with_fpn.13} parent=5 // pred_region
      // Predicated region
      $region25: #{backbone_with_fpn.13} parent=23 // pred_check
        %p142 = pneg %p41
      $region26: #{backbone_with_fpn.13} parent=23 // pred_check_branch
        %144 = sbr.rel (%p142) target = $region28
      $region27: #{backbone_with_fpn.13} parent=23 // pred_region
        %p145 = scmp.lt.s32.totalorder %s16, 1
        %s146 = scalar_select %p145, %s16, 1
        %s147 = smul.addr %s146, 6
        %s148 = smul.addr %s147, 8
        %s149 = scalar_lea.vmem %s0, %s148
      $region28: #{backbone_with_fpn.13} parent=23 // pred_fallthru
        _
    $region24: #{backbone_with_fpn.13} parent=5 // pred_fallthru
      _
    %p150 = scmp.le.s32.totalorder 1, %s9
    %p151 = scmp.lt.s32.totalorder %s9, 3
    %p152 = pnand %p150, %p151
    %p153 = pneg %p152
    // Predicated region
    $region29: #{backbone_with_fpn.13} parent=5 // pred_check
      _
    $region30: #{backbone_with_fpn.13} parent=5 // pred_check_branch
      %155 = sbr.rel (%p152) target = $region32
    $region31: #{backbone_with_fpn.13} parent=5 // pred_region
      %s156 = ssub.s32 %s9, 1
      %p157 = scmp.lt.s32.totalorder %s18, 1
      %s158 = scalar_select %p157, %s18, 1
      %s159 = smul.addr %s158, 6
      %s160 = smul.addr %s159, 8
      %s161 = scalar_lea.vmem %s0, %s160
      %p162 = pneg %p47
      %p163 = pneg %p44
      %p164 = pneg %p68
      %p165 = pneg %p65
      %p166 = pneg %p89
      %p167 = pneg %p86
      %p168 = pneg %p117
      %p169 = pneg %p114
      %s170 = smul.u32 4, %s19
      %p171 = scmp.lt.s32.totalorder %s18, 1
      %s172 = scalar_select %p171, %s18, 1
      %p173 = scmp.lt.s32.totalorder %s170, 3
      %s174 = scalar_select %p173, %s170, 3
      %s175 = smul.addr %s172, 4
      %s176 = sadd.s32 %s174, %s175
      %s177 = smul.addr %s176, 4
      %s178 = scalar_lea.vmem %s3, %s177
      %p179 = scmp.lt.s32.totalorder %s18, 1
      %s180 = scalar_select %p179, %s18, 1
      %s181 = smul.addr %s180, 6
      %s182 = smul.addr %s181, 8
      %s183 = scalar_lea.vmem %s0, %s182
      %s184 = smul.u32 4, %s19
      %p185 = scmp.lt.s32.totalorder %s18, 1
      %s186 = scalar_select %p185, %s18, 1
      %p187 = scmp.lt.s32.totalorder %s184, 3
      %s188 = scalar_select %p187, %s184, 3
      %s189 = smul.addr %s186, 4
      %s190 = sadd.s32 %s188, %s189
      %s191 = smul.addr %s190, 4
      %s192 = scalar_lea.vmem %s3, %s191
      %s193 = smul.u32 4, %s19
      %s194 = smul.u32 %s19, 4
      %s195 = smul.u32 %s194, 8
      %s196 = scalar_lea.vmem %s183, %s195
      %v197 = vld [vmem:[%s196] sm:$0x3f]
      %v198 = vld [vmem:[%s196 + $0x8] sm:$0x3f]
      %v199 = vld [vmem:[%s196 + $0x10] sm:$0x3f]
      %v200 = vld [vmem:[%s196 + $0x18] sm:$0x3f]
      %s201 = sadd.s32 %s194, 1
      %s202 = smul.u32 %s201, 8
      %s203 = scalar_lea.vmem %s183, %s202
      %v204 = vld [vmem:[%s203] sm:$0x3f]
      %v205 = vld [vmem:[%s203 + $0x8] sm:$0x3f]
      %v206 = vld [vmem:[%s203 + $0x10] sm:$0x3f]
      %v207 = vld [vmem:[%s203 + $0x18] sm:$0x3f]
      %s208 = sadd.s32 %s194, 2
      %s209 = smul.u32 %s208, 8
      %s210 = scalar_lea.vmem %s183, %s209
      %v211 = vld [vmem:[%s210] sm:$0x3f]
      %v212 = vld [vmem:[%s210 + $0x8] sm:$0x3f]
      %v213 = vld [vmem:[%s210 + $0x10] sm:$0x3f]
      %v214 = vld [vmem:[%s210 + $0x18] sm:$0x3f]
      %v219 = vrot.slane %v197, 1
      %v220 = vrot.slane %v198, 1
      %v221 = vrot.slane %v199, 1
      %v222 = vrot.slane %v200, 1
      %223 = vrot.lane.b32.xlu0 %v219, 16
      %v224 = vpop.permute.xlu0 %223
      %225 = vrot.lane.b32.xlu0 %v220, 16
      %v226 = vpop.permute.xlu0 %225
      %227 = vrot.lane.b32.xlu0 %v221, 16
      %v228 = vpop.permute.xlu0 %227
      %229 = vrot.lane.b32.xlu0 %v222, 16
      %v230 = vpop.permute.xlu0 %229
      %v235 = vrot.slane %v197, 2
      %v236 = vrot.slane %v198, 2
      %v237 = vrot.slane %v199, 2
      %v238 = vrot.slane %v200, 2
      %239 = vrot.lane.b32.xlu0 %v235, 32
      %v240 = vpop.permute.xlu0 %239
      %241 = vrot.lane.b32.xlu0 %v236, 32
      %v242 = vpop.permute.xlu0 %241
      %243 = vrot.lane.b32.xlu0 %v237, 32
      %v244 = vpop.permute.xlu0 %243
      %245 = vrot.lane.b32.xlu0 %v238, 32
      %v246 = vpop.permute.xlu0 %245
      %255 = vrot.lane.b32.xlu0 %v204, 48
      %v256 = vpop.permute.xlu0 %255
      %257 = vrot.lane.b32.xlu0 %v205, 48
      %v258 = vpop.permute.xlu0 %257
      %259 = vrot.lane.b32.xlu0 %v206, 48
      %v260 = vpop.permute.xlu0 %259
      %261 = vrot.lane.b32.xlu0 %v207, 48
      %v262 = vpop.permute.xlu0 %261
      %v267 = vrot.slane %v204, 1
      %v268 = vrot.slane %v205, 1
      %v269 = vrot.slane %v206, 1
      %v270 = vrot.slane %v207, 1
      %271 = vrot.lane.b32.xlu0 %v267, 64
      %v272 = vpop.permute.xlu0 %271
      %273 = vrot.lane.b32.xlu0 %v268, 64
      %v274 = vpop.permute.xlu0 %273
      %275 = vrot.lane.b32.xlu0 %v269, 64
      %v276 = vpop.permute.xlu0 %275
      %277 = vrot.lane.b32.xlu0 %v270, 64
      %v278 = vpop.permute.xlu0 %277
      %v283 = vrot.slane %v204, 2
      %v284 = vrot.slane %v205, 2
      %v285 = vrot.slane %v206, 2
      %v286 = vrot.slane %v207, 2
      %287 = vrot.lane.b32.xlu0 %v283, 80
      %v288 = vpop.permute.xlu0 %287
      %289 = vrot.lane.b32.xlu0 %v284, 80
      %v290 = vpop.permute.xlu0 %289
      %291 = vrot.lane.b32.xlu0 %v285, 80
      %v292 = vpop.permute.xlu0 %291
      %293 = vrot.lane.b32.xlu0 %v286, 80
      %v294 = vpop.permute.xlu0 %293
      %303 = vrot.lane.b32.xlu0 %v211, 96
      %v304 = vpop.permute.xlu0 %303
      %305 = vrot.lane.b32.xlu0 %v212, 96
      %v306 = vpop.permute.xlu0 %305
      %307 = vrot.lane.b32.xlu0 %v213, 96
      %v308 = vpop.permute.xlu0 %307
      %309 = vrot.lane.b32.xlu0 %v214, 96
      %v310 = vpop.permute.xlu0 %309
      %v315 = vrot.slane %v211, 1
      %v316 = vrot.slane %v212, 1
      %v317 = vrot.slane %v213, 1
      %v318 = vrot.slane %v214, 1
      %319 = vrot.lane.b32.xlu0 %v315, 112
      %v320 = vpop.permute.xlu0 %319
      %321 = vrot.lane.b32.xlu0 %v316, 112
      %v322 = vpop.permute.xlu0 %321
      %323 = vrot.lane.b32.xlu0 %v317, 112
      %v324 = vpop.permute.xlu0 %323
      %325 = vrot.lane.b32.xlu0 %v318, 112
      %v326 = vpop.permute.xlu0 %325
      %v331 = vrot.slane %v211, 2
      %v332 = vrot.slane %v212, 2
      %v333 = vrot.slane %v213, 2
      %v334 = vrot.slane %v214, 2
      %vm335 = vcmask 130048
      %v336 = vsel %vm335, %v197, %v224
      %v337 = vsel %vm335, %v198, %v226
      %v338 = vsel %vm335, %v199, %v228
      %v339 = vsel %vm335, %v200, %v230
      %vm340 = vcmask 261120
      %v341 = vsel %vm340, %v336, %v240
      %v342 = vsel %vm340, %v337, %v242
      %v343 = vsel %vm340, %v338, %v244
      %v344 = vsel %vm340, %v339, %v246
      %vm345 = vcmask 392192
      %v346 = vsel %vm345, %v341, %v256
      %v347 = vsel %vm345, %v342, %v258
      %v348 = vsel %vm345, %v343, %v260
      %v349 = vsel %vm345, %v344, %v262
      %vm350 = vcmask 523264
      %v351 = vsel %vm350, %v346, %v272
      %v352 = vsel %vm350, %v347, %v274
      %v353 = vsel %vm350, %v348, %v276
      %v354 = vsel %vm350, %v349, %v278
      %vm355 = vcmask 654336
      %v356 = vsel %vm355, %v351, %v288
      %v357 = vsel %vm355, %v352, %v290
      %v358 = vsel %vm355, %v353, %v292
      %v359 = vsel %vm355, %v354, %v294
      %vm360 = vcmask 785408
      %v361 = vsel %vm360, %v356, %v304
      %v362 = vsel %vm360, %v357, %v306
      %v363 = vsel %vm360, %v358, %v308
      %v364 = vsel %vm360, %v359, %v310
      %vm365 = vcmask 916480
      %v366 = vsel %vm365, %v361, %v320
      %v367 = vsel %vm365, %v362, %v322
      %v368 = vsel %vm365, %v363, %v324
      %v369 = vsel %vm365, %v364, %v326
      %v374 = vrot.slane %v331, 4
      %v375 = vrot.slane %v332, 4
      %v376 = vrot.slane %v333, 4
      %v377 = vrot.slane %v334, 4
      %vm378 = vcmask 1043456
      %v379 = vsel %vm378, %v366, %v374
      %v380 = vsel %vm378, %v367, %v375
      %v381 = vsel %vm378, %v368, %v376
      %v382 = vsel %vm378, %v369, %v377
      %v383 = vld [vmem:[%s1] sm:$0xff]
      %v384 = vld [vmem:[%s1 + $0x8] sm:$0xff]
      %v385 = vld [vmem:[%s1 + $0x10] sm:$0xff]
      %v386 = vld [vmem:[%s1 + $0x18] sm:$0xff]
      %v387 = vld [vmem:[%s1 + $0x20] sm:$0xff]
      %v388 = vld [vmem:[%s1 + $0x28] sm:$0xff]
      %v389 = vld [vmem:[%s1 + $0x30] sm:$0xff]
      %v390 = vld [vmem:[%s1 + $0x38] sm:$0xff]
      %v391 = vld [vmem:[%s1 + $0x40] sm:$0xff]
      %v392 = vld [vmem:[%s1 + $0x48] sm:$0xff]
      %v393 = vld [vmem:[%s1 + $0x50] sm:$0xff]
      %v394 = vld [vmem:[%s1 + $0x58] sm:$0xff]
      %v395 = vld [vmem:[%s1 + $0x60] sm:$0xff]
      %v396 = vld [vmem:[%s1 + $0x68] sm:$0xff]
      %v397 = vld [vmem:[%s1 + $0x70] sm:$0xff]
      %v398 = vld [vmem:[%s1 + $0x78] sm:$0xff]
      %v399 = vld [vmem:[%s1 + $0x80] sm:$0xff]
      %v400 = vld [vmem:[%s1 + $0x88] sm:$0xff]
      %v401 = vld [vmem:[%s2] sm:$0x1]
      %v403 = vperm.slane %v401, 0
      %405 = vst [vmem:[#allocation1] ss:$2 sm:$0xff] %v379
      %s406 = scalar_lea.vmem [#allocation1], 1
      %407 = vst [vmem:[%s406] ss:$2 sm:$0xff] %v380
      %s408 = scalar_lea.vmem [#allocation1], 16
      %409 = vst [vmem:[%s408] ss:$2 sm:$0xff] %v381
      %s410 = scalar_lea.vmem [#allocation1], 17
      %411 = vst [vmem:[%s410] ss:$2 sm:$0xff] %v382
      %v412 = vld.sshfl [vmem:[#allocation1] sm:$0xff pattern:$0x75316420]
      %v413 = vld.sshfl [vmem:[#allocation1 + $0x8] sm:$0xff pattern:$0x75316420]
      %v414 = vld.sshfl [vmem:[#allocation1 + $0x10] sm:$0xff pattern:$0x75316420]
      %v415 = vld.sshfl [vmem:[#allocation1 + $0x18] sm:$0xff pattern:$0x75316420]
      %v418 = vsel %vm335, %v413, 0
      %v420 = vsel %vm335, %v415, 0
      %422 = vmatpush.msra.mxu0 %v398
      %423 = vmatpush.msra.mxu0 %v397
      %424 = vmatpush.msra.mxu0 %v396
      %425 = vmatpush.msra.mxu0 %v395
      %426 = vmatpush.msra.mxu0 %v394
      %427 = vmatpush.msra.mxu0 %v393
      %428 = vmatpush.msra.mxu0 %v392
      %429 = vmatpush.msra.mxu0 %v391
      %430 = vmatpush.msra.mxu0 %v390
      %431 = vmatpush.msra.mxu0 %v389
      %432 = vmatpush.msra.mxu0 %v388
      %433 = vmatpush.msra.mxu0 %v387
      %434 = vmatpush.msra.mxu0 %v386
      %435 = vmatpush.msra.mxu0 %v385
      %436 = vmatpush.msra.mxu0 %v384
      %437 = vmatpush.msra.mxu0 %v383
      %438 = vmatmul.f32.gmra.mxu0 %v412
      %v439 = vpop.f32.mrf.mxu0
      %v440 = vadd.f32 %v403, %v439
      %441 = vmatmul.f32.gmra.mxu0 %v414
      %v442 = vpop.f32.mrf.mxu0
      %v443 = vadd.f32 %v403, %v442
      %444 = vdwg.mxu0
      %445 = vmatpush.msra.mxu0 0.0
      %446 = vmatpush.msra.mxu0 0.0
      %447 = vmatpush.msra.mxu0 0.0
      %448 = vmatpush.msra.mxu0 0.0
      %449 = vmatpush.msra.mxu0 0.0
      %450 = vmatpush.msra.mxu0 0.0
      %451 = vmatpush.msra.mxu0 0.0
      %452 = vmatpush.msra.mxu0 0.0
      %453 = vmatpush.msra.mxu0 0.0
      %454 = vmatpush.msra.mxu0 0.0
      %455 = vmatpush.msra.mxu0 0.0
      %456 = vmatpush.msra.mxu0 0.0
      %457 = vmatpush.msra.mxu0 0.0
      %458 = vmatpush.msra.mxu0 0.0
      %459 = vmatpush.msra.mxu0 %v400
      %460 = vmatpush.msra.mxu0 %v399
      %461 = vmatmul.f32.gmra.mxu0 %v418
      %v462 = vpop.f32.mrf.mxu0
      %v463 = vadd.f32 %v440, %v462
      %464 = vmatmul.f32.gmra.mxu0 %v420
      %v465 = vpop.f32.mrf.mxu0
      %v466 = vadd.f32 %v443, %v465
      %467 = vdwg.mxu0
      %v470 = vrot.slane %v463, 4
      %v471 = vrot.slane %v466, 4
      %vm474 = vcmask 125952
      %475 = vst.msk [vmem:[%s192] sm:$0xf] %vm474, %v463
      %476 = vst.msk [vmem:[%s192 + $0x4] sm:$0xf] %vm474, %v470
      %477 = vst.msk [vmem:[%s192 + $0x8] sm:$0xf] %vm474, %v466
      %478 = vst.msk [vmem:[%s192 + $0xc] sm:$0xf] %vm474, %v471
      %s479 = smul.u32 4, %s19
      %p480 = scmp.lt.s32.totalorder %s18, 1
      %s481 = scalar_select %p480, %s18, 1
      %p482 = scmp.lt.s32.totalorder %s479, 3
      %s483 = scalar_select %p482, %s479, 3
      %s484 = smul.addr %s481, 4
      %s485 = sadd.s32 %s483, %s484
      %s486 = smul.addr %s485, 4
      %s487 = scalar_lea.vmem %s3, %s486
      // Predicated region
      $region33: #{backbone_with_fpn.13} parent=31 // pred_check
        %p488 = pneg %p114
      $region34: #{backbone_with_fpn.13} parent=31 // pred_check_branch
        %490 = sbr.rel (%p488) target = $region36
      $region35: #{backbone_with_fpn.13} parent=31 // pred_region
        %s491 = smul.u32 4, %s19
      $region36: #{backbone_with_fpn.13} parent=31 // pred_fallthru
        _
    $region32: #{backbone_with_fpn.13} parent=5 // pred_fallthru
      _
    %p492 = scmp.le.s32.totalorder 2, %s9
    // Predicated region
    $region37: #{backbone_with_fpn.13} parent=5 // pred_check
      %p493 = pneg %p492
    $region38: #{backbone_with_fpn.13} parent=5 // pred_check_branch
      %495 = sbr.rel (%p493) target = $region40
    $region39: #{backbone_with_fpn.13} parent=5 // pred_region
      %s496 = ssub.s32 %s9, 2
      // Predicated region
      $region41: #{backbone_with_fpn.13} parent=39 // pred_check
        %p497 = pneg %p120
      $region42: #{backbone_with_fpn.13} parent=39 // pred_check_branch
        %499 = sbr.rel (%p497) target = $region44
      $region43: #{backbone_with_fpn.13} parent=39 // pred_region
        %s500 = smul.u32 4, %s21
        %p501 = scmp.lt.s32.totalorder %s20, 1
        %s502 = scalar_select %p501, %s20, 1
        %p503 = scmp.lt.s32.totalorder %s500, 3
        %s504 = scalar_select %p503, %s500, 3
        %s505 = smul.addr %s502, 4
        %s506 = sadd.s32 %s504, %s505
        %s507 = smul.addr %s506, 4
        %s508 = scalar_lea.vmem %s3, %s507
      $region44: #{backbone_with_fpn.13} parent=39 // pred_fallthru
        _
    $region40: #{backbone_with_fpn.13} parent=5 // pred_fallthru
      _
  $region6: #{backbone_with_fpn.13} parent=0 // loop_footer
    %s13 = sadd.s32 1, %s9
  $region7: #{backbone_with_fpn.13} parent=0 // loop_footer_branch
    %8 = sbr.rel target = $region3
  $region8: #{backbone_with_fpn.13} parent=0 // loop_exit
    _

// kernel: backbone_with_fpn.17
$region0: #{backbone_with_fpn.17}
  #allocation0 [shape = 'u32[]', space=smem, size = 0x4, offset = 0x4, fixed_abs, tag = 'smem constant byte address 0x4 - core index']
  #allocation1 [shape = 'u32[72,128]{1,0:T(1,128)}', space=vmem, size = 0x9000, scoped, tag = 'internal scratch']
  %s0 = inlined_call_operand.vmem [shape: f32[2,18,18,16], index: 0, kind: input, shape index: {}]
  %s1 = inlined_call_operand.vmem [shape: f32[144,16], index: 1, kind: input, shape index: {}]
  %s2 = inlined_call_operand.vmem [shape: f32[1,16], index: 2, kind: input, shape index: {}]
  %s3 = inlined_call_operand.vmem [shape: f32[2,16,16,16], index: 3, kind: output, shape index: {}]
  %s4 = sld [smem:[#allocation0]]
  $region45: #{backbone_with_fpn.17} parent=0
    _
  %s6 = ssub.s32 1, %s4
  %s7 = scalar_select 0, %s6, %s4
  loop: start=0, step=1, limit=4
  $region2: #{backbone_with_fpn.17} parent=0 // loop_pre_header
    _
  $region3: #{backbone_with_fpn.17} parent=0 // loop_header
    %s9 = sphi 0, %s13
    %p10 = scmp.ge.s32.totalorder %s9, 4
    %s16 = sphi 0, %s28
    %s17 = sphi 0, %s24
    %s18 = sphi 0, %s16
    %s19 = sphi 0, %s17
    %s20 = sphi 0, %s18
    %s21 = sphi 0, %s19
    %s31 = sphi 0, %s33
    %s34 = sphi 0, %s31
    %s35 = sphi 0, %s34
    %s51 = sphi 0, %s35
    %s55 = sphi 0, %s55
    %s57 = sphi 0, %s55
    %s58 = sphi 0, %s57
    %s72 = sphi 0, %s58
    %s76 = sphi 0, %s76
    %s78 = sphi 0, %s76
    %s79 = sphi 0, %s78
    %s93 = sphi 0, %s79
    %s101 = sphi 0, %s103
    %s104 = sphi 0, %s101
    %s105 = sphi 0, %s104
    %s121 = sphi 0, %s105
  $region4: #{backbone_with_fpn.17} parent=0 // loop_header_branch
    %12 = sbr.rel (%p10) target = $region8
  $region5: #{backbone_with_fpn.17} parent=0 // loop_body
    %s14 = ssub.s32 %s9, 1
    %s15 = ssub.s32 %s9, 2
    %s22 = sadd.s32 1, %s17
    %p23 = scmp.ge.s32.totalorder %s22, 1
    %s24 = scalar_select %p23, 0, %s22
    %s25 = sadd.s32 1, %s16
    %s26 = scalar_select %p23, %s25, %s16
    %p27 = scmp.ge.s32.totalorder %s26, 2
    %s28 = scalar_select %p27, 0, %s26
    %s29 = ssub.s32 %s16, %s28
    %p30 = scmp.eq.s32.totalorder %s29, 0
    %s32 = sadd.s32 %s31, 1
    %s33 = scalar_select %p30, %s31, %s32
    %p36 = pneg %p30
    %p37 = scmp.eq.s32.totalorder %s9, 1
    %p38 = por %p36, %p37
    %p39 = scmp.ne.s32.totalorder %s31, %s34
    %p40 = scmp.eq.s32.totalorder %s9, 0
    %p41 = por %p39, %p40
    %p42 = scmp.ne.s32.totalorder %s31, %s34
    %p43 = scmp.eq.s32.totalorder %s14, 1
    %p44 = por %p42, %p43
    %p45 = scmp.ne.s32.totalorder %s34, %s35
    %p46 = scmp.eq.s32.totalorder %s14, 0
    %p47 = por %p45, %p46
    %p48 = scmp.ne.s32.totalorder %s34, %s35
    %p49 = scmp.eq.s32.totalorder %s15, 1
    %p50 = por %p48, %p49
    %p52 = scmp.ne.s32.totalorder %s35, %s51
    %p53 = scmp.eq.s32.totalorder %s15, 0
    %p54 = por %p52, %p53
    %s56 = sadd.s32 %s55, 1
    %p59 = scmp.eq.s32.totalorder %s9, 1
    %p60 = scmp.ne.s32.totalorder %s55, %s57
    %p61 = scmp.eq.s32.totalorder %s9, 0
    %p62 = por %p60, %p61
    %p63 = scmp.ne.s32.totalorder %s55, %s57
    %p64 = scmp.eq.s32.totalorder %s14, 1
    %p65 = por %p63, %p64
    %p66 = scmp.ne.s32.totalorder %s57, %s58
    %p67 = scmp.eq.s32.totalorder %s14, 0
    %p68 = por %p66, %p67
    %p69 = scmp.ne.s32.totalorder %s57, %s58
    %p70 = scmp.eq.s32.totalorder %s15, 1
    %p71 = por %p69, %p70
    %p73 = scmp.ne.s32.totalorder %s58, %s72
    %p74 = scmp.eq.s32.totalorder %s15, 0
    %p75 = por %p73, %p74
    %s77 = sadd.s32 %s76, 1
    %p80 = scmp.eq.s32.totalorder %s9, 1
    %p81 = scmp.ne.s32.totalorder %s76, %s78
    %p82 = scmp.eq.s32.totalorder %s9, 0
    %p83 = por %p81, %p82
    %p84 = scmp.ne.s32.totalorder %s76, %s78
    %p85 = scmp.eq.s32.totalorder %s14, 1
    %p86 = por %p84, %p85
    %p87 = scmp.ne.s32.totalorder %s78, %s79
    %p88 = scmp.eq.s32.totalorder %s14, 0
    %p89 = por %p87, %p88
    %p90 = scmp.ne.s32.totalorder %s78, %s79
    %p91 = scmp.eq.s32.totalorder %s15, 1
    %p92 = por %p90, %p91
    %p94 = scmp.ne.s32.totalorder %s79, %s93
    %p95 = scmp.eq.s32.totalorder %s15, 0
    %p96 = por %p94, %p95
    %s97 = ssub.s32 %s16, %s28
    %s98 = ssub.s32 %s17, %s24
    %s99 = sor.u32 %s97, %s98
    %p100 = scmp.eq.s32.totalorder %s99, 0
    %s102 = sadd.s32 %s101, 1
    %s103 = scalar_select %p100, %s101, %s102
    %p106 = pneg %p100
    %p107 = scmp.eq.s32.totalorder %s9, 1
    %p108 = por %p106, %p107
    %p109 = scmp.ne.s32.totalorder %s101, %s104
    %p110 = scmp.eq.s32.totalorder %s9, 0
    %p111 = por %p109, %p110
    %p112 = scmp.ne.s32.totalorder %s101, %s104
    %p113 = scmp.eq.s32.totalorder %s14, 1
    %p114 = por %p112, %p113
    %p115 = scmp.ne.s32.totalorder %s104, %s105
    %p116 = scmp.eq.s32.totalorder %s14, 0
    %p117 = por %p115, %p116
    %p118 = scmp.ne.s32.totalorder %s104, %s105
    %p119 = scmp.eq.s32.totalorder %s15, 1
    %p120 = por %p118, %p119
    %p122 = scmp.ne.s32.totalorder %s105, %s121
    %p123 = scmp.eq.s32.totalorder %s15, 0
    %p124 = por %p122, %p123
    %p125 = scmp.le.s32.totalorder 1, %s9
    %p126 = scmp.lt.s32.totalorder %s9, 3
    %p127 = pnand %p125, %p126
    %p128 = pneg %p127
    // Predicated region
    $region9: #{backbone_with_fpn.17} parent=5 // pred_check
      _
    $region10: #{backbone_with_fpn.17} parent=5 // pred_check_branch
      %130 = sbr.rel (%p127) target = $region12
    $region11: #{backbone_with_fpn.17} parent=5 // pred_region
      %s131 = ssub.s32 %s9, 1
      // Predicated region
      $region13: #{backbone_with_fpn.17} parent=11 // pred_check
        %p132 = pneg %p68
      $region14: #{backbone_with_fpn.17} parent=11 // pred_check_branch
        %134 = sbr.rel (%p132) target = $region16
      $region15: #{backbone_with_fpn.17} parent=11 // pred_region
        _
      $region16: #{backbone_with_fpn.17} parent=11 // pred_fallthru
        _
      // Predicated region
      $region17: #{backbone_with_fpn.17} parent=11 // pred_check
        %p135 = pneg %p89
      $region18: #{backbone_with_fpn.17} parent=11 // pred_check_branch
        %137 = sbr.rel (%p135) target = $region20
      $region19: #{backbone_with_fpn.17} parent=11 // pred_region
        _
      $region20: #{backbone_with_fpn.17} parent=11 // pred_fallthru
        _
    $region12: #{backbone_with_fpn.17} parent=5 // pred_fallthru
      _
    %p138 = scmp.lt.s32.totalorder %s9, 2
    // Predicated region
    $region21: #{backbone_with_fpn.17} parent=5 // pred_check
      %p139 = pneg %p138
    $region22: #{backbone_with_fpn.17} parent=5 // pred_check_branch
      %141 = sbr.rel (%p139) target = $region24
    $region23: #{backbone_with_fpn.17} parent=5 // pred_region
      // Predicated region
      $region25: #{backbone_with_fpn.17} parent=23 // pred_check
        %p142 = pneg %p41
      $region26: #{backbone_with_fpn.17} parent=23 // pred_check_branch
        %144 = sbr.rel (%p142) target = $region28
      $region27: #{backbone_with_fpn.17} parent=23 // pred_region
        %p145 = scmp.lt.s32.totalorder %s16, 1
        %s146 = scalar_select %p145, %s16, 1
        %s147 = smul.addr %s146, 54
        %s148 = smul.addr %s147, 8
        %s149 = scalar_lea.vmem %s0, %s148
      $region28: #{backbone_with_fpn.17} parent=23 // pred_fallthru
        _
    $region24: #{backbone_with_fpn.17} parent=5 // pred_fallthru
      _
    %p150 = scmp.le.s32.totalorder 1, %s9
    %p151 = scmp.lt.s32.totalorder %s9, 3
    %p152 = pnand %p150, %p151
    %p153 = pneg %p152
    // Predicated region
    $region29: #{backbone_with_fpn.17} parent=5 // pred_check
      _
    $region30: #{backbone_with_fpn.17} parent=5 // pred_check_branch
      %155 = sbr.rel (%p152) target = $region32
    $region31: #{backbone_with_fpn.17} parent=5 // pred_region
      %s156 = ssub.s32 %s9, 1
      %p157 = scmp.lt.s32.totalorder %s18, 1
      %s158 = scalar_select %p157, %s18, 1
      %s159 = smul.addr %s158, 54
      %s160 = smul.addr %s159, 8
      %s161 = scalar_lea.vmem %s0, %s160
      %p162 = pneg %p47
      %p163 = pneg %p44
      %p164 = pneg %p68
      %p165 = pneg %p65
      %p166 = pneg %p89
      %p167 = pneg %p86
      %p168 = pneg %p117
      %p169 = pneg %p114
      %s170 = smul.u32 16, %s19
      %p171 = scmp.lt.s32.totalorder %s18, 1
      %s172 = scalar_select %p171, %s18, 1
      %p173 = scmp.lt.s32.totalorder %s170, 15
      %s174 = scalar_select %p173, %s170, 15
      %s175 = smul.addr %s174, 2
      %s176 = smul.addr %s172, 32
      %s177 = sadd.s32 %s175, %s176
      %s178 = smul.addr %s177, 8
      %s179 = scalar_lea.vmem %s3, %s178
      %p180 = scmp.lt.s32.totalorder %s18, 1
      %s181 = scalar_select %p180, %s18, 1
      %s182 = smul.addr %s181, 54
      %s183 = smul.addr %s182, 8
      %s184 = scalar_lea.vmem %s0, %s183
      %s185 = smul.u32 16, %s19
      %p186 = scmp.lt.s32.totalorder %s18, 1
      %s187 = scalar_select %p186, %s18, 1
      %p188 = scmp.lt.s32.totalorder %s185, 15
      %s189 = scalar_select %p188, %s185, 15
      %s190 = smul.addr %s189, 2
      %s191 = smul.addr %s187, 32
      %s192 = sadd.s32 %s190, %s191
      %s193 = smul.addr %s192, 8
      %s194 = scalar_lea.vmem %s3, %s193
      %s195 = smul.u32 16, %s19
      %s196 = smul.u32 %s19, 16
      %s197 = smul.u32 %s196, 24
      %s198 = scalar_lea.vmem %s184, %s197
      %v199 = vld [vmem:[%s198] sm:$0xff]
      %v200 = vld [vmem:[%s198 + $0x8] sm:$0xff]
      %v201 = vld [vmem:[%s198 + $0x10] sm:$0x3]
      %v202 = vld [vmem:[%s198 + $0x18] sm:$0xff]
      %v203 = vld [vmem:[%s198 + $0x20] sm:$0xff]
      %v204 = vld [vmem:[%s198 + $0x28] sm:$0x3]
      %v205 = vld [vmem:[%s198 + $0x30] sm:$0xff]
      %v206 = vld [vmem:[%s198 + $0x38] sm:$0xff]
      %v207 = vld [vmem:[%s198 + $0x40] sm:$0x3]
      %v208 = vld [vmem:[%s198 + $0x48] sm:$0xff]
      %v209 = vld [vmem:[%s198 + $0x50] sm:$0xff]
      %v210 = vld [vmem:[%s198 + $0x58] sm:$0x3]
      %v211 = vld [vmem:[%s198 + $0x60] sm:$0xff]
      %v212 = vld [vmem:[%s198 + $0x68] sm:$0xff]
      %v213 = vld [vmem:[%s198 + $0x70] sm:$0x3]
      %v214 = vld [vmem:[%s198 + $0x78] sm:$0xff]
      %v215 = vld [vmem:[%s198 + $0x80] sm:$0xff]
      %v216 = vld [vmem:[%s198 + $0x88] sm:$0x3]
      %v217 = vld [vmem:[%s198 + $0x90] sm:$0xff]
      %v218 = vld [vmem:[%s198 + $0x98] sm:$0xff]
      %v219 = vld [vmem:[%s198 + $0xa0] sm:$0x3]
      %v220 = vld [vmem:[%s198 + $0xa8] sm:$0xff]
      %v221 = vld [vmem:[%s198 + $0xb0] sm:$0xff]
      %v222 = vld [vmem:[%s198 + $0xb8] sm:$0x3]
      %v223 = vld [vmem:[%s198 + $0xc0] sm:$0xff]
      %v224 = vld [vmem:[%s198 + $0xc8] sm:$0xff]
      %v225 = vld [vmem:[%s198 + $0xd0] sm:$0x3]
      %v226 = vld [vmem:[%s198 + $0xd8] sm:$0xff]
      %v227 = vld [vmem:[%s198 + $0xe0] sm:$0xff]
      %v228 = vld [vmem:[%s198 + $0xe8] sm:$0x3]
      %v229 = vld [vmem:[%s198 + $0xf0] sm:$0xff]
      %v230 = vld [vmem:[%s198 + $0xf8] sm:$0xff]
      %v231 = vld [vmem:[%s198 + $0x100] sm:$0x3]
      %v232 = vld [vmem:[%s198 + $0x108] sm:$0xff]
      %v233 = vld [vmem:[%s198 + $0x110] sm:$0xff]
      %v234 = vld [vmem:[%s198 + $0x118] sm:$0x3]
      %v235 = vld [vmem:[%s198 + $0x120] sm:$0xff]
      %v236 = vld [vmem:[%s198 + $0x128] sm:$0xff]
      %v237 = vld [vmem:[%s198 + $0x130] sm:$0x3]
      %v238 = vld [vmem:[%s198 + $0x138] sm:$0xff]
      %v239 = vld [vmem:[%s198 + $0x140] sm:$0xff]
      %v240 = vld [vmem:[%s198 + $0x148] sm:$0x3]
      %v241 = vld [vmem:[%s198 + $0x150] sm:$0xff]
      %v242 = vld [vmem:[%s198 + $0x158] sm:$0xff]
      %v243 = vld [vmem:[%s198 + $0x160] sm:$0x3]
      %v244 = vld [vmem:[%s198 + $0x168] sm:$0xff]
      %v245 = vld [vmem:[%s198 + $0x170] sm:$0xff]
      %v246 = vld [vmem:[%s198 + $0x178] sm:$0x3]
      %s247 = sadd.s32 %s196, 1
      %s248 = smul.u32 %s247, 24
      %s249 = scalar_lea.vmem %s184, %s248
      %v250 = vld [vmem:[%s249] sm:$0xff]
      %v251 = vld [vmem:[%s249 + $0x8] sm:$0xff]
      %v252 = vld [vmem:[%s249 + $0x10] sm:$0x3]
      %v253 = vld [vmem:[%s249 + $0x18] sm:$0xff]
      %v254 = vld [vmem:[%s249 + $0x20] sm:$0xff]
      %v255 = vld [vmem:[%s249 + $0x28] sm:$0x3]
      %v256 = vld [vmem:[%s249 + $0x30] sm:$0xff]
      %v257 = vld [vmem:[%s249 + $0x38] sm:$0xff]
      %v258 = vld [vmem:[%s249 + $0x40] sm:$0x3]
      %v259 = vld [vmem:[%s249 + $0x48] sm:$0xff]
      %v260 = vld [vmem:[%s249 + $0x50] sm:$0xff]
      %v261 = vld [vmem:[%s249 + $0x58] sm:$0x3]
      %v262 = vld [vmem:[%s249 + $0x60] sm:$0xff]
      %v263 = vld [vmem:[%s249 + $0x68] sm:$0xff]
      %v264 = vld [vmem:[%s249 + $0x70] sm:$0x3]
      %v265 = vld [vmem:[%s249 + $0x78] sm:$0xff]
      %v266 = vld [vmem:[%s249 + $0x80] sm:$0xff]
      %v267 = vld [vmem:[%s249 + $0x88] sm:$0x3]
      %v268 = vld [vmem:[%s249 + $0x90] sm:$0xff]
      %v269 = vld [vmem:[%s249 + $0x98] sm:$0xff]
      %v270 = vld [vmem:[%s249 + $0xa0] sm:$0x3]
      %v271 = vld [vmem:[%s249 + $0xa8] sm:$0xff]
      %v272 = vld [vmem:[%s249 + $0xb0] sm:$0xff]
      %v273 = vld [vmem:[%s249 + $0xb8] sm:$0x3]
      %v274 = vld [vmem:[%s249 + $0xc0] sm:$0xff]
      %v275 = vld [vmem:[%s249 + $0xc8] sm:$0xff]
      %v276 = vld [vmem:[%s249 + $0xd0] sm:$0x3]
      %v277 = vld [vmem:[%s249 + $0xd8] sm:$0xff]
      %v278 = vld [vmem:[%s249 + $0xe0] sm:$0xff]
      %v279 = vld [vmem:[%s249 + $0xe8] sm:$0x3]
      %v280 = vld [vmem:[%s249 + $0xf0] sm:$0xff]
      %v281 = vld [vmem:[%s249 + $0xf8] sm:$0xff]
      %v282 = vld [vmem:[%s249 + $0x100] sm:$0x3]
      %v283 = vld [vmem:[%s249 + $0x108] sm:$0xff]
      %v284 = vld [vmem:[%s249 + $0x110] sm:$0xff]
      %v285 = vld [vmem:[%s249 + $0x118] sm:$0x3]
      %v286 = vld [vmem:[%s249 + $0x120] sm:$0xff]
      %v287 = vld [vmem:[%s249 + $0x128] sm:$0xff]
      %v288 = vld [vmem:[%s249 + $0x130] sm:$0x3]
      %v289 = vld [vmem:[%s249 + $0x138] sm:$0xff]
      %v290 = vld [vmem:[%s249 + $0x140] sm:$0xff]
      %v291 = vld [vmem:[%s249 + $0x148] sm:$0x3]
      %v292 = vld [vmem:[%s249 + $0x150] sm:$0xff]
      %v293 = vld [vmem:[%s249 + $0x158] sm:$0xff]
      %v294 = vld [vmem:[%s249 + $0x160] sm:$0x3]
      %v295 = vld [vmem:[%s249 + $0x168] sm:$0xff]
      %v296 = vld [vmem:[%s249 + $0x170] sm:$0xff]
      %v297 = vld [vmem:[%s249 + $0x178] sm:$0x3]
      %s298 = sadd.s32 %s196, 2
      %s299 = smul.u32 %s298, 24
      %s300 = scalar_lea.vmem %s184, %s299
      %v301 = vld [vmem:[%s300] sm:$0xff]
      %v302 = vld [vmem:[%s300 + $0x8] sm:$0xff]
      %v303 = vld [vmem:[%s300 + $0x10] sm:$0x3]
      %v304 = vld [vmem:[%s300 + $0x18] sm:$0xff]
      %v305 = vld [vmem:[%s300 + $0x20] sm:$0xff]
      %v306 = vld [vmem:[%s300 + $0x28] sm:$0x3]
      %v307 = vld [vmem:[%s300 + $0x30] sm:$0xff]
      %v308 = vld [vmem:[%s300 + $0x38] sm:$0xff]
      %v309 = vld [vmem:[%s300 + $0x40] sm:$0x3]
      %v310 = vld [vmem:[%s300 + $0x48] sm:$0xff]
      %v311 = vld [vmem:[%s300 + $0x50] sm:$0xff]
      %v312 = vld [vmem:[%s300 + $0x58] sm:$0x3]
      %v313 = vld [vmem:[%s300 + $0x60] sm:$0xff]
      %v314 = vld [vmem:[%s300 + $0x68] sm:$0xff]
      %v315 = vld [vmem:[%s300 + $0x70] sm:$0x3]
      %v316 = vld [vmem:[%s300 + $0x78] sm:$0xff]
      %v317 = vld [vmem:[%s300 + $0x80] sm:$0xff]
      %v318 = vld [vmem:[%s300 + $0x88] sm:$0x3]
      %v319 = vld [vmem:[%s300 + $0x90] sm:$0xff]
      %v320 = vld [vmem:[%s300 + $0x98] sm:$0xff]
      %v321 = vld [vmem:[%s300 + $0xa0] sm:$0x3]
      %v322 = vld [vmem:[%s300 + $0xa8] sm:$0xff]
      %v323 = vld [vmem:[%s300 + $0xb0] sm:$0xff]
      %v324 = vld [vmem:[%s300 + $0xb8] sm:$0x3]
      %v325 = vld [vmem:[%s300 + $0xc0] sm:$0xff]
      %v326 = vld [vmem:[%s300 + $0xc8] sm:$0xff]
      %v327 = vld [vmem:[%s300 + $0xd0] sm:$0x3]
      %v328 = vld [vmem:[%s300 + $0xd8] sm:$0xff]
      %v329 = vld [vmem:[%s300 + $0xe0] sm:$0xff]
      %v330 = vld [vmem:[%s300 + $0xe8] sm:$0x3]
      %v331 = vld [vmem:[%s300 + $0xf0] sm:$0xff]
      %v332 = vld [vmem:[%s300 + $0xf8] sm:$0xff]
      %v333 = vld [vmem:[%s300 + $0x100] sm:$0x3]
      %v334 = vld [vmem:[%s300 + $0x108] sm:$0xff]
      %v335 = vld [vmem:[%s300 + $0x110] sm:$0xff]
      %v336 = vld [vmem:[%s300 + $0x118] sm:$0x3]
      %v337 = vld [vmem:[%s300 + $0x120] sm:$0xff]
      %v338 = vld [vmem:[%s300 + $0x128] sm:$0xff]
      %v339 = vld [vmem:[%s300 + $0x130] sm:$0x3]
      %v340 = vld [vmem:[%s300 + $0x138] sm:$0xff]
      %v341 = vld [vmem:[%s300 + $0x140] sm:$0xff]
      %v342 = vld [vmem:[%s300 + $0x148] sm:$0x3]
      %v343 = vld [vmem:[%s300 + $0x150] sm:$0xff]
      %v344 = vld [vmem:[%s300 + $0x158] sm:$0xff]
      %v345 = vld [vmem:[%s300 + $0x160] sm:$0x3]
      %v346 = vld [vmem:[%s300 + $0x168] sm:$0xff]
      %v347 = vld [vmem:[%s300 + $0x170] sm:$0xff]
      %v348 = vld [vmem:[%s300 + $0x178] sm:$0x3]
      %vm397 = vcmask 1046528
      %v398 = vrot.slane %v199, 1
      %v399 = vrot.slane %v200, 1
      %v400 = vsel %vm397, %v398, %v399
      %v401 = vrot.slane %v201, 1
      %v402 = vsel %vm397, %v399, %v401
      %v403 = vrot.slane %v202, 1
      %v404 = vrot.slane %v203, 1
      %v405 = vsel %vm397, %v403, %v404
      %v406 = vrot.slane %v204, 1
      %v407 = vsel %vm397, %v404, %v406
      %v408 = vrot.slane %v205, 1
      %v409 = vrot.slane %v206, 1
      %v410 = vsel %vm397, %v408, %v409
      %v411 = vrot.slane %v207, 1
      %v412 = vsel %vm397, %v409, %v411
      %v413 = vrot.slane %v208, 1
      %v414 = vrot.slane %v209, 1
      %v415 = vsel %vm397, %v413, %v414
      %v416 = vrot.slane %v210, 1
      %v417 = vsel %vm397, %v414, %v416
      %v418 = vrot.slane %v211, 1
      %v419 = vrot.slane %v212, 1
      %v420 = vsel %vm397, %v418, %v419
      %v421 = vrot.slane %v213, 1
      %v422 = vsel %vm397, %v419, %v421
      %v423 = vrot.slane %v214, 1
      %v424 = vrot.slane %v215, 1
      %v425 = vsel %vm397, %v423, %v424
      %v426 = vrot.slane %v216, 1
      %v427 = vsel %vm397, %v424, %v426
      %v428 = vrot.slane %v217, 1
      %v429 = vrot.slane %v218, 1
      %v430 = vsel %vm397, %v428, %v429
      %v431 = vrot.slane %v219, 1
      %v432 = vsel %vm397, %v429, %v431
      %v433 = vrot.slane %v220, 1
      %v434 = vrot.slane %v221, 1
      %v435 = vsel %vm397, %v433, %v434
      %v436 = vrot.slane %v222, 1
      %v437 = vsel %vm397, %v434, %v436
      %v438 = vrot.slane %v223, 1
      %v439 = vrot.slane %v224, 1
      %v440 = vsel %vm397, %v438, %v439
      %v441 = vrot.slane %v225, 1
      %v442 = vsel %vm397, %v439, %v441
      %v443 = vrot.slane %v226, 1
      %v444 = vrot.slane %v227, 1
      %v445 = vsel %vm397, %v443, %v444
      %v446 = vrot.slane %v228, 1
      %v447 = vsel %vm397, %v444, %v446
      %v448 = vrot.slane %v229, 1
      %v449 = vrot.slane %v230, 1
      %v450 = vsel %vm397, %v448, %v449
      %v451 = vrot.slane %v231, 1
      %v452 = vsel %vm397, %v449, %v451
      %v453 = vrot.slane %v232, 1
      %v454 = vrot.slane %v233, 1
      %v455 = vsel %vm397, %v453, %v454
      %v456 = vrot.slane %v234, 1
      %v457 = vsel %vm397, %v454, %v456
      %v458 = vrot.slane %v235, 1
      %v459 = vrot.slane %v236, 1
      %v460 = vsel %vm397, %v458, %v459
      %v461 = vrot.slane %v237, 1
      %v462 = vsel %vm397, %v459, %v461
      %v463 = vrot.slane %v238, 1
      %v464 = vrot.slane %v239, 1
      %v465 = vsel %vm397, %v463, %v464
      %v466 = vrot.slane %v240, 1
      %v467 = vsel %vm397, %v464, %v466
      %v468 = vrot.slane %v241, 1
      %v469 = vrot.slane %v242, 1
      %v470 = vsel %vm397, %v468, %v469
      %v471 = vrot.slane %v243, 1
      %v472 = vsel %vm397, %v469, %v471
      %v473 = vrot.slane %v244, 1
      %v474 = vrot.slane %v245, 1
      %v475 = vsel %vm397, %v473, %v474
      %v476 = vrot.slane %v246, 1
      %v477 = vsel %vm397, %v474, %v476
      %478 = vrot.lane.b32.xlu0 %v400, 16
      %v479 = vpop.permute.xlu0 %478
      %480 = vrot.lane.b32.xlu0 %v402, 16
      %v481 = vpop.permute.xlu0 %480
      %482 = vrot.lane.b32.xlu0 %v405, 16
      %v483 = vpop.permute.xlu0 %482
      %484 = vrot.lane.b32.xlu0 %v407, 16
      %v485 = vpop.permute.xlu0 %484
      %486 = vrot.lane.b32.xlu0 %v410, 16
      %v487 = vpop.permute.xlu0 %486
      %488 = vrot.lane.b32.xlu0 %v412, 16
      %v489 = vpop.permute.xlu0 %488
      %490 = vrot.lane.b32.xlu0 %v415, 16
      %v491 = vpop.permute.xlu0 %490
      %492 = vrot.lane.b32.xlu0 %v417, 16
      %v493 = vpop.permute.xlu0 %492
      %494 = vrot.lane.b32.xlu0 %v420, 16
      %v495 = vpop.permute.xlu0 %494
      %496 = vrot.lane.b32.xlu0 %v422, 16
      %v497 = vpop.permute.xlu0 %496
      %498 = vrot.lane.b32.xlu0 %v425, 16
      %v499 = vpop.permute.xlu0 %498
      %500 = vrot.lane.b32.xlu0 %v427, 16
      %v501 = vpop.permute.xlu0 %500
      %502 = vrot.lane.b32.xlu0 %v430, 16
      %v503 = vpop.permute.xlu0 %502
      %504 = vrot.lane.b32.xlu0 %v432, 16
      %v505 = vpop.permute.xlu0 %504
      %506 = vrot.lane.b32.xlu0 %v435, 16
      %v507 = vpop.permute.xlu0 %506
      %508 = vrot.lane.b32.xlu0 %v437, 16
      %v509 = vpop.permute.xlu0 %508
      %510 = vrot.lane.b32.xlu0 %v440, 16
      %v511 = vpop.permute.xlu0 %510
      %512 = vrot.lane.b32.xlu0 %v442, 16
      %v513 = vpop.permute.xlu0 %512
      %514 = vrot.lane.b32.xlu0 %v445, 16
      %v515 = vpop.permute.xlu0 %514
      %516 = vrot.lane.b32.xlu0 %v447, 16
      %v517 = vpop.permute.xlu0 %516
      %518 = vrot.lane.b32.xlu0 %v450, 16
      %v519 = vpop.permute.xlu0 %518
      %520 = vrot.lane.b32.xlu0 %v452, 16
      %v521 = vpop.permute.xlu0 %520
      %522 = vrot.lane.b32.xlu0 %v455, 16
      %v523 = vpop.permute.xlu0 %522
      %524 = vrot.lane.b32.xlu0 %v457, 16
      %v525 = vpop.permute.xlu0 %524
      %526 = vrot.lane.b32.xlu0 %v460, 16
      %v527 = vpop.permute.xlu0 %526
      %528 = vrot.lane.b32.xlu0 %v462, 16
      %v529 = vpop.permute.xlu0 %528
      %530 = vrot.lane.b32.xlu0 %v465, 16
      %v531 = vpop.permute.xlu0 %530
      %532 = vrot.lane.b32.xlu0 %v467, 16
      %v533 = vpop.permute.xlu0 %532
      %534 = vrot.lane.b32.xlu0 %v470, 16
      %v535 = vpop.permute.xlu0 %534
      %536 = vrot.lane.b32.xlu0 %v472, 16
      %v537 = vpop.permute.xlu0 %536
      %538 = vrot.lane.b32.xlu0 %v475, 16
      %v539 = vpop.permute.xlu0 %538
      %540 = vrot.lane.b32.xlu0 %v477, 16
      %v541 = vpop.permute.xlu0 %540
      %vm574 = vcmask 1045504
      %v575 = vrot.slane %v199, 2
      %v576 = vrot.slane %v200, 2
      %v577 = vsel %vm574, %v575, %v576
      %v578 = vrot.slane %v201, 2
      %v579 = vsel %vm574, %v576, %v578
      %v580 = vrot.slane %v202, 2
      %v581 = vrot.slane %v203, 2
      %v582 = vsel %vm574, %v580, %v581
      %v583 = vrot.slane %v204, 2
      %v584 = vsel %vm574, %v581, %v583
      %v585 = vrot.slane %v205, 2
      %v586 = vrot.slane %v206, 2
      %v587 = vsel %vm574, %v585, %v586
      %v588 = vrot.slane %v207, 2
      %v589 = vsel %vm574, %v586, %v588
      %v590 = vrot.slane %v208, 2
      %v591 = vrot.slane %v209, 2
      %v592 = vsel %vm574, %v590, %v591
      %v593 = vrot.slane %v210, 2
      %v594 = vsel %vm574, %v591, %v593
      %v595 = vrot.slane %v211, 2
      %v596 = vrot.slane %v212, 2
      %v597 = vsel %vm574, %v595, %v596
      %v598 = vrot.slane %v213, 2
      %v599 = vsel %vm574, %v596, %v598
      %v600 = vrot.slane %v214, 2
      %v601 = vrot.slane %v215, 2
      %v602 = vsel %vm574, %v600, %v601
      %v603 = vrot.slane %v216, 2
      %v604 = vsel %vm574, %v601, %v603
      %v605 = vrot.slane %v217, 2
      %v606 = vrot.slane %v218, 2
      %v607 = vsel %vm574, %v605, %v606
      %v608 = vrot.slane %v219, 2
      %v609 = vsel %vm574, %v606, %v608
      %v610 = vrot.slane %v220, 2
      %v611 = vrot.slane %v221, 2
      %v612 = vsel %vm574, %v610, %v611
      %v613 = vrot.slane %v222, 2
      %v614 = vsel %vm574, %v611, %v613
      %v615 = vrot.slane %v223, 2
      %v616 = vrot.slane %v224, 2
      %v617 = vsel %vm574, %v615, %v616
      %v618 = vrot.slane %v225, 2
      %v619 = vsel %vm574, %v616, %v618
      %v620 = vrot.slane %v226, 2
      %v621 = vrot.slane %v227, 2
      %v622 = vsel %vm574, %v620, %v621
      %v623 = vrot.slane %v228, 2
      %v624 = vsel %vm574, %v621, %v623
      %v625 = vrot.slane %v229, 2
      %v626 = vrot.slane %v230, 2
      %v627 = vsel %vm574, %v625, %v626
      %v628 = vrot.slane %v231, 2
      %v629 = vsel %vm574, %v626, %v628
      %v630 = vrot.slane %v232, 2
      %v631 = vrot.slane %v233, 2
      %v632 = vsel %vm574, %v630, %v631
      %v633 = vrot.slane %v234, 2
      %v634 = vsel %vm574, %v631, %v633
      %v635 = vrot.slane %v235, 2
      %v636 = vrot.slane %v236, 2
      %v637 = vsel %vm574, %v635, %v636
      %v638 = vrot.slane %v237, 2
      %v639 = vsel %vm574, %v636, %v638
      %v640 = vrot.slane %v238, 2
      %v641 = vrot.slane %v239, 2
      %v642 = vsel %vm574, %v640, %v641
      %v643 = vrot.slane %v240, 2
      %v644 = vsel %vm574, %v641, %v643
      %v645 = vrot.slane %v241, 2
      %v646 = vrot.slane %v242, 2
      %v647 = vsel %vm574, %v645, %v646
      %v648 = vrot.slane %v243, 2
      %v649 = vsel %vm574, %v646, %v648
      %v650 = vrot.slane %v244, 2
      %v651 = vrot.slane %v245, 2
      %v652 = vsel %vm574, %v650, %v651
      %v653 = vrot.slane %v246, 2
      %v654 = vsel %vm574, %v651, %v653
      %655 = vrot.lane.b32.xlu0 %v577, 32
      %v656 = vpop.permute.xlu0 %655
      %657 = vrot.lane.b32.xlu0 %v579, 32
      %v658 = vpop.permute.xlu0 %657
      %659 = vrot.lane.b32.xlu0 %v582, 32
      %v660 = vpop.permute.xlu0 %659
      %661 = vrot.lane.b32.xlu0 %v584, 32
      %v662 = vpop.permute.xlu0 %661
      %663 = vrot.lane.b32.xlu0 %v587, 32
      %v664 = vpop.permute.xlu0 %663
      %665 = vrot.lane.b32.xlu0 %v589, 32
      %v666 = vpop.permute.xlu0 %665
      %667 = vrot.lane.b32.xlu0 %v592, 32
      %v668 = vpop.permute.xlu0 %667
      %669 = vrot.lane.b32.xlu0 %v594, 32
      %v670 = vpop.permute.xlu0 %669
      %671 = vrot.lane.b32.xlu0 %v597, 32
      %v672 = vpop.permute.xlu0 %671
      %673 = vrot.lane.b32.xlu0 %v599, 32
      %v674 = vpop.permute.xlu0 %673
      %675 = vrot.lane.b32.xlu0 %v602, 32
      %v676 = vpop.permute.xlu0 %675
      %677 = vrot.lane.b32.xlu0 %v604, 32
      %v678 = vpop.permute.xlu0 %677
      %679 = vrot.lane.b32.xlu0 %v607, 32
      %v680 = vpop.permute.xlu0 %679
      %681 = vrot.lane.b32.xlu0 %v609, 32
      %v682 = vpop.permute.xlu0 %681
      %683 = vrot.lane.b32.xlu0 %v612, 32
      %v684 = vpop.permute.xlu0 %683
      %685 = vrot.lane.b32.xlu0 %v614, 32
      %v686 = vpop.permute.xlu0 %685
      %687 = vrot.lane.b32.xlu0 %v617, 32
      %v688 = vpop.permute.xlu0 %687
      %689 = vrot.lane.b32.xlu0 %v619, 32
      %v690 = vpop.permute.xlu0 %689
      %691 = vrot.lane.b32.xlu0 %v622, 32
      %v692 = vpop.permute.xlu0 %691
      %693 = vrot.lane.b32.xlu0 %v624, 32
      %v694 = vpop.permute.xlu0 %693
      %695 = vrot.lane.b32.xlu0 %v627, 32
      %v696 = vpop.permute.xlu0 %695
      %697 = vrot.lane.b32.xlu0 %v629, 32
      %v698 = vpop.permute.xlu0 %697
      %699 = vrot.lane.b32.xlu0 %v632, 32
      %v700 = vpop.permute.xlu0 %699
      %701 = vrot.lane.b32.xlu0 %v634, 32
      %v702 = vpop.permute.xlu0 %701
      %703 = vrot.lane.b32.xlu0 %v637, 32
      %v704 = vpop.permute.xlu0 %703
      %705 = vrot.lane.b32.xlu0 %v639, 32
      %v706 = vpop.permute.xlu0 %705
      %707 = vrot.lane.b32.xlu0 %v642, 32
      %v708 = vpop.permute.xlu0 %707
      %709 = vrot.lane.b32.xlu0 %v644, 32
      %v710 = vpop.permute.xlu0 %709
      %711 = vrot.lane.b32.xlu0 %v647, 32
      %v712 = vpop.permute.xlu0 %711
      %713 = vrot.lane.b32.xlu0 %v649, 32
      %v714 = vpop.permute.xlu0 %713
      %715 = vrot.lane.b32.xlu0 %v652, 32
      %v716 = vpop.permute.xlu0 %715
      %717 = vrot.lane.b32.xlu0 %v654, 32
      %v718 = vpop.permute.xlu0 %717
      %783 = vrot.lane.b32.xlu0 %v250, 48
      %v784 = vpop.permute.xlu0 %783
      %785 = vrot.lane.b32.xlu0 %v251, 48
      %v786 = vpop.permute.xlu0 %785
      %787 = vrot.lane.b32.xlu0 %v253, 48
      %v788 = vpop.permute.xlu0 %787
      %789 = vrot.lane.b32.xlu0 %v254, 48
      %v790 = vpop.permute.xlu0 %789
      %791 = vrot.lane.b32.xlu0 %v256, 48
      %v792 = vpop.permute.xlu0 %791
      %793 = vrot.lane.b32.xlu0 %v257, 48
      %v794 = vpop.permute.xlu0 %793
      %795 = vrot.lane.b32.xlu0 %v259, 48
      %v796 = vpop.permute.xlu0 %795
      %797 = vrot.lane.b32.xlu0 %v260, 48
      %v798 = vpop.permute.xlu0 %797
      %799 = vrot.lane.b32.xlu0 %v262, 48
      %v800 = vpop.permute.xlu0 %799
      %801 = vrot.lane.b32.xlu0 %v263, 48
      %v802 = vpop.permute.xlu0 %801
      %803 = vrot.lane.b32.xlu0 %v265, 48
      %v804 = vpop.permute.xlu0 %803
      %805 = vrot.lane.b32.xlu0 %v266, 48
      %v806 = vpop.permute.xlu0 %805
      %807 = vrot.lane.b32.xlu0 %v268, 48
      %v808 = vpop.permute.xlu0 %807
      %809 = vrot.lane.b32.xlu0 %v269, 48
      %v810 = vpop.permute.xlu0 %809
      %811 = vrot.lane.b32.xlu0 %v271, 48
      %v812 = vpop.permute.xlu0 %811
      %813 = vrot.lane.b32.xlu0 %v272, 48
      %v814 = vpop.permute.xlu0 %813
      %815 = vrot.lane.b32.xlu0 %v274, 48
      %v816 = vpop.permute.xlu0 %815
      %817 = vrot.lane.b32.xlu0 %v275, 48
      %v818 = vpop.permute.xlu0 %817
      %819 = vrot.lane.b32.xlu0 %v277, 48
      %v820 = vpop.permute.xlu0 %819
      %821 = vrot.lane.b32.xlu0 %v278, 48
      %v822 = vpop.permute.xlu0 %821
      %823 = vrot.lane.b32.xlu0 %v280, 48
      %v824 = vpop.permute.xlu0 %823
      %825 = vrot.lane.b32.xlu0 %v281, 48
      %v826 = vpop.permute.xlu0 %825
      %827 = vrot.lane.b32.xlu0 %v283, 48
      %v828 = vpop.permute.xlu0 %827
      %829 = vrot.lane.b32.xlu0 %v284, 48
      %v830 = vpop.permute.xlu0 %829
      %831 = vrot.lane.b32.xlu0 %v286, 48
      %v832 = vpop.permute.xlu0 %831
      %833 = vrot.lane.b32.xlu0 %v287, 48
      %v834 = vpop.permute.xlu0 %833
      %835 = vrot.lane.b32.xlu0 %v289, 48
      %v836 = vpop.permute.xlu0 %835
      %837 = vrot.lane.b32.xlu0 %v290, 48
      %v838 = vpop.permute.xlu0 %837
      %839 = vrot.lane.b32.xlu0 %v292, 48
      %v840 = vpop.permute.xlu0 %839
      %841 = vrot.lane.b32.xlu0 %v293, 48
      %v842 = vpop.permute.xlu0 %841
      %843 = vrot.lane.b32.xlu0 %v295, 48
      %v844 = vpop.permute.xlu0 %843
      %845 = vrot.lane.b32.xlu0 %v296, 48
      %v846 = vpop.permute.xlu0 %845
      %v895 = vrot.slane %v250, 1
      %v896 = vrot.slane %v251, 1
      %v897 = vsel %vm397, %v895, %v896
      %v898 = vrot.slane %v252, 1
      %v899 = vsel %vm397, %v896, %v898
      %v900 = vrot.slane %v253, 1
      %v901 = vrot.slane %v254, 1
      %v902 = vsel %vm397, %v900, %v901
      %v903 = vrot.slane %v255, 1
      %v904 = vsel %vm397, %v901, %v903
      %v905 = vrot.slane %v256, 1
      %v906 = vrot.slane %v257, 1
      %v907 = vsel %vm397, %v905, %v906
      %v908 = vrot.slane %v258, 1
      %v909 = vsel %vm397, %v906, %v908
      %v910 = vrot.slane %v259, 1
      %v911 = vrot.slane %v260, 1
      %v912 = vsel %vm397, %v910, %v911
      %v913 = vrot.slane %v261, 1
      %v914 = vsel %vm397, %v911, %v913
      %v915 = vrot.slane %v262, 1
      %v916 = vrot.slane %v263, 1
      %v917 = vsel %vm397, %v915, %v916
      %v918 = vrot.slane %v264, 1
      %v919 = vsel %vm397, %v916, %v918
      %v920 = vrot.slane %v265, 1
      %v921 = vrot.slane %v266, 1
      %v922 = vsel %vm397, %v920, %v921
      %v923 = vrot.slane %v267, 1
      %v924 = vsel %vm397, %v921, %v923
      %v925 = vrot.slane %v268, 1
      %v926 = vrot.slane %v269, 1
      %v927 = vsel %vm397, %v925, %v926
      %v928 = vrot.slane %v270, 1
      %v929 = vsel %vm397, %v926, %v928
      %v930 = vrot.slane %v271, 1
      %v931 = vrot.slane %v272, 1
      %v932 = vsel %vm397, %v930, %v931
      %v933 = vrot.slane %v273, 1
      %v934 = vsel %vm397, %v931, %v933
      %v935 = vrot.slane %v274, 1
      %v936 = vrot.slane %v275, 1
      %v937 = vsel %vm397, %v935, %v936
      %v938 = vrot.slane %v276, 1
      %v939 = vsel %vm397, %v936, %v938
      %v940 = vrot.slane %v277, 1
      %v941 = vrot.slane %v278, 1
      %v942 = vsel %vm397, %v940, %v941
      %v943 = vrot.slane %v279, 1
      %v944 = vsel %vm397, %v941, %v943
      %v945 = vrot.slane %v280, 1
      %v946 = vrot.slane %v281, 1
      %v947 = vsel %vm397, %v945, %v946
      %v948 = vrot.slane %v282, 1
      %v949 = vsel %vm397, %v946, %v948
      %v950 = vrot.slane %v283, 1
      %v951 = vrot.slane %v284, 1
      %v952 = vsel %vm397, %v950, %v951
      %v953 = vrot.slane %v285, 1
      %v954 = vsel %vm397, %v951, %v953
      %v955 = vrot.slane %v286, 1
      %v956 = vrot.slane %v287, 1
      %v957 = vsel %vm397, %v955, %v956
      %v958 = vrot.slane %v288, 1
      %v959 = vsel %vm397, %v956, %v958
      %v960 = vrot.slane %v289, 1
      %v961 = vrot.slane %v290, 1
      %v962 = vsel %vm397, %v960, %v961
      %v963 = vrot.slane %v291, 1
      %v964 = vsel %vm397, %v961, %v963
      %v965 = vrot.slane %v292, 1
      %v966 = vrot.slane %v293, 1
      %v967 = vsel %vm397, %v965, %v966
      %v968 = vrot.slane %v294, 1
      %v969 = vsel %vm397, %v966, %v968
      %v970 = vrot.slane %v295, 1
      %v971 = vrot.slane %v296, 1
      %v972 = vsel %vm397, %v970, %v971
      %v973 = vrot.slane %v297, 1
      %v974 = vsel %vm397, %v971, %v973
      %975 = vrot.lane.b32.xlu0 %v897, 64
      %v976 = vpop.permute.xlu0 %975
      %977 = vrot.lane.b32.xlu0 %v899, 64
      %v978 = vpop.permute.xlu0 %977
      %979 = vrot.lane.b32.xlu0 %v902, 64
      %v980 = vpop.permute.xlu0 %979
      %981 = vrot.lane.b32.xlu0 %v904, 64
      %v982 = vpop.permute.xlu0 %981
      %983 = vrot.lane.b32.xlu0 %v907, 64
      %v984 = vpop.permute.xlu0 %983
      %985 = vrot.lane.b32.xlu0 %v909, 64
      %v986 = vpop.permute.xlu0 %985
      %987 = vrot.lane.b32.xlu0 %v912, 64
      %v988 = vpop.permute.xlu0 %987
      %989 = vrot.lane.b32.xlu0 %v914, 64
      %v990 = vpop.permute.xlu0 %989
      %991 = vrot.lane.b32.xlu0 %v917, 64
      %v992 = vpop.permute.xlu0 %991
      %993 = vrot.lane.b32.xlu0 %v919, 64
      %v994 = vpop.permute.xlu0 %993
      %995 = vrot.lane.b32.xlu0 %v922, 64
      %v996 = vpop.permute.xlu0 %995
      %997 = vrot.lane.b32.xlu0 %v924, 64
      %v998 = vpop.permute.xlu0 %997
      %999 = vrot.lane.b32.xlu0 %v927, 64
      %v1000 = vpop.permute.xlu0 %999
      %1001 = vrot.lane.b32.xlu0 %v929, 64
      %v1002 = vpop.permute.xlu0 %1001
      %1003 = vrot.lane.b32.xlu0 %v932, 64
      %v1004 = vpop.permute.xlu0 %1003
      %1005 = vrot.lane.b32.xlu0 %v934, 64
      %v1006 = vpop.permute.xlu0 %1005
      %1007 = vrot.lane.b32.xlu0 %v937, 64
      %v1008 = vpop.permute.xlu0 %1007
      %1009 = vrot.lane.b32.xlu0 %v939, 64
      %v1010 = vpop.permute.xlu0 %1009
      %1011 = vrot.lane.b32.xlu0 %v942, 64
      %v1012 = vpop.permute.xlu0 %1011
      %1013 = vrot.lane.b32.xlu0 %v944, 64
      %v1014 = vpop.permute.xlu0 %1013
      %1015 = vrot.lane.b32.xlu0 %v947, 64
      %v1016 = vpop.permute.xlu0 %1015
      %1017 = vrot.lane.b32.xlu0 %v949, 64
      %v1018 = vpop.permute.xlu0 %1017
      %1019 = vrot.lane.b32.xlu0 %v952, 64
      %v1020 = vpop.permute.xlu0 %1019
      %1021 = vrot.lane.b32.xlu0 %v954, 64
      %v1022 = vpop.permute.xlu0 %1021
      %1023 = vrot.lane.b32.xlu0 %v957, 64
      %v1024 = vpop.permute.xlu0 %1023
      %1025 = vrot.lane.b32.xlu0 %v959, 64
      %v1026 = vpop.permute.xlu0 %1025
      %1027 = vrot.lane.b32.xlu0 %v962, 64
      %v1028 = vpop.permute.xlu0 %1027
      %1029 = vrot.lane.b32.xlu0 %v964, 64
      %v1030 = vpop.permute.xlu0 %1029
      %1031 = vrot.lane.b32.xlu0 %v967, 64
      %v1032 = vpop.permute.xlu0 %1031
      %1033 = vrot.lane.b32.xlu0 %v969, 64
      %v1034 = vpop.permute.xlu0 %1033
      %1035 = vrot.lane.b32.xlu0 %v972, 64
      %v1036 = vpop.permute.xlu0 %1035
      %1037 = vrot.lane.b32.xlu0 %v974, 64
      %v1038 = vpop.permute.xlu0 %1037
      %v1071 = vrot.slane %v250, 2
      %v1072 = vrot.slane %v251, 2
      %v1073 = vsel %vm574, %v1071, %v1072
      %v1074 = vrot.slane %v252, 2
      %v1075 = vsel %vm574, %v1072, %v1074
      %v1076 = vrot.slane %v253, 2
      %v1077 = vrot.slane %v254, 2
      %v1078 = vsel %vm574, %v1076, %v1077
      %v1079 = vrot.slane %v255, 2
      %v1080 = vsel %vm574, %v1077, %v1079
      %v1081 = vrot.slane %v256, 2
      %v1082 = vrot.slane %v257, 2
      %v1083 = vsel %vm574, %v1081, %v1082
      %v1084 = vrot.slane %v258, 2
      %v1085 = vsel %vm574, %v1082, %v1084
      %v1086 = vrot.slane %v259, 2
      %v1087 = vrot.slane %v260, 2
      %v1088 = vsel %vm574, %v1086, %v1087
      %v1089 = vrot.slane %v261, 2
      %v1090 = vsel %vm574, %v1087, %v1089
      %v1091 = vrot.slane %v262, 2
      %v1092 = vrot.slane %v263, 2
      %v1093 = vsel %vm574, %v1091, %v1092
      %v1094 = vrot.slane %v264, 2
      %v1095 = vsel %vm574, %v1092, %v1094
      %v1096 = vrot.slane %v265, 2
      %v1097 = vrot.slane %v266, 2
      %v1098 = vsel %vm574, %v1096, %v1097
      %v1099 = vrot.slane %v267, 2
      %v1100 = vsel %vm574, %v1097, %v1099
      %v1101 = vrot.slane %v268, 2
      %v1102 = vrot.slane %v269, 2
      %v1103 = vsel %vm574, %v1101, %v1102
      %v1104 = vrot.slane %v270, 2
      %v1105 = vsel %vm574, %v1102, %v1104
      %v1106 = vrot.slane %v271, 2
      %v1107 = vrot.slane %v272, 2
      %v1108 = vsel %vm574, %v1106, %v1107
      %v1109 = vrot.slane %v273, 2
      %v1110 = vsel %vm574, %v1107, %v1109
      %v1111 = vrot.slane %v274, 2
      %v1112 = vrot.slane %v275, 2
      %v1113 = vsel %vm574, %v1111, %v1112
      %v1114 = vrot.slane %v276, 2
      %v1115 = vsel %vm574, %v1112, %v1114
      %v1116 = vrot.slane %v277, 2
      %v1117 = vrot.slane %v278, 2
      %v1118 = vsel %vm574, %v1116, %v1117
      %v1119 = vrot.slane %v279, 2
      %v1120 = vsel %vm574, %v1117, %v1119
      %v1121 = vrot.slane %v280, 2
      %v1122 = vrot.slane %v281, 2
      %v1123 = vsel %vm574, %v1121, %v1122
      %v1124 = vrot.slane %v282, 2
      %v1125 = vsel %vm574, %v1122, %v1124
      %v1126 = vrot.slane %v283, 2
      %v1127 = vrot.slane %v284, 2
      %v1128 = vsel %vm574, %v1126, %v1127
      %v1129 = vrot.slane %v285, 2
      %v1130 = vsel %vm574, %v1127, %v1129
      %v1131 = vrot.slane %v286, 2
      %v1132 = vrot.slane %v287, 2
      %v1133 = vsel %vm574, %v1131, %v1132
      %v1134 = vrot.slane %v288, 2
      %v1135 = vsel %vm574, %v1132, %v1134
      %v1136 = vrot.slane %v289, 2
      %v1137 = vrot.slane %v290, 2
      %v1138 = vsel %vm574, %v1136, %v1137
      %v1139 = vrot.slane %v291, 2
      %v1140 = vsel %vm574, %v1137, %v1139
      %v1141 = vrot.slane %v292, 2
      %v1142 = vrot.slane %v293, 2
      %v1143 = vsel %vm574, %v1141, %v1142
      %v1144 = vrot.slane %v294, 2
      %v1145 = vsel %vm574, %v1142, %v1144
      %v1146 = vrot.slane %v295, 2
      %v1147 = vrot.slane %v296, 2
      %v1148 = vsel %vm574, %v1146, %v1147
      %v1149 = vrot.slane %v297, 2
      %v1150 = vsel %vm574, %v1147, %v1149
      %1151 = vrot.lane.b32.xlu0 %v1073, 80
      %v1152 = vpop.permute.xlu0 %1151
      %1153 = vrot.lane.b32.xlu0 %v1075, 80
      %v1154 = vpop.permute.xlu0 %1153
      %1155 = vrot.lane.b32.xlu0 %v1078, 80
      %v1156 = vpop.permute.xlu0 %1155
      %1157 = vrot.lane.b32.xlu0 %v1080, 80
      %v1158 = vpop.permute.xlu0 %1157
      %1159 = vrot.lane.b32.xlu0 %v1083, 80
      %v1160 = vpop.permute.xlu0 %1159
      %1161 = vrot.lane.b32.xlu0 %v1085, 80
      %v1162 = vpop.permute.xlu0 %1161
      %1163 = vrot.lane.b32.xlu0 %v1088, 80
      %v1164 = vpop.permute.xlu0 %1163
      %1165 = vrot.lane.b32.xlu0 %v1090, 80
      %v1166 = vpop.permute.xlu0 %1165
      %1167 = vrot.lane.b32.xlu0 %v1093, 80
      %v1168 = vpop.permute.xlu0 %1167
      %1169 = vrot.lane.b32.xlu0 %v1095, 80
      %v1170 = vpop.permute.xlu0 %1169
      %1171 = vrot.lane.b32.xlu0 %v1098, 80
      %v1172 = vpop.permute.xlu0 %1171
      %1173 = vrot.lane.b32.xlu0 %v1100, 80
      %v1174 = vpop.permute.xlu0 %1173
      %1175 = vrot.lane.b32.xlu0 %v1103, 80
      %v1176 = vpop.permute.xlu0 %1175
      %1177 = vrot.lane.b32.xlu0 %v1105, 80
      %v1178 = vpop.permute.xlu0 %1177
      %1179 = vrot.lane.b32.xlu0 %v1108, 80
      %v1180 = vpop.permute.xlu0 %1179
      %1181 = vrot.lane.b32.xlu0 %v1110, 80
      %v1182 = vpop.permute.xlu0 %1181
      %1183 = vrot.lane.b32.xlu0 %v1113, 80
      %v1184 = vpop.permute.xlu0 %1183
      %1185 = vrot.lane.b32.xlu0 %v1115, 80
      %v1186 = vpop.permute.xlu0 %1185
      %1187 = vrot.lane.b32.xlu0 %v1118, 80
      %v1188 = vpop.permute.xlu0 %1187
      %1189 = vrot.lane.b32.xlu0 %v1120, 80
      %v1190 = vpop.permute.xlu0 %1189
      %1191 = vrot.lane.b32.xlu0 %v1123, 80
      %v1192 = vpop.permute.xlu0 %1191
      %1193 = vrot.lane.b32.xlu0 %v1125, 80
      %v1194 = vpop.permute.xlu0 %1193
      %1195 = vrot.lane.b32.xlu0 %v1128, 80
      %v1196 = vpop.permute.xlu0 %1195
      %1197 = vrot.lane.b32.xlu0 %v1130, 80
      %v1198 = vpop.permute.xlu0 %1197
      %1199 = vrot.lane.b32.xlu0 %v1133, 80
      %v1200 = vpop.permute.xlu0 %1199
      %1201 = vrot.lane.b32.xlu0 %v1135, 80
      %v1202 = vpop.permute.xlu0 %1201
      %1203 = vrot.lane.b32.xlu0 %v1138, 80
      %v1204 = vpop.permute.xlu0 %1203
      %1205 = vrot.lane.b32.xlu0 %v1140, 80
      %v1206 = vpop.permute.xlu0 %1205
      %1207 = vrot.lane.b32.xlu0 %v1143, 80
      %v1208 = vpop.permute.xlu0 %1207
      %1209 = vrot.lane.b32.xlu0 %v1145, 80
      %v1210 = vpop.permute.xlu0 %1209
      %1211 = vrot.lane.b32.xlu0 %v1148, 80
      %v1212 = vpop.permute.xlu0 %1211
      %1213 = vrot.lane.b32.xlu0 %v1150, 80
      %v1214 = vpop.permute.xlu0 %1213
      %1279 = vrot.lane.b32.xlu0 %v301, 96
      %v1280 = vpop.permute.xlu0 %1279
      %1281 = vrot.lane.b32.xlu0 %v302, 96
      %v1282 = vpop.permute.xlu0 %1281
      %1283 = vrot.lane.b32.xlu0 %v304, 96
      %v1284 = vpop.permute.xlu0 %1283
      %1285 = vrot.lane.b32.xlu0 %v305, 96
      %v1286 = vpop.permute.xlu0 %1285
      %1287 = vrot.lane.b32.xlu0 %v307, 96
      %v1288 = vpop.permute.xlu0 %1287
      %1289 = vrot.lane.b32.xlu0 %v308, 96
      %v1290 = vpop.permute.xlu0 %1289
      %1291 = vrot.lane.b32.xlu0 %v310, 96
      %v1292 = vpop.permute.xlu0 %1291
      %1293 = vrot.lane.b32.xlu0 %v311, 96
      %v1294 = vpop.permute.xlu0 %1293
      %1295 = vrot.lane.b32.xlu0 %v313, 96
      %v1296 = vpop.permute.xlu0 %1295
      %1297 = vrot.lane.b32.xlu0 %v314, 96
      %v1298 = vpop.permute.xlu0 %1297
      %1299 = vrot.lane.b32.xlu0 %v316, 96
      %v1300 = vpop.permute.xlu0 %1299
      %1301 = vrot.lane.b32.xlu0 %v317, 96
      %v1302 = vpop.permute.xlu0 %1301
      %1303 = vrot.lane.b32.xlu0 %v319, 96
      %v1304 = vpop.permute.xlu0 %1303
      %1305 = vrot.lane.b32.xlu0 %v320, 96
      %v1306 = vpop.permute.xlu0 %1305
      %1307 = vrot.lane.b32.xlu0 %v322, 96
      %v1308 = vpop.permute.xlu0 %1307
      %1309 = vrot.lane.b32.xlu0 %v323, 96
      %v1310 = vpop.permute.xlu0 %1309
      %1311 = vrot.lane.b32.xlu0 %v325, 96
      %v1312 = vpop.permute.xlu0 %1311
      %1313 = vrot.lane.b32.xlu0 %v326, 96
      %v1314 = vpop.permute.xlu0 %1313
      %1315 = vrot.lane.b32.xlu0 %v328, 96
      %v1316 = vpop.permute.xlu0 %1315
      %1317 = vrot.lane.b32.xlu0 %v329, 96
      %v1318 = vpop.permute.xlu0 %1317
      %1319 = vrot.lane.b32.xlu0 %v331, 96
      %v1320 = vpop.permute.xlu0 %1319
      %1321 = vrot.lane.b32.xlu0 %v332, 96
      %v1322 = vpop.permute.xlu0 %1321
      %1323 = vrot.lane.b32.xlu0 %v334, 96
      %v1324 = vpop.permute.xlu0 %1323
      %1325 = vrot.lane.b32.xlu0 %v335, 96
      %v1326 = vpop.permute.xlu0 %1325
      %1327 = vrot.lane.b32.xlu0 %v337, 96
      %v1328 = vpop.permute.xlu0 %1327
      %1329 = vrot.lane.b32.xlu0 %v338, 96
      %v1330 = vpop.permute.xlu0 %1329
      %1331 = vrot.lane.b32.xlu0 %v340, 96
      %v1332 = vpop.permute.xlu0 %1331
      %1333 = vrot.lane.b32.xlu0 %v341, 96
      %v1334 = vpop.permute.xlu0 %1333
      %1335 = vrot.lane.b32.xlu0 %v343, 96
      %v1336 = vpop.permute.xlu0 %1335
      %1337 = vrot.lane.b32.xlu0 %v344, 96
      %v1338 = vpop.permute.xlu0 %1337
      %1339 = vrot.lane.b32.xlu0 %v346, 96
      %v1340 = vpop.permute.xlu0 %1339
      %1341 = vrot.lane.b32.xlu0 %v347, 96
      %v1342 = vpop.permute.xlu0 %1341
      %v1391 = vrot.slane %v301, 1
      %v1392 = vrot.slane %v302, 1
      %v1393 = vsel %vm397, %v1391, %v1392
      %v1394 = vrot.slane %v303, 1
      %v1395 = vsel %vm397, %v1392, %v1394
      %v1396 = vrot.slane %v304, 1
      %v1397 = vrot.slane %v305, 1
      %v1398 = vsel %vm397, %v1396, %v1397
      %v1399 = vrot.slane %v306, 1
      %v1400 = vsel %vm397, %v1397, %v1399
      %v1401 = vrot.slane %v307, 1
      %v1402 = vrot.slane %v308, 1
      %v1403 = vsel %vm397, %v1401, %v1402
      %v1404 = vrot.slane %v309, 1
      %v1405 = vsel %vm397, %v1402, %v1404
      %v1406 = vrot.slane %v310, 1
      %v1407 = vrot.slane %v311, 1
      %v1408 = vsel %vm397, %v1406, %v1407
      %v1409 = vrot.slane %v312, 1
      %v1410 = vsel %vm397, %v1407, %v1409
      %v1411 = vrot.slane %v313, 1
      %v1412 = vrot.slane %v314, 1
      %v1413 = vsel %vm397, %v1411, %v1412
      %v1414 = vrot.slane %v315, 1
      %v1415 = vsel %vm397, %v1412, %v1414
      %v1416 = vrot.slane %v316, 1
      %v1417 = vrot.slane %v317, 1
      %v1418 = vsel %vm397, %v1416, %v1417
      %v1419 = vrot.slane %v318, 1
      %v1420 = vsel %vm397, %v1417, %v1419
      %v1421 = vrot.slane %v319, 1
      %v1422 = vrot.slane %v320, 1
      %v1423 = vsel %vm397, %v1421, %v1422
      %v1424 = vrot.slane %v321, 1
      %v1425 = vsel %vm397, %v1422, %v1424
      %v1426 = vrot.slane %v322, 1
      %v1427 = vrot.slane %v323, 1
      %v1428 = vsel %vm397, %v1426, %v1427
      %v1429 = vrot.slane %v324, 1
      %v1430 = vsel %vm397, %v1427, %v1429
      %v1431 = vrot.slane %v325, 1
      %v1432 = vrot.slane %v326, 1
      %v1433 = vsel %vm397, %v1431, %v1432
      %v1434 = vrot.slane %v327, 1
      %v1435 = vsel %vm397, %v1432, %v1434
      %v1436 = vrot.slane %v328, 1
      %v1437 = vrot.slane %v329, 1
      %v1438 = vsel %vm397, %v1436, %v1437
      %v1439 = vrot.slane %v330, 1
      %v1440 = vsel %vm397, %v1437, %v1439
      %v1441 = vrot.slane %v331, 1
      %v1442 = vrot.slane %v332, 1
      %v1443 = vsel %vm397, %v1441, %v1442
      %v1444 = vrot.slane %v333, 1
      %v1445 = vsel %vm397, %v1442, %v1444
      %v1446 = vrot.slane %v334, 1
      %v1447 = vrot.slane %v335, 1
      %v1448 = vsel %vm397, %v1446, %v1447
      %v1449 = vrot.slane %v336, 1
      %v1450 = vsel %vm397, %v1447, %v1449
      %v1451 = vrot.slane %v337, 1
      %v1452 = vrot.slane %v338, 1
      %v1453 = vsel %vm397, %v1451, %v1452
      %v1454 = vrot.slane %v339, 1
      %v1455 = vsel %vm397, %v1452, %v1454
      %v1456 = vrot.slane %v340, 1
      %v1457 = vrot.slane %v341, 1
      %v1458 = vsel %vm397, %v1456, %v1457
      %v1459 = vrot.slane %v342, 1
      %v1460 = vsel %vm397, %v1457, %v1459
      %v1461 = vrot.slane %v343, 1
      %v1462 = vrot.slane %v344, 1
      %v1463 = vsel %vm397, %v1461, %v1462
      %v1464 = vrot.slane %v345, 1
      %v1465 = vsel %vm397, %v1462, %v1464
      %v1466 = vrot.slane %v346, 1
      %v1467 = vrot.slane %v347, 1
      %v1468 = vsel %vm397, %v1466, %v1467
      %v1469 = vrot.slane %v348, 1
      %v1470 = vsel %vm397, %v1467, %v1469
      %1471 = vrot.lane.b32.xlu0 %v1393, 112
      %v1472 = vpop.permute.xlu0 %1471
      %1473 = vrot.lane.b32.xlu0 %v1395, 112
      %v1474 = vpop.permute.xlu0 %1473
      %1475 = vrot.lane.b32.xlu0 %v1398, 112
      %v1476 = vpop.permute.xlu0 %1475
      %1477 = vrot.lane.b32.xlu0 %v1400, 112
      %v1478 = vpop.permute.xlu0 %1477
      %1479 = vrot.lane.b32.xlu0 %v1403, 112
      %v1480 = vpop.permute.xlu0 %1479
      %1481 = vrot.lane.b32.xlu0 %v1405, 112
      %v1482 = vpop.permute.xlu0 %1481
      %1483 = vrot.lane.b32.xlu0 %v1408, 112
      %v1484 = vpop.permute.xlu0 %1483
      %1485 = vrot.lane.b32.xlu0 %v1410, 112
      %v1486 = vpop.permute.xlu0 %1485
      %1487 = vrot.lane.b32.xlu0 %v1413, 112
      %v1488 = vpop.permute.xlu0 %1487
      %1489 = vrot.lane.b32.xlu0 %v1415, 112
      %v1490 = vpop.permute.xlu0 %1489
      %1491 = vrot.lane.b32.xlu0 %v1418, 112
      %v1492 = vpop.permute.xlu0 %1491
      %1493 = vrot.lane.b32.xlu0 %v1420, 112
      %v1494 = vpop.permute.xlu0 %1493
      %1495 = vrot.lane.b32.xlu0 %v1423, 112
      %v1496 = vpop.permute.xlu0 %1495
      %1497 = vrot.lane.b32.xlu0 %v1425, 112
      %v1498 = vpop.permute.xlu0 %1497
      %1499 = vrot.lane.b32.xlu0 %v1428, 112
      %v1500 = vpop.permute.xlu0 %1499
      %1501 = vrot.lane.b32.xlu0 %v1430, 112
      %v1502 = vpop.permute.xlu0 %1501
      %1503 = vrot.lane.b32.xlu0 %v1433, 112
      %v1504 = vpop.permute.xlu0 %1503
      %1505 = vrot.lane.b32.xlu0 %v1435, 112
      %v1506 = vpop.permute.xlu0 %1505
      %1507 = vrot.lane.b32.xlu0 %v1438, 112
      %v1508 = vpop.permute.xlu0 %1507
      %1509 = vrot.lane.b32.xlu0 %v1440, 112
      %v1510 = vpop.permute.xlu0 %1509
      %1511 = vrot.lane.b32.xlu0 %v1443, 112
      %v1512 = vpop.permute.xlu0 %1511
      %1513 = vrot.lane.b32.xlu0 %v1445, 112
      %v1514 = vpop.permute.xlu0 %1513
      %1515 = vrot.lane.b32.xlu0 %v1448, 112
      %v1516 = vpop.permute.xlu0 %1515
      %1517 = vrot.lane.b32.xlu0 %v1450, 112
      %v1518 = vpop.permute.xlu0 %1517
      %1519 = vrot.lane.b32.xlu0 %v1453, 112
      %v1520 = vpop.permute.xlu0 %1519
      %1521 = vrot.lane.b32.xlu0 %v1455, 112
      %v1522 = vpop.permute.xlu0 %1521
      %1523 = vrot.lane.b32.xlu0 %v1458, 112
      %v1524 = vpop.permute.xlu0 %1523
      %1525 = vrot.lane.b32.xlu0 %v1460, 112
      %v1526 = vpop.permute.xlu0 %1525
      %1527 = vrot.lane.b32.xlu0 %v1463, 112
      %v1528 = vpop.permute.xlu0 %1527
      %1529 = vrot.lane.b32.xlu0 %v1465, 112
      %v1530 = vpop.permute.xlu0 %1529
      %1531 = vrot.lane.b32.xlu0 %v1468, 112
      %v1532 = vpop.permute.xlu0 %1531
      %1533 = vrot.lane.b32.xlu0 %v1470, 112
      %v1534 = vpop.permute.xlu0 %1533
      %v1567 = vrot.slane %v301, 2
      %v1568 = vrot.slane %v302, 2
      %v1569 = vsel %vm574, %v1567, %v1568
      %v1570 = vrot.slane %v303, 2
      %v1571 = vsel %vm574, %v1568, %v1570
      %v1572 = vrot.slane %v304, 2
      %v1573 = vrot.slane %v305, 2
      %v1574 = vsel %vm574, %v1572, %v1573
      %v1575 = vrot.slane %v306, 2
      %v1576 = vsel %vm574, %v1573, %v1575
      %v1577 = vrot.slane %v307, 2
      %v1578 = vrot.slane %v308, 2
      %v1579 = vsel %vm574, %v1577, %v1578
      %v1580 = vrot.slane %v309, 2
      %v1581 = vsel %vm574, %v1578, %v1580
      %v1582 = vrot.slane %v310, 2
      %v1583 = vrot.slane %v311, 2
      %v1584 = vsel %vm574, %v1582, %v1583
      %v1585 = vrot.slane %v312, 2
      %v1586 = vsel %vm574, %v1583, %v1585
      %v1587 = vrot.slane %v313, 2
      %v1588 = vrot.slane %v314, 2
      %v1589 = vsel %vm574, %v1587, %v1588
      %v1590 = vrot.slane %v315, 2
      %v1591 = vsel %vm574, %v1588, %v1590
      %v1592 = vrot.slane %v316, 2
      %v1593 = vrot.slane %v317, 2
      %v1594 = vsel %vm574, %v1592, %v1593
      %v1595 = vrot.slane %v318, 2
      %v1596 = vsel %vm574, %v1593, %v1595
      %v1597 = vrot.slane %v319, 2
      %v1598 = vrot.slane %v320, 2
      %v1599 = vsel %vm574, %v1597, %v1598
      %v1600 = vrot.slane %v321, 2
      %v1601 = vsel %vm574, %v1598, %v1600
      %v1602 = vrot.slane %v322, 2
      %v1603 = vrot.slane %v323, 2
      %v1604 = vsel %vm574, %v1602, %v1603
      %v1605 = vrot.slane %v324, 2
      %v1606 = vsel %vm574, %v1603, %v1605
      %v1607 = vrot.slane %v325, 2
      %v1608 = vrot.slane %v326, 2
      %v1609 = vsel %vm574, %v1607, %v1608
      %v1610 = vrot.slane %v327, 2
      %v1611 = vsel %vm574, %v1608, %v1610
      %v1612 = vrot.slane %v328, 2
      %v1613 = vrot.slane %v329, 2
      %v1614 = vsel %vm574, %v1612, %v1613
      %v1615 = vrot.slane %v330, 2
      %v1616 = vsel %vm574, %v1613, %v1615
      %v1617 = vrot.slane %v331, 2
      %v1618 = vrot.slane %v332, 2
      %v1619 = vsel %vm574, %v1617, %v1618
      %v1620 = vrot.slane %v333, 2
      %v1621 = vsel %vm574, %v1618, %v1620
      %v1622 = vrot.slane %v334, 2
      %v1623 = vrot.slane %v335, 2
      %v1624 = vsel %vm574, %v1622, %v1623
      %v1625 = vrot.slane %v336, 2
      %v1626 = vsel %vm574, %v1623, %v1625
      %v1627 = vrot.slane %v337, 2
      %v1628 = vrot.slane %v338, 2
      %v1629 = vsel %vm574, %v1627, %v1628
      %v1630 = vrot.slane %v339, 2
      %v1631 = vsel %vm574, %v1628, %v1630
      %v1632 = vrot.slane %v340, 2
      %v1633 = vrot.slane %v341, 2
      %v1634 = vsel %vm574, %v1632, %v1633
      %v1635 = vrot.slane %v342, 2
      %v1636 = vsel %vm574, %v1633, %v1635
      %v1637 = vrot.slane %v343, 2
      %v1638 = vrot.slane %v344, 2
      %v1639 = vsel %vm574, %v1637, %v1638
      %v1640 = vrot.slane %v345, 2
      %v1641 = vsel %vm574, %v1638, %v1640
      %v1642 = vrot.slane %v346, 2
      %v1643 = vrot.slane %v347, 2
      %v1644 = vsel %vm574, %v1642, %v1643
      %v1645 = vrot.slane %v348, 2
      %v1646 = vsel %vm574, %v1643, %v1645
      %vm1647 = vcmask 130048
      %v1648 = vsel %vm1647, %v199, %v479
      %v1649 = vsel %vm1647, %v200, %v481
      %v1650 = vsel %vm1647, %v202, %v483
      %v1651 = vsel %vm1647, %v203, %v485
      %v1652 = vsel %vm1647, %v205, %v487
      %v1653 = vsel %vm1647, %v206, %v489
      %v1654 = vsel %vm1647, %v208, %v491
      %v1655 = vsel %vm1647, %v209, %v493
      %v1656 = vsel %vm1647, %v211, %v495
      %v1657 = vsel %vm1647, %v212, %v497
      %v1658 = vsel %vm1647, %v214, %v499
      %v1659 = vsel %vm1647, %v215, %v501
      %v1660 = vsel %vm1647, %v217, %v503
      %v1661 = vsel %vm1647, %v218, %v505
      %v1662 = vsel %vm1647, %v220, %v507
      %v1663 = vsel %vm1647, %v221, %v509
      %v1664 = vsel %vm1647, %v223, %v511
      %v1665 = vsel %vm1647, %v224, %v513
      %v1666 = vsel %vm1647, %v226, %v515
      %v1667 = vsel %vm1647, %v227, %v517
      %v1668 = vsel %vm1647, %v229, %v519
      %v1669 = vsel %vm1647, %v230, %v521
      %v1670 = vsel %vm1647, %v232, %v523
      %v1671 = vsel %vm1647, %v233, %v525
      %v1672 = vsel %vm1647, %v235, %v527
      %v1673 = vsel %vm1647, %v236, %v529
      %v1674 = vsel %vm1647, %v238, %v531
      %v1675 = vsel %vm1647, %v239, %v533
      %v1676 = vsel %vm1647, %v241, %v535
      %v1677 = vsel %vm1647, %v242, %v537
      %v1678 = vsel %vm1647, %v244, %v539
      %v1679 = vsel %vm1647, %v245, %v541
      %vm1680 = vcmask 261120
      %v1681 = vsel %vm1680, %v1648, %v656
      %v1682 = vsel %vm1680, %v1649, %v658
      %v1683 = vsel %vm1680, %v1650, %v660
      %v1684 = vsel %vm1680, %v1651, %v662
      %v1685 = vsel %vm1680, %v1652, %v664
      %v1686 = vsel %vm1680, %v1653, %v666
      %v1687 = vsel %vm1680, %v1654, %v668
      %v1688 = vsel %vm1680, %v1655, %v670
      %v1689 = vsel %vm1680, %v1656, %v672
      %v1690 = vsel %vm1680, %v1657, %v674
      %v1691 = vsel %vm1680, %v1658, %v676
      %v1692 = vsel %vm1680, %v1659, %v678
      %v1693 = vsel %vm1680, %v1660, %v680
      %v1694 = vsel %vm1680, %v1661, %v682
      %v1695 = vsel %vm1680, %v1662, %v684
      %v1696 = vsel %vm1680, %v1663, %v686
      %v1697 = vsel %vm1680, %v1664, %v688
      %v1698 = vsel %vm1680, %v1665, %v690
      %v1699 = vsel %vm1680, %v1666, %v692
      %v1700 = vsel %vm1680, %v1667, %v694
      %v1701 = vsel %vm1680, %v1668, %v696
      %v1702 = vsel %vm1680, %v1669, %v698
      %v1703 = vsel %vm1680, %v1670, %v700
      %v1704 = vsel %vm1680, %v1671, %v702
      %v1705 = vsel %vm1680, %v1672, %v704
      %v1706 = vsel %vm1680, %v1673, %v706
      %v1707 = vsel %vm1680, %v1674, %v708
      %v1708 = vsel %vm1680, %v1675, %v710
      %v1709 = vsel %vm1680, %v1676, %v712
      %v1710 = vsel %vm1680, %v1677, %v714
      %v1711 = vsel %vm1680, %v1678, %v716
      %v1712 = vsel %vm1680, %v1679, %v718
      %vm1713 = vcmask 392192
      %v1714 = vsel %vm1713, %v1681, %v784
      %v1715 = vsel %vm1713, %v1682, %v786
      %v1716 = vsel %vm1713, %v1683, %v788
      %v1717 = vsel %vm1713, %v1684, %v790
      %v1718 = vsel %vm1713, %v1685, %v792
      %v1719 = vsel %vm1713, %v1686, %v794
      %v1720 = vsel %vm1713, %v1687, %v796
      %v1721 = vsel %vm1713, %v1688, %v798
      %v1722 = vsel %vm1713, %v1689, %v800
      %v1723 = vsel %vm1713, %v1690, %v802
      %v1724 = vsel %vm1713, %v1691, %v804
      %v1725 = vsel %vm1713, %v1692, %v806
      %v1726 = vsel %vm1713, %v1693, %v808
      %v1727 = vsel %vm1713, %v1694, %v810
      %v1728 = vsel %vm1713, %v1695, %v812
      %v1729 = vsel %vm1713, %v1696, %v814
      %v1730 = vsel %vm1713, %v1697, %v816
      %v1731 = vsel %vm1713, %v1698, %v818
      %v1732 = vsel %vm1713, %v1699, %v820
      %v1733 = vsel %vm1713, %v1700, %v822
      %v1734 = vsel %vm1713, %v1701, %v824
      %v1735 = vsel %vm1713, %v1702, %v826
      %v1736 = vsel %vm1713, %v1703, %v828
      %v1737 = vsel %vm1713, %v1704, %v830
      %v1738 = vsel %vm1713, %v1705, %v832
      %v1739 = vsel %vm1713, %v1706, %v834
      %v1740 = vsel %vm1713, %v1707, %v836
      %v1741 = vsel %vm1713, %v1708, %v838
      %v1742 = vsel %vm1713, %v1709, %v840
      %v1743 = vsel %vm1713, %v1710, %v842
      %v1744 = vsel %vm1713, %v1711, %v844
      %v1745 = vsel %vm1713, %v1712, %v846
      %vm1746 = vcmask 523264
      %v1747 = vsel %vm1746, %v1714, %v976
      %v1748 = vsel %vm1746, %v1715, %v978
      %v1749 = vsel %vm1746, %v1716, %v980
      %v1750 = vsel %vm1746, %v1717, %v982
      %v1751 = vsel %vm1746, %v1718, %v984
      %v1752 = vsel %vm1746, %v1719, %v986
      %v1753 = vsel %vm1746, %v1720, %v988
      %v1754 = vsel %vm1746, %v1721, %v990
      %v1755 = vsel %vm1746, %v1722, %v992
      %v1756 = vsel %vm1746, %v1723, %v994
      %v1757 = vsel %vm1746, %v1724, %v996
      %v1758 = vsel %vm1746, %v1725, %v998
      %v1759 = vsel %vm1746, %v1726, %v1000
      %v1760 = vsel %vm1746, %v1727, %v1002
      %v1761 = vsel %vm1746, %v1728, %v1004
      %v1762 = vsel %vm1746, %v1729, %v1006
      %v1763 = vsel %vm1746, %v1730, %v1008
      %v1764 = vsel %vm1746, %v1731, %v1010
      %v1765 = vsel %vm1746, %v1732, %v1012
      %v1766 = vsel %vm1746, %v1733, %v1014
      %v1767 = vsel %vm1746, %v1734, %v1016
      %v1768 = vsel %vm1746, %v1735, %v1018
      %v1769 = vsel %vm1746, %v1736, %v1020
      %v1770 = vsel %vm1746, %v1737, %v1022
      %v1771 = vsel %vm1746, %v1738, %v1024
      %v1772 = vsel %vm1746, %v1739, %v1026
      %v1773 = vsel %vm1746, %v1740, %v1028
      %v1774 = vsel %vm1746, %v1741, %v1030
      %v1775 = vsel %vm1746, %v1742, %v1032
      %v1776 = vsel %vm1746, %v1743, %v1034
      %v1777 = vsel %vm1746, %v1744, %v1036
      %v1778 = vsel %vm1746, %v1745, %v1038
      %vm1779 = vcmask 654336
      %v1780 = vsel %vm1779, %v1747, %v1152
      %v1781 = vsel %vm1779, %v1748, %v1154
      %v1782 = vsel %vm1779, %v1749, %v1156
      %v1783 = vsel %vm1779, %v1750, %v1158
      %v1784 = vsel %vm1779, %v1751, %v1160
      %v1785 = vsel %vm1779, %v1752, %v1162
      %v1786 = vsel %vm1779, %v1753, %v1164
      %v1787 = vsel %vm1779, %v1754, %v1166
      %v1788 = vsel %vm1779, %v1755, %v1168
      %v1789 = vsel %vm1779, %v1756, %v1170
      %v1790 = vsel %vm1779, %v1757, %v1172
      %v1791 = vsel %vm1779, %v1758, %v1174
      %v1792 = vsel %vm1779, %v1759, %v1176
      %v1793 = vsel %vm1779, %v1760, %v1178
      %v1794 = vsel %vm1779, %v1761, %v1180
      %v1795 = vsel %vm1779, %v1762, %v1182
      %v1796 = vsel %vm1779, %v1763, %v1184
      %v1797 = vsel %vm1779, %v1764, %v1186
      %v1798 = vsel %vm1779, %v1765, %v1188
      %v1799 = vsel %vm1779, %v1766, %v1190
      %v1800 = vsel %vm1779, %v1767, %v1192
      %v1801 = vsel %vm1779, %v1768, %v1194
      %v1802 = vsel %vm1779, %v1769, %v1196
      %v1803 = vsel %vm1779, %v1770, %v1198
      %v1804 = vsel %vm1779, %v1771, %v1200
      %v1805 = vsel %vm1779, %v1772, %v1202
      %v1806 = vsel %vm1779, %v1773, %v1204
      %v1807 = vsel %vm1779, %v1774, %v1206
      %v1808 = vsel %vm1779, %v1775, %v1208
      %v1809 = vsel %vm1779, %v1776, %v1210
      %v1810 = vsel %vm1779, %v1777, %v1212
      %v1811 = vsel %vm1779, %v1778, %v1214
      %vm1812 = vcmask 785408
      %v1813 = vsel %vm1812, %v1780, %v1280
      %v1814 = vsel %vm1812, %v1781, %v1282
      %v1815 = vsel %vm1812, %v1782, %v1284
      %v1816 = vsel %vm1812, %v1783, %v1286
      %v1817 = vsel %vm1812, %v1784, %v1288
      %v1818 = vsel %vm1812, %v1785, %v1290
      %v1819 = vsel %vm1812, %v1786, %v1292
      %v1820 = vsel %vm1812, %v1787, %v1294
      %v1821 = vsel %vm1812, %v1788, %v1296
      %v1822 = vsel %vm1812, %v1789, %v1298
      %v1823 = vsel %vm1812, %v1790, %v1300
      %v1824 = vsel %vm1812, %v1791, %v1302
      %v1825 = vsel %vm1812, %v1792, %v1304
      %v1826 = vsel %vm1812, %v1793, %v1306
      %v1827 = vsel %vm1812, %v1794, %v1308
      %v1828 = vsel %vm1812, %v1795, %v1310
      %v1829 = vsel %vm1812, %v1796, %v1312
      %v1830 = vsel %vm1812, %v1797, %v1314
      %v1831 = vsel %vm1812, %v1798, %v1316
      %v1832 = vsel %vm1812, %v1799, %v1318
      %v1833 = vsel %vm1812, %v1800, %v1320
      %v1834 = vsel %vm1812, %v1801, %v1322
      %v1835 = vsel %vm1812, %v1802, %v1324
      %v1836 = vsel %vm1812, %v1803, %v1326
      %v1837 = vsel %vm1812, %v1804, %v1328
      %v1838 = vsel %vm1812, %v1805, %v1330
      %v1839 = vsel %vm1812, %v1806, %v1332
      %v1840 = vsel %vm1812, %v1807, %v1334
      %v1841 = vsel %vm1812, %v1808, %v1336
      %v1842 = vsel %vm1812, %v1809, %v1338
      %v1843 = vsel %vm1812, %v1810, %v1340
      %v1844 = vsel %vm1812, %v1811, %v1342
      %vm1845 = vcmask 916480
      %v1846 = vsel %vm1845, %v1813, %v1472
      %v1847 = vsel %vm1845, %v1814, %v1474
      %v1848 = vsel %vm1845, %v1815, %v1476
      %v1849 = vsel %vm1845, %v1816, %v1478
      %v1850 = vsel %vm1845, %v1817, %v1480
      %v1851 = vsel %vm1845, %v1818, %v1482
      %v1852 = vsel %vm1845, %v1819, %v1484
      %v1853 = vsel %vm1845, %v1820, %v1486
      %v1854 = vsel %vm1845, %v1821, %v1488
      %v1855 = vsel %vm1845, %v1822, %v1490
      %v1856 = vsel %vm1845, %v1823, %v1492
      %v1857 = vsel %vm1845, %v1824, %v1494
      %v1858 = vsel %vm1845, %v1825, %v1496
      %v1859 = vsel %vm1845, %v1826, %v1498
      %v1860 = vsel %vm1845, %v1827, %v1500
      %v1861 = vsel %vm1845, %v1828, %v1502
      %v1862 = vsel %vm1845, %v1829, %v1504
      %v1863 = vsel %vm1845, %v1830, %v1506
      %v1864 = vsel %vm1845, %v1831, %v1508
      %v1865 = vsel %vm1845, %v1832, %v1510
      %v1866 = vsel %vm1845, %v1833, %v1512
      %v1867 = vsel %vm1845, %v1834, %v1514
      %v1868 = vsel %vm1845, %v1835, %v1516
      %v1869 = vsel %vm1845, %v1836, %v1518
      %v1870 = vsel %vm1845, %v1837, %v1520
      %v1871 = vsel %vm1845, %v1838, %v1522
      %v1872 = vsel %vm1845, %v1839, %v1524
      %v1873 = vsel %vm1845, %v1840, %v1526
      %v1874 = vsel %vm1845, %v1841, %v1528
      %v1875 = vsel %vm1845, %v1842, %v1530
      %v1876 = vsel %vm1845, %v1843, %v1532
      %v1877 = vsel %vm1845, %v1844, %v1534
      %v1878 = vld [vmem:[%s1] sm:$0xff]
      %v1879 = vld [vmem:[%s1 + $0x8] sm:$0xff]
      %v1880 = vld [vmem:[%s1 + $0x10] sm:$0xff]
      %v1881 = vld [vmem:[%s1 + $0x18] sm:$0xff]
      %v1882 = vld [vmem:[%s1 + $0x20] sm:$0xff]
      %v1883 = vld [vmem:[%s1 + $0x28] sm:$0xff]
      %v1884 = vld [vmem:[%s1 + $0x30] sm:$0xff]
      %v1885 = vld [vmem:[%s1 + $0x38] sm:$0xff]
      %v1886 = vld [vmem:[%s1 + $0x40] sm:$0xff]
      %v1887 = vld [vmem:[%s1 + $0x48] sm:$0xff]
      %v1888 = vld [vmem:[%s1 + $0x50] sm:$0xff]
      %v1889 = vld [vmem:[%s1 + $0x58] sm:$0xff]
      %v1890 = vld [vmem:[%s1 + $0x60] sm:$0xff]
      %v1891 = vld [vmem:[%s1 + $0x68] sm:$0xff]
      %v1892 = vld [vmem:[%s1 + $0x70] sm:$0xff]
      %v1893 = vld [vmem:[%s1 + $0x78] sm:$0xff]
      %v1894 = vld [vmem:[%s1 + $0x80] sm:$0xff]
      %v1895 = vld [vmem:[%s1 + $0x88] sm:$0xff]
      %v1896 = vld [vmem:[%s2] sm:$0x1]
      %v1898 = vperm.slane %v1896, 0
      %v1900 = vsel %vm1647, %v1569, 0
      %v1902 = vsel %vm1647, %v1571, 0
      %v1904 = vsel %vm1647, %v1574, 0
      %v1906 = vsel %vm1647, %v1576, 0
      %v1908 = vsel %vm1647, %v1579, 0
      %v1910 = vsel %vm1647, %v1581, 0
      %v1912 = vsel %vm1647, %v1584, 0
      %v1914 = vsel %vm1647, %v1586, 0
      %v1916 = vsel %vm1647, %v1589, 0
      %v1918 = vsel %vm1647, %v1591, 0
      %v1920 = vsel %vm1647, %v1594, 0
      %v1922 = vsel %vm1647, %v1596, 0
      %v1924 = vsel %vm1647, %v1599, 0
      %v1926 = vsel %vm1647, %v1601, 0
      %v1928 = vsel %vm1647, %v1604, 0
      %v1930 = vsel %vm1647, %v1606, 0
      %v1932 = vsel %vm1647, %v1609, 0
      %v1934 = vsel %vm1647, %v1611, 0
      %v1936 = vsel %vm1647, %v1614, 0
      %v1938 = vsel %vm1647, %v1616, 0
      %v1940 = vsel %vm1647, %v1619, 0
      %v1942 = vsel %vm1647, %v1621, 0
      %v1944 = vsel %vm1647, %v1624, 0
      %v1946 = vsel %vm1647, %v1626, 0
      %v1948 = vsel %vm1647, %v1629, 0
      %v1950 = vsel %vm1647, %v1631, 0
      %v1952 = vsel %vm1647, %v1634, 0
      %v1954 = vsel %vm1647, %v1636, 0
      %v1956 = vsel %vm1647, %v1639, 0
      %v1958 = vsel %vm1647, %v1641, 0
      %v1960 = vsel %vm1647, %v1644, 0
      %v1962 = vsel %vm1647, %v1646, 0
      %1964 = vmatpush.msra.mxu0 %v1893
      %1965 = vmatpush.msra.mxu0 %v1892
      %1966 = vmatpush.msra.mxu0 %v1891
      %1967 = vmatpush.msra.mxu0 %v1890
      %1968 = vmatpush.msra.mxu0 %v1889
      %1969 = vmatpush.msra.mxu0 %v1888
      %1970 = vmatpush.msra.mxu0 %v1887
      %1971 = vmatpush.msra.mxu0 %v1886
      %1972 = vmatpush.msra.mxu0 %v1885
      %1973 = vmatpush.msra.mxu0 %v1884
      %1974 = vmatpush.msra.mxu0 %v1883
      %1975 = vmatpush.msra.mxu0 %v1882
      %1976 = vmatpush.msra.mxu0 %v1881
      %1977 = vmatpush.msra.mxu0 %v1880
      %1978 = vmatpush.msra.mxu0 %v1879
      %1979 = vmatpush.msra.mxu0 %v1878
      %1980 = vmatmul.f32.gmra.mxu0 %v1846
      %v1981 = vpop.f32.mrf.mxu0
      %v1982 = vadd.f32 %v1898, %v1981
      %1983 = vmatmul.f32.gmra.mxu0 %v1847
      %v1984 = vpop.f32.mrf.mxu0
      %v1985 = vadd.f32 %v1898, %v1984
      %1986 = vmatmul.f32.gmra.mxu0 %v1848
      %v1987 = vpop.f32.mrf.mxu0
      %v1988 = vadd.f32 %v1898, %v1987
      %1989 = vmatmul.f32.gmra.mxu0 %v1849
      %v1990 = vpop.f32.mrf.mxu0
      %v1991 = vadd.f32 %v1898, %v1990
      %1992 = vmatmul.f32.gmra.mxu0 %v1850
      %v1993 = vpop.f32.mrf.mxu0
      %v1994 = vadd.f32 %v1898, %v1993
      %1995 = vmatmul.f32.gmra.mxu0 %v1851
      %v1996 = vpop.f32.mrf.mxu0
      %v1997 = vadd.f32 %v1898, %v1996
      %1998 = vmatmul.f32.gmra.mxu0 %v1852
      %v1999 = vpop.f32.mrf.mxu0
      %v2000 = vadd.f32 %v1898, %v1999
      %2001 = vmatmul.f32.gmra.mxu0 %v1853
      %v2002 = vpop.f32.mrf.mxu0
      %v2003 = vadd.f32 %v1898, %v2002
      %2004 = vmatmul.f32.gmra.mxu0 %v1854
      %v2005 = vpop.f32.mrf.mxu0
      %v2006 = vadd.f32 %v1898, %v2005
      %2007 = vmatmul.f32.gmra.mxu0 %v1855
      %v2008 = vpop.f32.mrf.mxu0
      %v2009 = vadd.f32 %v1898, %v2008
      %2010 = vmatmul.f32.gmra.mxu0 %v1856
      %v2011 = vpop.f32.mrf.mxu0
      %v2012 = vadd.f32 %v1898, %v2011
      %2013 = vmatmul.f32.gmra.mxu0 %v1857
      %v2014 = vpop.f32.mrf.mxu0
      %v2015 = vadd.f32 %v1898, %v2014
      %2016 = vmatmul.f32.gmra.mxu0 %v1858
      %v2017 = vpop.f32.mrf.mxu0
      %v2018 = vadd.f32 %v1898, %v2017
      %2019 = vmatmul.f32.gmra.mxu0 %v1859
      %v2020 = vpop.f32.mrf.mxu0
      %v2021 = vadd.f32 %v1898, %v2020
      %2022 = vmatmul.f32.gmra.mxu0 %v1860
      %v2023 = vpop.f32.mrf.mxu0
      %v2024 = vadd.f32 %v1898, %v2023
      %2025 = vmatmul.f32.gmra.mxu0 %v1861
      %v2026 = vpop.f32.mrf.mxu0
      %v2027 = vadd.f32 %v1898, %v2026
      %2028 = vmatmul.f32.gmra.mxu0 %v1862
      %v2029 = vpop.f32.mrf.mxu0
      %v2030 = vadd.f32 %v1898, %v2029
      %2031 = vmatmul.f32.gmra.mxu0 %v1863
      %v2032 = vpop.f32.mrf.mxu0
      %v2033 = vadd.f32 %v1898, %v2032
      %2034 = vmatmul.f32.gmra.mxu0 %v1864
      %v2035 = vpop.f32.mrf.mxu0
      %v2036 = vadd.f32 %v1898, %v2035
      %2037 = vmatmul.f32.gmra.mxu0 %v1865
      %v2038 = vpop.f32.mrf.mxu0
      %v2039 = vadd.f32 %v1898, %v2038
      %2040 = vmatmul.f32.gmra.mxu0 %v1866
      %v2041 = vpop.f32.mrf.mxu0
      %v2042 = vadd.f32 %v1898, %v2041
      %2043 = vmatmul.f32.gmra.mxu0 %v1867
      %v2044 = vpop.f32.mrf.mxu0
      %v2045 = vadd.f32 %v1898, %v2044
      %2046 = vmatmul.f32.gmra.mxu0 %v1868
      %v2047 = vpop.f32.mrf.mxu0
      %v2048 = vadd.f32 %v1898, %v2047
      %2049 = vmatmul.f32.gmra.mxu0 %v1869
      %v2050 = vpop.f32.mrf.mxu0
      %v2051 = vadd.f32 %v1898, %v2050
      %2052 = vmatmul.f32.gmra.mxu0 %v1870
      %v2053 = vpop.f32.mrf.mxu0
      %v2054 = vadd.f32 %v1898, %v2053
      %2055 = vmatmul.f32.gmra.mxu0 %v1871
      %v2056 = vpop.f32.mrf.mxu0
      %v2057 = vadd.f32 %v1898, %v2056
      %2058 = vmatmul.f32.gmra.mxu0 %v1872
      %v2059 = vpop.f32.mrf.mxu0
      %v2060 = vadd.f32 %v1898, %v2059
      %2061 = vmatmul.f32.gmra.mxu0 %v1873
      %v2062 = vpop.f32.mrf.mxu0
      %v2063 = vadd.f32 %v1898, %v2062
      %2064 = vmatmul.f32.gmra.mxu0 %v1874
      %v2065 = vpop.f32.mrf.mxu0
      %v2066 = vadd.f32 %v1898, %v2065
      %2067 = vmatmul.f32.gmra.mxu0 %v1875
      %v2068 = vpop.f32.mrf.mxu0
      %v2069 = vadd.f32 %v1898, %v2068
      %2070 = vmatmul.f32.gmra.mxu0 %v1876
      %v2071 = vpop.f32.mrf.mxu0
      %v2072 = vadd.f32 %v1898, %v2071
      %2073 = vmatmul.f32.gmra.mxu0 %v1877
      %v2074 = vpop.f32.mrf.mxu0
      %v2075 = vadd.f32 %v1898, %v2074
      %2076 = vdwg.mxu0
      %2077 = vmatpush.msra.mxu0 0.0
      %2078 = vmatpush.msra.mxu0 0.0
      %2079 = vmatpush.msra.mxu0 0.0
      %2080 = vmatpush.msra.mxu0 0.0
      %2081 = vmatpush.msra.mxu0 0.0
      %2082 = vmatpush.msra.mxu0 0.0
      %2083 = vmatpush.msra.mxu0 0.0
      %2084 = vmatpush.msra.mxu0 0.0
      %2085 = vmatpush.msra.mxu0 0.0
      %2086 = vmatpush.msra.mxu0 0.0
      %2087 = vmatpush.msra.mxu0 0.0
      %2088 = vmatpush.msra.mxu0 0.0
      %2089 = vmatpush.msra.mxu0 0.0
      %2090 = vmatpush.msra.mxu0 0.0
      %2091 = vmatpush.msra.mxu0 %v1895
      %2092 = vmatpush.msra.mxu0 %v1894
      %2093 = vmatmul.f32.gmra.mxu0 %v1900
      %v2094 = vpop.f32.mrf.mxu0
      %v2095 = vadd.f32 %v1982, %v2094
      %2096 = vmatmul.f32.gmra.mxu0 %v1902
      %v2097 = vpop.f32.mrf.mxu0
      %v2098 = vadd.f32 %v1985, %v2097
      %2099 = vmatmul.f32.gmra.mxu0 %v1904
      %v2100 = vpop.f32.mrf.mxu0
      %v2101 = vadd.f32 %v1988, %v2100
      %2102 = vmatmul.f32.gmra.mxu0 %v1906
      %v2103 = vpop.f32.mrf.mxu0
      %v2104 = vadd.f32 %v1991, %v2103
      %2105 = vmatmul.f32.gmra.mxu0 %v1908
      %v2106 = vpop.f32.mrf.mxu0
      %v2107 = vadd.f32 %v1994, %v2106
      %2108 = vmatmul.f32.gmra.mxu0 %v1910
      %v2109 = vpop.f32.mrf.mxu0
      %v2110 = vadd.f32 %v1997, %v2109
      %2111 = vmatmul.f32.gmra.mxu0 %v1912
      %v2112 = vpop.f32.mrf.mxu0
      %v2113 = vadd.f32 %v2000, %v2112
      %2114 = vmatmul.f32.gmra.mxu0 %v1914
      %v2115 = vpop.f32.mrf.mxu0
      %v2116 = vadd.f32 %v2003, %v2115
      %2117 = vmatmul.f32.gmra.mxu0 %v1916
      %v2118 = vpop.f32.mrf.mxu0
      %v2119 = vadd.f32 %v2006, %v2118
      %2120 = vmatmul.f32.gmra.mxu0 %v1918
      %v2121 = vpop.f32.mrf.mxu0
      %v2122 = vadd.f32 %v2009, %v2121
      %2123 = vmatmul.f32.gmra.mxu0 %v1920
      %v2124 = vpop.f32.mrf.mxu0
      %v2125 = vadd.f32 %v2012, %v2124
      %2126 = vmatmul.f32.gmra.mxu0 %v1922
      %v2127 = vpop.f32.mrf.mxu0
      %v2128 = vadd.f32 %v2015, %v2127
      %2129 = vmatmul.f32.gmra.mxu0 %v1924
      %v2130 = vpop.f32.mrf.mxu0
      %v2131 = vadd.f32 %v2018, %v2130
      %2132 = vmatmul.f32.gmra.mxu0 %v1926
      %v2133 = vpop.f32.mrf.mxu0
      %v2134 = vadd.f32 %v2021, %v2133
      %2135 = vmatmul.f32.gmra.mxu0 %v1928
      %v2136 = vpop.f32.mrf.mxu0
      %v2137 = vadd.f32 %v2024, %v2136
      %2138 = vmatmul.f32.gmra.mxu0 %v1930
      %v2139 = vpop.f32.mrf.mxu0
      %v2140 = vadd.f32 %v2027, %v2139
      %2141 = vmatmul.f32.gmra.mxu0 %v1932
      %v2142 = vpop.f32.mrf.mxu0
      %v2143 = vadd.f32 %v2030, %v2142
      %2144 = vmatmul.f32.gmra.mxu0 %v1934
      %v2145 = vpop.f32.mrf.mxu0
      %v2146 = vadd.f32 %v2033, %v2145
      %2147 = vmatmul.f32.gmra.mxu0 %v1936
      %v2148 = vpop.f32.mrf.mxu0
      %v2149 = vadd.f32 %v2036, %v2148
      %2150 = vmatmul.f32.gmra.mxu0 %v1938
      %v2151 = vpop.f32.mrf.mxu0
      %v2152 = vadd.f32 %v2039, %v2151
      %2153 = vmatmul.f32.gmra.mxu0 %v1940
      %v2154 = vpop.f32.mrf.mxu0
      %v2155 = vadd.f32 %v2042, %v2154
      %2156 = vmatmul.f32.gmra.mxu0 %v1942
      %v2157 = vpop.f32.mrf.mxu0
      %v2158 = vadd.f32 %v2045, %v2157
      %2159 = vmatmul.f32.gmra.mxu0 %v1944
      %v2160 = vpop.f32.mrf.mxu0
      %v2161 = vadd.f32 %v2048, %v2160
      %2162 = vmatmul.f32.gmra.mxu0 %v1946
      %v2163 = vpop.f32.mrf.mxu0
      %v2164 = vadd.f32 %v2051, %v2163
      %2165 = vmatmul.f32.gmra.mxu0 %v1948
      %v2166 = vpop.f32.mrf.mxu0
      %v2167 = vadd.f32 %v2054, %v2166
      %2168 = vmatmul.f32.gmra.mxu0 %v1950
      %v2169 = vpop.f32.mrf.mxu0
      %v2170 = vadd.f32 %v2057, %v2169
      %2171 = vmatmul.f32.gmra.mxu0 %v1952
      %v2172 = vpop.f32.mrf.mxu0
      %v2173 = vadd.f32 %v2060, %v2172
      %2174 = vmatmul.f32.gmra.mxu0 %v1954
      %v2175 = vpop.f32.mrf.mxu0
      %v2176 = vadd.f32 %v2063, %v2175
      %2177 = vmatmul.f32.gmra.mxu0 %v1956
      %v2178 = vpop.f32.mrf.mxu0
      %v2179 = vadd.f32 %v2066, %v2178
      %2180 = vmatmul.f32.gmra.mxu0 %v1958
      %v2181 = vpop.f32.mrf.mxu0
      %v2182 = vadd.f32 %v2069, %v2181
      %2183 = vmatmul.f32.gmra.mxu0 %v1960
      %v2184 = vpop.f32.mrf.mxu0
      %v2185 = vadd.f32 %v2072, %v2184
      %2186 = vmatmul.f32.gmra.mxu0 %v1962
      %v2187 = vpop.f32.mrf.mxu0
      %v2188 = vadd.f32 %v2075, %v2187
      %2189 = vdwg.mxu0
      %2190 = vst.msk [vmem:[%s194] sm:$0xff] %vm1647, %v2095
      %2191 = vst.msk [vmem:[%s194 + $0x8] sm:$0xff] %vm1647, %v2098
      %2192 = vst.msk [vmem:[%s194 + $0x10] sm:$0xff] %vm1647, %v2101
      %2193 = vst.msk [vmem:[%s194 + $0x18] sm:$0xff] %vm1647, %v2104
      %2194 = vst.msk [vmem:[%s194 + $0x20] sm:$0xff] %vm1647, %v2107
      %2195 = vst.msk [vmem:[%s194 + $0x28] sm:$0xff] %vm1647, %v2110
      %2196 = vst.msk [vmem:[%s194 + $0x30] sm:$0xff] %vm1647, %v2113
      %2197 = vst.msk [vmem:[%s194 + $0x38] sm:$0xff] %vm1647, %v2116
      %2198 = vst.msk [vmem:[%s194 + $0x40] sm:$0xff] %vm1647, %v2119
      %2199 = vst.msk [vmem:[%s194 + $0x48] sm:$0xff] %vm1647, %v2122
      %2200 = vst.msk [vmem:[%s194 + $0x50] sm:$0xff] %vm1647, %v2125
      %2201 = vst.msk [vmem:[%s194 + $0x58] sm:$0xff] %vm1647, %v2128
      %2202 = vst.msk [vmem:[%s194 + $0x60] sm:$0xff] %vm1647, %v2131
      %2203 = vst.msk [vmem:[%s194 + $0x68] sm:$0xff] %vm1647, %v2134
      %2204 = vst.msk [vmem:[%s194 + $0x70] sm:$0xff] %vm1647, %v2137
      %2205 = vst.msk [vmem:[%s194 + $0x78] sm:$0xff] %vm1647, %v2140
      %2206 = vst.msk [vmem:[%s194 + $0x80] sm:$0xff] %vm1647, %v2143
      %2207 = vst.msk [vmem:[%s194 + $0x88] sm:$0xff] %vm1647, %v2146
      %2208 = vst.msk [vmem:[%s194 + $0x90] sm:$0xff] %vm1647, %v2149
      %2209 = vst.msk [vmem:[%s194 + $0x98] sm:$0xff] %vm1647, %v2152
      %2210 = vst.msk [vmem:[%s194 + $0xa0] sm:$0xff] %vm1647, %v2155
      %2211 = vst.msk [vmem:[%s194 + $0xa8] sm:$0xff] %vm1647, %v2158
      %2212 = vst.msk [vmem:[%s194 + $0xb0] sm:$0xff] %vm1647, %v2161
      %2213 = vst.msk [vmem:[%s194 + $0xb8] sm:$0xff] %vm1647, %v2164
      %2214 = vst.msk [vmem:[%s194 + $0xc0] sm:$0xff] %vm1647, %v2167
      %2215 = vst.msk [vmem:[%s194 + $0xc8] sm:$0xff] %vm1647, %v2170
      %2216 = vst.msk [vmem:[%s194 + $0xd0] sm:$0xff] %vm1647, %v2173
      %2217 = vst.msk [vmem:[%s194 + $0xd8] sm:$0xff] %vm1647, %v2176
      %2218 = vst.msk [vmem:[%s194 + $0xe0] sm:$0xff] %vm1647, %v2179
      %2219 = vst.msk [vmem:[%s194 + $0xe8] sm:$0xff] %vm1647, %v2182
      %2220 = vst.msk [vmem:[%s194 + $0xf0] sm:$0xff] %vm1647, %v2185
      %2221 = vst.msk [vmem:[%s194 + $0xf8] sm:$0xff] %vm1647, %v2188
      %s2222 = smul.u32 16, %s19
      %p2223 = scmp.lt.s32.totalorder %s18, 1
      %s2224 = scalar_select %p2223, %s18, 1
      %p2225 = scmp.lt.s32.totalorder %s2222, 15
      %s2226 = scalar_select %p2225, %s2222, 15
      %s2227 = smul.addr %s2226, 2
      %s2228 = smul.addr %s2224, 32
      %s2229 = sadd.s32 %s2227, %s2228
      %s2230 = smul.addr %s2229, 8
      %s2231 = scalar_lea.vmem %s3, %s2230
      // Predicated region
      $region33: #{backbone_with_fpn.17} parent=31 // pred_check
        %p2232 = pneg %p114
      $region34: #{backbone_with_fpn.17} parent=31 // pred_check_branch
        %2234 = sbr.rel (%p2232) target = $region36
      $region35: #{backbone_with_fpn.17} parent=31 // pred_region
        %s2235 = smul.u32 16, %s19
      $region36: #{backbone_with_fpn.17} parent=31 // pred_fallthru
        _
    $region32: #{backbone_with_fpn.17} parent=5 // pred_fallthru
      _
    %p2236 = scmp.le.s32.totalorder 2, %s9
    // Predicated region
    $region37: #{backbone_with_fpn.17} parent=5 // pred_check
      %p2237 = pneg %p2236
    $region38: #{backbone_with_fpn.17} parent=5 // pred_check_branch
      %2239 = sbr.rel (%p2237) target = $region40
    $region39: #{backbone_with_fpn.17} parent=5 // pred_region
      %s2240 = ssub.s32 %s9, 2
      // Predicated region
      $region41: #{backbone_with_fpn.17} parent=39 // pred_check
        %p2241 = pneg %p120
      $region42: #{backbone_with_fpn.17} parent=39 // pred_check_branch
        %2243 = sbr.rel (%p2241) target = $region44
      $region43: #{backbone_with_fpn.17} parent=39 // pred_region
        %s2244 = smul.u32 16, %s21
        %p2245 = scmp.lt.s32.totalorder %s20, 1
        %s2246 = scalar_select %p2245, %s20, 1
        %p2247 = scmp.lt.s32.totalorder %s2244, 15
        %s2248 = scalar_select %p2247, %s2244, 15
        %s2249 = smul.addr %s2248, 2
        %s2250 = smul.addr %s2246, 32
        %s2251 = sadd.s32 %s2249, %s2250
        %s2252 = smul.addr %s2251, 8
        %s2253 = scalar_lea.vmem %s3, %s2252
      $region44: #{backbone_with_fpn.17} parent=39 // pred_fallthru
        _
    $region40: #{backbone_with_fpn.17} parent=5 // pred_fallthru
      _
  $region6: #{backbone_with_fpn.17} parent=0 // loop_footer
    %s13 = sadd.s32 1, %s9
  $region7: #{backbone_with_fpn.17} parent=0 // loop_footer_branch
    %8 = sbr.rel target = $region3
  $region8: #{backbone_with_fpn.17} parent=0 // loop_exit
    _

</llo_original>
